<compile_context>
chip_gen: v5e
topology: v5e:2x2
jax: 0.10.0
libtpu: 0.0.40
codegen_flags: <defaults>
</compile_context>

<pallas_src>
import functools
import math

import jax
import jax.numpy as jnp
from jax import lax
from jax.experimental import pallas as pl
from jax.experimental.pallas import tpu as pltpu

# ---------------- config (MambaConfig equivalents) ----------------
D_MODEL = 32
N_LAYERS = 3
D_STATE = 16
EXPAND = 2
D_CONV = 4
DT_RANK = math.ceil(D_MODEL / 16)          # 'auto'
D_INNER = EXPAND * D_MODEL
NF = D_INNER * D_STATE                     # flattened state width (n-major, e-minor)
DT_MIN, DT_MAX, DT_SCALE, DT_INIT_FLOOR = 1e-3, 0.1, 1.0, 1e-4
RMS_EPS = 1e-5

BATCH = 2
SEQ = 8


# ---------------- in-kernel helpers ----------------
def _silu(x):
    return x * (1.0 / (1.0 + jnp.exp(-x)))


def _softplus(x):
    return jnp.maximum(x, 0.0) + jnp.log1p(jnp.exp(-jnp.abs(x)))


def _mm_t(a, w):
    # a @ w.T (contract last dims), f32 accumulation
    return lax.dot_general(a, w, (((1,), (1,)), ((), ())),
                           preferred_element_type=jnp.float32)


def _mm(a, w):
    return jnp.dot(a, w, preferred_element_type=jnp.float32)


# ---------------- fused 3-layer Mamba kernel ----------------
# Row layout of the activation block: row = t * bpr + b  (time-major,
# batch-minor).  bpr = 1 (one batch row per grid step) or bpr = B (batch
# folded into the matmul M dimension, grid of size 1).
def mamba_fused_kernel(x_ref, g_ref, norm_w_ref, w_inx_ref, w_inz_ref,
                       conv_w_ref, conv_b_ref, w_dtr_ref, w_dt_ref, dt_b_ref,
                       w_brep_ref, w_crep_ref, neg_a_ref, d_ref, w_out_ref,
                       o_ref, bx_s, cv_s, *,
                       n_layers, L, bpr, d_inner, d_state, dt_rank, d_conv,
                       eps):
    rows = L * bpr
    nf = d_inner * d_state
    act = x_ref[0]                                     # (rows, d_model) residual stream

    # causal time-shift matrices for the depthwise conv (shift by s time steps
    # == s*bpr rows in the time-major layout; never crosses batch blocks)
    ii = lax.broadcasted_iota(jnp.int32, (rows, rows), 0)   # output row
    jj = lax.broadcasted_iota(jnp.int32, (rows, rows), 1)   # input row
    shift_mats = [(jj == (ii - s * bpr)).astype(jnp.float32)
                  for s in range(1, d_conv)]

    g = g_ref[...]                                     # (d_inner, nf), 0/1: j % d_inner == e

    if bpr == 1:
        row_ids = lax.broadcasted_iota(jnp.int32, (rows, 1), 0)
    else:
        # 0/1 placement matrices: scatter the bpr per-step state rows into hC
        pr = lax.broadcasted_iota(jnp.int32, (rows, bpr), 0)
        pc = lax.broadcasted_iota(jnp.int32, (rows, bpr), 1)
        place_mats = [(pr == (t * bpr + pc)).astype(jnp.float32)
                      for t in range(L)]

    for l in range(n_layers):
        # ---- RMSNorm ----
        ms = jnp.mean(act * act, axis=-1, keepdims=True)
        xn = act * lax.rsqrt(ms + eps) * norm_w_ref[l]

        # ---- in_proj (no bias), x / z halves as two matmuls (lane offset 0) ----
        x1 = _mm_t(xn, w_inx_ref[l])                   # (rows, d_inner)
        z = _mm_t(xn, w_inz_ref[l])                    # (rows, d_inner)

        # ---- depthwise causal conv1d + bias + SiLU (time-shift matmuls) ----
        cw = conv_w_ref[l]                             # (d_conv, d_inner)
        acc = conv_b_ref[l] + x1 * cw[d_conv - 1:d_conv, :]
        for s in range(1, d_conv):
            k = d_conv - 1 - s
            acc = acc + _mm(shift_mats[s - 1], x1) * cw[k:k + 1, :]
        x2 = _silu(acc)                                # (rows, d_inner)

        # ---- delta path: tiny x_proj slice + dt_proj (VPU broadcast FMAs) ----
        delta_r = _mm_t(x2, w_dtr_ref[l])              # (rows, dt_rank)
        wdt = w_dt_ref[l]                              # (dt_rank, d_inner)
        dlin = dt_b_ref[l] + delta_r[:, 0:1] * wdt[0:1, :]
        for r in range(1, dt_rank):
            dlin = dlin + delta_r[:, r:r + 1] * wdt[r:r + 1, :]
        delta = _softplus(dlin)                        # (rows, d_inner)

        # ---- discretization in flat state layout j = n*d_inner + e ----
        # all replications are MXU matmuls (g / pre-expanded B,C weights);
        # -exp(A_log) is precomputed in the wrapper.
        dA = jnp.exp(_mm(delta, g) * neg_a_ref[l])             # (rows, nf)
        bx_full = _mm(delta * x2, g) * _mm(x2, w_brep_ref[l])  # (rows, nf)
        cv_full = _mm(x2, w_crep_ref[l])                       # (rows, nf)

        if bpr > 1:
            # stage BX / Cv-rep in VMEM so the unrolled scan does not spill
            bx_s[...] = bx_full
            cv_s[...] = cv_full
            bx_row = lambda r0: bx_s[pl.ds(r0, bpr), :]
            cv_row = lambda r0: cv_s[pl.ds(r0, bpr), :]
        else:
            bx_row = lambda r0: bx_full[r0:r0 + bpr, :]
            cv_row = lambda r0: cv_full[r0:r0 + bpr, :]

        # ---- selective scan, fully unrolled, register-resident state ----
        h = jnp.zeros((bpr, nf), jnp.float32)
        hC = jnp.zeros((rows, nf), jnp.float32)
        for t in range(L):
            r0 = t * bpr
            h = dA[r0:r0 + bpr, :] * h + bx_row(r0)
            hval = h * cv_row(r0)
            if bpr == 1:
                hC = jnp.where(row_ids == t, hval, hC)           # vselect
            else:
                hC = hC + _mm(place_mats[t], hval)               # MXU placement

        # contract the d_state groups (stride d_inner) + D skip
        y = _mm_t(hC, g) + d_ref[l] * x2               # (rows, d_inner)

        # ---- SiLU gate, out_proj, residual ----
        act = _mm_t(y * _silu(z), w_out_ref[l]) + act

    o_ref[0] = act


# ---------------- generation detection (fold batch on single-TC parts) ----------
def _has_multiple_tensorcores():
    """True for parts with >1 TensorCore per chip (v4 / v5p / v7x)."""
    try:
        kind = jax.devices()[0].device_kind.lower()
    except Exception:
        return False
    if "v7" in kind or "7x" in kind:
        return True
    if "v4" in kind:
        return True
    if "v5" in kind and "lite" not in kind and "5e" not in kind:
        return True          # v5p megacore
    return False


# ---------------- wrapper: single pallas_call for the whole model ----------------
@functools.partial(jax.jit, static_argnames=("fold_batch",))
def mamba_forward(x, layer_params, fold_batch=True):
    B, L, d_model = x.shape
    n_layers = len(layer_params)

    stack = lambda name: jnp.stack([p[name] for p in layer_params])
    norm_w = stack("norm_w")                                          # (nl,1,d_model)
    w_in_x = jnp.stack([p["w_in"][:D_INNER] for p in layer_params])   # (nl,d_inner,d_model)
    w_in_z = jnp.stack([p["w_in"][D_INNER:] for p in layer_params])   # (nl,d_inner,d_model)
    conv_w = jnp.stack([p["conv_w"].T for p in layer_params])         # (nl,d_conv,d_inner)
    conv_b = stack("conv_b")                                          # (nl,1,d_inner)
    w_dtr = jnp.stack([p["w_x"][:DT_RANK] for p in layer_params])     # (nl,dt_rank,d_inner)
    w_dt = jnp.stack([p["w_dt"].T for p in layer_params])             # (nl,dt_rank,d_inner)
    dt_b = stack("dt_b")                                              # (nl,1,d_inner)

    # B/C projection weights pre-expanded to the flat state layout
    # (column j = n*d_inner + e maps to the projection row n) -- exact.
    expand_bc = lambda w: jnp.repeat(w.T, D_INNER, axis=1)            # (d_inner, NF)
    w_brep = jnp.stack([expand_bc(p["w_x"][DT_RANK:DT_RANK + D_STATE])
                        for p in layer_params])                       # (nl,d_inner,NF)
    w_crep = jnp.stack([expand_bc(p["w_x"][DT_RANK + D_STATE:])
                        for p in layer_params])                       # (nl,d_inner,NF)

    # -exp(A_log), hoisted out of the kernel, flattened n-major (j = n*d_inner + e)
    neg_a = jnp.stack([(-jnp.exp(p["a_log"])).T.reshape(1, NF)
                       for p in layer_params])                        # (nl,1,NF)
    d_w = stack("d")                                                  # (nl,1,d_inner)
    w_out = stack("w_out")                                            # (nl,d_model,d_inner)

    # 0/1 layout matrix g[e, j] = (j % d_inner == e): used for the delta / x
    # replication (MXU) and the final d_state contraction.
    j = jnp.arange(NF)
    g = (j[None, :] % D_INNER == jnp.arange(D_INNER)[:, None]).astype(jnp.float32)

    if fold_batch:
        bpr = B
        nblk = 1
        # time-major, batch-minor row order: row = t*B + b
        x_in = jnp.transpose(x, (1, 0, 2)).reshape(1, L * B, d_model)
        sem = ("arbitrary",)
    else:
        bpr = 1
        nblk = B
        x_in = x
        sem = ("parallel",)
    rows = L * bpr

    kernel = functools.partial(
        mamba_fused_kernel, n_layers=n_layers, L=L, bpr=bpr, d_inner=D_INNER,
        d_state=D_STATE, dt_rank=DT_RANK, d_conv=D_CONV, eps=RMS_EPS)

    def full(arr):
        nd = arr.ndim
        return pl.BlockSpec(arr.shape, lambda b, _n=nd: (0,) * _n)

    out = pl.pallas_call(
        kernel,
        out_shape=jax.ShapeDtypeStruct((nblk, rows, d_model), jnp.float32),
        grid_spec=pltpu.PrefetchScalarGridSpec(
            num_scalar_prefetch=0,
            grid=(nblk,),
            in_specs=[
                pl.BlockSpec((1, rows, d_model), lambda b: (b, 0, 0)),  # x
                full(g),
                full(norm_w), full(w_in_x), full(w_in_z),
                full(conv_w), full(conv_b),
                full(w_dtr), full(w_dt), full(dt_b),
                full(w_brep), full(w_crep), full(neg_a),
                full(d_w), full(w_out),
            ],
            out_specs=pl.BlockSpec((1, rows, d_model), lambda b: (b, 0, 0)),
            scratch_shapes=[pltpu.VMEM((rows, NF), jnp.float32),   # BX staging
                            pltpu.VMEM((rows, NF), jnp.float32)],  # Cv-rep staging
        ),
        compiler_params=pltpu.CompilerParams(dimension_semantics=sem),
    )(x_in, g, norm_w, w_in_x, w_in_z, conv_w, conv_b, w_dtr, w_dt, dt_b,
      w_brep, w_crep, neg_a, d_w, w_out)

    if fold_batch:
        out = jnp.transpose(out.reshape(L, B, d_model), (1, 0, 2))
    return out


# ---------------- deterministic parameter init (shapes per MambaBlock.__init__) ----
def init_layer_params(key):
    ks = jax.random.split(key, 7)

    def linear_w(k, out_f, in_f):
        bound = 1.0 / math.sqrt(in_f)
        return jax.random.uniform(k, (out_f, in_f), jnp.float32, -bound, bound)

    conv_bound = 1.0 / math.sqrt(1 * D_CONV)     # depthwise: fan_in = 1 * kernel_size
    dt_init_std = DT_RANK ** (-0.5) * DT_SCALE

    dt = jnp.exp(jax.random.uniform(ks[5], (D_INNER,), jnp.float32)
                 * (math.log(DT_MAX) - math.log(DT_MIN)) + math.log(DT_MIN))
    dt = jnp.maximum(dt, DT_INIT_FLOOR)
    inv_dt = dt + jnp.log(-jnp.expm1(-dt))

    a_log = jnp.log(jnp.broadcast_to(
        jnp.arange(1, D_STATE + 1, dtype=jnp.float32), (D_INNER, D_STATE)))

    return {
        "norm_w": jnp.ones((1, D_MODEL), jnp.float32),
        "w_in": linear_w(ks[0], 2 * D_INNER, D_MODEL),
        "conv_w": jax.random.uniform(ks[1], (D_INNER, D_CONV), jnp.float32,
                                     -conv_bound, conv_bound),
        "conv_b": jax.random.uniform(ks[2], (1, D_INNER), jnp.float32,
                                     -conv_bound, conv_bound),
        "w_x": linear_w(ks[3], DT_RANK + 2 * D_STATE, D_INNER),
        "w_dt": jax.random.uniform(ks[4], (D_INNER, DT_RANK), jnp.float32,
                                   -dt_init_std, dt_init_std),
        "dt_b": inv_dt.reshape(1, D_INNER),
        "a_log": a_log,
        "d": jnp.ones((1, D_INNER), jnp.float32),
        "w_out": linear_w(ks[6], D_MODEL, D_INNER),
    }


# ---------------- pure-JAX reference (mirrors the PyTorch forward) ----------------
def ref_residual_block(x, p):
    mm = functools.partial(jnp.matmul, precision=lax.Precision.HIGHEST)
    B, L, _ = x.shape
    ms = jnp.mean(x * x, axis=-1, keepdims=True)
    xn = x * lax.rsqrt(ms + RMS_EPS) * p["norm_w"][0]
    xz = mm(xn, p["w_in"].T)
    x1, z = xz[..., :D_INNER], xz[..., D_INNER:]
    xp = jnp.pad(x1, ((0, 0), (D_CONV - 1, 0), (0, 0)))
    conv = p["conv_b"][0]
    for k in range(D_CONV):
        conv = conv + xp[:, k:k + L, :] * p["conv_w"][:, k]
    x2 = jax.nn.silu(conv)
    dbc = mm(x2, p["w_x"].T)
    delta_r = dbc[..., :DT_RANK]
    Bv = dbc[..., DT_RANK:DT_RANK + D_STATE]
    Cv = dbc[..., DT_RANK + D_STATE:]
    delta = jax.nn.softplus(mm(delta_r, p["w_dt"].T) + p["dt_b"][0])
    A = -jnp.exp(p["a_log"])
    dA = jnp.exp(delta[..., None] * A)
    bx = (delta * x2)[..., None] * Bv[:, :, None, :]

    def scan_fn(h, inp):
        da_t, bx_t = inp
        h = da_t * h + bx_t
        return h, h

    h0 = jnp.zeros((B, D_INNER, D_STATE), jnp.float32)
    _, hs = lax.scan(scan_fn, h0,
                     (jnp.swapaxes(dA, 0, 1), jnp.swapaxes(bx, 0, 1)))
    hs = jnp.swapaxes(hs, 0, 1)
    y = jnp.sum(hs * Cv[:, :, None, :], axis=-1) + p["d"][0] * x2
    out = mm(y * jax.nn.silu(z), p["w_out"].T)
    return out + x


if __name__ == "__main__":
    key = jax.random.PRNGKey(0)
    k_x, k_p = jax.random.split(key)
    x = jax.random.normal(k_x, (BATCH, SEQ, D_MODEL), jnp.float32)
    layer_keys = jax.random.split(k_p, N_LAYERS)
    params = [init_layer_params(k) for k in layer_keys]

    # single-TC parts (v5e/v6e): fold batch into the matmul M dimension;
    # multi-TC parts (v4/v5p/v7x): one batch row per grid step, parallel cores.
    fold = not _has_multiple_tensorcores()

    out = mamba_forward(x, params, fold_batch=fold)
    out = jax.block_until_ready(out)

    ref = x
    for p in params:
        ref = ref_residual_block(ref, p)
    ref = jax.block_until_ready(ref)

    assert out.shape == (BATCH, SEQ, D_MODEL)
    err = float(jnp.max(jnp.abs(out - ref)))
    assert err < 2e-3, f"max abs err {err}"
    print("KERNEL_OK")
</pallas_src>

<mosaic_0001>
module attributes {stable_mosaic.version = 11 : i64} {
  func.func @mamba_fused_kernel(%arg0: i32, %arg1: memref<1x16x32xf32, #tpu.memory_space<vmem>>, %arg2: memref<64x1024xf32, #tpu.memory_space<vmem>>, %arg3: memref<3x1x32xf32, #tpu.memory_space<vmem>>, %arg4: memref<3x64x32xf32, #tpu.memory_space<vmem>>, %arg5: memref<3x64x32xf32, #tpu.memory_space<vmem>>, %arg6: memref<3x4x64xf32, #tpu.memory_space<vmem>>, %arg7: memref<3x1x64xf32, #tpu.memory_space<vmem>>, %arg8: memref<3x2x64xf32, #tpu.memory_space<vmem>>, %arg9: memref<3x2x64xf32, #tpu.memory_space<vmem>>, %arg10: memref<3x1x64xf32, #tpu.memory_space<vmem>>, %arg11: memref<3x64x1024xf32, #tpu.memory_space<vmem>>, %arg12: memref<3x64x1024xf32, #tpu.memory_space<vmem>>, %arg13: memref<3x1x1024xf32, #tpu.memory_space<vmem>>, %arg14: memref<3x1x64xf32, #tpu.memory_space<vmem>>, %arg15: memref<3x32x64xf32, #tpu.memory_space<vmem>>, %arg16: memref<1x16x32xf32, #tpu.memory_space<vmem>>, %arg17: memref<16x1024xf32, #tpu.memory_space<vmem>>, %arg18: memref<16x1024xf32, #tpu.memory_space<vmem>>) attributes {dimension_semantics = [#tpu.dimension_semantics<arbitrary>], iteration_bounds = array<i64: 1>, scalar_prefetch = 0 : i64, scratch_operands = 2 : i64, tpu.core_type = #tpu.core_type<tc>, window_params = [{transform_indices = @transform_0, window_bounds = array<i64: 1, 16, 32>}, {pipeline_mode = #tpu.pipeline_mode<synchronous>, transform_indices = @transform_1, window_bounds = array<i64: 64, 1024>}, {pipeline_mode = #tpu.pipeline_mode<synchronous>, transform_indices = @transform_2, window_bounds = array<i64: 3, 1, 32>}, {pipeline_mode = #tpu.pipeline_mode<synchronous>, transform_indices = @transform_3, window_bounds = array<i64: 3, 64, 32>}, {pipeline_mode = #tpu.pipeline_mode<synchronous>, transform_indices = @transform_4, window_bounds = array<i64: 3, 64, 32>}, {pipeline_mode = #tpu.pipeline_mode<synchronous>, transform_indices = @transform_5, window_bounds = array<i64: 3, 4, 64>}, {pipeline_mode = #tpu.pipeline_mode<synchronous>, transform_indices = @transform_6, window_bounds = array<i64: 3, 1, 64>}, {pipeline_mode = #tpu.pipeline_mode<synchronous>, transform_indices = @transform_7, window_bounds = array<i64: 3, 2, 64>}, {pipeline_mode = #tpu.pipeline_mode<synchronous>, transform_indices = @transform_8, window_bounds = array<i64: 3, 2, 64>}, {pipeline_mode = #tpu.pipeline_mode<synchronous>, transform_indices = @transform_9, window_bounds = array<i64: 3, 1, 64>}, {pipeline_mode = #tpu.pipeline_mode<synchronous>, transform_indices = @transform_10, window_bounds = array<i64: 3, 64, 1024>}, {pipeline_mode = #tpu.pipeline_mode<synchronous>, transform_indices = @transform_11, window_bounds = array<i64: 3, 64, 1024>}, {pipeline_mode = #tpu.pipeline_mode<synchronous>, transform_indices = @transform_12, window_bounds = array<i64: 3, 1, 1024>}, {pipeline_mode = #tpu.pipeline_mode<synchronous>, transform_indices = @transform_13, window_bounds = array<i64: 3, 1, 64>}, {pipeline_mode = #tpu.pipeline_mode<synchronous>, transform_indices = @transform_14, window_bounds = array<i64: 3, 32, 64>}, {transform_indices = @transform_15, window_bounds = array<i64: 1, 16, 32>}]} {
    %c0 = arith.constant 0 : index
    %c0_0 = arith.constant 0 : index
    %c0_1 = arith.constant 0 : index
    %0 = vector.load %arg1[%c0, %c0_0, %c0_1] : memref<1x16x32xf32, #tpu.memory_space<vmem>>, vector<1x16x32xf32>
    %1 = vector.shape_cast %0 : vector<1x16x32xf32> to vector<16x32xf32>
    %2 = tpu.iota {dimensions = array<i32: 0>} : vector<16x16xi32>
    %3 = tpu.iota {dimensions = array<i32: 1>} : vector<16x16xi32>
    %c2_i32 = arith.constant 2 : i32
    %4 = vector.broadcast %c2_i32 : i32 to vector<16x16xi32>
    %5 = arith.subi %2, %4 : vector<16x16xi32>
    %6 = arith.cmpi eq, %3, %5 : vector<16x16xi32>
    %7 = arith.extui %6 : vector<16x16xi1> to vector<16x16xi32>
    %8 = arith.sitofp %7 : vector<16x16xi32> to vector<16x16xf32>
    %c4_i32 = arith.constant 4 : i32
    %9 = vector.broadcast %c4_i32 : i32 to vector<16x16xi32>
    %10 = arith.subi %2, %9 : vector<16x16xi32>
    %11 = arith.cmpi eq, %3, %10 : vector<16x16xi32>
    %12 = arith.extui %11 : vector<16x16xi1> to vector<16x16xi32>
    %13 = arith.sitofp %12 : vector<16x16xi32> to vector<16x16xf32>
    %c6_i32 = arith.constant 6 : i32
    %14 = vector.broadcast %c6_i32 : i32 to vector<16x16xi32>
    %15 = arith.subi %2, %14 : vector<16x16xi32>
    %16 = arith.cmpi eq, %3, %15 : vector<16x16xi32>
    %17 = arith.extui %16 : vector<16x16xi1> to vector<16x16xi32>
    %18 = arith.sitofp %17 : vector<16x16xi32> to vector<16x16xf32>
    %c0_2 = arith.constant 0 : index
    %c0_3 = arith.constant 0 : index
    %19 = vector.load %arg2[%c0_2, %c0_3] : memref<64x1024xf32, #tpu.memory_space<vmem>>, vector<64x1024xf32>
    %20 = tpu.iota {dimensions = array<i32: 0>} : vector<16x2xi32>
    %21 = tpu.iota {dimensions = array<i32: 1>} : vector<16x2xi32>
    %c0_i32 = arith.constant 0 : i32
    %22 = vector.broadcast %c0_i32 : i32 to vector<16x2xi32>
    %23 = arith.addi %22, %21 : vector<16x2xi32>
    %24 = arith.cmpi eq, %20, %23 : vector<16x2xi32>
    %25 = arith.extui %24 : vector<16x2xi1> to vector<16x2xi32>
    %26 = arith.sitofp %25 : vector<16x2xi32> to vector<16x2xf32>
    %c2_i32_4 = arith.constant 2 : i32
    %27 = vector.broadcast %c2_i32_4 : i32 to vector<16x2xi32>
    %28 = arith.addi %27, %21 : vector<16x2xi32>
    %29 = arith.cmpi eq, %20, %28 : vector<16x2xi32>
    %30 = arith.extui %29 : vector<16x2xi1> to vector<16x2xi32>
    %31 = arith.sitofp %30 : vector<16x2xi32> to vector<16x2xf32>
    %c4_i32_5 = arith.constant 4 : i32
    %32 = vector.broadcast %c4_i32_5 : i32 to vector<16x2xi32>
    %33 = arith.addi %32, %21 : vector<16x2xi32>
    %34 = arith.cmpi eq, %20, %33 : vector<16x2xi32>
    %35 = arith.extui %34 : vector<16x2xi1> to vector<16x2xi32>
    %36 = arith.sitofp %35 : vector<16x2xi32> to vector<16x2xf32>
    %c6_i32_6 = arith.constant 6 : i32
    %37 = vector.broadcast %c6_i32_6 : i32 to vector<16x2xi32>
    %38 = arith.addi %37, %21 : vector<16x2xi32>
    %39 = arith.cmpi eq, %20, %38 : vector<16x2xi32>
    %40 = arith.extui %39 : vector<16x2xi1> to vector<16x2xi32>
    %41 = arith.sitofp %40 : vector<16x2xi32> to vector<16x2xf32>
    %c8_i32 = arith.constant 8 : i32
    %42 = vector.broadcast %c8_i32 : i32 to vector<16x2xi32>
    %43 = arith.addi %42, %21 : vector<16x2xi32>
    %44 = arith.cmpi eq, %20, %43 : vector<16x2xi32>
    %45 = arith.extui %44 : vector<16x2xi1> to vector<16x2xi32>
    %46 = arith.sitofp %45 : vector<16x2xi32> to vector<16x2xf32>
    %c10_i32 = arith.constant 10 : i32
    %47 = vector.broadcast %c10_i32 : i32 to vector<16x2xi32>
    %48 = arith.addi %47, %21 : vector<16x2xi32>
    %49 = arith.cmpi eq, %20, %48 : vector<16x2xi32>
    %50 = arith.extui %49 : vector<16x2xi1> to vector<16x2xi32>
    %51 = arith.sitofp %50 : vector<16x2xi32> to vector<16x2xf32>
    %c12_i32 = arith.constant 12 : i32
    %52 = vector.broadcast %c12_i32 : i32 to vector<16x2xi32>
    %53 = arith.addi %52, %21 : vector<16x2xi32>
    %54 = arith.cmpi eq, %20, %53 : vector<16x2xi32>
    %55 = arith.extui %54 : vector<16x2xi1> to vector<16x2xi32>
    %56 = arith.sitofp %55 : vector<16x2xi32> to vector<16x2xf32>
    %c14_i32 = arith.constant 14 : i32
    %57 = vector.broadcast %c14_i32 : i32 to vector<16x2xi32>
    %58 = arith.addi %57, %21 : vector<16x2xi32>
    %59 = arith.cmpi eq, %20, %58 : vector<16x2xi32>
    %60 = arith.extui %59 : vector<16x2xi1> to vector<16x2xi32>
    %61 = arith.sitofp %60 : vector<16x2xi32> to vector<16x2xf32>
    %62 = arith.mulf %1, %1 : vector<16x32xf32>
    %cst = arith.constant dense<0.000000e+00> : vector<16xf32>
    %63 = vector.multi_reduction <add>, %62, %cst [1] : vector<16x32xf32> to vector<16xf32>
    %64 = vector.shape_cast %63 : vector<16xf32> to vector<16x1xf32>
    %cst_7 = arith.constant 3.200000e+01 : f32
    %65 = vector.broadcast %cst_7 : f32 to vector<16x1xf32>
    %66 = arith.divf %64, %65 : vector<16x1xf32>
    %cst_8 = arith.constant 9.99999974E-6 : f32
    %67 = vector.broadcast %cst_8 : f32 to vector<16x1xf32>
    %68 = arith.addf %66, %67 : vector<16x1xf32>
    %69 = math.rsqrt %68 : vector<16x1xf32>
    %70 = vector.broadcast %69 : vector<16x1xf32> to vector<16x32xf32>
    %71 = arith.mulf %1, %70 : vector<16x32xf32>
    %c0_9 = arith.constant 0 : index
    %c0_10 = arith.constant 0 : index
    %c0_11 = arith.constant 0 : index
    %72 = vector.load %arg3[%c0_9, %c0_10, %c0_11] : memref<3x1x32xf32, #tpu.memory_space<vmem>>, vector<1x1x32xf32>
    %73 = vector.shape_cast %72 : vector<1x1x32xf32> to vector<1x32xf32>
    %74 = vector.broadcast %73 : vector<1x32xf32> to vector<16x32xf32>
    %75 = arith.mulf %71, %74 : vector<16x32xf32>
    %c0_12 = arith.constant 0 : index
    %c0_13 = arith.constant 0 : index
    %c0_14 = arith.constant 0 : index
    %76 = vector.load %arg4[%c0_12, %c0_13, %c0_14] : memref<3x64x32xf32, #tpu.memory_space<vmem>>, vector<1x64x32xf32>
    %77 = vector.shape_cast %76 : vector<1x64x32xf32> to vector<64x32xf32>
    %cst_15 = arith.constant dense<0.000000e+00> : vector<16x64xf32>
    %78 = tpu.matmul %75, %77, %cst_15 {dimension_numbers = #tpu.dot_dimension_numbers<[1], [1], [0], [0], [0, 0, 1, 0], [], []>} : vector<16x32xf32>, vector<64x32xf32>, vector<16x64xf32> -> vector<16x64xf32>
    %c0_16 = arith.constant 0 : index
    %c0_17 = arith.constant 0 : index
    %c0_18 = arith.constant 0 : index
    %79 = vector.load %arg5[%c0_16, %c0_17, %c0_18] : memref<3x64x32xf32, #tpu.memory_space<vmem>>, vector<1x64x32xf32>
    %80 = vector.shape_cast %79 : vector<1x64x32xf32> to vector<64x32xf32>
    %cst_19 = arith.constant dense<0.000000e+00> : vector<16x64xf32>
    %81 = tpu.matmul %75, %80, %cst_19 {dimension_numbers = #tpu.dot_dimension_numbers<[1], [1], [0], [0], [0, 0, 1, 0], [], []>} : vector<16x32xf32>, vector<64x32xf32>, vector<16x64xf32> -> vector<16x64xf32>
    %c0_20 = arith.constant 0 : index
    %c0_21 = arith.constant 0 : index
    %c0_22 = arith.constant 0 : index
    %82 = vector.load %arg6[%c0_20, %c0_21, %c0_22] : memref<3x4x64xf32, #tpu.memory_space<vmem>>, vector<1x4x64xf32>
    %83 = vector.shape_cast %82 : vector<1x4x64xf32> to vector<4x64xf32>
    %c0_23 = arith.constant 0 : index
    %c0_24 = arith.constant 0 : index
    %c0_25 = arith.constant 0 : index
    %84 = vector.load %arg7[%c0_23, %c0_24, %c0_25] : memref<3x1x64xf32, #tpu.memory_space<vmem>>, vector<1x1x64xf32>
    %85 = vector.shape_cast %84 : vector<1x1x64xf32> to vector<1x64xf32>
    %86 = vector.extract_strided_slice %83 {offsets = [3, 0], sizes = [1, 64], strides = [1, 1]} : vector<4x64xf32> to vector<1x64xf32>
    %87 = vector.broadcast %86 : vector<1x64xf32> to vector<16x64xf32>
    %88 = arith.mulf %78, %87 : vector<16x64xf32>
    %89 = vector.broadcast %85 : vector<1x64xf32> to vector<16x64xf32>
    %90 = arith.addf %89, %88 : vector<16x64xf32>
    %cst_26 = arith.constant dense<0.000000e+00> : vector<16x64xf32>
    %91 = tpu.matmul %8, %78, %cst_26 {dimension_numbers = #tpu.dot_dimension_numbers<[1], [0], [0], [1], [0, 0, 1, 1], [], []>} : vector<16x16xf32>, vector<16x64xf32>, vector<16x64xf32> -> vector<16x64xf32>
    %92 = vector.extract_strided_slice %83 {offsets = [2, 0], sizes = [1, 64], strides = [1, 1]} : vector<4x64xf32> to vector<1x64xf32>
    %93 = vector.broadcast %92 : vector<1x64xf32> to vector<16x64xf32>
    %94 = arith.mulf %91, %93 : vector<16x64xf32>
    %95 = arith.addf %90, %94 : vector<16x64xf32>
    %cst_27 = arith.constant dense<0.000000e+00> : vector<16x64xf32>
    %96 = tpu.matmul %13, %78, %cst_27 {dimension_numbers = #tpu.dot_dimension_numbers<[1], [0], [0], [1], [0, 0, 1, 1], [], []>} : vector<16x16xf32>, vector<16x64xf32>, vector<16x64xf32> -> vector<16x64xf32>
    %97 = vector.extract_strided_slice %83 {offsets = [1, 0], sizes = [1, 64], strides = [1, 1]} : vector<4x64xf32> to vector<1x64xf32>
    %98 = vector.broadcast %97 : vector<1x64xf32> to vector<16x64xf32>
    %99 = arith.mulf %96, %98 : vector<16x64xf32>
    %100 = arith.addf %95, %99 : vector<16x64xf32>
    %cst_28 = arith.constant dense<0.000000e+00> : vector<16x64xf32>
    %101 = tpu.matmul %18, %78, %cst_28 {dimension_numbers = #tpu.dot_dimension_numbers<[1], [0], [0], [1], [0, 0, 1, 1], [], []>} : vector<16x16xf32>, vector<16x64xf32>, vector<16x64xf32> -> vector<16x64xf32>
    %102 = vector.extract_strided_slice %83 {offsets = [0, 0], sizes = [1, 64], strides = [1, 1]} : vector<4x64xf32> to vector<1x64xf32>
    %103 = vector.broadcast %102 : vector<1x64xf32> to vector<16x64xf32>
    %104 = arith.mulf %101, %103 : vector<16x64xf32>
    %105 = arith.addf %100, %104 : vector<16x64xf32>
    %cst_29 = arith.constant 0.000000e+00 : f32
    %106 = vector.broadcast %cst_29 : f32 to vector<16x64xf32>
    %107 = arith.subf %106, %105 : vector<16x64xf32>
    %108 = math.exp %107 : vector<16x64xf32>
    %cst_30 = arith.constant 1.000000e+00 : f32
    %109 = vector.broadcast %cst_30 : f32 to vector<16x64xf32>
    %110 = arith.addf %109, %108 : vector<16x64xf32>
    %cst_31 = arith.constant 1.000000e+00 : f32
    %111 = vector.broadcast %cst_31 : f32 to vector<16x64xf32>
    %112 = arith.divf %111, %110 : vector<16x64xf32>
    %113 = arith.mulf %105, %112 : vector<16x64xf32>
    %c0_32 = arith.constant 0 : index
    %c0_33 = arith.constant 0 : index
    %c0_34 = arith.constant 0 : index
    %114 = vector.load %arg8[%c0_32, %c0_33, %c0_34] : memref<3x2x64xf32, #tpu.memory_space<vmem>>, vector<1x2x64xf32>
    %115 = vector.shape_cast %114 : vector<1x2x64xf32> to vector<2x64xf32>
    %cst_35 = arith.constant dense<0.000000e+00> : vector<16x2xf32>
    %116 = tpu.matmul %113, %115, %cst_35 {dimension_numbers = #tpu.dot_dimension_numbers<[1], [1], [0], [0], [0, 0, 1, 0], [], []>} : vector<16x64xf32>, vector<2x64xf32>, vector<16x2xf32> -> vector<16x2xf32>
    %c0_36 = arith.constant 0 : index
    %c0_37 = arith.constant 0 : index
    %c0_38 = arith.constant 0 : index
    %117 = vector.load %arg9[%c0_36, %c0_37, %c0_38] : memref<3x2x64xf32, #tpu.memory_space<vmem>>, vector<1x2x64xf32>
    %118 = vector.shape_cast %117 : vector<1x2x64xf32> to vector<2x64xf32>
    %c0_39 = arith.constant 0 : index
    %c0_40 = arith.constant 0 : index
    %c0_41 = arith.constant 0 : index
    %119 = vector.load %arg10[%c0_39, %c0_40, %c0_41] : memref<3x1x64xf32, #tpu.memory_space<vmem>>, vector<1x1x64xf32>
    %120 = vector.shape_cast %119 : vector<1x1x64xf32> to vector<1x64xf32>
    %121 = vector.extract_strided_slice %116 {offsets = [0, 0], sizes = [16, 1], strides = [1, 1]} : vector<16x2xf32> to vector<16x1xf32>
    %122 = vector.extract_strided_slice %118 {offsets = [0, 0], sizes = [1, 64], strides = [1, 1]} : vector<2x64xf32> to vector<1x64xf32>
    %123 = vector.broadcast %121 : vector<16x1xf32> to vector<16x64xf32>
    %124 = vector.broadcast %122 : vector<1x64xf32> to vector<16x64xf32>
    %125 = arith.mulf %123, %124 : vector<16x64xf32>
    %126 = vector.broadcast %120 : vector<1x64xf32> to vector<16x64xf32>
    %127 = arith.addf %126, %125 : vector<16x64xf32>
    %128 = vector.extract_strided_slice %116 {offsets = [0, 1], sizes = [16, 1], strides = [1, 1]} : vector<16x2xf32> to vector<16x1xf32>
    %129 = vector.extract_strided_slice %118 {offsets = [1, 0], sizes = [1, 64], strides = [1, 1]} : vector<2x64xf32> to vector<1x64xf32>
    %130 = vector.broadcast %128 : vector<16x1xf32> to vector<16x64xf32>
    %131 = vector.broadcast %129 : vector<1x64xf32> to vector<16x64xf32>
    %132 = arith.mulf %130, %131 : vector<16x64xf32>
    %133 = arith.addf %127, %132 : vector<16x64xf32>
    %cst_42 = arith.constant 0.000000e+00 : f32
    %134 = vector.broadcast %cst_42 : f32 to vector<16x64xf32>
    %135 = arith.maximumf %133, %134 : vector<16x64xf32>
    %136 = math.absf %133 : vector<16x64xf32>
    %cst_43 = arith.constant 0.000000e+00 : f32
    %137 = vector.broadcast %cst_43 : f32 to vector<16x64xf32>
    %138 = arith.subf %137, %136 : vector<16x64xf32>
    %139 = math.exp %138 : vector<16x64xf32>
    %140 = math.log1p %139 : vector<16x64xf32>
    %141 = arith.addf %135, %140 : vector<16x64xf32>
    %cst_44 = arith.constant dense<0.000000e+00> : vector<16x1024xf32>
    %142 = tpu.matmul %141, %19, %cst_44 {dimension_numbers = #tpu.dot_dimension_numbers<[1], [0], [0], [1], [0, 0, 1, 1], [], []>} : vector<16x64xf32>, vector<64x1024xf32>, vector<16x1024xf32> -> vector<16x1024xf32>
    %c0_45 = arith.constant 0 : index
    %c0_46 = arith.constant 0 : index
    %c0_47 = arith.constant 0 : index
    %143 = vector.load %arg13[%c0_45, %c0_46, %c0_47] : memref<3x1x1024xf32, #tpu.memory_space<vmem>>, vector<1x1x1024xf32>
    %144 = vector.shape_cast %143 : vector<1x1x1024xf32> to vector<1x1024xf32>
    %145 = vector.broadcast %144 : vector<1x1024xf32> to vector<16x1024xf32>
    %146 = arith.mulf %142, %145 : vector<16x1024xf32>
    %147 = math.exp %146 : vector<16x1024xf32>
    %148 = arith.mulf %141, %113 : vector<16x64xf32>
    %cst_48 = arith.constant dense<0.000000e+00> : vector<16x1024xf32>
    %149 = tpu.matmul %148, %19, %cst_48 {dimension_numbers = #tpu.dot_dimension_numbers<[1], [0], [0], [1], [0, 0, 1, 1], [], []>} : vector<16x64xf32>, vector<64x1024xf32>, vector<16x1024xf32> -> vector<16x1024xf32>
    %c0_49 = arith.constant 0 : index
    %c0_50 = arith.constant 0 : index
    %c0_51 = arith.constant 0 : index
    %150 = vector.load %arg11[%c0_49, %c0_50, %c0_51] : memref<3x64x1024xf32, #tpu.memory_space<vmem>>, vector<1x64x1024xf32>
    %151 = vector.shape_cast %150 : vector<1x64x1024xf32> to vector<64x1024xf32>
    %cst_52 = arith.constant dense<0.000000e+00> : vector<16x1024xf32>
    %152 = tpu.matmul %113, %151, %cst_52 {dimension_numbers = #tpu.dot_dimension_numbers<[1], [0], [0], [1], [0, 0, 1, 1], [], []>} : vector<16x64xf32>, vector<64x1024xf32>, vector<16x1024xf32> -> vector<16x1024xf32>
    %153 = arith.mulf %149, %152 : vector<16x1024xf32>
    %c0_53 = arith.constant 0 : index
    %c0_54 = arith.constant 0 : index
    %c0_55 = arith.constant 0 : index
    %154 = vector.load %arg12[%c0_53, %c0_54, %c0_55] : memref<3x64x1024xf32, #tpu.memory_space<vmem>>, vector<1x64x1024xf32>
    %155 = vector.shape_cast %154 : vector<1x64x1024xf32> to vector<64x1024xf32>
    %cst_56 = arith.constant dense<0.000000e+00> : vector<16x1024xf32>
    %156 = tpu.matmul %113, %155, %cst_56 {dimension_numbers = #tpu.dot_dimension_numbers<[1], [0], [0], [1], [0, 0, 1, 1], [], []>} : vector<16x64xf32>, vector<64x1024xf32>, vector<16x1024xf32> -> vector<16x1024xf32>
    %c0_57 = arith.constant 0 : index
    %c0_58 = arith.constant 0 : index
    %157 = vector.load %arg17[%c0_57, %c0_58] : memref<16x1024xf32, #tpu.memory_space<vmem>>, vector<16x1024xf32>
    tpu.vector_store %arg17[%c0_57, %c0_58], %153 {strides = array<i32>} : memref<16x1024xf32, #tpu.memory_space<vmem>>, vector<16x1024xf32>,
    %c0_59 = arith.constant 0 : index
    %c0_60 = arith.constant 0 : index
    %158 = vector.load %arg18[%c0_59, %c0_60] : memref<16x1024xf32, #tpu.memory_space<vmem>>, vector<16x1024xf32>
    tpu.vector_store %arg18[%c0_59, %c0_60], %156 {strides = array<i32>} : memref<16x1024xf32, #tpu.memory_space<vmem>>, vector<16x1024xf32>,
    %cst_61 = arith.constant 0.000000e+00 : f32
    %159 = vector.broadcast %cst_61 : f32 to vector<2x1024xf32>
    %cst_62 = arith.constant 0.000000e+00 : f32
    %160 = vector.broadcast %cst_62 : f32 to vector<16x1024xf32>
    %161 = vector.extract_strided_slice %147 {offsets = [0, 0], sizes = [2, 1024], strides = [1, 1]} : vector<16x1024xf32> to vector<2x1024xf32>
    %162 = arith.mulf %161, %159 : vector<2x1024xf32>
    %c0_63 = arith.constant 0 : index
    %c0_64 = arith.constant 0 : index
    %163 = vector.load %arg17[%c0_63, %c0_64] : memref<16x1024xf32, #tpu.memory_space<vmem>>, vector<2x1024xf32>
    %164 = arith.addf %162, %163 : vector<2x1024xf32>
    %c0_65 = arith.constant 0 : index
    %c0_66 = arith.constant 0 : index
    %165 = vector.load %arg18[%c0_65, %c0_66] : memref<16x1024xf32, #tpu.memory_space<vmem>>, vector<2x1024xf32>
    %166 = arith.mulf %164, %165 : vector<2x1024xf32>
    %cst_67 = arith.constant dense<0.000000e+00> : vector<16x1024xf32>
    %167 = tpu.matmul %26, %166, %cst_67 {dimension_numbers = #tpu.dot_dimension_numbers<[1], [0], [0], [1], [0, 0, 1, 1], [], []>} : vector<16x2xf32>, vector<2x1024xf32>, vector<16x1024xf32> -> vector<16x1024xf32>
    %168 = arith.addf %160, %167 : vector<16x1024xf32>
    %169 = vector.extract_strided_slice %147 {offsets = [2, 0], sizes = [2, 1024], strides = [1, 1]} : vector<16x1024xf32> to vector<2x1024xf32>
    %170 = arith.mulf %169, %164 : vector<2x1024xf32>
    %c2 = arith.constant 2 : index
    %c0_68 = arith.constant 0 : index
    %171 = vector.load %arg17[%c2, %c0_68] : memref<16x1024xf32, #tpu.memory_space<vmem>>, vector<2x1024xf32>
    %172 = arith.addf %170, %171 : vector<2x1024xf32>
    %c2_69 = arith.constant 2 : index
    %c0_70 = arith.constant 0 : index
    %173 = vector.load %arg18[%c2_69, %c0_70] : memref<16x1024xf32, #tpu.memory_space<vmem>>, vector<2x1024xf32>
    %174 = arith.mulf %172, %173 : vector<2x1024xf32>
    %cst_71 = arith.constant dense<0.000000e+00> : vector<16x1024xf32>
    %175 = tpu.matmul %31, %174, %cst_71 {dimension_numbers = #tpu.dot_dimension_numbers<[1], [0], [0], [1], [0, 0, 1, 1], [], []>} : vector<16x2xf32>, vector<2x1024xf32>, vector<16x1024xf32> -> vector<16x1024xf32>
    %176 = arith.addf %168, %175 : vector<16x1024xf32>
    %177 = vector.extract_strided_slice %147 {offsets = [4, 0], sizes = [2, 1024], strides = [1, 1]} : vector<16x1024xf32> to vector<2x1024xf32>
    %178 = arith.mulf %177, %172 : vector<2x1024xf32>
    %c4 = arith.constant 4 : index
    %c0_72 = arith.constant 0 : index
    %179 = vector.load %arg17[%c4, %c0_72] : memref<16x1024xf32, #tpu.memory_space<vmem>>, vector<2x1024xf32>
    %180 = arith.addf %178, %179 : vector<2x1024xf32>
    %c4_73 = arith.constant 4 : index
    %c0_74 = arith.constant 0 : index
    %181 = vector.load %arg18[%c4_73, %c0_74] : memref<16x1024xf32, #tpu.memory_space<vmem>>, vector<2x1024xf32>
    %182 = arith.mulf %180, %181 : vector<2x1024xf32>
    %cst_75 = arith.constant dense<0.000000e+00> : vector<16x1024xf32>
    %183 = tpu.matmul %36, %182, %cst_75 {dimension_numbers = #tpu.dot_dimension_numbers<[1], [0], [0], [1], [0, 0, 1, 1], [], []>} : vector<16x2xf32>, vector<2x1024xf32>, vector<16x1024xf32> -> vector<16x1024xf32>
    %184 = arith.addf %176, %183 : vector<16x1024xf32>
    %185 = vector.extract_strided_slice %147 {offsets = [6, 0], sizes = [2, 1024], strides = [1, 1]} : vector<16x1024xf32> to vector<2x1024xf32>
    %186 = arith.mulf %185, %180 : vector<2x1024xf32>
    %c6 = arith.constant 6 : index
    %c0_76 = arith.constant 0 : index
    %187 = vector.load %arg17[%c6, %c0_76] : memref<16x1024xf32, #tpu.memory_space<vmem>>, vector<2x1024xf32>
    %188 = arith.addf %186, %187 : vector<2x1024xf32>
    %c6_77 = arith.constant 6 : index
    %c0_78 = arith.constant 0 : index
    %189 = vector.load %arg18[%c6_77, %c0_78] : memref<16x1024xf32, #tpu.memory_space<vmem>>, vector<2x1024xf32>
    %190 = arith.mulf %188, %189 : vector<2x1024xf32>
    %cst_79 = arith.constant dense<0.000000e+00> : vector<16x1024xf32>
    %191 = tpu.matmul %41, %190, %cst_79 {dimension_numbers = #tpu.dot_dimension_numbers<[1], [0], [0], [1], [0, 0, 1, 1], [], []>} : vector<16x2xf32>, vector<2x1024xf32>, vector<16x1024xf32> -> vector<16x1024xf32>
    %192 = arith.addf %184, %191 : vector<16x1024xf32>
    %193 = vector.extract_strided_slice %147 {offsets = [8, 0], sizes = [2, 1024], strides = [1, 1]} : vector<16x1024xf32> to vector<2x1024xf32>
    %194 = arith.mulf %193, %188 : vector<2x1024xf32>
    %c8 = arith.constant 8 : index
    %c0_80 = arith.constant 0 : index
    %195 = vector.load %arg17[%c8, %c0_80] : memref<16x1024xf32, #tpu.memory_space<vmem>>, vector<2x1024xf32>
    %196 = arith.addf %194, %195 : vector<2x1024xf32>
    %c8_81 = arith.constant 8 : index
    %c0_82 = arith.constant 0 : index
    %197 = vector.load %arg18[%c8_81, %c0_82] : memref<16x1024xf32, #tpu.memory_space<vmem>>, vector<2x1024xf32>
    %198 = arith.mulf %196, %197 : vector<2x1024xf32>
    %cst_83 = arith.constant dense<0.000000e+00> : vector<16x1024xf32>
    %199 = tpu.matmul %46, %198, %cst_83 {dimension_numbers = #tpu.dot_dimension_numbers<[1], [0], [0], [1], [0, 0, 1, 1], [], []>} : vector<16x2xf32>, vector<2x1024xf32>, vector<16x1024xf32> -> vector<16x1024xf32>
    %200 = arith.addf %192, %199 : vector<16x1024xf32>
    %201 = vector.extract_strided_slice %147 {offsets = [10, 0], sizes = [2, 1024], strides = [1, 1]} : vector<16x1024xf32> to vector<2x1024xf32>
    %202 = arith.mulf %201, %196 : vector<2x1024xf32>
    %c10 = arith.constant 10 : index
    %c0_84 = arith.constant 0 : index
    %203 = vector.load %arg17[%c10, %c0_84] : memref<16x1024xf32, #tpu.memory_space<vmem>>, vector<2x1024xf32>
    %204 = arith.addf %202, %203 : vector<2x1024xf32>
    %c10_85 = arith.constant 10 : index
    %c0_86 = arith.constant 0 : index
    %205 = vector.load %arg18[%c10_85, %c0_86] : memref<16x1024xf32, #tpu.memory_space<vmem>>, vector<2x1024xf32>
    %206 = arith.mulf %204, %205 : vector<2x1024xf32>
    %cst_87 = arith.constant dense<0.000000e+00> : vector<16x1024xf32>
    %207 = tpu.matmul %51, %206, %cst_87 {dimension_numbers = #tpu.dot_dimension_numbers<[1], [0], [0], [1], [0, 0, 1, 1], [], []>} : vector<16x2xf32>, vector<2x1024xf32>, vector<16x1024xf32> -> vector<16x1024xf32>
    %208 = arith.addf %200, %207 : vector<16x1024xf32>
    %209 = vector.extract_strided_slice %147 {offsets = [12, 0], sizes = [2, 1024], strides = [1, 1]} : vector<16x1024xf32> to vector<2x1024xf32>
    %210 = arith.mulf %209, %204 : vector<2x1024xf32>
    %c12 = arith.constant 12 : index
    %c0_88 = arith.constant 0 : index
    %211 = vector.load %arg17[%c12, %c0_88] : memref<16x1024xf32, #tpu.memory_space<vmem>>, vector<2x1024xf32>
    %212 = arith.addf %210, %211 : vector<2x1024xf32>
    %c12_89 = arith.constant 12 : index
    %c0_90 = arith.constant 0 : index
    %213 = vector.load %arg18[%c12_89, %c0_90] : memref<16x1024xf32, #tpu.memory_space<vmem>>, vector<2x1024xf32>
    %214 = arith.mulf %212, %213 : vector<2x1024xf32>
    %cst_91 = arith.constant dense<0.000000e+00> : vector<16x1024xf32>
    %215 = tpu.matmul %56, %214, %cst_91 {dimension_numbers = #tpu.dot_dimension_numbers<[1], [0], [0], [1], [0, 0, 1, 1], [], []>} : vector<16x2xf32>, vector<2x1024xf32>, vector<16x1024xf32> -> vector<16x1024xf32>
    %216 = arith.addf %208, %215 : vector<16x1024xf32>
    %217 = vector.extract_strided_slice %147 {offsets = [14, 0], sizes = [2, 1024], strides = [1, 1]} : vector<16x1024xf32> to vector<2x1024xf32>
    %218 = arith.mulf %217, %212 : vector<2x1024xf32>
    %c14 = arith.constant 14 : index
    %c0_92 = arith.constant 0 : index
    %219 = vector.load %arg17[%c14, %c0_92] : memref<16x1024xf32, #tpu.memory_space<vmem>>, vector<2x1024xf32>
    %220 = arith.addf %218, %219 : vector<2x1024xf32>
    %c14_93 = arith.constant 14 : index
    %c0_94 = arith.constant 0 : index
    %221 = vector.load %arg18[%c14_93, %c0_94] : memref<16x1024xf32, #tpu.memory_space<vmem>>, vector<2x1024xf32>
    %222 = arith.mulf %220, %221 : vector<2x1024xf32>
    %cst_95 = arith.constant dense<0.000000e+00> : vector<16x1024xf32>
    %223 = tpu.matmul %61, %222, %cst_95 {dimension_numbers = #tpu.dot_dimension_numbers<[1], [0], [0], [1], [0, 0, 1, 1], [], []>} : vector<16x2xf32>, vector<2x1024xf32>, vector<16x1024xf32> -> vector<16x1024xf32>
    %224 = arith.addf %216, %223 : vector<16x1024xf32>
    %cst_96 = arith.constant dense<0.000000e+00> : vector<16x64xf32>
    %225 = tpu.matmul %224, %19, %cst_96 {dimension_numbers = #tpu.dot_dimension_numbers<[1], [1], [0], [0], [0, 0, 1, 0], [], []>} : vector<16x1024xf32>, vector<64x1024xf32>, vector<16x64xf32> -> vector<16x64xf32>
    %c0_97 = arith.constant 0 : index
    %c0_98 = arith.constant 0 : index
    %c0_99 = arith.constant 0 : index
    %226 = vector.load %arg14[%c0_97, %c0_98, %c0_99] : memref<3x1x64xf32, #tpu.memory_space<vmem>>, vector<1x1x64xf32>
    %227 = vector.shape_cast %226 : vector<1x1x64xf32> to vector<1x64xf32>
    %228 = vector.broadcast %227 : vector<1x64xf32> to vector<16x64xf32>
    %229 = arith.mulf %228, %113 : vector<16x64xf32>
    %230 = arith.addf %225, %229 : vector<16x64xf32>
    %cst_100 = arith.constant 0.000000e+00 : f32
    %231 = vector.broadcast %cst_100 : f32 to vector<16x64xf32>
    %232 = arith.subf %231, %81 : vector<16x64xf32>
    %233 = math.exp %232 : vector<16x64xf32>
    %cst_101 = arith.constant 1.000000e+00 : f32
    %234 = vector.broadcast %cst_101 : f32 to vector<16x64xf32>
    %235 = arith.addf %234, %233 : vector<16x64xf32>
    %cst_102 = arith.constant 1.000000e+00 : f32
    %236 = vector.broadcast %cst_102 : f32 to vector<16x64xf32>
    %237 = arith.divf %236, %235 : vector<16x64xf32>
    %238 = arith.mulf %81, %237 : vector<16x64xf32>
    %239 = arith.mulf %230, %238 : vector<16x64xf32>
    %c0_103 = arith.constant 0 : index
    %c0_104 = arith.constant 0 : index
    %c0_105 = arith.constant 0 : index
    %240 = vector.load %arg15[%c0_103, %c0_104, %c0_105] : memref<3x32x64xf32, #tpu.memory_space<vmem>>, vector<1x32x64xf32>
    %241 = vector.shape_cast %240 : vector<1x32x64xf32> to vector<32x64xf32>
    %cst_106 = arith.constant dense<0.000000e+00> : vector<16x32xf32>
    %242 = tpu.matmul %239, %241, %cst_106 {dimension_numbers = #tpu.dot_dimension_numbers<[1], [1], [0], [0], [0, 0, 1, 0], [], []>} : vector<16x64xf32>, vector<32x64xf32>, vector<16x32xf32> -> vector<16x32xf32>
    %243 = arith.addf %242, %1 : vector<16x32xf32>
    %244 = arith.mulf %243, %243 : vector<16x32xf32>
    %cst_107 = arith.constant dense<0.000000e+00> : vector<16xf32>
    %245 = vector.multi_reduction <add>, %244, %cst_107 [1] : vector<16x32xf32> to vector<16xf32>
    %246 = vector.shape_cast %245 : vector<16xf32> to vector<16x1xf32>
    %cst_108 = arith.constant 3.200000e+01 : f32
    %247 = vector.broadcast %cst_108 : f32 to vector<16x1xf32>
    %248 = arith.divf %246, %247 : vector<16x1xf32>
    %cst_109 = arith.constant 9.99999974E-6 : f32
    %249 = vector.broadcast %cst_109 : f32 to vector<16x1xf32>
    %250 = arith.addf %248, %249 : vector<16x1xf32>
    %251 = math.rsqrt %250 : vector<16x1xf32>
    %252 = vector.broadcast %251 : vector<16x1xf32> to vector<16x32xf32>
    %253 = arith.mulf %243, %252 : vector<16x32xf32>
    %c1 = arith.constant 1 : index
    %c0_110 = arith.constant 0 : index
    %c0_111 = arith.constant 0 : index
    %254 = vector.load %arg3[%c1, %c0_110, %c0_111] : memref<3x1x32xf32, #tpu.memory_space<vmem>>, vector<1x1x32xf32>
    %255 = vector.shape_cast %254 : vector<1x1x32xf32> to vector<1x32xf32>
    %256 = vector.broadcast %255 : vector<1x32xf32> to vector<16x32xf32>
    %257 = arith.mulf %253, %256 : vector<16x32xf32>
    %c1_112 = arith.constant 1 : index
    %c0_113 = arith.constant 0 : index
    %c0_114 = arith.constant 0 : index
    %258 = vector.load %arg4[%c1_112, %c0_113, %c0_114] : memref<3x64x32xf32, #tpu.memory_space<vmem>>, vector<1x64x32xf32>
    %259 = vector.shape_cast %258 : vector<1x64x32xf32> to vector<64x32xf32>
    %cst_115 = arith.constant dense<0.000000e+00> : vector<16x64xf32>
    %260 = tpu.matmul %257, %259, %cst_115 {dimension_numbers = #tpu.dot_dimension_numbers<[1], [1], [0], [0], [0, 0, 1, 0], [], []>} : vector<16x32xf32>, vector<64x32xf32>, vector<16x64xf32> -> vector<16x64xf32>
    %c1_116 = arith.constant 1 : index
    %c0_117 = arith.constant 0 : index
    %c0_118 = arith.constant 0 : index
    %261 = vector.load %arg5[%c1_116, %c0_117, %c0_118] : memref<3x64x32xf32, #tpu.memory_space<vmem>>, vector<1x64x32xf32>
    %262 = vector.shape_cast %261 : vector<1x64x32xf32> to vector<64x32xf32>
    %cst_119 = arith.constant dense<0.000000e+00> : vector<16x64xf32>
    %263 = tpu.matmul %257, %262, %cst_119 {dimension_numbers = #tpu.dot_dimension_numbers<[1], [1], [0], [0], [0, 0, 1, 0], [], []>} : vector<16x32xf32>, vector<64x32xf32>, vector<16x64xf32> -> vector<16x64xf32>
    %c1_120 = arith.constant 1 : index
    %c0_121 = arith.constant 0 : index
    %c0_122 = arith.constant 0 : index
    %264 = vector.load %arg6[%c1_120, %c0_121, %c0_122] : memref<3x4x64xf32, #tpu.memory_space<vmem>>, vector<1x4x64xf32>
    %265 = vector.shape_cast %264 : vector<1x4x64xf32> to vector<4x64xf32>
    %c1_123 = arith.constant 1 : index
    %c0_124 = arith.constant 0 : index
    %c0_125 = arith.constant 0 : index
    %266 = vector.load %arg7[%c1_123, %c0_124, %c0_125] : memref<3x1x64xf32, #tpu.memory_space<vmem>>, vector<1x1x64xf32>
    %267 = vector.shape_cast %266 : vector<1x1x64xf32> to vector<1x64xf32>
    %268 = vector.extract_strided_slice %265 {offsets = [3, 0], sizes = [1, 64], strides = [1, 1]} : vector<4x64xf32> to vector<1x64xf32>
    %269 = vector.broadcast %268 : vector<1x64xf32> to vector<16x64xf32>
    %270 = arith.mulf %260, %269 : vector<16x64xf32>
    %271 = vector.broadcast %267 : vector<1x64xf32> to vector<16x64xf32>
    %272 = arith.addf %271, %270 : vector<16x64xf32>
    %cst_126 = arith.constant dense<0.000000e+00> : vector<16x64xf32>
    %273 = tpu.matmul %8, %260, %cst_126 {dimension_numbers = #tpu.dot_dimension_numbers<[1], [0], [0], [1], [0, 0, 1, 1], [], []>} : vector<16x16xf32>, vector<16x64xf32>, vector<16x64xf32> -> vector<16x64xf32>
    %274 = vector.extract_strided_slice %265 {offsets = [2, 0], sizes = [1, 64], strides = [1, 1]} : vector<4x64xf32> to vector<1x64xf32>
    %275 = vector.broadcast %274 : vector<1x64xf32> to vector<16x64xf32>
    %276 = arith.mulf %273, %275 : vector<16x64xf32>
    %277 = arith.addf %272, %276 : vector<16x64xf32>
    %cst_127 = arith.constant dense<0.000000e+00> : vector<16x64xf32>
    %278 = tpu.matmul %13, %260, %cst_127 {dimension_numbers = #tpu.dot_dimension_numbers<[1], [0], [0], [1], [0, 0, 1, 1], [], []>} : vector<16x16xf32>, vector<16x64xf32>, vector<16x64xf32> -> vector<16x64xf32>
    %279 = vector.extract_strided_slice %265 {offsets = [1, 0], sizes = [1, 64], strides = [1, 1]} : vector<4x64xf32> to vector<1x64xf32>
    %280 = vector.broadcast %279 : vector<1x64xf32> to vector<16x64xf32>
    %281 = arith.mulf %278, %280 : vector<16x64xf32>
    %282 = arith.addf %277, %281 : vector<16x64xf32>
    %cst_128 = arith.constant dense<0.000000e+00> : vector<16x64xf32>
    %283 = tpu.matmul %18, %260, %cst_128 {dimension_numbers = #tpu.dot_dimension_numbers<[1], [0], [0], [1], [0, 0, 1, 1], [], []>} : vector<16x16xf32>, vector<16x64xf32>, vector<16x64xf32> -> vector<16x64xf32>
    %284 = vector.extract_strided_slice %265 {offsets = [0, 0], sizes = [1, 64], strides = [1, 1]} : vector<4x64xf32> to vector<1x64xf32>
    %285 = vector.broadcast %284 : vector<1x64xf32> to vector<16x64xf32>
    %286 = arith.mulf %283, %285 : vector<16x64xf32>
    %287 = arith.addf %282, %286 : vector<16x64xf32>
    %cst_129 = arith.constant 0.000000e+00 : f32
    %288 = vector.broadcast %cst_129 : f32 to vector<16x64xf32>
    %289 = arith.subf %288, %287 : vector<16x64xf32>
    %290 = math.exp %289 : vector<16x64xf32>
    %cst_130 = arith.constant 1.000000e+00 : f32
    %291 = vector.broadcast %cst_130 : f32 to vector<16x64xf32>
    %292 = arith.addf %291, %290 : vector<16x64xf32>
    %cst_131 = arith.constant 1.000000e+00 : f32
    %293 = vector.broadcast %cst_131 : f32 to vector<16x64xf32>
    %294 = arith.divf %293, %292 : vector<16x64xf32>
    %295 = arith.mulf %287, %294 : vector<16x64xf32>
    %c1_132 = arith.constant 1 : index
    %c0_133 = arith.constant 0 : index
    %c0_134 = arith.constant 0 : index
    %296 = vector.load %arg8[%c1_132, %c0_133, %c0_134] : memref<3x2x64xf32, #tpu.memory_space<vmem>>, vector<1x2x64xf32>
    %297 = vector.shape_cast %296 : vector<1x2x64xf32> to vector<2x64xf32>
    %cst_135 = arith.constant dense<0.000000e+00> : vector<16x2xf32>
    %298 = tpu.matmul %295, %297, %cst_135 {dimension_numbers = #tpu.dot_dimension_numbers<[1], [1], [0], [0], [0, 0, 1, 0], [], []>} : vector<16x64xf32>, vector<2x64xf32>, vector<16x2xf32> -> vector<16x2xf32>
    %c1_136 = arith.constant 1 : index
    %c0_137 = arith.constant 0 : index
    %c0_138 = arith.constant 0 : index
    %299 = vector.load %arg9[%c1_136, %c0_137, %c0_138] : memref<3x2x64xf32, #tpu.memory_space<vmem>>, vector<1x2x64xf32>
    %300 = vector.shape_cast %299 : vector<1x2x64xf32> to vector<2x64xf32>
    %c1_139 = arith.constant 1 : index
    %c0_140 = arith.constant 0 : index
    %c0_141 = arith.constant 0 : index
    %301 = vector.load %arg10[%c1_139, %c0_140, %c0_141] : memref<3x1x64xf32, #tpu.memory_space<vmem>>, vector<1x1x64xf32>
    %302 = vector.shape_cast %301 : vector<1x1x64xf32> to vector<1x64xf32>
    %303 = vector.extract_strided_slice %298 {offsets = [0, 0], sizes = [16, 1], strides = [1, 1]} : vector<16x2xf32> to vector<16x1xf32>
    %304 = vector.extract_strided_slice %300 {offsets = [0, 0], sizes = [1, 64], strides = [1, 1]} : vector<2x64xf32> to vector<1x64xf32>
    %305 = vector.broadcast %303 : vector<16x1xf32> to vector<16x64xf32>
    %306 = vector.broadcast %304 : vector<1x64xf32> to vector<16x64xf32>
    %307 = arith.mulf %305, %306 : vector<16x64xf32>
    %308 = vector.broadcast %302 : vector<1x64xf32> to vector<16x64xf32>
    %309 = arith.addf %308, %307 : vector<16x64xf32>
    %310 = vector.extract_strided_slice %298 {offsets = [0, 1], sizes = [16, 1], strides = [1, 1]} : vector<16x2xf32> to vector<16x1xf32>
    %311 = vector.extract_strided_slice %300 {offsets = [1, 0], sizes = [1, 64], strides = [1, 1]} : vector<2x64xf32> to vector<1x64xf32>
    %312 = vector.broadcast %310 : vector<16x1xf32> to vector<16x64xf32>
    %313 = vector.broadcast %311 : vector<1x64xf32> to vector<16x64xf32>
    %314 = arith.mulf %312, %313 : vector<16x64xf32>
    %315 = arith.addf %309, %314 : vector<16x64xf32>
    %cst_142 = arith.constant 0.000000e+00 : f32
    %316 = vector.broadcast %cst_142 : f32 to vector<16x64xf32>
    %317 = arith.maximumf %315, %316 : vector<16x64xf32>
    %318 = math.absf %315 : vector<16x64xf32>
    %cst_143 = arith.constant 0.000000e+00 : f32
    %319 = vector.broadcast %cst_143 : f32 to vector<16x64xf32>
    %320 = arith.subf %319, %318 : vector<16x64xf32>
    %321 = math.exp %320 : vector<16x64xf32>
    %322 = math.log1p %321 : vector<16x64xf32>
    %323 = arith.addf %317, %322 : vector<16x64xf32>
    %cst_144 = arith.constant dense<0.000000e+00> : vector<16x1024xf32>
    %324 = tpu.matmul %323, %19, %cst_144 {dimension_numbers = #tpu.dot_dimension_numbers<[1], [0], [0], [1], [0, 0, 1, 1], [], []>} : vector<16x64xf32>, vector<64x1024xf32>, vector<16x1024xf32> -> vector<16x1024xf32>
    %c1_145 = arith.constant 1 : index
    %c0_146 = arith.constant 0 : index
    %c0_147 = arith.constant 0 : index
    %325 = vector.load %arg13[%c1_145, %c0_146, %c0_147] : memref<3x1x1024xf32, #tpu.memory_space<vmem>>, vector<1x1x1024xf32>
    %326 = vector.shape_cast %325 : vector<1x1x1024xf32> to vector<1x1024xf32>
    %327 = vector.broadcast %326 : vector<1x1024xf32> to vector<16x1024xf32>
    %328 = arith.mulf %324, %327 : vector<16x1024xf32>
    %329 = math.exp %328 : vector<16x1024xf32>
    %330 = arith.mulf %323, %295 : vector<16x64xf32>
    %cst_148 = arith.constant dense<0.000000e+00> : vector<16x1024xf32>
    %331 = tpu.matmul %330, %19, %cst_148 {dimension_numbers = #tpu.dot_dimension_numbers<[1], [0], [0], [1], [0, 0, 1, 1], [], []>} : vector<16x64xf32>, vector<64x1024xf32>, vector<16x1024xf32> -> vector<16x1024xf32>
    %c1_149 = arith.constant 1 : index
    %c0_150 = arith.constant 0 : index
    %c0_151 = arith.constant 0 : index
    %332 = vector.load %arg11[%c1_149, %c0_150, %c0_151] : memref<3x64x1024xf32, #tpu.memory_space<vmem>>, vector<1x64x1024xf32>
    %333 = vector.shape_cast %332 : vector<1x64x1024xf32> to vector<64x1024xf32>
    %cst_152 = arith.constant dense<0.000000e+00> : vector<16x1024xf32>
    %334 = tpu.matmul %295, %333, %cst_152 {dimension_numbers = #tpu.dot_dimension_numbers<[1], [0], [0], [1], [0, 0, 1, 1], [], []>} : vector<16x64xf32>, vector<64x1024xf32>, vector<16x1024xf32> -> vector<16x1024xf32>
    %335 = arith.mulf %331, %334 : vector<16x1024xf32>
    %c1_153 = arith.constant 1 : index
    %c0_154 = arith.constant 0 : index
    %c0_155 = arith.constant 0 : index
    %336 = vector.load %arg12[%c1_153, %c0_154, %c0_155] : memref<3x64x1024xf32, #tpu.memory_space<vmem>>, vector<1x64x1024xf32>
    %337 = vector.shape_cast %336 : vector<1x64x1024xf32> to vector<64x1024xf32>
    %cst_156 = arith.constant dense<0.000000e+00> : vector<16x1024xf32>
    %338 = tpu.matmul %295, %337, %cst_156 {dimension_numbers = #tpu.dot_dimension_numbers<[1], [0], [0], [1], [0, 0, 1, 1], [], []>} : vector<16x64xf32>, vector<64x1024xf32>, vector<16x1024xf32> -> vector<16x1024xf32>
    %c0_157 = arith.constant 0 : index
    %c0_158 = arith.constant 0 : index
    %339 = vector.load %arg17[%c0_157, %c0_158] : memref<16x1024xf32, #tpu.memory_space<vmem>>, vector<16x1024xf32>
    tpu.vector_store %arg17[%c0_157, %c0_158], %335 {strides = array<i32>} : memref<16x1024xf32, #tpu.memory_space<vmem>>, vector<16x1024xf32>,
    %c0_159 = arith.constant 0 : index
    %c0_160 = arith.constant 0 : index
    %340 = vector.load %arg18[%c0_159, %c0_160] : memref<16x1024xf32, #tpu.memory_space<vmem>>, vector<16x1024xf32>
    tpu.vector_store %arg18[%c0_159, %c0_160], %338 {strides = array<i32>} : memref<16x1024xf32, #tpu.memory_space<vmem>>, vector<16x1024xf32>,
    %cst_161 = arith.constant 0.000000e+00 : f32
    %341 = vector.broadcast %cst_161 : f32 to vector<2x1024xf32>
    %cst_162 = arith.constant 0.000000e+00 : f32
    %342 = vector.broadcast %cst_162 : f32 to vector<16x1024xf32>
    %343 = vector.extract_strided_slice %329 {offsets = [0, 0], sizes = [2, 1024], strides = [1, 1]} : vector<16x1024xf32> to vector<2x1024xf32>
    %344 = arith.mulf %343, %341 : vector<2x1024xf32>
    %c0_163 = arith.constant 0 : index
    %c0_164 = arith.constant 0 : index
    %345 = vector.load %arg17[%c0_163, %c0_164] : memref<16x1024xf32, #tpu.memory_space<vmem>>, vector<2x1024xf32>
    %346 = arith.addf %344, %345 : vector<2x1024xf32>
    %c0_165 = arith.constant 0 : index
    %c0_166 = arith.constant 0 : index
    %347 = vector.load %arg18[%c0_165, %c0_166] : memref<16x1024xf32, #tpu.memory_space<vmem>>, vector<2x1024xf32>
    %348 = arith.mulf %346, %347 : vector<2x1024xf32>
    %cst_167 = arith.constant dense<0.000000e+00> : vector<16x1024xf32>
    %349 = tpu.matmul %26, %348, %cst_167 {dimension_numbers = #tpu.dot_dimension_numbers<[1], [0], [0], [1], [0, 0, 1, 1], [], []>} : vector<16x2xf32>, vector<2x1024xf32>, vector<16x1024xf32> -> vector<16x1024xf32>
    %350 = arith.addf %342, %349 : vector<16x1024xf32>
    %351 = vector.extract_strided_slice %329 {offsets = [2, 0], sizes = [2, 1024], strides = [1, 1]} : vector<16x1024xf32> to vector<2x1024xf32>
    %352 = arith.mulf %351, %346 : vector<2x1024xf32>
    %c2_168 = arith.constant 2 : index
    %c0_169 = arith.constant 0 : index
    %353 = vector.load %arg17[%c2_168, %c0_169] : memref<16x1024xf32, #tpu.memory_space<vmem>>, vector<2x1024xf32>
    %354 = arith.addf %352, %353 : vector<2x1024xf32>
    %c2_170 = arith.constant 2 : index
    %c0_171 = arith.constant 0 : index
    %355 = vector.load %arg18[%c2_170, %c0_171] : memref<16x1024xf32, #tpu.memory_space<vmem>>, vector<2x1024xf32>
    %356 = arith.mulf %354, %355 : vector<2x1024xf32>
    %cst_172 = arith.constant dense<0.000000e+00> : vector<16x1024xf32>
    %357 = tpu.matmul %31, %356, %cst_172 {dimension_numbers = #tpu.dot_dimension_numbers<[1], [0], [0], [1], [0, 0, 1, 1], [], []>} : vector<16x2xf32>, vector<2x1024xf32>, vector<16x1024xf32> -> vector<16x1024xf32>
    %358 = arith.addf %350, %357 : vector<16x1024xf32>
    %359 = vector.extract_strided_slice %329 {offsets = [4, 0], sizes = [2, 1024], strides = [1, 1]} : vector<16x1024xf32> to vector<2x1024xf32>
    %360 = arith.mulf %359, %354 : vector<2x1024xf32>
    %c4_173 = arith.constant 4 : index
    %c0_174 = arith.constant 0 : index
    %361 = vector.load %arg17[%c4_173, %c0_174] : memref<16x1024xf32, #tpu.memory_space<vmem>>, vector<2x1024xf32>
    %362 = arith.addf %360, %361 : vector<2x1024xf32>
    %c4_175 = arith.constant 4 : index
    %c0_176 = arith.constant 0 : index
    %363 = vector.load %arg18[%c4_175, %c0_176] : memref<16x1024xf32, #tpu.memory_space<vmem>>, vector<2x1024xf32>
    %364 = arith.mulf %362, %363 : vector<2x1024xf32>
    %cst_177 = arith.constant dense<0.000000e+00> : vector<16x1024xf32>
    %365 = tpu.matmul %36, %364, %cst_177 {dimension_numbers = #tpu.dot_dimension_numbers<[1], [0], [0], [1], [0, 0, 1, 1], [], []>} : vector<16x2xf32>, vector<2x1024xf32>, vector<16x1024xf32> -> vector<16x1024xf32>
    %366 = arith.addf %358, %365 : vector<16x1024xf32>
    %367 = vector.extract_strided_slice %329 {offsets = [6, 0], sizes = [2, 1024], strides = [1, 1]} : vector<16x1024xf32> to vector<2x1024xf32>
    %368 = arith.mulf %367, %362 : vector<2x1024xf32>
    %c6_178 = arith.constant 6 : index
    %c0_179 = arith.constant 0 : index
    %369 = vector.load %arg17[%c6_178, %c0_179] : memref<16x1024xf32, #tpu.memory_space<vmem>>, vector<2x1024xf32>
    %370 = arith.addf %368, %369 : vector<2x1024xf32>
    %c6_180 = arith.constant 6 : index
    %c0_181 = arith.constant 0 : index
    %371 = vector.load %arg18[%c6_180, %c0_181] : memref<16x1024xf32, #tpu.memory_space<vmem>>, vector<2x1024xf32>
    %372 = arith.mulf %370, %371 : vector<2x1024xf32>
    %cst_182 = arith.constant dense<0.000000e+00> : vector<16x1024xf32>
    %373 = tpu.matmul %41, %372, %cst_182 {dimension_numbers = #tpu.dot_dimension_numbers<[1], [0], [0], [1], [0, 0, 1, 1], [], []>} : vector<16x2xf32>, vector<2x1024xf32>, vector<16x1024xf32> -> vector<16x1024xf32>
    %374 = arith.addf %366, %373 : vector<16x1024xf32>
    %375 = vector.extract_strided_slice %329 {offsets = [8, 0], sizes = [2, 1024], strides = [1, 1]} : vector<16x1024xf32> to vector<2x1024xf32>
    %376 = arith.mulf %375, %370 : vector<2x1024xf32>
    %c8_183 = arith.constant 8 : index
    %c0_184 = arith.constant 0 : index
    %377 = vector.load %arg17[%c8_183, %c0_184] : memref<16x1024xf32, #tpu.memory_space<vmem>>, vector<2x1024xf32>
    %378 = arith.addf %376, %377 : vector<2x1024xf32>
    %c8_185 = arith.constant 8 : index
    %c0_186 = arith.constant 0 : index
    %379 = vector.load %arg18[%c8_185, %c0_186] : memref<16x1024xf32, #tpu.memory_space<vmem>>, vector<2x1024xf32>
    %380 = arith.mulf %378, %379 : vector<2x1024xf32>
    %cst_187 = arith.constant dense<0.000000e+00> : vector<16x1024xf32>
    %381 = tpu.matmul %46, %380, %cst_187 {dimension_numbers = #tpu.dot_dimension_numbers<[1], [0], [0], [1], [0, 0, 1, 1], [], []>} : vector<16x2xf32>, vector<2x1024xf32>, vector<16x1024xf32> -> vector<16x1024xf32>
    %382 = arith.addf %374, %381 : vector<16x1024xf32>
    %383 = vector.extract_strided_slice %329 {offsets = [10, 0], sizes = [2, 1024], strides = [1, 1]} : vector<16x1024xf32> to vector<2x1024xf32>
    %384 = arith.mulf %383, %378 : vector<2x1024xf32>
    %c10_188 = arith.constant 10 : index
    %c0_189 = arith.constant 0 : index
    %385 = vector.load %arg17[%c10_188, %c0_189] : memref<16x1024xf32, #tpu.memory_space<vmem>>, vector<2x1024xf32>
    %386 = arith.addf %384, %385 : vector<2x1024xf32>
    %c10_190 = arith.constant 10 : index
    %c0_191 = arith.constant 0 : index
    %387 = vector.load %arg18[%c10_190, %c0_191] : memref<16x1024xf32, #tpu.memory_space<vmem>>, vector<2x1024xf32>
    %388 = arith.mulf %386, %387 : vector<2x1024xf32>
    %cst_192 = arith.constant dense<0.000000e+00> : vector<16x1024xf32>
    %389 = tpu.matmul %51, %388, %cst_192 {dimension_numbers = #tpu.dot_dimension_numbers<[1], [0], [0], [1], [0, 0, 1, 1], [], []>} : vector<16x2xf32>, vector<2x1024xf32>, vector<16x1024xf32> -> vector<16x1024xf32>
    %390 = arith.addf %382, %389 : vector<16x1024xf32>
    %391 = vector.extract_strided_slice %329 {offsets = [12, 0], sizes = [2, 1024], strides = [1, 1]} : vector<16x1024xf32> to vector<2x1024xf32>
    %392 = arith.mulf %391, %386 : vector<2x1024xf32>
    %c12_193 = arith.constant 12 : index
    %c0_194 = arith.constant 0 : index
    %393 = vector.load %arg17[%c12_193, %c0_194] : memref<16x1024xf32, #tpu.memory_space<vmem>>, vector<2x1024xf32>
    %394 = arith.addf %392, %393 : vector<2x1024xf32>
    %c12_195 = arith.constant 12 : index
    %c0_196 = arith.constant 0 : index
    %395 = vector.load %arg18[%c12_195, %c0_196] : memref<16x1024xf32, #tpu.memory_space<vmem>>, vector<2x1024xf32>
    %396 = arith.mulf %394, %395 : vector<2x1024xf32>
    %cst_197 = arith.constant dense<0.000000e+00> : vector<16x1024xf32>
    %397 = tpu.matmul %56, %396, %cst_197 {dimension_numbers = #tpu.dot_dimension_numbers<[1], [0], [0], [1], [0, 0, 1, 1], [], []>} : vector<16x2xf32>, vector<2x1024xf32>, vector<16x1024xf32> -> vector<16x1024xf32>
    %398 = arith.addf %390, %397 : vector<16x1024xf32>
    %399 = vector.extract_strided_slice %329 {offsets = [14, 0], sizes = [2, 1024], strides = [1, 1]} : vector<16x1024xf32> to vector<2x1024xf32>
    %400 = arith.mulf %399, %394 : vector<2x1024xf32>
    %c14_198 = arith.constant 14 : index
    %c0_199 = arith.constant 0 : index
    %401 = vector.load %arg17[%c14_198, %c0_199] : memref<16x1024xf32, #tpu.memory_space<vmem>>, vector<2x1024xf32>
    %402 = arith.addf %400, %401 : vector<2x1024xf32>
    %c14_200 = arith.constant 14 : index
    %c0_201 = arith.constant 0 : index
    %403 = vector.load %arg18[%c14_200, %c0_201] : memref<16x1024xf32, #tpu.memory_space<vmem>>, vector<2x1024xf32>
    %404 = arith.mulf %402, %403 : vector<2x1024xf32>
    %cst_202 = arith.constant dense<0.000000e+00> : vector<16x1024xf32>
    %405 = tpu.matmul %61, %404, %cst_202 {dimension_numbers = #tpu.dot_dimension_numbers<[1], [0], [0], [1], [0, 0, 1, 1], [], []>} : vector<16x2xf32>, vector<2x1024xf32>, vector<16x1024xf32> -> vector<16x1024xf32>
    %406 = arith.addf %398, %405 : vector<16x1024xf32>
    %cst_203 = arith.constant dense<0.000000e+00> : vector<16x64xf32>
    %407 = tpu.matmul %406, %19, %cst_203 {dimension_numbers = #tpu.dot_dimension_numbers<[1], [1], [0], [0], [0, 0, 1, 0], [], []>} : vector<16x1024xf32>, vector<64x1024xf32>, vector<16x64xf32> -> vector<16x64xf32>
    %c1_204 = arith.constant 1 : index
    %c0_205 = arith.constant 0 : index
    %c0_206 = arith.constant 0 : index
    %408 = vector.load %arg14[%c1_204, %c0_205, %c0_206] : memref<3x1x64xf32, #tpu.memory_space<vmem>>, vector<1x1x64xf32>
    %409 = vector.shape_cast %408 : vector<1x1x64xf32> to vector<1x64xf32>
    %410 = vector.broadcast %409 : vector<1x64xf32> to vector<16x64xf32>
    %411 = arith.mulf %410, %295 : vector<16x64xf32>
    %412 = arith.addf %407, %411 : vector<16x64xf32>
    %cst_207 = arith.constant 0.000000e+00 : f32
    %413 = vector.broadcast %cst_207 : f32 to vector<16x64xf32>
    %414 = arith.subf %413, %263 : vector<16x64xf32>
    %415 = math.exp %414 : vector<16x64xf32>
    %cst_208 = arith.constant 1.000000e+00 : f32
    %416 = vector.broadcast %cst_208 : f32 to vector<16x64xf32>
    %417 = arith.addf %416, %415 : vector<16x64xf32>
    %cst_209 = arith.constant 1.000000e+00 : f32
    %418 = vector.broadcast %cst_209 : f32 to vector<16x64xf32>
    %419 = arith.divf %418, %417 : vector<16x64xf32>
    %420 = arith.mulf %263, %419 : vector<16x64xf32>
    %421 = arith.mulf %412, %420 : vector<16x64xf32>
    %c1_210 = arith.constant 1 : index
    %c0_211 = arith.constant 0 : index
    %c0_212 = arith.constant 0 : index
    %422 = vector.load %arg15[%c1_210, %c0_211, %c0_212] : memref<3x32x64xf32, #tpu.memory_space<vmem>>, vector<1x32x64xf32>
    %423 = vector.shape_cast %422 : vector<1x32x64xf32> to vector<32x64xf32>
    %cst_213 = arith.constant dense<0.000000e+00> : vector<16x32xf32>
    %424 = tpu.matmul %421, %423, %cst_213 {dimension_numbers = #tpu.dot_dimension_numbers<[1], [1], [0], [0], [0, 0, 1, 0], [], []>} : vector<16x64xf32>, vector<32x64xf32>, vector<16x32xf32> -> vector<16x32xf32>
    %425 = arith.addf %424, %243 : vector<16x32xf32>
    %426 = arith.mulf %425, %425 : vector<16x32xf32>
    %cst_214 = arith.constant dense<0.000000e+00> : vector<16xf32>
    %427 = vector.multi_reduction <add>, %426, %cst_214 [1] : vector<16x32xf32> to vector<16xf32>
    %428 = vector.shape_cast %427 : vector<16xf32> to vector<16x1xf32>
    %cst_215 = arith.constant 3.200000e+01 : f32
    %429 = vector.broadcast %cst_215 : f32 to vector<16x1xf32>
    %430 = arith.divf %428, %429 : vector<16x1xf32>
    %cst_216 = arith.constant 9.99999974E-6 : f32
    %431 = vector.broadcast %cst_216 : f32 to vector<16x1xf32>
    %432 = arith.addf %430, %431 : vector<16x1xf32>
    %433 = math.rsqrt %432 : vector<16x1xf32>
    %434 = vector.broadcast %433 : vector<16x1xf32> to vector<16x32xf32>
    %435 = arith.mulf %425, %434 : vector<16x32xf32>
    %c2_217 = arith.constant 2 : index
    %c0_218 = arith.constant 0 : index
    %c0_219 = arith.constant 0 : index
    %436 = vector.load %arg3[%c2_217, %c0_218, %c0_219] : memref<3x1x32xf32, #tpu.memory_space<vmem>>, vector<1x1x32xf32>
    %437 = vector.shape_cast %436 : vector<1x1x32xf32> to vector<1x32xf32>
    %438 = vector.broadcast %437 : vector<1x32xf32> to vector<16x32xf32>
    %439 = arith.mulf %435, %438 : vector<16x32xf32>
    %c2_220 = arith.constant 2 : index
    %c0_221 = arith.constant 0 : index
    %c0_222 = arith.constant 0 : index
    %440 = vector.load %arg4[%c2_220, %c0_221, %c0_222] : memref<3x64x32xf32, #tpu.memory_space<vmem>>, vector<1x64x32xf32>
    %441 = vector.shape_cast %440 : vector<1x64x32xf32> to vector<64x32xf32>
    %cst_223 = arith.constant dense<0.000000e+00> : vector<16x64xf32>
    %442 = tpu.matmul %439, %441, %cst_223 {dimension_numbers = #tpu.dot_dimension_numbers<[1], [1], [0], [0], [0, 0, 1, 0], [], []>} : vector<16x32xf32>, vector<64x32xf32>, vector<16x64xf32> -> vector<16x64xf32>
    %c2_224 = arith.constant 2 : index
    %c0_225 = arith.constant 0 : index
    %c0_226 = arith.constant 0 : index
    %443 = vector.load %arg5[%c2_224, %c0_225, %c0_226] : memref<3x64x32xf32, #tpu.memory_space<vmem>>, vector<1x64x32xf32>
    %444 = vector.shape_cast %443 : vector<1x64x32xf32> to vector<64x32xf32>
    %cst_227 = arith.constant dense<0.000000e+00> : vector<16x64xf32>
    %445 = tpu.matmul %439, %444, %cst_227 {dimension_numbers = #tpu.dot_dimension_numbers<[1], [1], [0], [0], [0, 0, 1, 0], [], []>} : vector<16x32xf32>, vector<64x32xf32>, vector<16x64xf32> -> vector<16x64xf32>
    %c2_228 = arith.constant 2 : index
    %c0_229 = arith.constant 0 : index
    %c0_230 = arith.constant 0 : index
    %446 = vector.load %arg6[%c2_228, %c0_229, %c0_230] : memref<3x4x64xf32, #tpu.memory_space<vmem>>, vector<1x4x64xf32>
    %447 = vector.shape_cast %446 : vector<1x4x64xf32> to vector<4x64xf32>
    %c2_231 = arith.constant 2 : index
    %c0_232 = arith.constant 0 : index
    %c0_233 = arith.constant 0 : index
    %448 = vector.load %arg7[%c2_231, %c0_232, %c0_233] : memref<3x1x64xf32, #tpu.memory_space<vmem>>, vector<1x1x64xf32>
    %449 = vector.shape_cast %448 : vector<1x1x64xf32> to vector<1x64xf32>
    %450 = vector.extract_strided_slice %447 {offsets = [3, 0], sizes = [1, 64], strides = [1, 1]} : vector<4x64xf32> to vector<1x64xf32>
    %451 = vector.broadcast %450 : vector<1x64xf32> to vector<16x64xf32>
    %452 = arith.mulf %442, %451 : vector<16x64xf32>
    %453 = vector.broadcast %449 : vector<1x64xf32> to vector<16x64xf32>
    %454 = arith.addf %453, %452 : vector<16x64xf32>
    %cst_234 = arith.constant dense<0.000000e+00> : vector<16x64xf32>
    %455 = tpu.matmul %8, %442, %cst_234 {dimension_numbers = #tpu.dot_dimension_numbers<[1], [0], [0], [1], [0, 0, 1, 1], [], []>} : vector<16x16xf32>, vector<16x64xf32>, vector<16x64xf32> -> vector<16x64xf32>
    %456 = vector.extract_strided_slice %447 {offsets = [2, 0], sizes = [1, 64], strides = [1, 1]} : vector<4x64xf32> to vector<1x64xf32>
    %457 = vector.broadcast %456 : vector<1x64xf32> to vector<16x64xf32>
    %458 = arith.mulf %455, %457 : vector<16x64xf32>
    %459 = arith.addf %454, %458 : vector<16x64xf32>
    %cst_235 = arith.constant dense<0.000000e+00> : vector<16x64xf32>
    %460 = tpu.matmul %13, %442, %cst_235 {dimension_numbers = #tpu.dot_dimension_numbers<[1], [0], [0], [1], [0, 0, 1, 1], [], []>} : vector<16x16xf32>, vector<16x64xf32>, vector<16x64xf32> -> vector<16x64xf32>
    %461 = vector.extract_strided_slice %447 {offsets = [1, 0], sizes = [1, 64], strides = [1, 1]} : vector<4x64xf32> to vector<1x64xf32>
    %462 = vector.broadcast %461 : vector<1x64xf32> to vector<16x64xf32>
    %463 = arith.mulf %460, %462 : vector<16x64xf32>
    %464 = arith.addf %459, %463 : vector<16x64xf32>
    %cst_236 = arith.constant dense<0.000000e+00> : vector<16x64xf32>
    %465 = tpu.matmul %18, %442, %cst_236 {dimension_numbers = #tpu.dot_dimension_numbers<[1], [0], [0], [1], [0, 0, 1, 1], [], []>} : vector<16x16xf32>, vector<16x64xf32>, vector<16x64xf32> -> vector<16x64xf32>
    %466 = vector.extract_strided_slice %447 {offsets = [0, 0], sizes = [1, 64], strides = [1, 1]} : vector<4x64xf32> to vector<1x64xf32>
    %467 = vector.broadcast %466 : vector<1x64xf32> to vector<16x64xf32>
    %468 = arith.mulf %465, %467 : vector<16x64xf32>
    %469 = arith.addf %464, %468 : vector<16x64xf32>
    %cst_237 = arith.constant 0.000000e+00 : f32
    %470 = vector.broadcast %cst_237 : f32 to vector<16x64xf32>
    %471 = arith.subf %470, %469 : vector<16x64xf32>
    %472 = math.exp %471 : vector<16x64xf32>
    %cst_238 = arith.constant 1.000000e+00 : f32
    %473 = vector.broadcast %cst_238 : f32 to vector<16x64xf32>
    %474 = arith.addf %473, %472 : vector<16x64xf32>
    %cst_239 = arith.constant 1.000000e+00 : f32
    %475 = vector.broadcast %cst_239 : f32 to vector<16x64xf32>
    %476 = arith.divf %475, %474 : vector<16x64xf32>
    %477 = arith.mulf %469, %476 : vector<16x64xf32>
    %c2_240 = arith.constant 2 : index
    %c0_241 = arith.constant 0 : index
    %c0_242 = arith.constant 0 : index
    %478 = vector.load %arg8[%c2_240, %c0_241, %c0_242] : memref<3x2x64xf32, #tpu.memory_space<vmem>>, vector<1x2x64xf32>
    %479 = vector.shape_cast %478 : vector<1x2x64xf32> to vector<2x64xf32>
    %cst_243 = arith.constant dense<0.000000e+00> : vector<16x2xf32>
    %480 = tpu.matmul %477, %479, %cst_243 {dimension_numbers = #tpu.dot_dimension_numbers<[1], [1], [0], [0], [0, 0, 1, 0], [], []>} : vector<16x64xf32>, vector<2x64xf32>, vector<16x2xf32> -> vector<16x2xf32>
    %c2_244 = arith.constant 2 : index
    %c0_245 = arith.constant 0 : index
    %c0_246 = arith.constant 0 : index
    %481 = vector.load %arg9[%c2_244, %c0_245, %c0_246] : memref<3x2x64xf32, #tpu.memory_space<vmem>>, vector<1x2x64xf32>
    %482 = vector.shape_cast %481 : vector<1x2x64xf32> to vector<2x64xf32>
    %c2_247 = arith.constant 2 : index
    %c0_248 = arith.constant 0 : index
    %c0_249 = arith.constant 0 : index
    %483 = vector.load %arg10[%c2_247, %c0_248, %c0_249] : memref<3x1x64xf32, #tpu.memory_space<vmem>>, vector<1x1x64xf32>
    %484 = vector.shape_cast %483 : vector<1x1x64xf32> to vector<1x64xf32>
    %485 = vector.extract_strided_slice %480 {offsets = [0, 0], sizes = [16, 1], strides = [1, 1]} : vector<16x2xf32> to vector<16x1xf32>
    %486 = vector.extract_strided_slice %482 {offsets = [0, 0], sizes = [1, 64], strides = [1, 1]} : vector<2x64xf32> to vector<1x64xf32>
    %487 = vector.broadcast %485 : vector<16x1xf32> to vector<16x64xf32>
    %488 = vector.broadcast %486 : vector<1x64xf32> to vector<16x64xf32>
    %489 = arith.mulf %487, %488 : vector<16x64xf32>
    %490 = vector.broadcast %484 : vector<1x64xf32> to vector<16x64xf32>
    %491 = arith.addf %490, %489 : vector<16x64xf32>
    %492 = vector.extract_strided_slice %480 {offsets = [0, 1], sizes = [16, 1], strides = [1, 1]} : vector<16x2xf32> to vector<16x1xf32>
    %493 = vector.extract_strided_slice %482 {offsets = [1, 0], sizes = [1, 64], strides = [1, 1]} : vector<2x64xf32> to vector<1x64xf32>
    %494 = vector.broadcast %492 : vector<16x1xf32> to vector<16x64xf32>
    %495 = vector.broadcast %493 : vector<1x64xf32> to vector<16x64xf32>
    %496 = arith.mulf %494, %495 : vector<16x64xf32>
    %497 = arith.addf %491, %496 : vector<16x64xf32>
    %cst_250 = arith.constant 0.000000e+00 : f32
    %498 = vector.broadcast %cst_250 : f32 to vector<16x64xf32>
    %499 = arith.maximumf %497, %498 : vector<16x64xf32>
    %500 = math.absf %497 : vector<16x64xf32>
    %cst_251 = arith.constant 0.000000e+00 : f32
    %501 = vector.broadcast %cst_251 : f32 to vector<16x64xf32>
    %502 = arith.subf %501, %500 : vector<16x64xf32>
    %503 = math.exp %502 : vector<16x64xf32>
    %504 = math.log1p %503 : vector<16x64xf32>
    %505 = arith.addf %499, %504 : vector<16x64xf32>
    %cst_252 = arith.constant dense<0.000000e+00> : vector<16x1024xf32>
    %506 = tpu.matmul %505, %19, %cst_252 {dimension_numbers = #tpu.dot_dimension_numbers<[1], [0], [0], [1], [0, 0, 1, 1], [], []>} : vector<16x64xf32>, vector<64x1024xf32>, vector<16x1024xf32> -> vector<16x1024xf32>
    %c2_253 = arith.constant 2 : index
    %c0_254 = arith.constant 0 : index
    %c0_255 = arith.constant 0 : index
    %507 = vector.load %arg13[%c2_253, %c0_254, %c0_255] : memref<3x1x1024xf32, #tpu.memory_space<vmem>>, vector<1x1x1024xf32>
    %508 = vector.shape_cast %507 : vector<1x1x1024xf32> to vector<1x1024xf32>
    %509 = vector.broadcast %508 : vector<1x1024xf32> to vector<16x1024xf32>
    %510 = arith.mulf %506, %509 : vector<16x1024xf32>
    %511 = math.exp %510 : vector<16x1024xf32>
    %512 = arith.mulf %505, %477 : vector<16x64xf32>
    %cst_256 = arith.constant dense<0.000000e+00> : vector<16x1024xf32>
    %513 = tpu.matmul %512, %19, %cst_256 {dimension_numbers = #tpu.dot_dimension_numbers<[1], [0], [0], [1], [0, 0, 1, 1], [], []>} : vector<16x64xf32>, vector<64x1024xf32>, vector<16x1024xf32> -> vector<16x1024xf32>
    %c2_257 = arith.constant 2 : index
    %c0_258 = arith.constant 0 : index
    %c0_259 = arith.constant 0 : index
    %514 = vector.load %arg11[%c2_257, %c0_258, %c0_259] : memref<3x64x1024xf32, #tpu.memory_space<vmem>>, vector<1x64x1024xf32>
    %515 = vector.shape_cast %514 : vector<1x64x1024xf32> to vector<64x1024xf32>
    %cst_260 = arith.constant dense<0.000000e+00> : vector<16x1024xf32>
    %516 = tpu.matmul %477, %515, %cst_260 {dimension_numbers = #tpu.dot_dimension_numbers<[1], [0], [0], [1], [0, 0, 1, 1], [], []>} : vector<16x64xf32>, vector<64x1024xf32>, vector<16x1024xf32> -> vector<16x1024xf32>
    %517 = arith.mulf %513, %516 : vector<16x1024xf32>
    %c2_261 = arith.constant 2 : index
    %c0_262 = arith.constant 0 : index
    %c0_263 = arith.constant 0 : index
    %518 = vector.load %arg12[%c2_261, %c0_262, %c0_263] : memref<3x64x1024xf32, #tpu.memory_space<vmem>>, vector<1x64x1024xf32>
    %519 = vector.shape_cast %518 : vector<1x64x1024xf32> to vector<64x1024xf32>
    %cst_264 = arith.constant dense<0.000000e+00> : vector<16x1024xf32>
    %520 = tpu.matmul %477, %519, %cst_264 {dimension_numbers = #tpu.dot_dimension_numbers<[1], [0], [0], [1], [0, 0, 1, 1], [], []>} : vector<16x64xf32>, vector<64x1024xf32>, vector<16x1024xf32> -> vector<16x1024xf32>
    %c0_265 = arith.constant 0 : index
    %c0_266 = arith.constant 0 : index
    %521 = vector.load %arg17[%c0_265, %c0_266] : memref<16x1024xf32, #tpu.memory_space<vmem>>, vector<16x1024xf32>
    tpu.vector_store %arg17[%c0_265, %c0_266], %517 {strides = array<i32>} : memref<16x1024xf32, #tpu.memory_space<vmem>>, vector<16x1024xf32>,
    %c0_267 = arith.constant 0 : index
    %c0_268 = arith.constant 0 : index
    %522 = vector.load %arg18[%c0_267, %c0_268] : memref<16x1024xf32, #tpu.memory_space<vmem>>, vector<16x1024xf32>
    tpu.vector_store %arg18[%c0_267, %c0_268], %520 {strides = array<i32>} : memref<16x1024xf32, #tpu.memory_space<vmem>>, vector<16x1024xf32>,
    %cst_269 = arith.constant 0.000000e+00 : f32
    %523 = vector.broadcast %cst_269 : f32 to vector<2x1024xf32>
    %cst_270 = arith.constant 0.000000e+00 : f32
    %524 = vector.broadcast %cst_270 : f32 to vector<16x1024xf32>
    %525 = vector.extract_strided_slice %511 {offsets = [0, 0], sizes = [2, 1024], strides = [1, 1]} : vector<16x1024xf32> to vector<2x1024xf32>
    %526 = arith.mulf %525, %523 : vector<2x1024xf32>
    %c0_271 = arith.constant 0 : index
    %c0_272 = arith.constant 0 : index
    %527 = vector.load %arg17[%c0_271, %c0_272] : memref<16x1024xf32, #tpu.memory_space<vmem>>, vector<2x1024xf32>
    %528 = arith.addf %526, %527 : vector<2x1024xf32>
    %c0_273 = arith.constant 0 : index
    %c0_274 = arith.constant 0 : index
    %529 = vector.load %arg18[%c0_273, %c0_274] : memref<16x1024xf32, #tpu.memory_space<vmem>>, vector<2x1024xf32>
    %530 = arith.mulf %528, %529 : vector<2x1024xf32>
    %cst_275 = arith.constant dense<0.000000e+00> : vector<16x1024xf32>
    %531 = tpu.matmul %26, %530, %cst_275 {dimension_numbers = #tpu.dot_dimension_numbers<[1], [0], [0], [1], [0, 0, 1, 1], [], []>} : vector<16x2xf32>, vector<2x1024xf32>, vector<16x1024xf32> -> vector<16x1024xf32>
    %532 = arith.addf %524, %531 : vector<16x1024xf32>
    %533 = vector.extract_strided_slice %511 {offsets = [2, 0], sizes = [2, 1024], strides = [1, 1]} : vector<16x1024xf32> to vector<2x1024xf32>
    %534 = arith.mulf %533, %528 : vector<2x1024xf32>
    %c2_276 = arith.constant 2 : index
    %c0_277 = arith.constant 0 : index
    %535 = vector.load %arg17[%c2_276, %c0_277] : memref<16x1024xf32, #tpu.memory_space<vmem>>, vector<2x1024xf32>
    %536 = arith.addf %534, %535 : vector<2x1024xf32>
    %c2_278 = arith.constant 2 : index
    %c0_279 = arith.constant 0 : index
    %537 = vector.load %arg18[%c2_278, %c0_279] : memref<16x1024xf32, #tpu.memory_space<vmem>>, vector<2x1024xf32>
    %538 = arith.mulf %536, %537 : vector<2x1024xf32>
    %cst_280 = arith.constant dense<0.000000e+00> : vector<16x1024xf32>
    %539 = tpu.matmul %31, %538, %cst_280 {dimension_numbers = #tpu.dot_dimension_numbers<[1], [0], [0], [1], [0, 0, 1, 1], [], []>} : vector<16x2xf32>, vector<2x1024xf32>, vector<16x1024xf32> -> vector<16x1024xf32>
    %540 = arith.addf %532, %539 : vector<16x1024xf32>
    %541 = vector.extract_strided_slice %511 {offsets = [4, 0], sizes = [2, 1024], strides = [1, 1]} : vector<16x1024xf32> to vector<2x1024xf32>
    %542 = arith.mulf %541, %536 : vector<2x1024xf32>
    %c4_281 = arith.constant 4 : index
    %c0_282 = arith.constant 0 : index
    %543 = vector.load %arg17[%c4_281, %c0_282] : memref<16x1024xf32, #tpu.memory_space<vmem>>, vector<2x1024xf32>
    %544 = arith.addf %542, %543 : vector<2x1024xf32>
    %c4_283 = arith.constant 4 : index
    %c0_284 = arith.constant 0 : index
    %545 = vector.load %arg18[%c4_283, %c0_284] : memref<16x1024xf32, #tpu.memory_space<vmem>>, vector<2x1024xf32>
    %546 = arith.mulf %544, %545 : vector<2x1024xf32>
    %cst_285 = arith.constant dense<0.000000e+00> : vector<16x1024xf32>
    %547 = tpu.matmul %36, %546, %cst_285 {dimension_numbers = #tpu.dot_dimension_numbers<[1], [0], [0], [1], [0, 0, 1, 1], [], []>} : vector<16x2xf32>, vector<2x1024xf32>, vector<16x1024xf32> -> vector<16x1024xf32>
    %548 = arith.addf %540, %547 : vector<16x1024xf32>
    %549 = vector.extract_strided_slice %511 {offsets = [6, 0], sizes = [2, 1024], strides = [1, 1]} : vector<16x1024xf32> to vector<2x1024xf32>
    %550 = arith.mulf %549, %544 : vector<2x1024xf32>
    %c6_286 = arith.constant 6 : index
    %c0_287 = arith.constant 0 : index
    %551 = vector.load %arg17[%c6_286, %c0_287] : memref<16x1024xf32, #tpu.memory_space<vmem>>, vector<2x1024xf32>
    %552 = arith.addf %550, %551 : vector<2x1024xf32>
    %c6_288 = arith.constant 6 : index
    %c0_289 = arith.constant 0 : index
    %553 = vector.load %arg18[%c6_288, %c0_289] : memref<16x1024xf32, #tpu.memory_space<vmem>>, vector<2x1024xf32>
    %554 = arith.mulf %552, %553 : vector<2x1024xf32>
    %cst_290 = arith.constant dense<0.000000e+00> : vector<16x1024xf32>
    %555 = tpu.matmul %41, %554, %cst_290 {dimension_numbers = #tpu.dot_dimension_numbers<[1], [0], [0], [1], [0, 0, 1, 1], [], []>} : vector<16x2xf32>, vector<2x1024xf32>, vector<16x1024xf32> -> vector<16x1024xf32>
    %556 = arith.addf %548, %555 : vector<16x1024xf32>
    %557 = vector.extract_strided_slice %511 {offsets = [8, 0], sizes = [2, 1024], strides = [1, 1]} : vector<16x1024xf32> to vector<2x1024xf32>
    %558 = arith.mulf %557, %552 : vector<2x1024xf32>
    %c8_291 = arith.constant 8 : index
    %c0_292 = arith.constant 0 : index
    %559 = vector.load %arg17[%c8_291, %c0_292] : memref<16x1024xf32, #tpu.memory_space<vmem>>, vector<2x1024xf32>
    %560 = arith.addf %558, %559 : vector<2x1024xf32>
    %c8_293 = arith.constant 8 : index
    %c0_294 = arith.constant 0 : index
    %561 = vector.load %arg18[%c8_293, %c0_294] : memref<16x1024xf32, #tpu.memory_space<vmem>>, vector<2x1024xf32>
    %562 = arith.mulf %560, %561 : vector<2x1024xf32>
    %cst_295 = arith.constant dense<0.000000e+00> : vector<16x1024xf32>
    %563 = tpu.matmul %46, %562, %cst_295 {dimension_numbers = #tpu.dot_dimension_numbers<[1], [0], [0], [1], [0, 0, 1, 1], [], []>} : vector<16x2xf32>, vector<2x1024xf32>, vector<16x1024xf32> -> vector<16x1024xf32>
    %564 = arith.addf %556, %563 : vector<16x1024xf32>
    %565 = vector.extract_strided_slice %511 {offsets = [10, 0], sizes = [2, 1024], strides = [1, 1]} : vector<16x1024xf32> to vector<2x1024xf32>
    %566 = arith.mulf %565, %560 : vector<2x1024xf32>
    %c10_296 = arith.constant 10 : index
    %c0_297 = arith.constant 0 : index
    %567 = vector.load %arg17[%c10_296, %c0_297] : memref<16x1024xf32, #tpu.memory_space<vmem>>, vector<2x1024xf32>
    %568 = arith.addf %566, %567 : vector<2x1024xf32>
    %c10_298 = arith.constant 10 : index
    %c0_299 = arith.constant 0 : index
    %569 = vector.load %arg18[%c10_298, %c0_299] : memref<16x1024xf32, #tpu.memory_space<vmem>>, vector<2x1024xf32>
    %570 = arith.mulf %568, %569 : vector<2x1024xf32>
    %cst_300 = arith.constant dense<0.000000e+00> : vector<16x1024xf32>
    %571 = tpu.matmul %51, %570, %cst_300 {dimension_numbers = #tpu.dot_dimension_numbers<[1], [0], [0], [1], [0, 0, 1, 1], [], []>} : vector<16x2xf32>, vector<2x1024xf32>, vector<16x1024xf32> -> vector<16x1024xf32>
    %572 = arith.addf %564, %571 : vector<16x1024xf32>
    %573 = vector.extract_strided_slice %511 {offsets = [12, 0], sizes = [2, 1024], strides = [1, 1]} : vector<16x1024xf32> to vector<2x1024xf32>
    %574 = arith.mulf %573, %568 : vector<2x1024xf32>
    %c12_301 = arith.constant 12 : index
    %c0_302 = arith.constant 0 : index
    %575 = vector.load %arg17[%c12_301, %c0_302] : memref<16x1024xf32, #tpu.memory_space<vmem>>, vector<2x1024xf32>
    %576 = arith.addf %574, %575 : vector<2x1024xf32>
    %c12_303 = arith.constant 12 : index
    %c0_304 = arith.constant 0 : index
    %577 = vector.load %arg18[%c12_303, %c0_304] : memref<16x1024xf32, #tpu.memory_space<vmem>>, vector<2x1024xf32>
    %578 = arith.mulf %576, %577 : vector<2x1024xf32>
    %cst_305 = arith.constant dense<0.000000e+00> : vector<16x1024xf32>
    %579 = tpu.matmul %56, %578, %cst_305 {dimension_numbers = #tpu.dot_dimension_numbers<[1], [0], [0], [1], [0, 0, 1, 1], [], []>} : vector<16x2xf32>, vector<2x1024xf32>, vector<16x1024xf32> -> vector<16x1024xf32>
    %580 = arith.addf %572, %579 : vector<16x1024xf32>
    %581 = vector.extract_strided_slice %511 {offsets = [14, 0], sizes = [2, 1024], strides = [1, 1]} : vector<16x1024xf32> to vector<2x1024xf32>
    %582 = arith.mulf %581, %576 : vector<2x1024xf32>
    %c14_306 = arith.constant 14 : index
    %c0_307 = arith.constant 0 : index
    %583 = vector.load %arg17[%c14_306, %c0_307] : memref<16x1024xf32, #tpu.memory_space<vmem>>, vector<2x1024xf32>
    %584 = arith.addf %582, %583 : vector<2x1024xf32>
    %c14_308 = arith.constant 14 : index
    %c0_309 = arith.constant 0 : index
    %585 = vector.load %arg18[%c14_308, %c0_309] : memref<16x1024xf32, #tpu.memory_space<vmem>>, vector<2x1024xf32>
    %586 = arith.mulf %584, %585 : vector<2x1024xf32>
    %cst_310 = arith.constant dense<0.000000e+00> : vector<16x1024xf32>
    %587 = tpu.matmul %61, %586, %cst_310 {dimension_numbers = #tpu.dot_dimension_numbers<[1], [0], [0], [1], [0, 0, 1, 1], [], []>} : vector<16x2xf32>, vector<2x1024xf32>, vector<16x1024xf32> -> vector<16x1024xf32>
    %588 = arith.addf %580, %587 : vector<16x1024xf32>
    %cst_311 = arith.constant dense<0.000000e+00> : vector<16x64xf32>
    %589 = tpu.matmul %588, %19, %cst_311 {dimension_numbers = #tpu.dot_dimension_numbers<[1], [1], [0], [0], [0, 0, 1, 0], [], []>} : vector<16x1024xf32>, vector<64x1024xf32>, vector<16x64xf32> -> vector<16x64xf32>
    %c2_312 = arith.constant 2 : index
    %c0_313 = arith.constant 0 : index
    %c0_314 = arith.constant 0 : index
    %590 = vector.load %arg14[%c2_312, %c0_313, %c0_314] : memref<3x1x64xf32, #tpu.memory_space<vmem>>, vector<1x1x64xf32>
    %591 = vector.shape_cast %590 : vector<1x1x64xf32> to vector<1x64xf32>
    %592 = vector.broadcast %591 : vector<1x64xf32> to vector<16x64xf32>
    %593 = arith.mulf %592, %477 : vector<16x64xf32>
    %594 = arith.addf %589, %593 : vector<16x64xf32>
    %cst_315 = arith.constant 0.000000e+00 : f32
    %595 = vector.broadcast %cst_315 : f32 to vector<16x64xf32>
    %596 = arith.subf %595, %445 : vector<16x64xf32>
    %597 = math.exp %596 : vector<16x64xf32>
    %cst_316 = arith.constant 1.000000e+00 : f32
    %598 = vector.broadcast %cst_316 : f32 to vector<16x64xf32>
    %599 = arith.addf %598, %597 : vector<16x64xf32>
    %cst_317 = arith.constant 1.000000e+00 : f32
    %600 = vector.broadcast %cst_317 : f32 to vector<16x64xf32>
    %601 = arith.divf %600, %599 : vector<16x64xf32>
    %602 = arith.mulf %445, %601 : vector<16x64xf32>
    %603 = arith.mulf %594, %602 : vector<16x64xf32>
    %c2_318 = arith.constant 2 : index
    %c0_319 = arith.constant 0 : index
    %c0_320 = arith.constant 0 : index
    %604 = vector.load %arg15[%c2_318, %c0_319, %c0_320] : memref<3x32x64xf32, #tpu.memory_space<vmem>>, vector<1x32x64xf32>
    %605 = vector.shape_cast %604 : vector<1x32x64xf32> to vector<32x64xf32>
    %cst_321 = arith.constant dense<0.000000e+00> : vector<16x32xf32>
    %606 = tpu.matmul %603, %605, %cst_321 {dimension_numbers = #tpu.dot_dimension_numbers<[1], [1], [0], [0], [0, 0, 1, 0], [], []>} : vector<16x64xf32>, vector<32x64xf32>, vector<16x32xf32> -> vector<16x32xf32>
    %607 = arith.addf %606, %425 : vector<16x32xf32>
    %c0_322 = arith.constant 0 : index
    %c0_323 = arith.constant 0 : index
    %c0_324 = arith.constant 0 : index
    %608 = vector.load %arg16[%c0_322, %c0_323, %c0_324] : memref<1x16x32xf32, #tpu.memory_space<vmem>>, vector<1x16x32xf32>
    %609 = vector.shape_cast %608 : vector<1x16x32xf32> to vector<16x32xf32>
    %610 = vector.shape_cast %607 : vector<16x32xf32> to vector<1x16x32xf32>
    tpu.vector_store %arg16[%c0_322, %c0_323, %c0_324], %610 {strides = array<i32>} : memref<1x16x32xf32, #tpu.memory_space<vmem>>, vector<1x16x32xf32>,
    return
  }
  func.func @transform_0(%arg0: i32) -> (i32, i32, i32) {
    %c0_i32 = arith.constant 0 : i32
    %c0_i32_0 = arith.constant 0 : i32
    %c0_i32_1 = arith.constant 0 : i32
    return %arg0, %c0_i32, %c0_i32_0 : i32, i32, i32
  }
  func.func @transform_1(%arg0: i32) -> (i32, i32) {
    %c0_i32 = arith.constant 0 : i32
    %c0_i32_0 = arith.constant 0 : i32
    %c0_i32_1 = arith.constant 0 : i32
    return %c0_i32, %c0_i32_0 : i32, i32
  }
  func.func @transform_2(%arg0: i32) -> (i32, i32, i32) {
    %c0_i32 = arith.constant 0 : i32
    %c0_i32_0 = arith.constant 0 : i32
    %c0_i32_1 = arith.constant 0 : i32
    %c0_i32_2 = arith.constant 0 : i32
    return %c0_i32, %c0_i32_0, %c0_i32_1 : i32, i32, i32
  }
  func.func @transform_3(%arg0: i32) -> (i32, i32, i32) {
    %c0_i32 = arith.constant 0 : i32
    %c0_i32_0 = arith.constant 0 : i32
    %c0_i32_1 = arith.constant 0 : i32
    %c0_i32_2 = arith.constant 0 : i32
    return %c0_i32, %c0_i32_0, %c0_i32_1 : i32, i32, i32
  }
  func.func @transform_4(%arg0: i32) -> (i32, i32, i32) {
    %c0_i32 = arith.constant 0 : i32
    %c0_i32_0 = arith.constant 0 : i32
    %c0_i32_1 = arith.constant 0 : i32
    %c0_i32_2 = arith.constant 0 : i32
    return %c0_i32, %c0_i32_0, %c0_i32_1 : i32, i32, i32
  }
  func.func @transform_5(%arg0: i32) -> (i32, i32, i32) {
    %c0_i32 = arith.constant 0 : i32
    %c0_i32_0 = arith.constant 0 : i32
    %c0_i32_1 = arith.constant 0 : i32
    %c0_i32_2 = arith.constant 0 : i32
    return %c0_i32, %c0_i32_0, %c0_i32_1 : i32, i32, i32
  }
  func.func @transform_6(%arg0: i32) -> (i32, i32, i32) {
    %c0_i32 = arith.constant 0 : i32
    %c0_i32_0 = arith.constant 0 : i32
    %c0_i32_1 = arith.constant 0 : i32
    %c0_i32_2 = arith.constant 0 : i32
    return %c0_i32, %c0_i32_0, %c0_i32_1 : i32, i32, i32
  }
  func.func @transform_7(%arg0: i32) -> (i32, i32, i32) {
    %c0_i32 = arith.constant 0 : i32
    %c0_i32_0 = arith.constant 0 : i32
    %c0_i32_1 = arith.constant 0 : i32
    %c0_i32_2 = arith.constant 0 : i32
    return %c0_i32, %c0_i32_0, %c0_i32_1 : i32, i32, i32
  }
  func.func @transform_8(%arg0: i32) -> (i32, i32, i32) {
    %c0_i32 = arith.constant 0 : i32
    %c0_i32_0 = arith.constant 0 : i32
    %c0_i32_1 = arith.constant 0 : i32
    %c0_i32_2 = arith.constant 0 : i32
    return %c0_i32, %c0_i32_0, %c0_i32_1 : i32, i32, i32
  }
  func.func @transform_9(%arg0: i32) -> (i32, i32, i32) {
    %c0_i32 = arith.constant 0 : i32
    %c0_i32_0 = arith.constant 0 : i32
    %c0_i32_1 = arith.constant 0 : i32
    %c0_i32_2 = arith.constant 0 : i32
    return %c0_i32, %c0_i32_0, %c0_i32_1 : i32, i32, i32
  }
  func.func @transform_10(%arg0: i32) -> (i32, i32, i32) {
    %c0_i32 = arith.constant 0 : i32
    %c0_i32_0 = arith.constant 0 : i32
    %c0_i32_1 = arith.constant 0 : i32
    %c0_i32_2 = arith.constant 0 : i32
    return %c0_i32, %c0_i32_0, %c0_i32_1 : i32, i32, i32
  }
  func.func @transform_11(%arg0: i32) -> (i32, i32, i32) {
    %c0_i32 = arith.constant 0 : i32
    %c0_i32_0 = arith.constant 0 : i32
    %c0_i32_1 = arith.constant 0 : i32
    %c0_i32_2 = arith.constant 0 : i32
    return %c0_i32, %c0_i32_0, %c0_i32_1 : i32, i32, i32
  }
  func.func @transform_12(%arg0: i32) -> (i32, i32, i32) {
    %c0_i32 = arith.constant 0 : i32
    %c0_i32_0 = arith.constant 0 : i32
    %c0_i32_1 = arith.constant 0 : i32
    %c0_i32_2 = arith.constant 0 : i32
    return %c0_i32, %c0_i32_0, %c0_i32_1 : i32, i32, i32
  }
  func.func @transform_13(%arg0: i32) -> (i32, i32, i32) {
    %c0_i32 = arith.constant 0 : i32
    %c0_i32_0 = arith.constant 0 : i32
    %c0_i32_1 = arith.constant 0 : i32
    %c0_i32_2 = arith.constant 0 : i32
    return %c0_i32, %c0_i32_0, %c0_i32_1 : i32, i32, i32
  }
  func.func @transform_14(%arg0: i32) -> (i32, i32, i32) {
    %c0_i32 = arith.constant 0 : i32
    %c0_i32_0 = arith.constant 0 : i32
    %c0_i32_1 = arith.constant 0 : i32
    %c0_i32_2 = arith.constant 0 : i32
    return %c0_i32, %c0_i32_0, %c0_i32_1 : i32, i32, i32
  }
  func.func @transform_15(%arg0: i32) -> (i32, i32, i32) {
    %c0_i32 = arith.constant 0 : i32
    %c0_i32_0 = arith.constant 0 : i32
    %c0_i32_1 = arith.constant 0 : i32
    return %arg0, %c0_i32, %c0_i32_0 : i32, i32, i32
  }
}

</mosaic_0001>

<llo_original>
// kernel: mamba_forward.1
$region0: #{mamba_forward.1}
  #allocation0 [shape = 'u32[]', space=smem, size = 0x4, offset = 0x4, fixed_abs, tag = 'smem constant byte address 0x4 - core index']
  #allocation1 [shape = 'u32[72,128]{1,0:T(1,128)}', space=vmem, size = 0x9000, scoped, tag = 'internal scratch']
  #allocation2 [shape = 'f32[16,1024]{1,0:T(8,128)}', space=vmem, size = 0x10000, scoped, tag = 'scratch operand']
  #allocation3 [shape = 'f32[16,1024]{1,0:T(8,128)}', space=vmem, size = 0x10000, scoped, tag = 'scratch operand']
  %s0 = inlined_call_operand.vmem [shape: f32[1,16,32], index: 0, kind: input, shape index: {}]
  %s1 = inlined_call_operand.vmem [shape: f32[64,1024], index: 1, kind: input, shape index: {}]
  %s2 = inlined_call_operand.vmem [shape: f32[3,1,32], index: 2, kind: input, shape index: {}]
  %s3 = inlined_call_operand.vmem [shape: f32[3,64,32], index: 3, kind: input, shape index: {}]
  %s4 = inlined_call_operand.vmem [shape: f32[3,64,32], index: 4, kind: input, shape index: {}]
  %s5 = inlined_call_operand.vmem [shape: f32[3,4,64], index: 5, kind: input, shape index: {}]
  %s6 = inlined_call_operand.vmem [shape: f32[3,1,64], index: 6, kind: input, shape index: {}]
  %s7 = inlined_call_operand.vmem [shape: f32[3,2,64], index: 7, kind: input, shape index: {}]
  %s8 = inlined_call_operand.vmem [shape: f32[3,2,64], index: 8, kind: input, shape index: {}]
  %s9 = inlined_call_operand.vmem [shape: f32[3,1,64], index: 9, kind: input, shape index: {}]
  %s10 = inlined_call_operand.vmem [shape: f32[3,64,1024], index: 10, kind: input, shape index: {}]
  %s11 = inlined_call_operand.vmem [shape: f32[3,64,1024], index: 11, kind: input, shape index: {}]
  %s12 = inlined_call_operand.vmem [shape: f32[3,1,1024], index: 12, kind: input, shape index: {}]
  %s13 = inlined_call_operand.vmem [shape: f32[3,1,64], index: 13, kind: input, shape index: {}]
  %s14 = inlined_call_operand.vmem [shape: f32[3,32,64], index: 14, kind: input, shape index: {}]
  %s15 = inlined_call_operand.vmem [shape: f32[1,16,32], index: 15, kind: output, shape index: {}]
  %s16 = sld [smem:[#allocation0]]
  $region70: #{mamba_forward.1} parent=0
    _
  %s18 = ssub.s32 1, %s16
  %s19 = scalar_select 0, %s18, %s16
  // Predicated region
  $region2: #{mamba_forward.1} parent=0 // pred_check
    _
  $region3: #{mamba_forward.1} parent=0 // pred_check_branch
    %21 = sbr.rel (0) target = $region5
  $region4: #{mamba_forward.1} parent=0 // pred_region
    _
  $region5: #{mamba_forward.1} parent=0 // pred_fallthru
    _
  // Predicated region
  $region6: #{mamba_forward.1} parent=0 // pred_check
    _
  $region7: #{mamba_forward.1} parent=0 // pred_check_branch
    %23 = sbr.rel (0) target = $region9
  $region8: #{mamba_forward.1} parent=0 // pred_region
    _
  $region9: #{mamba_forward.1} parent=0 // pred_fallthru
    _
  // Predicated region
  $region10: #{mamba_forward.1} parent=0 // pred_check
    _
  $region11: #{mamba_forward.1} parent=0 // pred_check_branch
    %25 = sbr.rel (0) target = $region13
  $region12: #{mamba_forward.1} parent=0 // pred_region
    _
  $region13: #{mamba_forward.1} parent=0 // pred_fallthru
    _
  // Predicated region
  $region14: #{mamba_forward.1} parent=0 // pred_check
    _
  $region15: #{mamba_forward.1} parent=0 // pred_check_branch
    %27 = sbr.rel (0) target = $region17
  $region16: #{mamba_forward.1} parent=0 // pred_region
    _
  $region17: #{mamba_forward.1} parent=0 // pred_fallthru
    _
  // Predicated region
  $region18: #{mamba_forward.1} parent=0 // pred_check
    _
  $region19: #{mamba_forward.1} parent=0 // pred_check_branch
    %29 = sbr.rel (0) target = $region21
  $region20: #{mamba_forward.1} parent=0 // pred_region
    _
  $region21: #{mamba_forward.1} parent=0 // pred_fallthru
    _
  // Predicated region
  $region22: #{mamba_forward.1} parent=0 // pred_check
    _
  $region23: #{mamba_forward.1} parent=0 // pred_check_branch
    %31 = sbr.rel (0) target = $region25
  $region24: #{mamba_forward.1} parent=0 // pred_region
    _
  $region25: #{mamba_forward.1} parent=0 // pred_fallthru
    _
  // Predicated region
  $region26: #{mamba_forward.1} parent=0 // pred_check
    _
  $region27: #{mamba_forward.1} parent=0 // pred_check_branch
    %33 = sbr.rel (0) target = $region29
  $region28: #{mamba_forward.1} parent=0 // pred_region
    _
  $region29: #{mamba_forward.1} parent=0 // pred_fallthru
    _
  // Predicated region
  $region30: #{mamba_forward.1} parent=0 // pred_check
    _
  $region31: #{mamba_forward.1} parent=0 // pred_check_branch
    %35 = sbr.rel (0) target = $region33
  $region32: #{mamba_forward.1} parent=0 // pred_region
    _
  $region33: #{mamba_forward.1} parent=0 // pred_fallthru
    _
  // Predicated region
  $region34: #{mamba_forward.1} parent=0 // pred_check
    _
  $region35: #{mamba_forward.1} parent=0 // pred_check_branch
    %37 = sbr.rel (0) target = $region37
  $region36: #{mamba_forward.1} parent=0 // pred_region
    _
  $region37: #{mamba_forward.1} parent=0 // pred_fallthru
    _
  // Predicated region
  $region38: #{mamba_forward.1} parent=0 // pred_check
    _
  $region39: #{mamba_forward.1} parent=0 // pred_check_branch
    %39 = sbr.rel (0) target = $region41
  $region40: #{mamba_forward.1} parent=0 // pred_region
    _
  $region41: #{mamba_forward.1} parent=0 // pred_fallthru
    _
  // Predicated region
  $region42: #{mamba_forward.1} parent=0 // pred_check
    _
  $region43: #{mamba_forward.1} parent=0 // pred_check_branch
    %41 = sbr.rel (0) target = $region45
  $region44: #{mamba_forward.1} parent=0 // pred_region
    _
  $region45: #{mamba_forward.1} parent=0 // pred_fallthru
    _
  // Predicated region
  $region46: #{mamba_forward.1} parent=0 // pred_check
    _
  $region47: #{mamba_forward.1} parent=0 // pred_check_branch
    %43 = sbr.rel (0) target = $region49
  $region48: #{mamba_forward.1} parent=0 // pred_region
    _
  $region49: #{mamba_forward.1} parent=0 // pred_fallthru
    _
  // Predicated region
  $region50: #{mamba_forward.1} parent=0 // pred_check
    _
  $region51: #{mamba_forward.1} parent=0 // pred_check_branch
    %45 = sbr.rel (0) target = $region53
  $region52: #{mamba_forward.1} parent=0 // pred_region
    _
  $region53: #{mamba_forward.1} parent=0 // pred_fallthru
    _
  // Predicated region
  $region54: #{mamba_forward.1} parent=0 // pred_check
    _
  $region55: #{mamba_forward.1} parent=0 // pred_check_branch
    %47 = sbr.rel (0) target = $region57
  $region56: #{mamba_forward.1} parent=0 // pred_region
    _
  $region57: #{mamba_forward.1} parent=0 // pred_fallthru
    _
  // Predicated region
  $region58: #{mamba_forward.1} parent=0 // pred_check
    _
  $region59: #{mamba_forward.1} parent=0 // pred_check_branch
    %49 = sbr.rel (0) target = $region61
  $region60: #{mamba_forward.1} parent=0 // pred_region
    _
  $region61: #{mamba_forward.1} parent=0 // pred_fallthru
    _
  %v50 = vld [vmem:[%s0] sm:$0xff]
  %v51 = vld [vmem:[%s0 + $0x8] sm:$0xff]
  %v52 = vlaneseq
  %v53 = vshrl.u32 %v52, 7
  %v54 = vadd.s32 %v53, 8
  %v55 = vlaneseq
  %v56 = vand.u32 %v55, 127
  %v57 = vsub.s32 %v53, 2
  %v58 = vsub.s32 %v54, 2
  %vm59 = vcmp.eq.s32.totalorder %v56, %v57
  %vm60 = vcmp.eq.s32.totalorder %v56, %v58
  %v61 = vsel %vm59, 1, 0
  %v62 = vsel %vm60, 1, 0
  %v63 = vcvt.s32.f32 %v61
  %v64 = vcvt.s32.f32 %v62
  %v65 = vsub.s32 %v53, 4
  %v66 = vsub.s32 %v54, 4
  %vm67 = vcmp.eq.s32.totalorder %v56, %v65
  %vm68 = vcmp.eq.s32.totalorder %v56, %v66
  %v69 = vsel %vm67, 1, 0
  %v70 = vsel %vm68, 1, 0
  %v71 = vcvt.s32.f32 %v69
  %v72 = vcvt.s32.f32 %v70
  %v73 = vsub.s32 %v53, 6
  %v74 = vsub.s32 %v54, 6
  %vm75 = vcmp.eq.s32.totalorder %v56, %v73
  %vm76 = vcmp.eq.s32.totalorder %v56, %v74
  %v77 = vsel %vm75, 1, 0
  %v78 = vsel %vm76, 1, 0
  %v79 = vcvt.s32.f32 %v77
  %v80 = vcvt.s32.f32 %v78
  %v81 = vld [vmem:[%s1] sm:$0xff]
  %v82 = vld [vmem:[%s1 + $0x8] sm:$0xff]
  %v83 = vld [vmem:[%s1 + $0x10] sm:$0xff]
  %v84 = vld [vmem:[%s1 + $0x18] sm:$0xff]
  %v85 = vld [vmem:[%s1 + $0x20] sm:$0xff]
  %v86 = vld [vmem:[%s1 + $0x28] sm:$0xff]
  %v87 = vld [vmem:[%s1 + $0x30] sm:$0xff]
  %v88 = vld [vmem:[%s1 + $0x38] sm:$0xff]
  %v89 = vld [vmem:[%s1 + $0x40] sm:$0xff]
  %v90 = vld [vmem:[%s1 + $0x48] sm:$0xff]
  %v91 = vld [vmem:[%s1 + $0x50] sm:$0xff]
  %v92 = vld [vmem:[%s1 + $0x58] sm:$0xff]
  %v93 = vld [vmem:[%s1 + $0x60] sm:$0xff]
  %v94 = vld [vmem:[%s1 + $0x68] sm:$0xff]
  %v95 = vld [vmem:[%s1 + $0x70] sm:$0xff]
  %v96 = vld [vmem:[%s1 + $0x78] sm:$0xff]
  %v97 = vld [vmem:[%s1 + $0x80] sm:$0xff]
  %v98 = vld [vmem:[%s1 + $0x88] sm:$0xff]
  %v99 = vld [vmem:[%s1 + $0x90] sm:$0xff]
  %v100 = vld [vmem:[%s1 + $0x98] sm:$0xff]
  %v101 = vld [vmem:[%s1 + $0xa0] sm:$0xff]
  %v102 = vld [vmem:[%s1 + $0xa8] sm:$0xff]
  %v103 = vld [vmem:[%s1 + $0xb0] sm:$0xff]
  %v104 = vld [vmem:[%s1 + $0xb8] sm:$0xff]
  %v105 = vld [vmem:[%s1 + $0xc0] sm:$0xff]
  %v106 = vld [vmem:[%s1 + $0xc8] sm:$0xff]
  %v107 = vld [vmem:[%s1 + $0xd0] sm:$0xff]
  %v108 = vld [vmem:[%s1 + $0xd8] sm:$0xff]
  %v109 = vld [vmem:[%s1 + $0xe0] sm:$0xff]
  %v110 = vld [vmem:[%s1 + $0xe8] sm:$0xff]
  %v111 = vld [vmem:[%s1 + $0xf0] sm:$0xff]
  %v112 = vld [vmem:[%s1 + $0xf8] sm:$0xff]
  %v113 = vld [vmem:[%s1 + $0x100] sm:$0xff]
  %v114 = vld [vmem:[%s1 + $0x108] sm:$0xff]
  %v115 = vld [vmem:[%s1 + $0x110] sm:$0xff]
  %v116 = vld [vmem:[%s1 + $0x118] sm:$0xff]
  %v117 = vld [vmem:[%s1 + $0x120] sm:$0xff]
  %v118 = vld [vmem:[%s1 + $0x128] sm:$0xff]
  %v119 = vld [vmem:[%s1 + $0x130] sm:$0xff]
  %v120 = vld [vmem:[%s1 + $0x138] sm:$0xff]
  %v121 = vld [vmem:[%s1 + $0x140] sm:$0xff]
  %v122 = vld [vmem:[%s1 + $0x148] sm:$0xff]
  %v123 = vld [vmem:[%s1 + $0x150] sm:$0xff]
  %v124 = vld [vmem:[%s1 + $0x158] sm:$0xff]
  %v125 = vld [vmem:[%s1 + $0x160] sm:$0xff]
  %v126 = vld [vmem:[%s1 + $0x168] sm:$0xff]
  %v127 = vld [vmem:[%s1 + $0x170] sm:$0xff]
  %v128 = vld [vmem:[%s1 + $0x178] sm:$0xff]
  %v129 = vld [vmem:[%s1 + $0x180] sm:$0xff]
  %v130 = vld [vmem:[%s1 + $0x188] sm:$0xff]
  %v131 = vld [vmem:[%s1 + $0x190] sm:$0xff]
  %v132 = vld [vmem:[%s1 + $0x198] sm:$0xff]
  %v133 = vld [vmem:[%s1 + $0x1a0] sm:$0xff]
  %v134 = vld [vmem:[%s1 + $0x1a8] sm:$0xff]
  %v135 = vld [vmem:[%s1 + $0x1b0] sm:$0xff]
  %v136 = vld [vmem:[%s1 + $0x1b8] sm:$0xff]
  %v137 = vld [vmem:[%s1 + $0x1c0] sm:$0xff]
  %v138 = vld [vmem:[%s1 + $0x1c8] sm:$0xff]
  %v139 = vld [vmem:[%s1 + $0x1d0] sm:$0xff]
  %v140 = vld [vmem:[%s1 + $0x1d8] sm:$0xff]
  %v141 = vld [vmem:[%s1 + $0x1e0] sm:$0xff]
  %v142 = vld [vmem:[%s1 + $0x1e8] sm:$0xff]
  %v143 = vld [vmem:[%s1 + $0x1f0] sm:$0xff]
  %v144 = vld [vmem:[%s1 + $0x1f8] sm:$0xff]
  %vm145 = vcmp.eq.s32.totalorder %v53, %v56
  %vm146 = vcmp.eq.s32.totalorder %v54, %v56
  %v147 = vsel %vm145, 1, 0
  %v148 = vsel %vm146, 1, 0
  %v149 = vcvt.s32.f32 %v147
  %v150 = vcvt.s32.f32 %v148
  %v151 = vadd.s32 %v56, 2
  %vm152 = vcmp.eq.s32.totalorder %v53, %v151
  %vm153 = vcmp.eq.s32.totalorder %v54, %v151
  %v154 = vsel %vm152, 1, 0
  %v155 = vsel %vm153, 1, 0
  %v156 = vcvt.s32.f32 %v154
  %v157 = vcvt.s32.f32 %v155
  %v158 = vadd.s32 %v56, 4
  %vm159 = vcmp.eq.s32.totalorder %v53, %v158
  %vm160 = vcmp.eq.s32.totalorder %v54, %v158
  %v161 = vsel %vm159, 1, 0
  %v162 = vsel %vm160, 1, 0
  %v163 = vcvt.s32.f32 %v161
  %v164 = vcvt.s32.f32 %v162
  %v165 = vadd.s32 %v56, 6
  %vm166 = vcmp.eq.s32.totalorder %v53, %v165
  %vm167 = vcmp.eq.s32.totalorder %v54, %v165
  %v168 = vsel %vm166, 1, 0
  %v169 = vsel %vm167, 1, 0
  %v170 = vcvt.s32.f32 %v168
  %v171 = vcvt.s32.f32 %v169
  %v172 = vadd.s32 %v56, 8
  %vm173 = vcmp.eq.s32.totalorder %v53, %v172
  %vm174 = vcmp.eq.s32.totalorder %v54, %v172
  %v175 = vsel %vm173, 1, 0
  %v176 = vsel %vm174, 1, 0
  %v177 = vcvt.s32.f32 %v175
  %v178 = vcvt.s32.f32 %v176
  %v179 = vadd.s32 %v56, 10
  %vm180 = vcmp.eq.s32.totalorder %v53, %v179
  %vm181 = vcmp.eq.s32.totalorder %v54, %v179
  %v182 = vsel %vm180, 1, 0
  %v183 = vsel %vm181, 1, 0
  %v184 = vcvt.s32.f32 %v182
  %v185 = vcvt.s32.f32 %v183
  %v186 = vadd.s32 %v56, 12
  %vm187 = vcmp.eq.s32.totalorder %v53, %v186
  %vm188 = vcmp.eq.s32.totalorder %v54, %v186
  %v189 = vsel %vm187, 1, 0
  %v190 = vsel %vm188, 1, 0
  %v191 = vcvt.s32.f32 %v189
  %v192 = vcvt.s32.f32 %v190
  %v193 = vadd.s32 %v56, 14
  %vm194 = vcmp.eq.s32.totalorder %v53, %v193
  %vm195 = vcmp.eq.s32.totalorder %v54, %v193
  %v196 = vsel %vm194, 1, 0
  %v197 = vsel %vm195, 1, 0
  %v198 = vcvt.s32.f32 %v196
  %v199 = vcvt.s32.f32 %v197
  %v200 = vmul.f32 %v50, %v50
  %v201 = vmul.f32 %v51, %v51
  %vm202 = vcmask 261120
  %v203 = vsel %vm202, %v200, 0.0
  %204 = vadd.xlane.f32.xlu0 %v203
  %v205 = vpop.xlane.xlu0 %204
  %v206 = vsel %vm202, %v201, 0.0
  %207 = vadd.xlane.f32.xlu0 %v206
  %v208 = vpop.xlane.xlu0 %207
  %v209 = vrcp.pop 32.0
  %v210 = vmul.f32 32.0, %v209
  %v211 = vsub.f32 1.0, %v210
  %v212 = vmul.f32 %v209, %v211
  %v213 = vadd.f32 %v209, %v212
  %vm214 = vweird.f32 %v209
  %v215 = vsel %vm214, %v209, %v213
  %v216 = vmul.f32 %v205, %v215
  %v217 = vmul.f32 %v208, %v215
  %v218 = vadd.f32 %v216, 1e-05
  %v219 = vadd.f32 %v217, 1e-05
  %v220 = vrsqrt.pop %v218
  %v221 = vmul.f32 %v220, %v218
  %v222 = vmul.f32 %v221, %v220
  %v223 = vmul.f32 0.5, %v222
  %v224 = vsub.f32 1.5, %v223
  %v225 = vmul.f32 %v220, %v224
  %vm226 = vweird.f32 %v218
  %vm227 = vweird.f32 %v220
  %vm228 = vmor %vm226, %vm227
  %v229 = vsel %vm228, %v220, %v225
  %v230 = vrsqrt.pop %v219
  %v231 = vmul.f32 %v230, %v219
  %v232 = vmul.f32 %v231, %v230
  %v233 = vmul.f32 0.5, %v232
  %v234 = vsub.f32 1.5, %v233
  %v235 = vmul.f32 %v230, %v234
  %vm236 = vweird.f32 %v219
  %vm237 = vweird.f32 %v230
  %vm238 = vmor %vm236, %vm237
  %v239 = vsel %vm238, %v230, %v235
  %v240 = vmul.f32 %v50, %v229
  %v241 = vmul.f32 %v51, %v239
  %v242 = vld [vmem:[%s2] sm:$0x1]
  %v244 = vperm.slane %v242, 0
  %v246 = vmul.f32 %v240, %v244
  %v247 = vmul.f32 %v241, %v244
  %v248 = vld [vmem:[%s3] sm:$0xff]
  %v249 = vld [vmem:[%s3 + $0x8] sm:$0xff]
  %v250 = vld [vmem:[%s3 + $0x10] sm:$0xff]
  %v251 = vld [vmem:[%s3 + $0x18] sm:$0xff]
  %v252 = vld [vmem:[%s3 + $0x20] sm:$0xff]
  %v253 = vld [vmem:[%s3 + $0x28] sm:$0xff]
  %v254 = vld [vmem:[%s3 + $0x30] sm:$0xff]
  %v255 = vld [vmem:[%s3 + $0x38] sm:$0xff]
  %v257 = vsel %vm202, %v246, 0
  %v260 = vsel %vm202, %v247, 0
  %v263 = vsel %vm202, %v248, 0
  %v266 = vsel %vm202, %v249, 0
  %v269 = vsel %vm202, %v250, 0
  %v272 = vsel %vm202, %v251, 0
  %v275 = vsel %vm202, %v252, 0
  %v278 = vsel %vm202, %v253, 0
  %v281 = vsel %vm202, %v254, 0
  %v284 = vsel %vm202, %v255, 0
  %286 = vmatpush.xpose.msra.mxu0 0.0
  %287 = vmatpush.xpose.msra.mxu0 0.0
  %288 = vmatpush.xpose.msra.mxu0 0.0
  %289 = vmatpush.xpose.msra.mxu0 0.0
  %290 = vmatpush.xpose.msra.mxu0 0.0
  %291 = vmatpush.xpose.msra.mxu0 0.0
  %292 = vmatpush.xpose.msra.mxu0 0.0
  %293 = vmatpush.xpose.msra.mxu0 0.0
  %294 = vmatpush.xpose.msra.mxu0 %v284
  %295 = vmatpush.xpose.msra.mxu0 %v281
  %296 = vmatpush.xpose.msra.mxu0 %v278
  %297 = vmatpush.xpose.msra.mxu0 %v275
  %298 = vmatpush.xpose.msra.mxu0 %v272
  %299 = vmatpush.xpose.msra.mxu0 %v269
  %300 = vmatpush.xpose.msra.mxu0 %v266
  %301 = vmatpush.xpose.msra.mxu0 %v263
  %302 = vmatmul.f32.gmra.mxu0 %v257
  %v303 = vpop.f32.mrf.mxu0
  %v304 = vadd.f32 0.0, %v303
  %305 = vmatmul.f32.gmra.mxu0 %v260
  %v306 = vpop.f32.mrf.mxu0
  %v307 = vadd.f32 0.0, %v306
  %308 = vdwg.mxu0
  %v309 = vld [vmem:[%s4] sm:$0xff]
  %v310 = vld [vmem:[%s4 + $0x8] sm:$0xff]
  %v311 = vld [vmem:[%s4 + $0x10] sm:$0xff]
  %v312 = vld [vmem:[%s4 + $0x18] sm:$0xff]
  %v313 = vld [vmem:[%s4 + $0x20] sm:$0xff]
  %v314 = vld [vmem:[%s4 + $0x28] sm:$0xff]
  %v315 = vld [vmem:[%s4 + $0x30] sm:$0xff]
  %v316 = vld [vmem:[%s4 + $0x38] sm:$0xff]
  %v318 = vsel %vm202, %v309, 0
  %v321 = vsel %vm202, %v310, 0
  %v324 = vsel %vm202, %v311, 0
  %v327 = vsel %vm202, %v312, 0
  %v330 = vsel %vm202, %v313, 0
  %v333 = vsel %vm202, %v314, 0
  %v336 = vsel %vm202, %v315, 0
  %v339 = vsel %vm202, %v316, 0
  %341 = vmatpush.xpose.msra.mxu0 0.0
  %342 = vmatpush.xpose.msra.mxu0 0.0
  %343 = vmatpush.xpose.msra.mxu0 0.0
  %344 = vmatpush.xpose.msra.mxu0 0.0
  %345 = vmatpush.xpose.msra.mxu0 0.0
  %346 = vmatpush.xpose.msra.mxu0 0.0
  %347 = vmatpush.xpose.msra.mxu0 0.0
  %348 = vmatpush.xpose.msra.mxu0 0.0
  %349 = vmatpush.xpose.msra.mxu0 %v339
  %350 = vmatpush.xpose.msra.mxu0 %v336
  %351 = vmatpush.xpose.msra.mxu0 %v333
  %352 = vmatpush.xpose.msra.mxu0 %v330
  %353 = vmatpush.xpose.msra.mxu0 %v327
  %354 = vmatpush.xpose.msra.mxu0 %v324
  %355 = vmatpush.xpose.msra.mxu0 %v321
  %356 = vmatpush.xpose.msra.mxu0 %v318
  %357 = vmatmul.f32.gmra.mxu0 %v257
  %v358 = vpop.f32.mrf.mxu0
  %v359 = vadd.f32 0.0, %v358
  %360 = vmatmul.f32.gmra.mxu0 %v260
  %v361 = vpop.f32.mrf.mxu0
  %v362 = vadd.f32 0.0, %v361
  %363 = vdwg.mxu0
  %v364 = vld [vmem:[%s5] sm:$0xf]
  %v365 = vld [vmem:[%s6] sm:$0x1]
  %v366 = vperm.slane %v364, 3
  %v367 = vmul.f32 %v304, %v366
  %v368 = vmul.f32 %v307, %v366
  %v370 = vperm.slane %v365, 0
  %v372 = vadd.f32 %v370, %v367
  %v373 = vadd.f32 %v370, %v368
  %vm374 = vcmask 130048
  %v376 = vsel %vm374, %v63, 0
  %v379 = vsel %vm374, %v64, 0
  %381 = vmatpush.msra.mxu0 0.0
  %382 = vmatpush.msra.mxu0 0.0
  %383 = vmatpush.msra.mxu0 0.0
  %384 = vmatpush.msra.mxu0 0.0
  %385 = vmatpush.msra.mxu0 0.0
  %386 = vmatpush.msra.mxu0 0.0
  %387 = vmatpush.msra.mxu0 0.0
  %388 = vmatpush.msra.mxu0 0.0
  %389 = vmatpush.msra.mxu0 0.0
  %390 = vmatpush.msra.mxu0 0.0
  %391 = vmatpush.msra.mxu0 0.0
  %392 = vmatpush.msra.mxu0 0.0
  %393 = vmatpush.msra.mxu0 0.0
  %394 = vmatpush.msra.mxu0 0.0
  %395 = vmatpush.msra.mxu0 %v307
  %396 = vmatpush.msra.mxu0 %v304
  %397 = vmatmul.f32.gmra.mxu0 %v376
  %v398 = vpop.f32.mrf.mxu0
  %v399 = vadd.f32 0.0, %v398
  %400 = vmatmul.f32.gmra.mxu0 %v379
  %v401 = vpop.f32.mrf.mxu0
  %v402 = vadd.f32 0.0, %v401
  %403 = vdwg.mxu0
  %v404 = vperm.slane %v364, 2
  %v405 = vmul.f32 %v399, %v404
  %v406 = vmul.f32 %v402, %v404
  %v407 = vadd.f32 %v372, %v405
  %v408 = vadd.f32 %v373, %v406
  %v410 = vsel %vm374, %v71, 0
  %v413 = vsel %vm374, %v72, 0
  %415 = vmatpush.msra.mxu0 0.0
  %416 = vmatpush.msra.mxu0 0.0
  %417 = vmatpush.msra.mxu0 0.0
  %418 = vmatpush.msra.mxu0 0.0
  %419 = vmatpush.msra.mxu0 0.0
  %420 = vmatpush.msra.mxu0 0.0
  %421 = vmatpush.msra.mxu0 0.0
  %422 = vmatpush.msra.mxu0 0.0
  %423 = vmatpush.msra.mxu0 0.0
  %424 = vmatpush.msra.mxu0 0.0
  %425 = vmatpush.msra.mxu0 0.0
  %426 = vmatpush.msra.mxu0 0.0
  %427 = vmatpush.msra.mxu0 0.0
  %428 = vmatpush.msra.mxu0 0.0
  %429 = vmatpush.msra.mxu0 %v307
  %430 = vmatpush.msra.mxu0 %v304
  %431 = vmatmul.f32.gmra.mxu0 %v410
  %v432 = vpop.f32.mrf.mxu0
  %v433 = vadd.f32 0.0, %v432
  %434 = vmatmul.f32.gmra.mxu0 %v413
  %v435 = vpop.f32.mrf.mxu0
  %v436 = vadd.f32 0.0, %v435
  %437 = vdwg.mxu0
  %v438 = vperm.slane %v364, 1
  %v439 = vmul.f32 %v433, %v438
  %v440 = vmul.f32 %v436, %v438
  %v441 = vadd.f32 %v407, %v439
  %v442 = vadd.f32 %v408, %v440
  %v444 = vsel %vm374, %v79, 0
  %v447 = vsel %vm374, %v80, 0
  %449 = vmatpush.msra.mxu0 0.0
  %450 = vmatpush.msra.mxu0 0.0
  %451 = vmatpush.msra.mxu0 0.0
  %452 = vmatpush.msra.mxu0 0.0
  %453 = vmatpush.msra.mxu0 0.0
  %454 = vmatpush.msra.mxu0 0.0
  %455 = vmatpush.msra.mxu0 0.0
  %456 = vmatpush.msra.mxu0 0.0
  %457 = vmatpush.msra.mxu0 0.0
  %458 = vmatpush.msra.mxu0 0.0
  %459 = vmatpush.msra.mxu0 0.0
  %460 = vmatpush.msra.mxu0 0.0
  %461 = vmatpush.msra.mxu0 0.0
  %462 = vmatpush.msra.mxu0 0.0
  %463 = vmatpush.msra.mxu0 %v307
  %464 = vmatpush.msra.mxu0 %v304
  %465 = vmatmul.f32.gmra.mxu0 %v444
  %v466 = vpop.f32.mrf.mxu0
  %v467 = vadd.f32 0.0, %v466
  %468 = vmatmul.f32.gmra.mxu0 %v447
  %v469 = vpop.f32.mrf.mxu0
  %v470 = vadd.f32 0.0, %v469
  %471 = vdwg.mxu0
  %v472 = vperm.slane %v364, 0
  %v473 = vmul.f32 %v467, %v472
  %v474 = vmul.f32 %v470, %v472
  %v475 = vadd.f32 %v441, %v473
  %v476 = vadd.f32 %v442, %v474
  %v477 = vsub.f32 0.0, %v475
  %v478 = vsub.f32 0.0, %v476
  %v479 = vmul.f32 %v477, 1.442695
  %v480 = vpow.pop %v479
  %v481 = vmul.f32 %v478, 1.442695
  %v482 = vpow.pop %v481
  %v483 = vadd.f32 %v480, 1.0
  %v484 = vadd.f32 %v482, 1.0
  %v485 = vrcp.pop %v483
  %v486 = vmul.f32 %v483, %v485
  %v487 = vsub.f32 1.0, %v486
  %v488 = vmul.f32 %v485, %v487
  %v489 = vadd.f32 %v485, %v488
  %vm490 = vweird.f32 %v483
  %vm491 = vweird.f32 %v485
  %vm492 = vmor %vm490, %vm491
  %v493 = vsel %vm492, %v485, %v489
  %v494 = vand.u32 2147483647, %v483
  %vm495 = vcmp.eq.f32.partialorder %v494, 8.507059e+37
  %v496 = vand.u32 %v483, 2147483648
  %v497 = vor.u32 1.1754944e-38, %v496
  %v498 = vsel %vm495, %v497, %v493
  %v499 = vmul.f32 1.0, %v498
  %v500 = vrcp.pop %v484
  %v501 = vmul.f32 %v484, %v500
  %v502 = vsub.f32 1.0, %v501
  %v503 = vmul.f32 %v500, %v502
  %v504 = vadd.f32 %v500, %v503
  %vm505 = vweird.f32 %v484
  %vm506 = vweird.f32 %v500
  %vm507 = vmor %vm505, %vm506
  %v508 = vsel %vm507, %v500, %v504
  %v509 = vand.u32 2147483647, %v484
  %vm510 = vcmp.eq.f32.partialorder %v509, 8.507059e+37
  %v511 = vand.u32 %v484, 2147483648
  %v512 = vor.u32 1.1754944e-38, %v511
  %v513 = vsel %vm510, %v512, %v508
  %v514 = vmul.f32 1.0, %v513
  %v515 = vmul.f32 %v475, %v499
  %v516 = vmul.f32 %v476, %v514
  %v517 = vld [vmem:[%s7] sm:$0x3]
  %vm518 = vcmask 523264
  %v520 = vsel %vm518, %v515, 0
  %v523 = vsel %vm518, %v516, 0
  %v526 = vsel %vm518, %v517, 0
  %528 = vmatpush.xpose.msra.mxu0 0.0
  %529 = vmatpush.xpose.msra.mxu0 0.0
  %530 = vmatpush.xpose.msra.mxu0 0.0
  %531 = vmatpush.xpose.msra.mxu0 0.0
  %532 = vmatpush.xpose.msra.mxu0 0.0
  %533 = vmatpush.xpose.msra.mxu0 0.0
  %534 = vmatpush.xpose.msra.mxu0 0.0
  %535 = vmatpush.xpose.msra.mxu0 0.0
  %536 = vmatpush.xpose.msra.mxu0 0.0
  %537 = vmatpush.xpose.msra.mxu0 0.0
  %538 = vmatpush.xpose.msra.mxu0 0.0
  %539 = vmatpush.xpose.msra.mxu0 0.0
  %540 = vmatpush.xpose.msra.mxu0 0.0
  %541 = vmatpush.xpose.msra.mxu0 0.0
  %542 = vmatpush.xpose.msra.mxu0 0.0
  %543 = vmatpush.xpose.msra.mxu0 %v526
  %544 = vmatmul.f32.gmra.mxu0 %v520
  %v545 = vpop.f32.mrf.mxu0
  %v546 = vadd.f32 0.0, %v545
  %547 = vmatmul.f32.gmra.mxu0 %v523
  %v548 = vpop.f32.mrf.mxu0
  %v549 = vadd.f32 0.0, %v548
  %550 = vdwg.mxu0
  %v551 = vld [vmem:[%s8] sm:$0x3]
  %v552 = vld [vmem:[%s9] sm:$0x1]
  %554 = vset.pattern.permute.xlu0 0
  %555 = vperm.xlu0 %554, %v546
  %v556 = vpop.permute.xlu0 %555
  %559 = vset.pattern.permute.xlu0 0
  %560 = vperm.xlu0 %559, %v549
  %v561 = vpop.permute.xlu0 %560
  %v563 = vperm.slane %v551, 0
  %v564 = vmul.f32 %v556, %v563
  %v565 = vmul.f32 %v561, %v563
  %v567 = vperm.slane %v552, 0
  %v569 = vadd.f32 %v567, %v564
  %v570 = vadd.f32 %v567, %v565
  %571 = vset.pattern.permute.xlu0 1
  %572 = vperm.xlu0 %571, %v546
  %v573 = vpop.permute.xlu0 %572
  %575 = vset.pattern.permute.xlu0 1
  %576 = vperm.xlu0 %575, %v549
  %v577 = vpop.permute.xlu0 %576
  %v579 = vperm.slane %v551, 1
  %v580 = vmul.f32 %v573, %v579
  %v581 = vmul.f32 %v577, %v579
  %v582 = vadd.f32 %v569, %v580
  %v583 = vadd.f32 %v570, %v581
  %v584 = vmax.f32 %v582, 0.0
  %v585 = vmax.f32 %v583, 0.0
  %v586 = vand.u32 2147483647, %v582
  %v587 = vand.u32 2147483647, %v583
  %v588 = vsub.f32 0.0, %v586
  %v589 = vsub.f32 0.0, %v587
  %v590 = vmul.f32 %v588, 1.442695
  %v591 = vpow.pop %v590
  %v592 = vmul.f32 %v589, 1.442695
  %v593 = vpow.pop %v592
  %v594 = vadd.f32 %v591, 1.0
  %v595 = vlog2.pop %v594
  %v596 = vmul.f32 %v595, 0.6931472
  %v597 = vmul.f32 -0.5, %v591
  %v598 = vadd.f32 %v597, 1.0
  %v599 = vmul.f32 %v598, %v591
  %v600 = vand.u32 2147483647, %v591
  %vm601 = vcmp.lt.f32.partialorder %v600, 0.0004427343
  %v602 = vsel %vm601, %v599, %v596
  %v603 = vadd.f32 %v593, 1.0
  %v604 = vlog2.pop %v603
  %v605 = vmul.f32 %v604, 0.6931472
  %v606 = vmul.f32 -0.5, %v593
  %v607 = vadd.f32 %v606, 1.0
  %v608 = vmul.f32 %v607, %v593
  %v609 = vand.u32 2147483647, %v593
  %vm610 = vcmp.lt.f32.partialorder %v609, 0.0004427343
  %v611 = vsel %vm610, %v608, %v605
  %v612 = vadd.f32 %v584, %v602
  %v613 = vadd.f32 %v585, %v611
  %v615 = vsel %vm518, %v612, 0
  %v618 = vsel %vm518, %v613, 0
  %620 = vmatpush.msra.mxu0 0.0
  %621 = vmatpush.msra.mxu0 0.0
  %622 = vmatpush.msra.mxu0 0.0
  %623 = vmatpush.msra.mxu0 0.0
  %624 = vmatpush.msra.mxu0 0.0
  %625 = vmatpush.msra.mxu0 0.0
  %626 = vmatpush.msra.mxu0 0.0
  %627 = vmatpush.msra.mxu0 0.0
  %628 = vmatpush.msra.mxu0 %v137
  %629 = vmatpush.msra.mxu0 %v129
  %630 = vmatpush.msra.mxu0 %v121
  %631 = vmatpush.msra.mxu0 %v113
  %632 = vmatpush.msra.mxu0 %v105
  %633 = vmatpush.msra.mxu0 %v97
  %634 = vmatpush.msra.mxu0 %v89
  %635 = vmatpush.msra.mxu0 %v81
  %636 = vmatmul.f32.gmra.mxu0 %v615
  %v637 = vpop.f32.mrf.mxu0
  %v638 = vadd.f32 0.0, %v637
  %639 = vmatmul.f32.gmra.mxu0 %v618
  %v640 = vpop.f32.mrf.mxu0
  %v641 = vadd.f32 0.0, %v640
  %642 = vdwg.mxu0
  %643 = vmatpush.msra.mxu0 0.0
  %644 = vmatpush.msra.mxu0 0.0
  %645 = vmatpush.msra.mxu0 0.0
  %646 = vmatpush.msra.mxu0 0.0
  %647 = vmatpush.msra.mxu0 0.0
  %648 = vmatpush.msra.mxu0 0.0
  %649 = vmatpush.msra.mxu0 0.0
  %650 = vmatpush.msra.mxu0 0.0
  %651 = vmatpush.msra.mxu0 %v138
  %652 = vmatpush.msra.mxu0 %v130
  %653 = vmatpush.msra.mxu0 %v122
  %654 = vmatpush.msra.mxu0 %v114
  %655 = vmatpush.msra.mxu0 %v106
  %656 = vmatpush.msra.mxu0 %v98
  %657 = vmatpush.msra.mxu0 %v90
  %658 = vmatpush.msra.mxu0 %v82
  %659 = vmatmul.f32.gmra.mxu0 %v615
  %v660 = vpop.f32.mrf.mxu0
  %v661 = vadd.f32 0.0, %v660
  %662 = vmatmul.f32.gmra.mxu0 %v618
  %v663 = vpop.f32.mrf.mxu0
  %v664 = vadd.f32 0.0, %v663
  %665 = vdwg.mxu0
  %666 = vmatpush.msra.mxu0 0.0
  %667 = vmatpush.msra.mxu0 0.0
  %668 = vmatpush.msra.mxu0 0.0
  %669 = vmatpush.msra.mxu0 0.0
  %670 = vmatpush.msra.mxu0 0.0
  %671 = vmatpush.msra.mxu0 0.0
  %672 = vmatpush.msra.mxu0 0.0
  %673 = vmatpush.msra.mxu0 0.0
  %674 = vmatpush.msra.mxu0 %v139
  %675 = vmatpush.msra.mxu0 %v131
  %676 = vmatpush.msra.mxu0 %v123
  %677 = vmatpush.msra.mxu0 %v115
  %678 = vmatpush.msra.mxu0 %v107
  %679 = vmatpush.msra.mxu0 %v99
  %680 = vmatpush.msra.mxu0 %v91
  %681 = vmatpush.msra.mxu0 %v83
  %682 = vmatmul.f32.gmra.mxu0 %v615
  %v683 = vpop.f32.mrf.mxu0
  %v684 = vadd.f32 0.0, %v683
  %685 = vmatmul.f32.gmra.mxu0 %v618
  %v686 = vpop.f32.mrf.mxu0
  %v687 = vadd.f32 0.0, %v686
  %688 = vdwg.mxu0
  %689 = vmatpush.msra.mxu0 0.0
  %690 = vmatpush.msra.mxu0 0.0
  %691 = vmatpush.msra.mxu0 0.0
  %692 = vmatpush.msra.mxu0 0.0
  %693 = vmatpush.msra.mxu0 0.0
  %694 = vmatpush.msra.mxu0 0.0
  %695 = vmatpush.msra.mxu0 0.0
  %696 = vmatpush.msra.mxu0 0.0
  %697 = vmatpush.msra.mxu0 %v140
  %698 = vmatpush.msra.mxu0 %v132
  %699 = vmatpush.msra.mxu0 %v124
  %700 = vmatpush.msra.mxu0 %v116
  %701 = vmatpush.msra.mxu0 %v108
  %702 = vmatpush.msra.mxu0 %v100
  %703 = vmatpush.msra.mxu0 %v92
  %704 = vmatpush.msra.mxu0 %v84
  %705 = vmatmul.f32.gmra.mxu0 %v615
  %v706 = vpop.f32.mrf.mxu0
  %v707 = vadd.f32 0.0, %v706
  %708 = vmatmul.f32.gmra.mxu0 %v618
  %v709 = vpop.f32.mrf.mxu0
  %v710 = vadd.f32 0.0, %v709
  %711 = vdwg.mxu0
  %712 = vmatpush.msra.mxu0 0.0
  %713 = vmatpush.msra.mxu0 0.0
  %714 = vmatpush.msra.mxu0 0.0
  %715 = vmatpush.msra.mxu0 0.0
  %716 = vmatpush.msra.mxu0 0.0
  %717 = vmatpush.msra.mxu0 0.0
  %718 = vmatpush.msra.mxu0 0.0
  %719 = vmatpush.msra.mxu0 0.0
  %720 = vmatpush.msra.mxu0 %v141
  %721 = vmatpush.msra.mxu0 %v133
  %722 = vmatpush.msra.mxu0 %v125
  %723 = vmatpush.msra.mxu0 %v117
  %724 = vmatpush.msra.mxu0 %v109
  %725 = vmatpush.msra.mxu0 %v101
  %726 = vmatpush.msra.mxu0 %v93
  %727 = vmatpush.msra.mxu0 %v85
  %728 = vmatmul.f32.gmra.mxu0 %v615
  %v729 = vpop.f32.mrf.mxu0
  %v730 = vadd.f32 0.0, %v729
  %731 = vmatmul.f32.gmra.mxu0 %v618
  %v732 = vpop.f32.mrf.mxu0
  %v733 = vadd.f32 0.0, %v732
  %734 = vdwg.mxu0
  %735 = vmatpush.msra.mxu0 0.0
  %736 = vmatpush.msra.mxu0 0.0
  %737 = vmatpush.msra.mxu0 0.0
  %738 = vmatpush.msra.mxu0 0.0
  %739 = vmatpush.msra.mxu0 0.0
  %740 = vmatpush.msra.mxu0 0.0
  %741 = vmatpush.msra.mxu0 0.0
  %742 = vmatpush.msra.mxu0 0.0
  %743 = vmatpush.msra.mxu0 %v142
  %744 = vmatpush.msra.mxu0 %v134
  %745 = vmatpush.msra.mxu0 %v126
  %746 = vmatpush.msra.mxu0 %v118
  %747 = vmatpush.msra.mxu0 %v110
  %748 = vmatpush.msra.mxu0 %v102
  %749 = vmatpush.msra.mxu0 %v94
  %750 = vmatpush.msra.mxu0 %v86
  %751 = vmatmul.f32.gmra.mxu0 %v615
  %v752 = vpop.f32.mrf.mxu0
  %v753 = vadd.f32 0.0, %v752
  %754 = vmatmul.f32.gmra.mxu0 %v618
  %v755 = vpop.f32.mrf.mxu0
  %v756 = vadd.f32 0.0, %v755
  %757 = vdwg.mxu0
  %758 = vmatpush.msra.mxu0 0.0
  %759 = vmatpush.msra.mxu0 0.0
  %760 = vmatpush.msra.mxu0 0.0
  %761 = vmatpush.msra.mxu0 0.0
  %762 = vmatpush.msra.mxu0 0.0
  %763 = vmatpush.msra.mxu0 0.0
  %764 = vmatpush.msra.mxu0 0.0
  %765 = vmatpush.msra.mxu0 0.0
  %766 = vmatpush.msra.mxu0 %v143
  %767 = vmatpush.msra.mxu0 %v135
  %768 = vmatpush.msra.mxu0 %v127
  %769 = vmatpush.msra.mxu0 %v119
  %770 = vmatpush.msra.mxu0 %v111
  %771 = vmatpush.msra.mxu0 %v103
  %772 = vmatpush.msra.mxu0 %v95
  %773 = vmatpush.msra.mxu0 %v87
  %774 = vmatmul.f32.gmra.mxu0 %v615
  %v775 = vpop.f32.mrf.mxu0
  %v776 = vadd.f32 0.0, %v775
  %777 = vmatmul.f32.gmra.mxu0 %v618
  %v778 = vpop.f32.mrf.mxu0
  %v779 = vadd.f32 0.0, %v778
  %780 = vdwg.mxu0
  %781 = vmatpush.msra.mxu0 0.0
  %782 = vmatpush.msra.mxu0 0.0
  %783 = vmatpush.msra.mxu0 0.0
  %784 = vmatpush.msra.mxu0 0.0
  %785 = vmatpush.msra.mxu0 0.0
  %786 = vmatpush.msra.mxu0 0.0
  %787 = vmatpush.msra.mxu0 0.0
  %788 = vmatpush.msra.mxu0 0.0
  %789 = vmatpush.msra.mxu0 %v144
  %790 = vmatpush.msra.mxu0 %v136
  %791 = vmatpush.msra.mxu0 %v128
  %792 = vmatpush.msra.mxu0 %v120
  %793 = vmatpush.msra.mxu0 %v112
  %794 = vmatpush.msra.mxu0 %v104
  %795 = vmatpush.msra.mxu0 %v96
  %796 = vmatpush.msra.mxu0 %v88
  %797 = vmatmul.f32.gmra.mxu0 %v615
  %v798 = vpop.f32.mrf.mxu0
  %v799 = vadd.f32 0.0, %v798
  %800 = vmatmul.f32.gmra.mxu0 %v618
  %v801 = vpop.f32.mrf.mxu0
  %v802 = vadd.f32 0.0, %v801
  %803 = vdwg.mxu0
  %v804 = vld [vmem:[%s12] sm:$0xff]
  %v806 = vperm.slane %v804, 0
  %v807 = vperm.slane %v804, 1
  %v808 = vperm.slane %v804, 2
  %v809 = vperm.slane %v804, 3
  %v810 = vperm.slane %v804, 4
  %v811 = vperm.slane %v804, 5
  %v812 = vperm.slane %v804, 6
  %v813 = vperm.slane %v804, 7
  %v822 = vmul.f32 %v638, %v806
  %v823 = vmul.f32 %v661, %v807
  %v824 = vmul.f32 %v684, %v808
  %v825 = vmul.f32 %v707, %v809
  %v826 = vmul.f32 %v730, %v810
  %v827 = vmul.f32 %v753, %v811
  %v828 = vmul.f32 %v776, %v812
  %v829 = vmul.f32 %v799, %v813
  %v830 = vmul.f32 %v641, %v806
  %v831 = vmul.f32 %v664, %v807
  %v832 = vmul.f32 %v687, %v808
  %v833 = vmul.f32 %v710, %v809
  %v834 = vmul.f32 %v733, %v810
  %v835 = vmul.f32 %v756, %v811
  %v836 = vmul.f32 %v779, %v812
  %v837 = vmul.f32 %v802, %v813
  %v838 = vmul.f32 %v822, 1.442695
  %v839 = vpow.pop %v838
  %v840 = vmul.f32 %v823, 1.442695
  %v841 = vpow.pop %v840
  %v842 = vmul.f32 %v824, 1.442695
  %v843 = vpow.pop %v842
  %v844 = vmul.f32 %v825, 1.442695
  %v845 = vpow.pop %v844
  %v846 = vmul.f32 %v826, 1.442695
  %v847 = vpow.pop %v846
  %v848 = vmul.f32 %v827, 1.442695
  %v849 = vpow.pop %v848
  %v850 = vmul.f32 %v828, 1.442695
  %v851 = vpow.pop %v850
  %v852 = vmul.f32 %v829, 1.442695
  %v853 = vpow.pop %v852
  %v854 = vmul.f32 %v830, 1.442695
  %v855 = vpow.pop %v854
  %v856 = vmul.f32 %v831, 1.442695
  %v857 = vpow.pop %v856
  %v858 = vmul.f32 %v832, 1.442695
  %v859 = vpow.pop %v858
  %v860 = vmul.f32 %v833, 1.442695
  %v861 = vpow.pop %v860
  %v862 = vmul.f32 %v834, 1.442695
  %v863 = vpow.pop %v862
  %v864 = vmul.f32 %v835, 1.442695
  %v865 = vpow.pop %v864
  %v866 = vmul.f32 %v836, 1.442695
  %v867 = vpow.pop %v866
  %v868 = vmul.f32 %v837, 1.442695
  %v869 = vpow.pop %v868
  %v870 = vmul.f32 %v612, %v515
  %v871 = vmul.f32 %v613, %v516
  %v873 = vsel %vm518, %v870, 0
  %v876 = vsel %vm518, %v871, 0
  %878 = vmatpush.msra.mxu0 0.0
  %879 = vmatpush.msra.mxu0 0.0
  %880 = vmatpush.msra.mxu0 0.0
  %881 = vmatpush.msra.mxu0 0.0
  %882 = vmatpush.msra.mxu0 0.0
  %883 = vmatpush.msra.mxu0 0.0
  %884 = vmatpush.msra.mxu0 0.0
  %885 = vmatpush.msra.mxu0 0.0
  %886 = vmatpush.msra.mxu0 %v137
  %887 = vmatpush.msra.mxu0 %v129
  %888 = vmatpush.msra.mxu0 %v121
  %889 = vmatpush.msra.mxu0 %v113
  %890 = vmatpush.msra.mxu0 %v105
  %891 = vmatpush.msra.mxu0 %v97
  %892 = vmatpush.msra.mxu0 %v89
  %893 = vmatpush.msra.mxu0 %v81
  %894 = vmatmul.f32.gmra.mxu0 %v873
  %v895 = vpop.f32.mrf.mxu0
  %v896 = vadd.f32 0.0, %v895
  %897 = vmatmul.f32.gmra.mxu0 %v876
  %v898 = vpop.f32.mrf.mxu0
  %v899 = vadd.f32 0.0, %v898
  %900 = vdwg.mxu0
  %901 = vmatpush.msra.mxu0 0.0
  %902 = vmatpush.msra.mxu0 0.0
  %903 = vmatpush.msra.mxu0 0.0
  %904 = vmatpush.msra.mxu0 0.0
  %905 = vmatpush.msra.mxu0 0.0
  %906 = vmatpush.msra.mxu0 0.0
  %907 = vmatpush.msra.mxu0 0.0
  %908 = vmatpush.msra.mxu0 0.0
  %909 = vmatpush.msra.mxu0 %v138
  %910 = vmatpush.msra.mxu0 %v130
  %911 = vmatpush.msra.mxu0 %v122
  %912 = vmatpush.msra.mxu0 %v114
  %913 = vmatpush.msra.mxu0 %v106
  %914 = vmatpush.msra.mxu0 %v98
  %915 = vmatpush.msra.mxu0 %v90
  %916 = vmatpush.msra.mxu0 %v82
  %917 = vmatmul.f32.gmra.mxu0 %v873
  %v918 = vpop.f32.mrf.mxu0
  %v919 = vadd.f32 0.0, %v918
  %920 = vmatmul.f32.gmra.mxu0 %v876
  %v921 = vpop.f32.mrf.mxu0
  %v922 = vadd.f32 0.0, %v921
  %923 = vdwg.mxu0
  %924 = vmatpush.msra.mxu0 0.0
  %925 = vmatpush.msra.mxu0 0.0
  %926 = vmatpush.msra.mxu0 0.0
  %927 = vmatpush.msra.mxu0 0.0
  %928 = vmatpush.msra.mxu0 0.0
  %929 = vmatpush.msra.mxu0 0.0
  %930 = vmatpush.msra.mxu0 0.0
  %931 = vmatpush.msra.mxu0 0.0
  %932 = vmatpush.msra.mxu0 %v139
  %933 = vmatpush.msra.mxu0 %v131
  %934 = vmatpush.msra.mxu0 %v123
  %935 = vmatpush.msra.mxu0 %v115
  %936 = vmatpush.msra.mxu0 %v107
  %937 = vmatpush.msra.mxu0 %v99
  %938 = vmatpush.msra.mxu0 %v91
  %939 = vmatpush.msra.mxu0 %v83
  %940 = vmatmul.f32.gmra.mxu0 %v873
  %v941 = vpop.f32.mrf.mxu0
  %v942 = vadd.f32 0.0, %v941
  %943 = vmatmul.f32.gmra.mxu0 %v876
  %v944 = vpop.f32.mrf.mxu0
  %v945 = vadd.f32 0.0, %v944
  %946 = vdwg.mxu0
  %947 = vmatpush.msra.mxu0 0.0
  %948 = vmatpush.msra.mxu0 0.0
  %949 = vmatpush.msra.mxu0 0.0
  %950 = vmatpush.msra.mxu0 0.0
  %951 = vmatpush.msra.mxu0 0.0
  %952 = vmatpush.msra.mxu0 0.0
  %953 = vmatpush.msra.mxu0 0.0
  %954 = vmatpush.msra.mxu0 0.0
  %955 = vmatpush.msra.mxu0 %v140
  %956 = vmatpush.msra.mxu0 %v132
  %957 = vmatpush.msra.mxu0 %v124
  %958 = vmatpush.msra.mxu0 %v116
  %959 = vmatpush.msra.mxu0 %v108
  %960 = vmatpush.msra.mxu0 %v100
  %961 = vmatpush.msra.mxu0 %v92
  %962 = vmatpush.msra.mxu0 %v84
  %963 = vmatmul.f32.gmra.mxu0 %v873
  %v964 = vpop.f32.mrf.mxu0
  %v965 = vadd.f32 0.0, %v964
  %966 = vmatmul.f32.gmra.mxu0 %v876
  %v967 = vpop.f32.mrf.mxu0
  %v968 = vadd.f32 0.0, %v967
  %969 = vdwg.mxu0
  %970 = vmatpush.msra.mxu0 0.0
  %971 = vmatpush.msra.mxu0 0.0
  %972 = vmatpush.msra.mxu0 0.0
  %973 = vmatpush.msra.mxu0 0.0
  %974 = vmatpush.msra.mxu0 0.0
  %975 = vmatpush.msra.mxu0 0.0
  %976 = vmatpush.msra.mxu0 0.0
  %977 = vmatpush.msra.mxu0 0.0
  %978 = vmatpush.msra.mxu0 %v141
  %979 = vmatpush.msra.mxu0 %v133
  %980 = vmatpush.msra.mxu0 %v125
  %981 = vmatpush.msra.mxu0 %v117
  %982 = vmatpush.msra.mxu0 %v109
  %983 = vmatpush.msra.mxu0 %v101
  %984 = vmatpush.msra.mxu0 %v93
  %985 = vmatpush.msra.mxu0 %v85
  %986 = vmatmul.f32.gmra.mxu0 %v873
  %v987 = vpop.f32.mrf.mxu0
  %v988 = vadd.f32 0.0, %v987
  %989 = vmatmul.f32.gmra.mxu0 %v876
  %v990 = vpop.f32.mrf.mxu0
  %v991 = vadd.f32 0.0, %v990
  %992 = vdwg.mxu0
  %993 = vmatpush.msra.mxu0 0.0
  %994 = vmatpush.msra.mxu0 0.0
  %995 = vmatpush.msra.mxu0 0.0
  %996 = vmatpush.msra.mxu0 0.0
  %997 = vmatpush.msra.mxu0 0.0
  %998 = vmatpush.msra.mxu0 0.0
  %999 = vmatpush.msra.mxu0 0.0
  %1000 = vmatpush.msra.mxu0 0.0
  %1001 = vmatpush.msra.mxu0 %v142
  %1002 = vmatpush.msra.mxu0 %v134
  %1003 = vmatpush.msra.mxu0 %v126
  %1004 = vmatpush.msra.mxu0 %v118
  %1005 = vmatpush.msra.mxu0 %v110
  %1006 = vmatpush.msra.mxu0 %v102
  %1007 = vmatpush.msra.mxu0 %v94
  %1008 = vmatpush.msra.mxu0 %v86
  %1009 = vmatmul.f32.gmra.mxu0 %v873
  %v1010 = vpop.f32.mrf.mxu0
  %v1011 = vadd.f32 0.0, %v1010
  %1012 = vmatmul.f32.gmra.mxu0 %v876
  %v1013 = vpop.f32.mrf.mxu0
  %v1014 = vadd.f32 0.0, %v1013
  %1015 = vdwg.mxu0
  %1016 = vmatpush.msra.mxu0 0.0
  %1017 = vmatpush.msra.mxu0 0.0
  %1018 = vmatpush.msra.mxu0 0.0
  %1019 = vmatpush.msra.mxu0 0.0
  %1020 = vmatpush.msra.mxu0 0.0
  %1021 = vmatpush.msra.mxu0 0.0
  %1022 = vmatpush.msra.mxu0 0.0
  %1023 = vmatpush.msra.mxu0 0.0
  %1024 = vmatpush.msra.mxu0 %v143
  %1025 = vmatpush.msra.mxu0 %v135
  %1026 = vmatpush.msra.mxu0 %v127
  %1027 = vmatpush.msra.mxu0 %v119
  %1028 = vmatpush.msra.mxu0 %v111
  %1029 = vmatpush.msra.mxu0 %v103
  %1030 = vmatpush.msra.mxu0 %v95
  %1031 = vmatpush.msra.mxu0 %v87
  %1032 = vmatmul.f32.gmra.mxu0 %v873
  %v1033 = vpop.f32.mrf.mxu0
  %v1034 = vadd.f32 0.0, %v1033
  %1035 = vmatmul.f32.gmra.mxu0 %v876
  %v1036 = vpop.f32.mrf.mxu0
  %v1037 = vadd.f32 0.0, %v1036
  %1038 = vdwg.mxu0
  %1039 = vmatpush.msra.mxu0 0.0
  %1040 = vmatpush.msra.mxu0 0.0
  %1041 = vmatpush.msra.mxu0 0.0
  %1042 = vmatpush.msra.mxu0 0.0
  %1043 = vmatpush.msra.mxu0 0.0
  %1044 = vmatpush.msra.mxu0 0.0
  %1045 = vmatpush.msra.mxu0 0.0
  %1046 = vmatpush.msra.mxu0 0.0
  %1047 = vmatpush.msra.mxu0 %v144
  %1048 = vmatpush.msra.mxu0 %v136
  %1049 = vmatpush.msra.mxu0 %v128
  %1050 = vmatpush.msra.mxu0 %v120
  %1051 = vmatpush.msra.mxu0 %v112
  %1052 = vmatpush.msra.mxu0 %v104
  %1053 = vmatpush.msra.mxu0 %v96
  %1054 = vmatpush.msra.mxu0 %v88
  %1055 = vmatmul.f32.gmra.mxu0 %v873
  %v1056 = vpop.f32.mrf.mxu0
  %v1057 = vadd.f32 0.0, %v1056
  %1058 = vmatmul.f32.gmra.mxu0 %v876
  %v1059 = vpop.f32.mrf.mxu0
  %v1060 = vadd.f32 0.0, %v1059
  %1061 = vdwg.mxu0
  %v1062 = vld [vmem:[%s10] sm:$0xff]
  %v1063 = vld [vmem:[%s10 + $0x8] sm:$0xff]
  %v1064 = vld [vmem:[%s10 + $0x10] sm:$0xff]
  %v1065 = vld [vmem:[%s10 + $0x18] sm:$0xff]
  %v1066 = vld [vmem:[%s10 + $0x20] sm:$0xff]
  %v1067 = vld [vmem:[%s10 + $0x28] sm:$0xff]
  %v1068 = vld [vmem:[%s10 + $0x30] sm:$0xff]
  %v1069 = vld [vmem:[%s10 + $0x38] sm:$0xff]
  %v1070 = vld [vmem:[%s10 + $0x40] sm:$0xff]
  %v1071 = vld [vmem:[%s10 + $0x48] sm:$0xff]
  %v1072 = vld [vmem:[%s10 + $0x50] sm:$0xff]
  %v1073 = vld [vmem:[%s10 + $0x58] sm:$0xff]
  %v1074 = vld [vmem:[%s10 + $0x60] sm:$0xff]
  %v1075 = vld [vmem:[%s10 + $0x68] sm:$0xff]
  %v1076 = vld [vmem:[%s10 + $0x70] sm:$0xff]
  %v1077 = vld [vmem:[%s10 + $0x78] sm:$0xff]
  %v1078 = vld [vmem:[%s10 + $0x80] sm:$0xff]
  %v1079 = vld [vmem:[%s10 + $0x88] sm:$0xff]
  %v1080 = vld [vmem:[%s10 + $0x90] sm:$0xff]
  %v1081 = vld [vmem:[%s10 + $0x98] sm:$0xff]
  %v1082 = vld [vmem:[%s10 + $0xa0] sm:$0xff]
  %v1083 = vld [vmem:[%s10 + $0xa8] sm:$0xff]
  %v1084 = vld [vmem:[%s10 + $0xb0] sm:$0xff]
  %v1085 = vld [vmem:[%s10 + $0xb8] sm:$0xff]
  %v1086 = vld [vmem:[%s10 + $0xc0] sm:$0xff]
  %v1087 = vld [vmem:[%s10 + $0xc8] sm:$0xff]
  %v1088 = vld [vmem:[%s10 + $0xd0] sm:$0xff]
  %v1089 = vld [vmem:[%s10 + $0xd8] sm:$0xff]
  %v1090 = vld [vmem:[%s10 + $0xe0] sm:$0xff]
  %v1091 = vld [vmem:[%s10 + $0xe8] sm:$0xff]
  %v1092 = vld [vmem:[%s10 + $0xf0] sm:$0xff]
  %v1093 = vld [vmem:[%s10 + $0xf8] sm:$0xff]
  %v1094 = vld [vmem:[%s10 + $0x100] sm:$0xff]
  %v1095 = vld [vmem:[%s10 + $0x108] sm:$0xff]
  %v1096 = vld [vmem:[%s10 + $0x110] sm:$0xff]
  %v1097 = vld [vmem:[%s10 + $0x118] sm:$0xff]
  %v1098 = vld [vmem:[%s10 + $0x120] sm:$0xff]
  %v1099 = vld [vmem:[%s10 + $0x128] sm:$0xff]
  %v1100 = vld [vmem:[%s10 + $0x130] sm:$0xff]
  %v1101 = vld [vmem:[%s10 + $0x138] sm:$0xff]
  %v1102 = vld [vmem:[%s10 + $0x140] sm:$0xff]
  %v1103 = vld [vmem:[%s10 + $0x148] sm:$0xff]
  %v1104 = vld [vmem:[%s10 + $0x150] sm:$0xff]
  %v1105 = vld [vmem:[%s10 + $0x158] sm:$0xff]
  %v1106 = vld [vmem:[%s10 + $0x160] sm:$0xff]
  %v1107 = vld [vmem:[%s10 + $0x168] sm:$0xff]
  %v1108 = vld [vmem:[%s10 + $0x170] sm:$0xff]
  %v1109 = vld [vmem:[%s10 + $0x178] sm:$0xff]
  %v1110 = vld [vmem:[%s10 + $0x180] sm:$0xff]
  %v1111 = vld [vmem:[%s10 + $0x188] sm:$0xff]
  %v1112 = vld [vmem:[%s10 + $0x190] sm:$0xff]
  %v1113 = vld [vmem:[%s10 + $0x198] sm:$0xff]
  %v1114 = vld [vmem:[%s10 + $0x1a0] sm:$0xff]
  %v1115 = vld [vmem:[%s10 + $0x1a8] sm:$0xff]
  %v1116 = vld [vmem:[%s10 + $0x1b0] sm:$0xff]
  %v1117 = vld [vmem:[%s10 + $0x1b8] sm:$0xff]
  %v1118 = vld [vmem:[%s10 + $0x1c0] sm:$0xff]
  %v1119 = vld [vmem:[%s10 + $0x1c8] sm:$0xff]
  %v1120 = vld [vmem:[%s10 + $0x1d0] sm:$0xff]
  %v1121 = vld [vmem:[%s10 + $0x1d8] sm:$0xff]
  %v1122 = vld [vmem:[%s10 + $0x1e0] sm:$0xff]
  %v1123 = vld [vmem:[%s10 + $0x1e8] sm:$0xff]
  %v1124 = vld [vmem:[%s10 + $0x1f0] sm:$0xff]
  %v1125 = vld [vmem:[%s10 + $0x1f8] sm:$0xff]
  %1126 = vmatpush.msra.mxu0 0.0
  %1127 = vmatpush.msra.mxu0 0.0
  %1128 = vmatpush.msra.mxu0 0.0
  %1129 = vmatpush.msra.mxu0 0.0
  %1130 = vmatpush.msra.mxu0 0.0
  %1131 = vmatpush.msra.mxu0 0.0
  %1132 = vmatpush.msra.mxu0 0.0
  %1133 = vmatpush.msra.mxu0 0.0
  %1134 = vmatpush.msra.mxu0 %v1118
  %1135 = vmatpush.msra.mxu0 %v1110
  %1136 = vmatpush.msra.mxu0 %v1102
  %1137 = vmatpush.msra.mxu0 %v1094
  %1138 = vmatpush.msra.mxu0 %v1086
  %1139 = vmatpush.msra.mxu0 %v1078
  %1140 = vmatpush.msra.mxu0 %v1070
  %1141 = vmatpush.msra.mxu0 %v1062
  %1142 = vmatmul.f32.gmra.mxu0 %v520
  %v1143 = vpop.f32.mrf.mxu0
  %v1144 = vadd.f32 0.0, %v1143
  %1145 = vmatmul.f32.gmra.mxu0 %v523
  %v1146 = vpop.f32.mrf.mxu0
  %v1147 = vadd.f32 0.0, %v1146
  %1148 = vdwg.mxu0
  %1149 = vmatpush.msra.mxu0 0.0
  %1150 = vmatpush.msra.mxu0 0.0
  %1151 = vmatpush.msra.mxu0 0.0
  %1152 = vmatpush.msra.mxu0 0.0
  %1153 = vmatpush.msra.mxu0 0.0
  %1154 = vmatpush.msra.mxu0 0.0
  %1155 = vmatpush.msra.mxu0 0.0
  %1156 = vmatpush.msra.mxu0 0.0
  %1157 = vmatpush.msra.mxu0 %v1119
  %1158 = vmatpush.msra.mxu0 %v1111
  %1159 = vmatpush.msra.mxu0 %v1103
  %1160 = vmatpush.msra.mxu0 %v1095
  %1161 = vmatpush.msra.mxu0 %v1087
  %1162 = vmatpush.msra.mxu0 %v1079
  %1163 = vmatpush.msra.mxu0 %v1071
  %1164 = vmatpush.msra.mxu0 %v1063
  %1165 = vmatmul.f32.gmra.mxu0 %v520
  %v1166 = vpop.f32.mrf.mxu0
  %v1167 = vadd.f32 0.0, %v1166
  %1168 = vmatmul.f32.gmra.mxu0 %v523
  %v1169 = vpop.f32.mrf.mxu0
  %v1170 = vadd.f32 0.0, %v1169
  %1171 = vdwg.mxu0
  %1172 = vmatpush.msra.mxu0 0.0
  %1173 = vmatpush.msra.mxu0 0.0
  %1174 = vmatpush.msra.mxu0 0.0
  %1175 = vmatpush.msra.mxu0 0.0
  %1176 = vmatpush.msra.mxu0 0.0
  %1177 = vmatpush.msra.mxu0 0.0
  %1178 = vmatpush.msra.mxu0 0.0
  %1179 = vmatpush.msra.mxu0 0.0
  %1180 = vmatpush.msra.mxu0 %v1120
  %1181 = vmatpush.msra.mxu0 %v1112
  %1182 = vmatpush.msra.mxu0 %v1104
  %1183 = vmatpush.msra.mxu0 %v1096
  %1184 = vmatpush.msra.mxu0 %v1088
  %1185 = vmatpush.msra.mxu0 %v1080
  %1186 = vmatpush.msra.mxu0 %v1072
  %1187 = vmatpush.msra.mxu0 %v1064
  %1188 = vmatmul.f32.gmra.mxu0 %v520
  %v1189 = vpop.f32.mrf.mxu0
  %v1190 = vadd.f32 0.0, %v1189
  %1191 = vmatmul.f32.gmra.mxu0 %v523
  %v1192 = vpop.f32.mrf.mxu0
  %v1193 = vadd.f32 0.0, %v1192
  %1194 = vdwg.mxu0
  %1195 = vmatpush.msra.mxu0 0.0
  %1196 = vmatpush.msra.mxu0 0.0
  %1197 = vmatpush.msra.mxu0 0.0
  %1198 = vmatpush.msra.mxu0 0.0
  %1199 = vmatpush.msra.mxu0 0.0
  %1200 = vmatpush.msra.mxu0 0.0
  %1201 = vmatpush.msra.mxu0 0.0
  %1202 = vmatpush.msra.mxu0 0.0
  %1203 = vmatpush.msra.mxu0 %v1121
  %1204 = vmatpush.msra.mxu0 %v1113
  %1205 = vmatpush.msra.mxu0 %v1105
  %1206 = vmatpush.msra.mxu0 %v1097
  %1207 = vmatpush.msra.mxu0 %v1089
  %1208 = vmatpush.msra.mxu0 %v1081
  %1209 = vmatpush.msra.mxu0 %v1073
  %1210 = vmatpush.msra.mxu0 %v1065
  %1211 = vmatmul.f32.gmra.mxu0 %v520
  %v1212 = vpop.f32.mrf.mxu0
  %v1213 = vadd.f32 0.0, %v1212
  %1214 = vmatmul.f32.gmra.mxu0 %v523
  %v1215 = vpop.f32.mrf.mxu0
  %v1216 = vadd.f32 0.0, %v1215
  %1217 = vdwg.mxu0
  %1218 = vmatpush.msra.mxu0 0.0
  %1219 = vmatpush.msra.mxu0 0.0
  %1220 = vmatpush.msra.mxu0 0.0
  %1221 = vmatpush.msra.mxu0 0.0
  %1222 = vmatpush.msra.mxu0 0.0
  %1223 = vmatpush.msra.mxu0 0.0
  %1224 = vmatpush.msra.mxu0 0.0
  %1225 = vmatpush.msra.mxu0 0.0
  %1226 = vmatpush.msra.mxu0 %v1122
  %1227 = vmatpush.msra.mxu0 %v1114
  %1228 = vmatpush.msra.mxu0 %v1106
  %1229 = vmatpush.msra.mxu0 %v1098
  %1230 = vmatpush.msra.mxu0 %v1090
  %1231 = vmatpush.msra.mxu0 %v1082
  %1232 = vmatpush.msra.mxu0 %v1074
  %1233 = vmatpush.msra.mxu0 %v1066
  %1234 = vmatmul.f32.gmra.mxu0 %v520
  %v1235 = vpop.f32.mrf.mxu0
  %v1236 = vadd.f32 0.0, %v1235
  %1237 = vmatmul.f32.gmra.mxu0 %v523
  %v1238 = vpop.f32.mrf.mxu0
  %v1239 = vadd.f32 0.0, %v1238
  %1240 = vdwg.mxu0
  %1241 = vmatpush.msra.mxu0 0.0
  %1242 = vmatpush.msra.mxu0 0.0
  %1243 = vmatpush.msra.mxu0 0.0
  %1244 = vmatpush.msra.mxu0 0.0
  %1245 = vmatpush.msra.mxu0 0.0
  %1246 = vmatpush.msra.mxu0 0.0
  %1247 = vmatpush.msra.mxu0 0.0
  %1248 = vmatpush.msra.mxu0 0.0
  %1249 = vmatpush.msra.mxu0 %v1123
  %1250 = vmatpush.msra.mxu0 %v1115
  %1251 = vmatpush.msra.mxu0 %v1107
  %1252 = vmatpush.msra.mxu0 %v1099
  %1253 = vmatpush.msra.mxu0 %v1091
  %1254 = vmatpush.msra.mxu0 %v1083
  %1255 = vmatpush.msra.mxu0 %v1075
  %1256 = vmatpush.msra.mxu0 %v1067
  %1257 = vmatmul.f32.gmra.mxu0 %v520
  %v1258 = vpop.f32.mrf.mxu0
  %v1259 = vadd.f32 0.0, %v1258
  %1260 = vmatmul.f32.gmra.mxu0 %v523
  %v1261 = vpop.f32.mrf.mxu0
  %v1262 = vadd.f32 0.0, %v1261
  %1263 = vdwg.mxu0
  %1264 = vmatpush.msra.mxu0 0.0
  %1265 = vmatpush.msra.mxu0 0.0
  %1266 = vmatpush.msra.mxu0 0.0
  %1267 = vmatpush.msra.mxu0 0.0
  %1268 = vmatpush.msra.mxu0 0.0
  %1269 = vmatpush.msra.mxu0 0.0
  %1270 = vmatpush.msra.mxu0 0.0
  %1271 = vmatpush.msra.mxu0 0.0
  %1272 = vmatpush.msra.mxu0 %v1124
  %1273 = vmatpush.msra.mxu0 %v1116
  %1274 = vmatpush.msra.mxu0 %v1108
  %1275 = vmatpush.msra.mxu0 %v1100
  %1276 = vmatpush.msra.mxu0 %v1092
  %1277 = vmatpush.msra.mxu0 %v1084
  %1278 = vmatpush.msra.mxu0 %v1076
  %1279 = vmatpush.msra.mxu0 %v1068
  %1280 = vmatmul.f32.gmra.mxu0 %v520
  %v1281 = vpop.f32.mrf.mxu0
  %v1282 = vadd.f32 0.0, %v1281
  %1283 = vmatmul.f32.gmra.mxu0 %v523
  %v1284 = vpop.f32.mrf.mxu0
  %v1285 = vadd.f32 0.0, %v1284
  %1286 = vdwg.mxu0
  %1287 = vmatpush.msra.mxu0 0.0
  %1288 = vmatpush.msra.mxu0 0.0
  %1289 = vmatpush.msra.mxu0 0.0
  %1290 = vmatpush.msra.mxu0 0.0
  %1291 = vmatpush.msra.mxu0 0.0
  %1292 = vmatpush.msra.mxu0 0.0
  %1293 = vmatpush.msra.mxu0 0.0
  %1294 = vmatpush.msra.mxu0 0.0
  %1295 = vmatpush.msra.mxu0 %v1125
  %1296 = vmatpush.msra.mxu0 %v1117
  %1297 = vmatpush.msra.mxu0 %v1109
  %1298 = vmatpush.msra.mxu0 %v1101
  %1299 = vmatpush.msra.mxu0 %v1093
  %1300 = vmatpush.msra.mxu0 %v1085
  %1301 = vmatpush.msra.mxu0 %v1077
  %1302 = vmatpush.msra.mxu0 %v1069
  %1303 = vmatmul.f32.gmra.mxu0 %v520
  %v1304 = vpop.f32.mrf.mxu0
  %v1305 = vadd.f32 0.0, %v1304
  %1306 = vmatmul.f32.gmra.mxu0 %v523
  %v1307 = vpop.f32.mrf.mxu0
  %v1308 = vadd.f32 0.0, %v1307
  %1309 = vdwg.mxu0
  %v1310 = vmul.f32 %v896, %v1144
  %v1311 = vmul.f32 %v919, %v1167
  %v1312 = vmul.f32 %v942, %v1190
  %v1313 = vmul.f32 %v965, %v1213
  %v1314 = vmul.f32 %v988, %v1236
  %v1315 = vmul.f32 %v1011, %v1259
  %v1316 = vmul.f32 %v1034, %v1282
  %v1317 = vmul.f32 %v1057, %v1305
  %v1318 = vmul.f32 %v899, %v1147
  %v1319 = vmul.f32 %v922, %v1170
  %v1320 = vmul.f32 %v945, %v1193
  %v1321 = vmul.f32 %v968, %v1216
  %v1322 = vmul.f32 %v991, %v1239
  %v1323 = vmul.f32 %v1014, %v1262
  %v1324 = vmul.f32 %v1037, %v1285
  %v1325 = vmul.f32 %v1060, %v1308
  %v1326 = vld [vmem:[%s11] sm:$0xff]
  %v1327 = vld [vmem:[%s11 + $0x8] sm:$0xff]
  %v1328 = vld [vmem:[%s11 + $0x10] sm:$0xff]
  %v1329 = vld [vmem:[%s11 + $0x18] sm:$0xff]
  %v1330 = vld [vmem:[%s11 + $0x20] sm:$0xff]
  %v1331 = vld [vmem:[%s11 + $0x28] sm:$0xff]
  %v1332 = vld [vmem:[%s11 + $0x30] sm:$0xff]
  %v1333 = vld [vmem:[%s11 + $0x38] sm:$0xff]
  %v1334 = vld [vmem:[%s11 + $0x40] sm:$0xff]
  %v1335 = vld [vmem:[%s11 + $0x48] sm:$0xff]
  %v1336 = vld [vmem:[%s11 + $0x50] sm:$0xff]
  %v1337 = vld [vmem:[%s11 + $0x58] sm:$0xff]
  %v1338 = vld [vmem:[%s11 + $0x60] sm:$0xff]
  %v1339 = vld [vmem:[%s11 + $0x68] sm:$0xff]
  %v1340 = vld [vmem:[%s11 + $0x70] sm:$0xff]
  %v1341 = vld [vmem:[%s11 + $0x78] sm:$0xff]
  %v1342 = vld [vmem:[%s11 + $0x80] sm:$0xff]
  %v1343 = vld [vmem:[%s11 + $0x88] sm:$0xff]
  %v1344 = vld [vmem:[%s11 + $0x90] sm:$0xff]
  %v1345 = vld [vmem:[%s11 + $0x98] sm:$0xff]
  %v1346 = vld [vmem:[%s11 + $0xa0] sm:$0xff]
  %v1347 = vld [vmem:[%s11 + $0xa8] sm:$0xff]
  %v1348 = vld [vmem:[%s11 + $0xb0] sm:$0xff]
  %v1349 = vld [vmem:[%s11 + $0xb8] sm:$0xff]
  %v1350 = vld [vmem:[%s11 + $0xc0] sm:$0xff]
  %v1351 = vld [vmem:[%s11 + $0xc8] sm:$0xff]
  %v1352 = vld [vmem:[%s11 + $0xd0] sm:$0xff]
  %v1353 = vld [vmem:[%s11 + $0xd8] sm:$0xff]
  %v1354 = vld [vmem:[%s11 + $0xe0] sm:$0xff]
  %v1355 = vld [vmem:[%s11 + $0xe8] sm:$0xff]
  %v1356 = vld [vmem:[%s11 + $0xf0] sm:$0xff]
  %v1357 = vld [vmem:[%s11 + $0xf8] sm:$0xff]
  %v1358 = vld [vmem:[%s11 + $0x100] sm:$0xff]
  %v1359 = vld [vmem:[%s11 + $0x108] sm:$0xff]
  %v1360 = vld [vmem:[%s11 + $0x110] sm:$0xff]
  %v1361 = vld [vmem:[%s11 + $0x118] sm:$0xff]
  %v1362 = vld [vmem:[%s11 + $0x120] sm:$0xff]
  %v1363 = vld [vmem:[%s11 + $0x128] sm:$0xff]
  %v1364 = vld [vmem:[%s11 + $0x130] sm:$0xff]
  %v1365 = vld [vmem:[%s11 + $0x138] sm:$0xff]
  %v1366 = vld [vmem:[%s11 + $0x140] sm:$0xff]
  %v1367 = vld [vmem:[%s11 + $0x148] sm:$0xff]
  %v1368 = vld [vmem:[%s11 + $0x150] sm:$0xff]
  %v1369 = vld [vmem:[%s11 + $0x158] sm:$0xff]
  %v1370 = vld [vmem:[%s11 + $0x160] sm:$0xff]
  %v1371 = vld [vmem:[%s11 + $0x168] sm:$0xff]
  %v1372 = vld [vmem:[%s11 + $0x170] sm:$0xff]
  %v1373 = vld [vmem:[%s11 + $0x178] sm:$0xff]
  %v1374 = vld [vmem:[%s11 + $0x180] sm:$0xff]
  %v1375 = vld [vmem:[%s11 + $0x188] sm:$0xff]
  %v1376 = vld [vmem:[%s11 + $0x190] sm:$0xff]
  %v1377 = vld [vmem:[%s11 + $0x198] sm:$0xff]
  %v1378 = vld [vmem:[%s11 + $0x1a0] sm:$0xff]
  %v1379 = vld [vmem:[%s11 + $0x1a8] sm:$0xff]
  %v1380 = vld [vmem:[%s11 + $0x1b0] sm:$0xff]
  %v1381 = vld [vmem:[%s11 + $0x1b8] sm:$0xff]
  %v1382 = vld [vmem:[%s11 + $0x1c0] sm:$0xff]
  %v1383 = vld [vmem:[%s11 + $0x1c8] sm:$0xff]
  %v1384 = vld [vmem:[%s11 + $0x1d0] sm:$0xff]
  %v1385 = vld [vmem:[%s11 + $0x1d8] sm:$0xff]
  %v1386 = vld [vmem:[%s11 + $0x1e0] sm:$0xff]
  %v1387 = vld [vmem:[%s11 + $0x1e8] sm:$0xff]
  %v1388 = vld [vmem:[%s11 + $0x1f0] sm:$0xff]
  %v1389 = vld [vmem:[%s11 + $0x1f8] sm:$0xff]
  %1390 = vmatpush.msra.mxu0 0.0
  %1391 = vmatpush.msra.mxu0 0.0
  %1392 = vmatpush.msra.mxu0 0.0
  %1393 = vmatpush.msra.mxu0 0.0
  %1394 = vmatpush.msra.mxu0 0.0
  %1395 = vmatpush.msra.mxu0 0.0
  %1396 = vmatpush.msra.mxu0 0.0
  %1397 = vmatpush.msra.mxu0 0.0
  %1398 = vmatpush.msra.mxu0 %v1382
  %1399 = vmatpush.msra.mxu0 %v1374
  %1400 = vmatpush.msra.mxu0 %v1366
  %1401 = vmatpush.msra.mxu0 %v1358
  %1402 = vmatpush.msra.mxu0 %v1350
  %1403 = vmatpush.msra.mxu0 %v1342
  %1404 = vmatpush.msra.mxu0 %v1334
  %1405 = vmatpush.msra.mxu0 %v1326
  %1406 = vmatmul.f32.gmra.mxu0 %v520
  %v1407 = vpop.f32.mrf.mxu0
  %v1408 = vadd.f32 0.0, %v1407
  %1409 = vmatmul.f32.gmra.mxu0 %v523
  %v1410 = vpop.f32.mrf.mxu0
  %v1411 = vadd.f32 0.0, %v1410
  %1412 = vdwg.mxu0
  %1413 = vmatpush.msra.mxu0 0.0
  %1414 = vmatpush.msra.mxu0 0.0
  %1415 = vmatpush.msra.mxu0 0.0
  %1416 = vmatpush.msra.mxu0 0.0
  %1417 = vmatpush.msra.mxu0 0.0
  %1418 = vmatpush.msra.mxu0 0.0
  %1419 = vmatpush.msra.mxu0 0.0
  %1420 = vmatpush.msra.mxu0 0.0
  %1421 = vmatpush.msra.mxu0 %v1383
  %1422 = vmatpush.msra.mxu0 %v1375
  %1423 = vmatpush.msra.mxu0 %v1367
  %1424 = vmatpush.msra.mxu0 %v1359
  %1425 = vmatpush.msra.mxu0 %v1351
  %1426 = vmatpush.msra.mxu0 %v1343
  %1427 = vmatpush.msra.mxu0 %v1335
  %1428 = vmatpush.msra.mxu0 %v1327
  %1429 = vmatmul.f32.gmra.mxu0 %v520
  %v1430 = vpop.f32.mrf.mxu0
  %v1431 = vadd.f32 0.0, %v1430
  %1432 = vmatmul.f32.gmra.mxu0 %v523
  %v1433 = vpop.f32.mrf.mxu0
  %v1434 = vadd.f32 0.0, %v1433
  %1435 = vdwg.mxu0
  %1436 = vmatpush.msra.mxu0 0.0
  %1437 = vmatpush.msra.mxu0 0.0
  %1438 = vmatpush.msra.mxu0 0.0
  %1439 = vmatpush.msra.mxu0 0.0
  %1440 = vmatpush.msra.mxu0 0.0
  %1441 = vmatpush.msra.mxu0 0.0
  %1442 = vmatpush.msra.mxu0 0.0
  %1443 = vmatpush.msra.mxu0 0.0
  %1444 = vmatpush.msra.mxu0 %v1384
  %1445 = vmatpush.msra.mxu0 %v1376
  %1446 = vmatpush.msra.mxu0 %v1368
  %1447 = vmatpush.msra.mxu0 %v1360
  %1448 = vmatpush.msra.mxu0 %v1352
  %1449 = vmatpush.msra.mxu0 %v1344
  %1450 = vmatpush.msra.mxu0 %v1336
  %1451 = vmatpush.msra.mxu0 %v1328
  %1452 = vmatmul.f32.gmra.mxu0 %v520
  %v1453 = vpop.f32.mrf.mxu0
  %v1454 = vadd.f32 0.0, %v1453
  %1455 = vmatmul.f32.gmra.mxu0 %v523
  %v1456 = vpop.f32.mrf.mxu0
  %v1457 = vadd.f32 0.0, %v1456
  %1458 = vdwg.mxu0
  %1459 = vmatpush.msra.mxu0 0.0
  %1460 = vmatpush.msra.mxu0 0.0
  %1461 = vmatpush.msra.mxu0 0.0
  %1462 = vmatpush.msra.mxu0 0.0
  %1463 = vmatpush.msra.mxu0 0.0
  %1464 = vmatpush.msra.mxu0 0.0
  %1465 = vmatpush.msra.mxu0 0.0
  %1466 = vmatpush.msra.mxu0 0.0
  %1467 = vmatpush.msra.mxu0 %v1385
  %1468 = vmatpush.msra.mxu0 %v1377
  %1469 = vmatpush.msra.mxu0 %v1369
  %1470 = vmatpush.msra.mxu0 %v1361
  %1471 = vmatpush.msra.mxu0 %v1353
  %1472 = vmatpush.msra.mxu0 %v1345
  %1473 = vmatpush.msra.mxu0 %v1337
  %1474 = vmatpush.msra.mxu0 %v1329
  %1475 = vmatmul.f32.gmra.mxu0 %v520
  %v1476 = vpop.f32.mrf.mxu0
  %v1477 = vadd.f32 0.0, %v1476
  %1478 = vmatmul.f32.gmra.mxu0 %v523
  %v1479 = vpop.f32.mrf.mxu0
  %v1480 = vadd.f32 0.0, %v1479
  %1481 = vdwg.mxu0
  %1482 = vmatpush.msra.mxu0 0.0
  %1483 = vmatpush.msra.mxu0 0.0
  %1484 = vmatpush.msra.mxu0 0.0
  %1485 = vmatpush.msra.mxu0 0.0
  %1486 = vmatpush.msra.mxu0 0.0
  %1487 = vmatpush.msra.mxu0 0.0
  %1488 = vmatpush.msra.mxu0 0.0
  %1489 = vmatpush.msra.mxu0 0.0
  %1490 = vmatpush.msra.mxu0 %v1386
  %1491 = vmatpush.msra.mxu0 %v1378
  %1492 = vmatpush.msra.mxu0 %v1370
  %1493 = vmatpush.msra.mxu0 %v1362
  %1494 = vmatpush.msra.mxu0 %v1354
  %1495 = vmatpush.msra.mxu0 %v1346
  %1496 = vmatpush.msra.mxu0 %v1338
  %1497 = vmatpush.msra.mxu0 %v1330
  %1498 = vmatmul.f32.gmra.mxu0 %v520
  %v1499 = vpop.f32.mrf.mxu0
  %v1500 = vadd.f32 0.0, %v1499
  %1501 = vmatmul.f32.gmra.mxu0 %v523
  %v1502 = vpop.f32.mrf.mxu0
  %v1503 = vadd.f32 0.0, %v1502
  %1504 = vdwg.mxu0
  %1505 = vmatpush.msra.mxu0 0.0
  %1506 = vmatpush.msra.mxu0 0.0
  %1507 = vmatpush.msra.mxu0 0.0
  %1508 = vmatpush.msra.mxu0 0.0
  %1509 = vmatpush.msra.mxu0 0.0
  %1510 = vmatpush.msra.mxu0 0.0
  %1511 = vmatpush.msra.mxu0 0.0
  %1512 = vmatpush.msra.mxu0 0.0
  %1513 = vmatpush.msra.mxu0 %v1387
  %1514 = vmatpush.msra.mxu0 %v1379
  %1515 = vmatpush.msra.mxu0 %v1371
  %1516 = vmatpush.msra.mxu0 %v1363
  %1517 = vmatpush.msra.mxu0 %v1355
  %1518 = vmatpush.msra.mxu0 %v1347
  %1519 = vmatpush.msra.mxu0 %v1339
  %1520 = vmatpush.msra.mxu0 %v1331
  %1521 = vmatmul.f32.gmra.mxu0 %v520
  %v1522 = vpop.f32.mrf.mxu0
  %v1523 = vadd.f32 0.0, %v1522
  %1524 = vmatmul.f32.gmra.mxu0 %v523
  %v1525 = vpop.f32.mrf.mxu0
  %v1526 = vadd.f32 0.0, %v1525
  %1527 = vdwg.mxu0
  %1528 = vmatpush.msra.mxu0 0.0
  %1529 = vmatpush.msra.mxu0 0.0
  %1530 = vmatpush.msra.mxu0 0.0
  %1531 = vmatpush.msra.mxu0 0.0
  %1532 = vmatpush.msra.mxu0 0.0
  %1533 = vmatpush.msra.mxu0 0.0
  %1534 = vmatpush.msra.mxu0 0.0
  %1535 = vmatpush.msra.mxu0 0.0
  %1536 = vmatpush.msra.mxu0 %v1388
  %1537 = vmatpush.msra.mxu0 %v1380
  %1538 = vmatpush.msra.mxu0 %v1372
  %1539 = vmatpush.msra.mxu0 %v1364
  %1540 = vmatpush.msra.mxu0 %v1356
  %1541 = vmatpush.msra.mxu0 %v1348
  %1542 = vmatpush.msra.mxu0 %v1340
  %1543 = vmatpush.msra.mxu0 %v1332
  %1544 = vmatmul.f32.gmra.mxu0 %v520
  %v1545 = vpop.f32.mrf.mxu0
  %v1546 = vadd.f32 0.0, %v1545
  %1547 = vmatmul.f32.gmra.mxu0 %v523
  %v1548 = vpop.f32.mrf.mxu0
  %v1549 = vadd.f32 0.0, %v1548
  %1550 = vdwg.mxu0
  %1551 = vmatpush.msra.mxu0 0.0
  %1552 = vmatpush.msra.mxu0 0.0
  %1553 = vmatpush.msra.mxu0 0.0
  %1554 = vmatpush.msra.mxu0 0.0
  %1555 = vmatpush.msra.mxu0 0.0
  %1556 = vmatpush.msra.mxu0 0.0
  %1557 = vmatpush.msra.mxu0 0.0
  %1558 = vmatpush.msra.mxu0 0.0
  %1559 = vmatpush.msra.mxu0 %v1389
  %1560 = vmatpush.msra.mxu0 %v1381
  %1561 = vmatpush.msra.mxu0 %v1373
  %1562 = vmatpush.msra.mxu0 %v1365
  %1563 = vmatpush.msra.mxu0 %v1357
  %1564 = vmatpush.msra.mxu0 %v1349
  %1565 = vmatpush.msra.mxu0 %v1341
  %1566 = vmatpush.msra.mxu0 %v1333
  %1567 = vmatmul.f32.gmra.mxu0 %v520
  %v1568 = vpop.f32.mrf.mxu0
  %v1569 = vadd.f32 0.0, %v1568
  %1570 = vmatmul.f32.gmra.mxu0 %v523
  %v1571 = vpop.f32.mrf.mxu0
  %v1572 = vadd.f32 0.0, %v1571
  %1573 = vdwg.mxu0
  %1574 = vst [vmem:[#allocation2] sm:$0xff] %v1310
  %1575 = vst [vmem:[#allocation2 + $0x8] sm:$0xff] %v1311
  %1576 = vst [vmem:[#allocation2 + $0x10] sm:$0xff] %v1312
  %1577 = vst [vmem:[#allocation2 + $0x18] sm:$0xff] %v1313
  %1578 = vst [vmem:[#allocation2 + $0x20] sm:$0xff] %v1314
  %1579 = vst [vmem:[#allocation2 + $0x28] sm:$0xff] %v1315
  %1580 = vst [vmem:[#allocation2 + $0x30] sm:$0xff] %v1316
  %1581 = vst [vmem:[#allocation2 + $0x38] sm:$0xff] %v1317
  %1582 = vst [vmem:[#allocation2 + $0x40] sm:$0xff] %v1318
  %1583 = vst [vmem:[#allocation2 + $0x48] sm:$0xff] %v1319
  %1584 = vst [vmem:[#allocation2 + $0x50] sm:$0xff] %v1320
  %1585 = vst [vmem:[#allocation2 + $0x58] sm:$0xff] %v1321
  %1586 = vst [vmem:[#allocation2 + $0x60] sm:$0xff] %v1322
  %1587 = vst [vmem:[#allocation2 + $0x68] sm:$0xff] %v1323
  %1588 = vst [vmem:[#allocation2 + $0x70] sm:$0xff] %v1324
  %1589 = vst [vmem:[#allocation2 + $0x78] sm:$0xff] %v1325
  %1590 = vst [vmem:[#allocation3] sm:$0xff] %v1408
  %1591 = vst [vmem:[#allocation3 + $0x8] sm:$0xff] %v1431
  %1592 = vst [vmem:[#allocation3 + $0x10] sm:$0xff] %v1454
  %1593 = vst [vmem:[#allocation3 + $0x18] sm:$0xff] %v1477
  %1594 = vst [vmem:[#allocation3 + $0x20] sm:$0xff] %v1500
  %1595 = vst [vmem:[#allocation3 + $0x28] sm:$0xff] %v1523
  %1596 = vst [vmem:[#allocation3 + $0x30] sm:$0xff] %v1546
  %1597 = vst [vmem:[#allocation3 + $0x38] sm:$0xff] %v1569
  %1598 = vst [vmem:[#allocation3 + $0x40] sm:$0xff] %v1411
  %1599 = vst [vmem:[#allocation3 + $0x48] sm:$0xff] %v1434
  %1600 = vst [vmem:[#allocation3 + $0x50] sm:$0xff] %v1457
  %1601 = vst [vmem:[#allocation3 + $0x58] sm:$0xff] %v1480
  %1602 = vst [vmem:[#allocation3 + $0x60] sm:$0xff] %v1503
  %1603 = vst [vmem:[#allocation3 + $0x68] sm:$0xff] %v1526
  %1604 = vst [vmem:[#allocation3 + $0x70] sm:$0xff] %v1549
  %1605 = vst [vmem:[#allocation3 + $0x78] sm:$0xff] %v1572
  %v1606 = vmul.f32 %v839, 0.0
  %v1607 = vmul.f32 %v841, 0.0
  %v1608 = vmul.f32 %v843, 0.0
  %v1609 = vmul.f32 %v845, 0.0
  %v1610 = vmul.f32 %v847, 0.0
  %v1611 = vmul.f32 %v849, 0.0
  %v1612 = vmul.f32 %v851, 0.0
  %v1613 = vmul.f32 %v853, 0.0
  %v1614 = vld [vmem:[#allocation2] sm:$0x3]
  %v1615 = vld [vmem:[#allocation2 + $0x8] sm:$0x3]
  %v1616 = vld [vmem:[#allocation2 + $0x10] sm:$0x3]
  %v1617 = vld [vmem:[#allocation2 + $0x18] sm:$0x3]
  %v1618 = vld [vmem:[#allocation2 + $0x20] sm:$0x3]
  %v1619 = vld [vmem:[#allocation2 + $0x28] sm:$0x3]
  %v1620 = vld [vmem:[#allocation2 + $0x30] sm:$0x3]
  %v1621 = vld [vmem:[#allocation2 + $0x38] sm:$0x3]
  %v1622 = vadd.f32 %v1606, %v1614
  %v1623 = vadd.f32 %v1607, %v1615
  %v1624 = vadd.f32 %v1608, %v1616
  %v1625 = vadd.f32 %v1609, %v1617
  %v1626 = vadd.f32 %v1610, %v1618
  %v1627 = vadd.f32 %v1611, %v1619
  %v1628 = vadd.f32 %v1612, %v1620
  %v1629 = vadd.f32 %v1613, %v1621
  %v1630 = vld [vmem:[#allocation3] sm:$0x3]
  %v1631 = vld [vmem:[#allocation3 + $0x8] sm:$0x3]
  %v1632 = vld [vmem:[#allocation3 + $0x10] sm:$0x3]
  %v1633 = vld [vmem:[#allocation3 + $0x18] sm:$0x3]
  %v1634 = vld [vmem:[#allocation3 + $0x20] sm:$0x3]
  %v1635 = vld [vmem:[#allocation3 + $0x28] sm:$0x3]
  %v1636 = vld [vmem:[#allocation3 + $0x30] sm:$0x3]
  %v1637 = vld [vmem:[#allocation3 + $0x38] sm:$0x3]
  %v1638 = vmul.f32 %v1622, %v1630
  %v1639 = vmul.f32 %v1623, %v1631
  %v1640 = vmul.f32 %v1624, %v1632
  %v1641 = vmul.f32 %v1625, %v1633
  %v1642 = vmul.f32 %v1626, %v1634
  %v1643 = vmul.f32 %v1627, %v1635
  %v1644 = vmul.f32 %v1628, %v1636
  %v1645 = vmul.f32 %v1629, %v1637
  %v1654 = vrot.slane %v1622, 6
  %v1655 = vrot.slane %v1623, 6
  %v1656 = vrot.slane %v1624, 6
  %v1657 = vrot.slane %v1625, 6
  %v1658 = vrot.slane %v1626, 6
  %v1659 = vrot.slane %v1627, 6
  %v1660 = vrot.slane %v1628, 6
  %v1661 = vrot.slane %v1629, 6
  %v1670 = vmul.f32 %v839, %v1654
  %v1671 = vmul.f32 %v841, %v1655
  %v1672 = vmul.f32 %v843, %v1656
  %v1673 = vmul.f32 %v845, %v1657
  %v1674 = vmul.f32 %v847, %v1658
  %v1675 = vmul.f32 %v849, %v1659
  %v1676 = vmul.f32 %v851, %v1660
  %v1677 = vmul.f32 %v853, %v1661
  %v1678 = vld [vmem:[#allocation2] sm:$0xc]
  %v1679 = vld [vmem:[#allocation2 + $0x8] sm:$0xc]
  %v1680 = vld [vmem:[#allocation2 + $0x10] sm:$0xc]
  %v1681 = vld [vmem:[#allocation2 + $0x18] sm:$0xc]
  %v1682 = vld [vmem:[#allocation2 + $0x20] sm:$0xc]
  %v1683 = vld [vmem:[#allocation2 + $0x28] sm:$0xc]
  %v1684 = vld [vmem:[#allocation2 + $0x30] sm:$0xc]
  %v1685 = vld [vmem:[#allocation2 + $0x38] sm:$0xc]
  %v1686 = vadd.f32 %v1670, %v1678
  %v1687 = vadd.f32 %v1671, %v1679
  %v1688 = vadd.f32 %v1672, %v1680
  %v1689 = vadd.f32 %v1673, %v1681
  %v1690 = vadd.f32 %v1674, %v1682
  %v1691 = vadd.f32 %v1675, %v1683
  %v1692 = vadd.f32 %v1676, %v1684
  %v1693 = vadd.f32 %v1677, %v1685
  %v1694 = vld [vmem:[#allocation3] sm:$0xc]
  %v1695 = vld [vmem:[#allocation3 + $0x8] sm:$0xc]
  %v1696 = vld [vmem:[#allocation3 + $0x10] sm:$0xc]
  %v1697 = vld [vmem:[#allocation3 + $0x18] sm:$0xc]
  %v1698 = vld [vmem:[#allocation3 + $0x20] sm:$0xc]
  %v1699 = vld [vmem:[#allocation3 + $0x28] sm:$0xc]
  %v1700 = vld [vmem:[#allocation3 + $0x30] sm:$0xc]
  %v1701 = vld [vmem:[#allocation3 + $0x38] sm:$0xc]
  %v1702 = vmul.f32 %v1686, %v1694
  %v1703 = vmul.f32 %v1687, %v1695
  %v1704 = vmul.f32 %v1688, %v1696
  %v1705 = vmul.f32 %v1689, %v1697
  %v1706 = vmul.f32 %v1690, %v1698
  %v1707 = vmul.f32 %v1691, %v1699
  %v1708 = vmul.f32 %v1692, %v1700
  %v1709 = vmul.f32 %v1693, %v1701
  %v1718 = vrot.slane %v1702, 2
  %v1719 = vrot.slane %v1703, 2
  %v1720 = vrot.slane %v1704, 2
  %v1721 = vrot.slane %v1705, 2
  %v1722 = vrot.slane %v1706, 2
  %v1723 = vrot.slane %v1707, 2
  %v1724 = vrot.slane %v1708, 2
  %v1725 = vrot.slane %v1709, 2
  %vm1726 = vcmask 15360
  %v1728 = vsel %vm1726, %v156, 0
  %v1731 = vsel %vm1726, %v157, 0
  %vm1733 = vcmask 1041408
  %v1734 = vsel %vm1733, %v1718, 0
  %v1736 = vsel %vm1733, %v1719, 0
  %v1738 = vsel %vm1733, %v1720, 0
  %v1740 = vsel %vm1733, %v1721, 0
  %v1742 = vsel %vm1733, %v1722, 0
  %v1744 = vsel %vm1733, %v1723, 0
  %v1746 = vsel %vm1733, %v1724, 0
  %v1748 = vsel %vm1733, %v1725, 0
  %1750 = vmatpush.msra.mxu0 0.0
  %1751 = vmatpush.msra.mxu0 0.0
  %1752 = vmatpush.msra.mxu0 0.0
  %1753 = vmatpush.msra.mxu0 0.0
  %1754 = vmatpush.msra.mxu0 0.0
  %1755 = vmatpush.msra.mxu0 0.0
  %1756 = vmatpush.msra.mxu0 0.0
  %1757 = vmatpush.msra.mxu0 0.0
  %1758 = vmatpush.msra.mxu0 0.0
  %1759 = vmatpush.msra.mxu0 0.0
  %1760 = vmatpush.msra.mxu0 0.0
  %1761 = vmatpush.msra.mxu0 0.0
  %1762 = vmatpush.msra.mxu0 0.0
  %1763 = vmatpush.msra.mxu0 0.0
  %1764 = vmatpush.msra.mxu0 0.0
  %1765 = vmatpush.msra.mxu0 %v1734
  %1766 = vmatmul.f32.gmra.mxu0 %v1728
  %v1767 = vpop.f32.mrf.mxu0
  %v1768 = vadd.f32 0.0, %v1767
  %1769 = vmatmul.f32.gmra.mxu0 %v1731
  %v1770 = vpop.f32.mrf.mxu0
  %v1771 = vadd.f32 0.0, %v1770
  %1772 = vdwg.mxu0
  %1773 = vmatpush.msra.mxu0 0.0
  %1774 = vmatpush.msra.mxu0 0.0
  %1775 = vmatpush.msra.mxu0 0.0
  %1776 = vmatpush.msra.mxu0 0.0
  %1777 = vmatpush.msra.mxu0 0.0
  %1778 = vmatpush.msra.mxu0 0.0
  %1779 = vmatpush.msra.mxu0 0.0
  %1780 = vmatpush.msra.mxu0 0.0
  %1781 = vmatpush.msra.mxu0 0.0
  %1782 = vmatpush.msra.mxu0 0.0
  %1783 = vmatpush.msra.mxu0 0.0
  %1784 = vmatpush.msra.mxu0 0.0
  %1785 = vmatpush.msra.mxu0 0.0
  %1786 = vmatpush.msra.mxu0 0.0
  %1787 = vmatpush.msra.mxu0 0.0
  %1788 = vmatpush.msra.mxu0 %v1736
  %1789 = vmatmul.f32.gmra.mxu0 %v1728
  %v1790 = vpop.f32.mrf.mxu0
  %v1791 = vadd.f32 0.0, %v1790
  %1792 = vmatmul.f32.gmra.mxu0 %v1731
  %v1793 = vpop.f32.mrf.mxu0
  %v1794 = vadd.f32 0.0, %v1793
  %1795 = vdwg.mxu0
  %1796 = vmatpush.msra.mxu0 0.0
  %1797 = vmatpush.msra.mxu0 0.0
  %1798 = vmatpush.msra.mxu0 0.0
  %1799 = vmatpush.msra.mxu0 0.0
  %1800 = vmatpush.msra.mxu0 0.0
  %1801 = vmatpush.msra.mxu0 0.0
  %1802 = vmatpush.msra.mxu0 0.0
  %1803 = vmatpush.msra.mxu0 0.0
  %1804 = vmatpush.msra.mxu0 0.0
  %1805 = vmatpush.msra.mxu0 0.0
  %1806 = vmatpush.msra.mxu0 0.0
  %1807 = vmatpush.msra.mxu0 0.0
  %1808 = vmatpush.msra.mxu0 0.0
  %1809 = vmatpush.msra.mxu0 0.0
  %1810 = vmatpush.msra.mxu0 0.0
  %1811 = vmatpush.msra.mxu0 %v1738
  %1812 = vmatmul.f32.gmra.mxu0 %v1728
  %v1813 = vpop.f32.mrf.mxu0
  %v1814 = vadd.f32 0.0, %v1813
  %1815 = vmatmul.f32.gmra.mxu0 %v1731
  %v1816 = vpop.f32.mrf.mxu0
  %v1817 = vadd.f32 0.0, %v1816
  %1818 = vdwg.mxu0
  %1819 = vmatpush.msra.mxu0 0.0
  %1820 = vmatpush.msra.mxu0 0.0
  %1821 = vmatpush.msra.mxu0 0.0
  %1822 = vmatpush.msra.mxu0 0.0
  %1823 = vmatpush.msra.mxu0 0.0
  %1824 = vmatpush.msra.mxu0 0.0
  %1825 = vmatpush.msra.mxu0 0.0
  %1826 = vmatpush.msra.mxu0 0.0
  %1827 = vmatpush.msra.mxu0 0.0
  %1828 = vmatpush.msra.mxu0 0.0
  %1829 = vmatpush.msra.mxu0 0.0
  %1830 = vmatpush.msra.mxu0 0.0
  %1831 = vmatpush.msra.mxu0 0.0
  %1832 = vmatpush.msra.mxu0 0.0
  %1833 = vmatpush.msra.mxu0 0.0
  %1834 = vmatpush.msra.mxu0 %v1740
  %1835 = vmatmul.f32.gmra.mxu0 %v1728
  %v1836 = vpop.f32.mrf.mxu0
  %v1837 = vadd.f32 0.0, %v1836
  %1838 = vmatmul.f32.gmra.mxu0 %v1731
  %v1839 = vpop.f32.mrf.mxu0
  %v1840 = vadd.f32 0.0, %v1839
  %1841 = vdwg.mxu0
  %1842 = vmatpush.msra.mxu0 0.0
  %1843 = vmatpush.msra.mxu0 0.0
  %1844 = vmatpush.msra.mxu0 0.0
  %1845 = vmatpush.msra.mxu0 0.0
  %1846 = vmatpush.msra.mxu0 0.0
  %1847 = vmatpush.msra.mxu0 0.0
  %1848 = vmatpush.msra.mxu0 0.0
  %1849 = vmatpush.msra.mxu0 0.0
  %1850 = vmatpush.msra.mxu0 0.0
  %1851 = vmatpush.msra.mxu0 0.0
  %1852 = vmatpush.msra.mxu0 0.0
  %1853 = vmatpush.msra.mxu0 0.0
  %1854 = vmatpush.msra.mxu0 0.0
  %1855 = vmatpush.msra.mxu0 0.0
  %1856 = vmatpush.msra.mxu0 0.0
  %1857 = vmatpush.msra.mxu0 %v1742
  %1858 = vmatmul.f32.gmra.mxu0 %v1728
  %v1859 = vpop.f32.mrf.mxu0
  %v1860 = vadd.f32 0.0, %v1859
  %1861 = vmatmul.f32.gmra.mxu0 %v1731
  %v1862 = vpop.f32.mrf.mxu0
  %v1863 = vadd.f32 0.0, %v1862
  %1864 = vdwg.mxu0
  %1865 = vmatpush.msra.mxu0 0.0
  %1866 = vmatpush.msra.mxu0 0.0
  %1867 = vmatpush.msra.mxu0 0.0
  %1868 = vmatpush.msra.mxu0 0.0
  %1869 = vmatpush.msra.mxu0 0.0
  %1870 = vmatpush.msra.mxu0 0.0
  %1871 = vmatpush.msra.mxu0 0.0
  %1872 = vmatpush.msra.mxu0 0.0
  %1873 = vmatpush.msra.mxu0 0.0
  %1874 = vmatpush.msra.mxu0 0.0
  %1875 = vmatpush.msra.mxu0 0.0
  %1876 = vmatpush.msra.mxu0 0.0
  %1877 = vmatpush.msra.mxu0 0.0
  %1878 = vmatpush.msra.mxu0 0.0
  %1879 = vmatpush.msra.mxu0 0.0
  %1880 = vmatpush.msra.mxu0 %v1744
  %1881 = vmatmul.f32.gmra.mxu0 %v1728
  %v1882 = vpop.f32.mrf.mxu0
  %v1883 = vadd.f32 0.0, %v1882
  %1884 = vmatmul.f32.gmra.mxu0 %v1731
  %v1885 = vpop.f32.mrf.mxu0
  %v1886 = vadd.f32 0.0, %v1885
  %1887 = vdwg.mxu0
  %1888 = vmatpush.msra.mxu0 0.0
  %1889 = vmatpush.msra.mxu0 0.0
  %1890 = vmatpush.msra.mxu0 0.0
  %1891 = vmatpush.msra.mxu0 0.0
  %1892 = vmatpush.msra.mxu0 0.0
  %1893 = vmatpush.msra.mxu0 0.0
  %1894 = vmatpush.msra.mxu0 0.0
  %1895 = vmatpush.msra.mxu0 0.0
  %1896 = vmatpush.msra.mxu0 0.0
  %1897 = vmatpush.msra.mxu0 0.0
  %1898 = vmatpush.msra.mxu0 0.0
  %1899 = vmatpush.msra.mxu0 0.0
  %1900 = vmatpush.msra.mxu0 0.0
  %1901 = vmatpush.msra.mxu0 0.0
  %1902 = vmatpush.msra.mxu0 0.0
  %1903 = vmatpush.msra.mxu0 %v1746
  %1904 = vmatmul.f32.gmra.mxu0 %v1728
  %v1905 = vpop.f32.mrf.mxu0
  %v1906 = vadd.f32 0.0, %v1905
  %1907 = vmatmul.f32.gmra.mxu0 %v1731
  %v1908 = vpop.f32.mrf.mxu0
  %v1909 = vadd.f32 0.0, %v1908
  %1910 = vdwg.mxu0
  %1911 = vmatpush.msra.mxu0 0.0
  %1912 = vmatpush.msra.mxu0 0.0
  %1913 = vmatpush.msra.mxu0 0.0
  %1914 = vmatpush.msra.mxu0 0.0
  %1915 = vmatpush.msra.mxu0 0.0
  %1916 = vmatpush.msra.mxu0 0.0
  %1917 = vmatpush.msra.mxu0 0.0
  %1918 = vmatpush.msra.mxu0 0.0
  %1919 = vmatpush.msra.mxu0 0.0
  %1920 = vmatpush.msra.mxu0 0.0
  %1921 = vmatpush.msra.mxu0 0.0
  %1922 = vmatpush.msra.mxu0 0.0
  %1923 = vmatpush.msra.mxu0 0.0
  %1924 = vmatpush.msra.mxu0 0.0
  %1925 = vmatpush.msra.mxu0 0.0
  %1926 = vmatpush.msra.mxu0 %v1748
  %1927 = vmatmul.f32.gmra.mxu0 %v1728
  %v1928 = vpop.f32.mrf.mxu0
  %v1929 = vadd.f32 0.0, %v1928
  %1930 = vmatmul.f32.gmra.mxu0 %v1731
  %v1931 = vpop.f32.mrf.mxu0
  %v1932 = vadd.f32 0.0, %v1931
  %1933 = vdwg.mxu0
  %v1935 = vsel %vm1726, %v149, 0
  %v1938 = vsel %vm1726, %v150, 0
  %v1941 = vsel %vm1733, %v1638, 0
  %v1944 = vsel %vm1733, %v1639, 0
  %v1947 = vsel %vm1733, %v1640, 0
  %v1950 = vsel %vm1733, %v1641, 0
  %v1953 = vsel %vm1733, %v1642, 0
  %v1956 = vsel %vm1733, %v1643, 0
  %v1959 = vsel %vm1733, %v1644, 0
  %v1962 = vsel %vm1733, %v1645, 0
  %1964 = vmatpush.msra.mxu0 0.0
  %1965 = vmatpush.msra.mxu0 0.0
  %1966 = vmatpush.msra.mxu0 0.0
  %1967 = vmatpush.msra.mxu0 0.0
  %1968 = vmatpush.msra.mxu0 0.0
  %1969 = vmatpush.msra.mxu0 0.0
  %1970 = vmatpush.msra.mxu0 0.0
  %1971 = vmatpush.msra.mxu0 0.0
  %1972 = vmatpush.msra.mxu0 0.0
  %1973 = vmatpush.msra.mxu0 0.0
  %1974 = vmatpush.msra.mxu0 0.0
  %1975 = vmatpush.msra.mxu0 0.0
  %1976 = vmatpush.msra.mxu0 0.0
  %1977 = vmatpush.msra.mxu0 0.0
  %1978 = vmatpush.msra.mxu0 0.0
  %1979 = vmatpush.msra.mxu0 %v1941
  %1980 = vmatmul.f32.gmra.mxu0 %v1935
  %v1981 = vpop.f32.mrf.mxu0
  %v1982 = vadd.f32 %v1768, %v1981
  %1983 = vmatmul.f32.gmra.mxu0 %v1938
  %v1984 = vpop.f32.mrf.mxu0
  %v1985 = vadd.f32 %v1771, %v1984
  %1986 = vdwg.mxu0
  %1987 = vmatpush.msra.mxu0 0.0
  %1988 = vmatpush.msra.mxu0 0.0
  %1989 = vmatpush.msra.mxu0 0.0
  %1990 = vmatpush.msra.mxu0 0.0
  %1991 = vmatpush.msra.mxu0 0.0
  %1992 = vmatpush.msra.mxu0 0.0
  %1993 = vmatpush.msra.mxu0 0.0
  %1994 = vmatpush.msra.mxu0 0.0
  %1995 = vmatpush.msra.mxu0 0.0
  %1996 = vmatpush.msra.mxu0 0.0
  %1997 = vmatpush.msra.mxu0 0.0
  %1998 = vmatpush.msra.mxu0 0.0
  %1999 = vmatpush.msra.mxu0 0.0
  %2000 = vmatpush.msra.mxu0 0.0
  %2001 = vmatpush.msra.mxu0 0.0
  %2002 = vmatpush.msra.mxu0 %v1944
  %2003 = vmatmul.f32.gmra.mxu0 %v1935
  %v2004 = vpop.f32.mrf.mxu0
  %v2005 = vadd.f32 %v1791, %v2004
  %2006 = vmatmul.f32.gmra.mxu0 %v1938
  %v2007 = vpop.f32.mrf.mxu0
  %v2008 = vadd.f32 %v1794, %v2007
  %2009 = vdwg.mxu0
  %2010 = vmatpush.msra.mxu0 0.0
  %2011 = vmatpush.msra.mxu0 0.0
  %2012 = vmatpush.msra.mxu0 0.0
  %2013 = vmatpush.msra.mxu0 0.0
  %2014 = vmatpush.msra.mxu0 0.0
  %2015 = vmatpush.msra.mxu0 0.0
  %2016 = vmatpush.msra.mxu0 0.0
  %2017 = vmatpush.msra.mxu0 0.0
  %2018 = vmatpush.msra.mxu0 0.0
  %2019 = vmatpush.msra.mxu0 0.0
  %2020 = vmatpush.msra.mxu0 0.0
  %2021 = vmatpush.msra.mxu0 0.0
  %2022 = vmatpush.msra.mxu0 0.0
  %2023 = vmatpush.msra.mxu0 0.0
  %2024 = vmatpush.msra.mxu0 0.0
  %2025 = vmatpush.msra.mxu0 %v1947
  %2026 = vmatmul.f32.gmra.mxu0 %v1935
  %v2027 = vpop.f32.mrf.mxu0
  %v2028 = vadd.f32 %v1814, %v2027
  %2029 = vmatmul.f32.gmra.mxu0 %v1938
  %v2030 = vpop.f32.mrf.mxu0
  %v2031 = vadd.f32 %v1817, %v2030
  %2032 = vdwg.mxu0
  %2033 = vmatpush.msra.mxu0 0.0
  %2034 = vmatpush.msra.mxu0 0.0
  %2035 = vmatpush.msra.mxu0 0.0
  %2036 = vmatpush.msra.mxu0 0.0
  %2037 = vmatpush.msra.mxu0 0.0
  %2038 = vmatpush.msra.mxu0 0.0
  %2039 = vmatpush.msra.mxu0 0.0
  %2040 = vmatpush.msra.mxu0 0.0
  %2041 = vmatpush.msra.mxu0 0.0
  %2042 = vmatpush.msra.mxu0 0.0
  %2043 = vmatpush.msra.mxu0 0.0
  %2044 = vmatpush.msra.mxu0 0.0
  %2045 = vmatpush.msra.mxu0 0.0
  %2046 = vmatpush.msra.mxu0 0.0
  %2047 = vmatpush.msra.mxu0 0.0
  %2048 = vmatpush.msra.mxu0 %v1950
  %2049 = vmatmul.f32.gmra.mxu0 %v1935
  %v2050 = vpop.f32.mrf.mxu0
  %v2051 = vadd.f32 %v1837, %v2050
  %2052 = vmatmul.f32.gmra.mxu0 %v1938
  %v2053 = vpop.f32.mrf.mxu0
  %v2054 = vadd.f32 %v1840, %v2053
  %2055 = vdwg.mxu0
  %2056 = vmatpush.msra.mxu0 0.0
  %2057 = vmatpush.msra.mxu0 0.0
  %2058 = vmatpush.msra.mxu0 0.0
  %2059 = vmatpush.msra.mxu0 0.0
  %2060 = vmatpush.msra.mxu0 0.0
  %2061 = vmatpush.msra.mxu0 0.0
  %2062 = vmatpush.msra.mxu0 0.0
  %2063 = vmatpush.msra.mxu0 0.0
  %2064 = vmatpush.msra.mxu0 0.0
  %2065 = vmatpush.msra.mxu0 0.0
  %2066 = vmatpush.msra.mxu0 0.0
  %2067 = vmatpush.msra.mxu0 0.0
  %2068 = vmatpush.msra.mxu0 0.0
  %2069 = vmatpush.msra.mxu0 0.0
  %2070 = vmatpush.msra.mxu0 0.0
  %2071 = vmatpush.msra.mxu0 %v1953
  %2072 = vmatmul.f32.gmra.mxu0 %v1935
  %v2073 = vpop.f32.mrf.mxu0
  %v2074 = vadd.f32 %v1860, %v2073
  %2075 = vmatmul.f32.gmra.mxu0 %v1938
  %v2076 = vpop.f32.mrf.mxu0
  %v2077 = vadd.f32 %v1863, %v2076
  %2078 = vdwg.mxu0
  %2079 = vmatpush.msra.mxu0 0.0
  %2080 = vmatpush.msra.mxu0 0.0
  %2081 = vmatpush.msra.mxu0 0.0
  %2082 = vmatpush.msra.mxu0 0.0
  %2083 = vmatpush.msra.mxu0 0.0
  %2084 = vmatpush.msra.mxu0 0.0
  %2085 = vmatpush.msra.mxu0 0.0
  %2086 = vmatpush.msra.mxu0 0.0
  %2087 = vmatpush.msra.mxu0 0.0
  %2088 = vmatpush.msra.mxu0 0.0
  %2089 = vmatpush.msra.mxu0 0.0
  %2090 = vmatpush.msra.mxu0 0.0
  %2091 = vmatpush.msra.mxu0 0.0
  %2092 = vmatpush.msra.mxu0 0.0
  %2093 = vmatpush.msra.mxu0 0.0
  %2094 = vmatpush.msra.mxu0 %v1956
  %2095 = vmatmul.f32.gmra.mxu0 %v1935
  %v2096 = vpop.f32.mrf.mxu0
  %v2097 = vadd.f32 %v1883, %v2096
  %2098 = vmatmul.f32.gmra.mxu0 %v1938
  %v2099 = vpop.f32.mrf.mxu0
  %v2100 = vadd.f32 %v1886, %v2099
  %2101 = vdwg.mxu0
  %2102 = vmatpush.msra.mxu0 0.0
  %2103 = vmatpush.msra.mxu0 0.0
  %2104 = vmatpush.msra.mxu0 0.0
  %2105 = vmatpush.msra.mxu0 0.0
  %2106 = vmatpush.msra.mxu0 0.0
  %2107 = vmatpush.msra.mxu0 0.0
  %2108 = vmatpush.msra.mxu0 0.0
  %2109 = vmatpush.msra.mxu0 0.0
  %2110 = vmatpush.msra.mxu0 0.0
  %2111 = vmatpush.msra.mxu0 0.0
  %2112 = vmatpush.msra.mxu0 0.0
  %2113 = vmatpush.msra.mxu0 0.0
  %2114 = vmatpush.msra.mxu0 0.0
  %2115 = vmatpush.msra.mxu0 0.0
  %2116 = vmatpush.msra.mxu0 0.0
  %2117 = vmatpush.msra.mxu0 %v1959
  %2118 = vmatmul.f32.gmra.mxu0 %v1935
  %v2119 = vpop.f32.mrf.mxu0
  %v2120 = vadd.f32 %v1906, %v2119
  %2121 = vmatmul.f32.gmra.mxu0 %v1938
  %v2122 = vpop.f32.mrf.mxu0
  %v2123 = vadd.f32 %v1909, %v2122
  %2124 = vdwg.mxu0
  %2125 = vmatpush.msra.mxu0 0.0
  %2126 = vmatpush.msra.mxu0 0.0
  %2127 = vmatpush.msra.mxu0 0.0
  %2128 = vmatpush.msra.mxu0 0.0
  %2129 = vmatpush.msra.mxu0 0.0
  %2130 = vmatpush.msra.mxu0 0.0
  %2131 = vmatpush.msra.mxu0 0.0
  %2132 = vmatpush.msra.mxu0 0.0
  %2133 = vmatpush.msra.mxu0 0.0
  %2134 = vmatpush.msra.mxu0 0.0
  %2135 = vmatpush.msra.mxu0 0.0
  %2136 = vmatpush.msra.mxu0 0.0
  %2137 = vmatpush.msra.mxu0 0.0
  %2138 = vmatpush.msra.mxu0 0.0
  %2139 = vmatpush.msra.mxu0 0.0
  %2140 = vmatpush.msra.mxu0 %v1962
  %2141 = vmatmul.f32.gmra.mxu0 %v1935
  %v2142 = vpop.f32.mrf.mxu0
  %v2143 = vadd.f32 %v1929, %v2142
  %2144 = vmatmul.f32.gmra.mxu0 %v1938
  %v2145 = vpop.f32.mrf.mxu0
  %v2146 = vadd.f32 %v1932, %v2145
  %2147 = vdwg.mxu0
  %v2156 = vrot.slane %v1686, 6
  %v2157 = vrot.slane %v1687, 6
  %v2158 = vrot.slane %v1688, 6
  %v2159 = vrot.slane %v1689, 6
  %v2160 = vrot.slane %v1690, 6
  %v2161 = vrot.slane %v1691, 6
  %v2162 = vrot.slane %v1692, 6
  %v2163 = vrot.slane %v1693, 6
  %v2172 = vmul.f32 %v839, %v2156
  %v2173 = vmul.f32 %v841, %v2157
  %v2174 = vmul.f32 %v843, %v2158
  %v2175 = vmul.f32 %v845, %v2159
  %v2176 = vmul.f32 %v847, %v2160
  %v2177 = vmul.f32 %v849, %v2161
  %v2178 = vmul.f32 %v851, %v2162
  %v2179 = vmul.f32 %v853, %v2163
  %v2180 = vld [vmem:[#allocation2] sm:$0x30]
  %v2181 = vld [vmem:[#allocation2 + $0x8] sm:$0x30]
  %v2182 = vld [vmem:[#allocation2 + $0x10] sm:$0x30]
  %v2183 = vld [vmem:[#allocation2 + $0x18] sm:$0x30]
  %v2184 = vld [vmem:[#allocation2 + $0x20] sm:$0x30]
  %v2185 = vld [vmem:[#allocation2 + $0x28] sm:$0x30]
  %v2186 = vld [vmem:[#allocation2 + $0x30] sm:$0x30]
  %v2187 = vld [vmem:[#allocation2 + $0x38] sm:$0x30]
  %v2188 = vadd.f32 %v2172, %v2180
  %v2189 = vadd.f32 %v2173, %v2181
  %v2190 = vadd.f32 %v2174, %v2182
  %v2191 = vadd.f32 %v2175, %v2183
  %v2192 = vadd.f32 %v2176, %v2184
  %v2193 = vadd.f32 %v2177, %v2185
  %v2194 = vadd.f32 %v2178, %v2186
  %v2195 = vadd.f32 %v2179, %v2187
  %v2196 = vld [vmem:[#allocation3] sm:$0x30]
  %v2197 = vld [vmem:[#allocation3 + $0x8] sm:$0x30]
  %v2198 = vld [vmem:[#allocation3 + $0x10] sm:$0x30]
  %v2199 = vld [vmem:[#allocation3 + $0x18] sm:$0x30]
  %v2200 = vld [vmem:[#allocation3 + $0x20] sm:$0x30]
  %v2201 = vld [vmem:[#allocation3 + $0x28] sm:$0x30]
  %v2202 = vld [vmem:[#allocation3 + $0x30] sm:$0x30]
  %v2203 = vld [vmem:[#allocation3 + $0x38] sm:$0x30]
  %v2204 = vmul.f32 %v2188, %v2196
  %v2205 = vmul.f32 %v2189, %v2197
  %v2206 = vmul.f32 %v2190, %v2198
  %v2207 = vmul.f32 %v2191, %v2199
  %v2208 = vmul.f32 %v2192, %v2200
  %v2209 = vmul.f32 %v2193, %v2201
  %v2210 = vmul.f32 %v2194, %v2202
  %v2211 = vmul.f32 %v2195, %v2203
  %v2220 = vrot.slane %v2204, 4
  %v2221 = vrot.slane %v2205, 4
  %v2222 = vrot.slane %v2206, 4
  %v2223 = vrot.slane %v2207, 4
  %v2224 = vrot.slane %v2208, 4
  %v2225 = vrot.slane %v2209, 4
  %v2226 = vrot.slane %v2210, 4
  %v2227 = vrot.slane %v2211, 4
  %v2229 = vsel %vm1726, %v163, 0
  %v2232 = vsel %vm1726, %v164, 0
  %v2234 = vsel %vm1733, %v2220, 0
  %v2236 = vsel %vm1733, %v2221, 0
  %v2238 = vsel %vm1733, %v2222, 0
  %v2240 = vsel %vm1733, %v2223, 0
  %v2242 = vsel %vm1733, %v2224, 0
  %v2244 = vsel %vm1733, %v2225, 0
  %v2246 = vsel %vm1733, %v2226, 0
  %v2248 = vsel %vm1733, %v2227, 0
  %2250 = vmatpush.msra.mxu0 0.0
  %2251 = vmatpush.msra.mxu0 0.0
  %2252 = vmatpush.msra.mxu0 0.0
  %2253 = vmatpush.msra.mxu0 0.0
  %2254 = vmatpush.msra.mxu0 0.0
  %2255 = vmatpush.msra.mxu0 0.0
  %2256 = vmatpush.msra.mxu0 0.0
  %2257 = vmatpush.msra.mxu0 0.0
  %2258 = vmatpush.msra.mxu0 0.0
  %2259 = vmatpush.msra.mxu0 0.0
  %2260 = vmatpush.msra.mxu0 0.0
  %2261 = vmatpush.msra.mxu0 0.0
  %2262 = vmatpush.msra.mxu0 0.0
  %2263 = vmatpush.msra.mxu0 0.0
  %2264 = vmatpush.msra.mxu0 0.0
  %2265 = vmatpush.msra.mxu0 %v2234
  %2266 = vmatmul.f32.gmra.mxu0 %v2229
  %v2267 = vpop.f32.mrf.mxu0
  %v2268 = vadd.f32 0.0, %v2267
  %2269 = vmatmul.f32.gmra.mxu0 %v2232
  %v2270 = vpop.f32.mrf.mxu0
  %v2271 = vadd.f32 0.0, %v2270
  %2272 = vdwg.mxu0
  %2273 = vmatpush.msra.mxu0 0.0
  %2274 = vmatpush.msra.mxu0 0.0
  %2275 = vmatpush.msra.mxu0 0.0
  %2276 = vmatpush.msra.mxu0 0.0
  %2277 = vmatpush.msra.mxu0 0.0
  %2278 = vmatpush.msra.mxu0 0.0
  %2279 = vmatpush.msra.mxu0 0.0
  %2280 = vmatpush.msra.mxu0 0.0
  %2281 = vmatpush.msra.mxu0 0.0
  %2282 = vmatpush.msra.mxu0 0.0
  %2283 = vmatpush.msra.mxu0 0.0
  %2284 = vmatpush.msra.mxu0 0.0
  %2285 = vmatpush.msra.mxu0 0.0
  %2286 = vmatpush.msra.mxu0 0.0
  %2287 = vmatpush.msra.mxu0 0.0
  %2288 = vmatpush.msra.mxu0 %v2236
  %2289 = vmatmul.f32.gmra.mxu0 %v2229
  %v2290 = vpop.f32.mrf.mxu0
  %v2291 = vadd.f32 0.0, %v2290
  %2292 = vmatmul.f32.gmra.mxu0 %v2232
  %v2293 = vpop.f32.mrf.mxu0
  %v2294 = vadd.f32 0.0, %v2293
  %2295 = vdwg.mxu0
  %2296 = vmatpush.msra.mxu0 0.0
  %2297 = vmatpush.msra.mxu0 0.0
  %2298 = vmatpush.msra.mxu0 0.0
  %2299 = vmatpush.msra.mxu0 0.0
  %2300 = vmatpush.msra.mxu0 0.0
  %2301 = vmatpush.msra.mxu0 0.0
  %2302 = vmatpush.msra.mxu0 0.0
  %2303 = vmatpush.msra.mxu0 0.0
  %2304 = vmatpush.msra.mxu0 0.0
  %2305 = vmatpush.msra.mxu0 0.0
  %2306 = vmatpush.msra.mxu0 0.0
  %2307 = vmatpush.msra.mxu0 0.0
  %2308 = vmatpush.msra.mxu0 0.0
  %2309 = vmatpush.msra.mxu0 0.0
  %2310 = vmatpush.msra.mxu0 0.0
  %2311 = vmatpush.msra.mxu0 %v2238
  %2312 = vmatmul.f32.gmra.mxu0 %v2229
  %v2313 = vpop.f32.mrf.mxu0
  %v2314 = vadd.f32 0.0, %v2313
  %2315 = vmatmul.f32.gmra.mxu0 %v2232
  %v2316 = vpop.f32.mrf.mxu0
  %v2317 = vadd.f32 0.0, %v2316
  %2318 = vdwg.mxu0
  %2319 = vmatpush.msra.mxu0 0.0
  %2320 = vmatpush.msra.mxu0 0.0
  %2321 = vmatpush.msra.mxu0 0.0
  %2322 = vmatpush.msra.mxu0 0.0
  %2323 = vmatpush.msra.mxu0 0.0
  %2324 = vmatpush.msra.mxu0 0.0
  %2325 = vmatpush.msra.mxu0 0.0
  %2326 = vmatpush.msra.mxu0 0.0
  %2327 = vmatpush.msra.mxu0 0.0
  %2328 = vmatpush.msra.mxu0 0.0
  %2329 = vmatpush.msra.mxu0 0.0
  %2330 = vmatpush.msra.mxu0 0.0
  %2331 = vmatpush.msra.mxu0 0.0
  %2332 = vmatpush.msra.mxu0 0.0
  %2333 = vmatpush.msra.mxu0 0.0
  %2334 = vmatpush.msra.mxu0 %v2240
  %2335 = vmatmul.f32.gmra.mxu0 %v2229
  %v2336 = vpop.f32.mrf.mxu0
  %v2337 = vadd.f32 0.0, %v2336
  %2338 = vmatmul.f32.gmra.mxu0 %v2232
  %v2339 = vpop.f32.mrf.mxu0
  %v2340 = vadd.f32 0.0, %v2339
  %2341 = vdwg.mxu0
  %2342 = vmatpush.msra.mxu0 0.0
  %2343 = vmatpush.msra.mxu0 0.0
  %2344 = vmatpush.msra.mxu0 0.0
  %2345 = vmatpush.msra.mxu0 0.0
  %2346 = vmatpush.msra.mxu0 0.0
  %2347 = vmatpush.msra.mxu0 0.0
  %2348 = vmatpush.msra.mxu0 0.0
  %2349 = vmatpush.msra.mxu0 0.0
  %2350 = vmatpush.msra.mxu0 0.0
  %2351 = vmatpush.msra.mxu0 0.0
  %2352 = vmatpush.msra.mxu0 0.0
  %2353 = vmatpush.msra.mxu0 0.0
  %2354 = vmatpush.msra.mxu0 0.0
  %2355 = vmatpush.msra.mxu0 0.0
  %2356 = vmatpush.msra.mxu0 0.0
  %2357 = vmatpush.msra.mxu0 %v2242
  %2358 = vmatmul.f32.gmra.mxu0 %v2229
  %v2359 = vpop.f32.mrf.mxu0
  %v2360 = vadd.f32 0.0, %v2359
  %2361 = vmatmul.f32.gmra.mxu0 %v2232
  %v2362 = vpop.f32.mrf.mxu0
  %v2363 = vadd.f32 0.0, %v2362
  %2364 = vdwg.mxu0
  %2365 = vmatpush.msra.mxu0 0.0
  %2366 = vmatpush.msra.mxu0 0.0
  %2367 = vmatpush.msra.mxu0 0.0
  %2368 = vmatpush.msra.mxu0 0.0
  %2369 = vmatpush.msra.mxu0 0.0
  %2370 = vmatpush.msra.mxu0 0.0
  %2371 = vmatpush.msra.mxu0 0.0
  %2372 = vmatpush.msra.mxu0 0.0
  %2373 = vmatpush.msra.mxu0 0.0
  %2374 = vmatpush.msra.mxu0 0.0
  %2375 = vmatpush.msra.mxu0 0.0
  %2376 = vmatpush.msra.mxu0 0.0
  %2377 = vmatpush.msra.mxu0 0.0
  %2378 = vmatpush.msra.mxu0 0.0
  %2379 = vmatpush.msra.mxu0 0.0
  %2380 = vmatpush.msra.mxu0 %v2244
  %2381 = vmatmul.f32.gmra.mxu0 %v2229
  %v2382 = vpop.f32.mrf.mxu0
  %v2383 = vadd.f32 0.0, %v2382
  %2384 = vmatmul.f32.gmra.mxu0 %v2232
  %v2385 = vpop.f32.mrf.mxu0
  %v2386 = vadd.f32 0.0, %v2385
  %2387 = vdwg.mxu0
  %2388 = vmatpush.msra.mxu0 0.0
  %2389 = vmatpush.msra.mxu0 0.0
  %2390 = vmatpush.msra.mxu0 0.0
  %2391 = vmatpush.msra.mxu0 0.0
  %2392 = vmatpush.msra.mxu0 0.0
  %2393 = vmatpush.msra.mxu0 0.0
  %2394 = vmatpush.msra.mxu0 0.0
  %2395 = vmatpush.msra.mxu0 0.0
  %2396 = vmatpush.msra.mxu0 0.0
  %2397 = vmatpush.msra.mxu0 0.0
  %2398 = vmatpush.msra.mxu0 0.0
  %2399 = vmatpush.msra.mxu0 0.0
  %2400 = vmatpush.msra.mxu0 0.0
  %2401 = vmatpush.msra.mxu0 0.0
  %2402 = vmatpush.msra.mxu0 0.0
  %2403 = vmatpush.msra.mxu0 %v2246
  %2404 = vmatmul.f32.gmra.mxu0 %v2229
  %v2405 = vpop.f32.mrf.mxu0
  %v2406 = vadd.f32 0.0, %v2405
  %2407 = vmatmul.f32.gmra.mxu0 %v2232
  %v2408 = vpop.f32.mrf.mxu0
  %v2409 = vadd.f32 0.0, %v2408
  %2410 = vdwg.mxu0
  %2411 = vmatpush.msra.mxu0 0.0
  %2412 = vmatpush.msra.mxu0 0.0
  %2413 = vmatpush.msra.mxu0 0.0
  %2414 = vmatpush.msra.mxu0 0.0
  %2415 = vmatpush.msra.mxu0 0.0
  %2416 = vmatpush.msra.mxu0 0.0
  %2417 = vmatpush.msra.mxu0 0.0
  %2418 = vmatpush.msra.mxu0 0.0
  %2419 = vmatpush.msra.mxu0 0.0
  %2420 = vmatpush.msra.mxu0 0.0
  %2421 = vmatpush.msra.mxu0 0.0
  %2422 = vmatpush.msra.mxu0 0.0
  %2423 = vmatpush.msra.mxu0 0.0
  %2424 = vmatpush.msra.mxu0 0.0
  %2425 = vmatpush.msra.mxu0 0.0
  %2426 = vmatpush.msra.mxu0 %v2248
  %2427 = vmatmul.f32.gmra.mxu0 %v2229
  %v2428 = vpop.f32.mrf.mxu0
  %v2429 = vadd.f32 0.0, %v2428
  %2430 = vmatmul.f32.gmra.mxu0 %v2232
  %v2431 = vpop.f32.mrf.mxu0
  %v2432 = vadd.f32 0.0, %v2431
  %2433 = vdwg.mxu0
  %v2434 = vadd.f32 %v1982, %v2268
  %v2435 = vadd.f32 %v2005, %v2291
  %v2436 = vadd.f32 %v2028, %v2314
  %v2437 = vadd.f32 %v2051, %v2337
  %v2438 = vadd.f32 %v2074, %v2360
  %v2439 = vadd.f32 %v2097, %v2383
  %v2440 = vadd.f32 %v2120, %v2406
  %v2441 = vadd.f32 %v2143, %v2429
  %v2442 = vadd.f32 %v1985, %v2271
  %v2443 = vadd.f32 %v2008, %v2294
  %v2444 = vadd.f32 %v2031, %v2317
  %v2445 = vadd.f32 %v2054, %v2340
  %v2446 = vadd.f32 %v2077, %v2363
  %v2447 = vadd.f32 %v2100, %v2386
  %v2448 = vadd.f32 %v2123, %v2409
  %v2449 = vadd.f32 %v2146, %v2432
  %v2458 = vrot.slane %v2188, 6
  %v2459 = vrot.slane %v2189, 6
  %v2460 = vrot.slane %v2190, 6
  %v2461 = vrot.slane %v2191, 6
  %v2462 = vrot.slane %v2192, 6
  %v2463 = vrot.slane %v2193, 6
  %v2464 = vrot.slane %v2194, 6
  %v2465 = vrot.slane %v2195, 6
  %v2474 = vmul.f32 %v839, %v2458
  %v2475 = vmul.f32 %v841, %v2459
  %v2476 = vmul.f32 %v843, %v2460
  %v2477 = vmul.f32 %v845, %v2461
  %v2478 = vmul.f32 %v847, %v2462
  %v2479 = vmul.f32 %v849, %v2463
  %v2480 = vmul.f32 %v851, %v2464
  %v2481 = vmul.f32 %v853, %v2465
  %v2482 = vld [vmem:[#allocation2] sm:$0xc0]
  %v2483 = vld [vmem:[#allocation2 + $0x8] sm:$0xc0]
  %v2484 = vld [vmem:[#allocation2 + $0x10] sm:$0xc0]
  %v2485 = vld [vmem:[#allocation2 + $0x18] sm:$0xc0]
  %v2486 = vld [vmem:[#allocation2 + $0x20] sm:$0xc0]
  %v2487 = vld [vmem:[#allocation2 + $0x28] sm:$0xc0]
  %v2488 = vld [vmem:[#allocation2 + $0x30] sm:$0xc0]
  %v2489 = vld [vmem:[#allocation2 + $0x38] sm:$0xc0]
  %v2490 = vadd.f32 %v2474, %v2482
  %v2491 = vadd.f32 %v2475, %v2483
  %v2492 = vadd.f32 %v2476, %v2484
  %v2493 = vadd.f32 %v2477, %v2485
  %v2494 = vadd.f32 %v2478, %v2486
  %v2495 = vadd.f32 %v2479, %v2487
  %v2496 = vadd.f32 %v2480, %v2488
  %v2497 = vadd.f32 %v2481, %v2489
  %v2498 = vld [vmem:[#allocation3] sm:$0xc0]
  %v2499 = vld [vmem:[#allocation3 + $0x8] sm:$0xc0]
  %v2500 = vld [vmem:[#allocation3 + $0x10] sm:$0xc0]
  %v2501 = vld [vmem:[#allocation3 + $0x18] sm:$0xc0]
  %v2502 = vld [vmem:[#allocation3 + $0x20] sm:$0xc0]
  %v2503 = vld [vmem:[#allocation3 + $0x28] sm:$0xc0]
  %v2504 = vld [vmem:[#allocation3 + $0x30] sm:$0xc0]
  %v2505 = vld [vmem:[#allocation3 + $0x38] sm:$0xc0]
  %v2506 = vmul.f32 %v2490, %v2498
  %v2507 = vmul.f32 %v2491, %v2499
  %v2508 = vmul.f32 %v2492, %v2500
  %v2509 = vmul.f32 %v2493, %v2501
  %v2510 = vmul.f32 %v2494, %v2502
  %v2511 = vmul.f32 %v2495, %v2503
  %v2512 = vmul.f32 %v2496, %v2504
  %v2513 = vmul.f32 %v2497, %v2505
  %v2522 = vrot.slane %v2506, 6
  %v2523 = vrot.slane %v2507, 6
  %v2524 = vrot.slane %v2508, 6
  %v2525 = vrot.slane %v2509, 6
  %v2526 = vrot.slane %v2510, 6
  %v2527 = vrot.slane %v2511, 6
  %v2528 = vrot.slane %v2512, 6
  %v2529 = vrot.slane %v2513, 6
  %v2531 = vsel %vm1726, %v170, 0
  %v2534 = vsel %vm1726, %v171, 0
  %v2536 = vsel %vm1733, %v2522, 0
  %v2538 = vsel %vm1733, %v2523, 0
  %v2540 = vsel %vm1733, %v2524, 0
  %v2542 = vsel %vm1733, %v2525, 0
  %v2544 = vsel %vm1733, %v2526, 0
  %v2546 = vsel %vm1733, %v2527, 0
  %v2548 = vsel %vm1733, %v2528, 0
  %v2550 = vsel %vm1733, %v2529, 0
  %2552 = vmatpush.msra.mxu0 0.0
  %2553 = vmatpush.msra.mxu0 0.0
  %2554 = vmatpush.msra.mxu0 0.0
  %2555 = vmatpush.msra.mxu0 0.0
  %2556 = vmatpush.msra.mxu0 0.0
  %2557 = vmatpush.msra.mxu0 0.0
  %2558 = vmatpush.msra.mxu0 0.0
  %2559 = vmatpush.msra.mxu0 0.0
  %2560 = vmatpush.msra.mxu0 0.0
  %2561 = vmatpush.msra.mxu0 0.0
  %2562 = vmatpush.msra.mxu0 0.0
  %2563 = vmatpush.msra.mxu0 0.0
  %2564 = vmatpush.msra.mxu0 0.0
  %2565 = vmatpush.msra.mxu0 0.0
  %2566 = vmatpush.msra.mxu0 0.0
  %2567 = vmatpush.msra.mxu0 %v2536
  %2568 = vmatmul.f32.gmra.mxu0 %v2531
  %v2569 = vpop.f32.mrf.mxu0
  %v2570 = vadd.f32 0.0, %v2569
  %2571 = vmatmul.f32.gmra.mxu0 %v2534
  %v2572 = vpop.f32.mrf.mxu0
  %v2573 = vadd.f32 0.0, %v2572
  %2574 = vdwg.mxu0
  %2575 = vmatpush.msra.mxu0 0.0
  %2576 = vmatpush.msra.mxu0 0.0
  %2577 = vmatpush.msra.mxu0 0.0
  %2578 = vmatpush.msra.mxu0 0.0
  %2579 = vmatpush.msra.mxu0 0.0
  %2580 = vmatpush.msra.mxu0 0.0
  %2581 = vmatpush.msra.mxu0 0.0
  %2582 = vmatpush.msra.mxu0 0.0
  %2583 = vmatpush.msra.mxu0 0.0
  %2584 = vmatpush.msra.mxu0 0.0
  %2585 = vmatpush.msra.mxu0 0.0
  %2586 = vmatpush.msra.mxu0 0.0
  %2587 = vmatpush.msra.mxu0 0.0
  %2588 = vmatpush.msra.mxu0 0.0
  %2589 = vmatpush.msra.mxu0 0.0
  %2590 = vmatpush.msra.mxu0 %v2538
  %2591 = vmatmul.f32.gmra.mxu0 %v2531
  %v2592 = vpop.f32.mrf.mxu0
  %v2593 = vadd.f32 0.0, %v2592
  %2594 = vmatmul.f32.gmra.mxu0 %v2534
  %v2595 = vpop.f32.mrf.mxu0
  %v2596 = vadd.f32 0.0, %v2595
  %2597 = vdwg.mxu0
  %2598 = vmatpush.msra.mxu0 0.0
  %2599 = vmatpush.msra.mxu0 0.0
  %2600 = vmatpush.msra.mxu0 0.0
  %2601 = vmatpush.msra.mxu0 0.0
  %2602 = vmatpush.msra.mxu0 0.0
  %2603 = vmatpush.msra.mxu0 0.0
  %2604 = vmatpush.msra.mxu0 0.0
  %2605 = vmatpush.msra.mxu0 0.0
  %2606 = vmatpush.msra.mxu0 0.0
  %2607 = vmatpush.msra.mxu0 0.0
  %2608 = vmatpush.msra.mxu0 0.0
  %2609 = vmatpush.msra.mxu0 0.0
  %2610 = vmatpush.msra.mxu0 0.0
  %2611 = vmatpush.msra.mxu0 0.0
  %2612 = vmatpush.msra.mxu0 0.0
  %2613 = vmatpush.msra.mxu0 %v2540
  %2614 = vmatmul.f32.gmra.mxu0 %v2531
  %v2615 = vpop.f32.mrf.mxu0
  %v2616 = vadd.f32 0.0, %v2615
  %2617 = vmatmul.f32.gmra.mxu0 %v2534
  %v2618 = vpop.f32.mrf.mxu0
  %v2619 = vadd.f32 0.0, %v2618
  %2620 = vdwg.mxu0
  %2621 = vmatpush.msra.mxu0 0.0
  %2622 = vmatpush.msra.mxu0 0.0
  %2623 = vmatpush.msra.mxu0 0.0
  %2624 = vmatpush.msra.mxu0 0.0
  %2625 = vmatpush.msra.mxu0 0.0
  %2626 = vmatpush.msra.mxu0 0.0
  %2627 = vmatpush.msra.mxu0 0.0
  %2628 = vmatpush.msra.mxu0 0.0
  %2629 = vmatpush.msra.mxu0 0.0
  %2630 = vmatpush.msra.mxu0 0.0
  %2631 = vmatpush.msra.mxu0 0.0
  %2632 = vmatpush.msra.mxu0 0.0
  %2633 = vmatpush.msra.mxu0 0.0
  %2634 = vmatpush.msra.mxu0 0.0
  %2635 = vmatpush.msra.mxu0 0.0
  %2636 = vmatpush.msra.mxu0 %v2542
  %2637 = vmatmul.f32.gmra.mxu0 %v2531
  %v2638 = vpop.f32.mrf.mxu0
  %v2639 = vadd.f32 0.0, %v2638
  %2640 = vmatmul.f32.gmra.mxu0 %v2534
  %v2641 = vpop.f32.mrf.mxu0
  %v2642 = vadd.f32 0.0, %v2641
  %2643 = vdwg.mxu0
  %2644 = vmatpush.msra.mxu0 0.0
  %2645 = vmatpush.msra.mxu0 0.0
  %2646 = vmatpush.msra.mxu0 0.0
  %2647 = vmatpush.msra.mxu0 0.0
  %2648 = vmatpush.msra.mxu0 0.0
  %2649 = vmatpush.msra.mxu0 0.0
  %2650 = vmatpush.msra.mxu0 0.0
  %2651 = vmatpush.msra.mxu0 0.0
  %2652 = vmatpush.msra.mxu0 0.0
  %2653 = vmatpush.msra.mxu0 0.0
  %2654 = vmatpush.msra.mxu0 0.0
  %2655 = vmatpush.msra.mxu0 0.0
  %2656 = vmatpush.msra.mxu0 0.0
  %2657 = vmatpush.msra.mxu0 0.0
  %2658 = vmatpush.msra.mxu0 0.0
  %2659 = vmatpush.msra.mxu0 %v2544
  %2660 = vmatmul.f32.gmra.mxu0 %v2531
  %v2661 = vpop.f32.mrf.mxu0
  %v2662 = vadd.f32 0.0, %v2661
  %2663 = vmatmul.f32.gmra.mxu0 %v2534
  %v2664 = vpop.f32.mrf.mxu0
  %v2665 = vadd.f32 0.0, %v2664
  %2666 = vdwg.mxu0
  %2667 = vmatpush.msra.mxu0 0.0
  %2668 = vmatpush.msra.mxu0 0.0
  %2669 = vmatpush.msra.mxu0 0.0
  %2670 = vmatpush.msra.mxu0 0.0
  %2671 = vmatpush.msra.mxu0 0.0
  %2672 = vmatpush.msra.mxu0 0.0
  %2673 = vmatpush.msra.mxu0 0.0
  %2674 = vmatpush.msra.mxu0 0.0
  %2675 = vmatpush.msra.mxu0 0.0
  %2676 = vmatpush.msra.mxu0 0.0
  %2677 = vmatpush.msra.mxu0 0.0
  %2678 = vmatpush.msra.mxu0 0.0
  %2679 = vmatpush.msra.mxu0 0.0
  %2680 = vmatpush.msra.mxu0 0.0
  %2681 = vmatpush.msra.mxu0 0.0
  %2682 = vmatpush.msra.mxu0 %v2546
  %2683 = vmatmul.f32.gmra.mxu0 %v2531
  %v2684 = vpop.f32.mrf.mxu0
  %v2685 = vadd.f32 0.0, %v2684
  %2686 = vmatmul.f32.gmra.mxu0 %v2534
  %v2687 = vpop.f32.mrf.mxu0
  %v2688 = vadd.f32 0.0, %v2687
  %2689 = vdwg.mxu0
  %2690 = vmatpush.msra.mxu0 0.0
  %2691 = vmatpush.msra.mxu0 0.0
  %2692 = vmatpush.msra.mxu0 0.0
  %2693 = vmatpush.msra.mxu0 0.0
  %2694 = vmatpush.msra.mxu0 0.0
  %2695 = vmatpush.msra.mxu0 0.0
  %2696 = vmatpush.msra.mxu0 0.0
  %2697 = vmatpush.msra.mxu0 0.0
  %2698 = vmatpush.msra.mxu0 0.0
  %2699 = vmatpush.msra.mxu0 0.0
  %2700 = vmatpush.msra.mxu0 0.0
  %2701 = vmatpush.msra.mxu0 0.0
  %2702 = vmatpush.msra.mxu0 0.0
  %2703 = vmatpush.msra.mxu0 0.0
  %2704 = vmatpush.msra.mxu0 0.0
  %2705 = vmatpush.msra.mxu0 %v2548
  %2706 = vmatmul.f32.gmra.mxu0 %v2531
  %v2707 = vpop.f32.mrf.mxu0
  %v2708 = vadd.f32 0.0, %v2707
  %2709 = vmatmul.f32.gmra.mxu0 %v2534
  %v2710 = vpop.f32.mrf.mxu0
  %v2711 = vadd.f32 0.0, %v2710
  %2712 = vdwg.mxu0
  %2713 = vmatpush.msra.mxu0 0.0
  %2714 = vmatpush.msra.mxu0 0.0
  %2715 = vmatpush.msra.mxu0 0.0
  %2716 = vmatpush.msra.mxu0 0.0
  %2717 = vmatpush.msra.mxu0 0.0
  %2718 = vmatpush.msra.mxu0 0.0
  %2719 = vmatpush.msra.mxu0 0.0
  %2720 = vmatpush.msra.mxu0 0.0
  %2721 = vmatpush.msra.mxu0 0.0
  %2722 = vmatpush.msra.mxu0 0.0
  %2723 = vmatpush.msra.mxu0 0.0
  %2724 = vmatpush.msra.mxu0 0.0
  %2725 = vmatpush.msra.mxu0 0.0
  %2726 = vmatpush.msra.mxu0 0.0
  %2727 = vmatpush.msra.mxu0 0.0
  %2728 = vmatpush.msra.mxu0 %v2550
  %2729 = vmatmul.f32.gmra.mxu0 %v2531
  %v2730 = vpop.f32.mrf.mxu0
  %v2731 = vadd.f32 0.0, %v2730
  %2732 = vmatmul.f32.gmra.mxu0 %v2534
  %v2733 = vpop.f32.mrf.mxu0
  %v2734 = vadd.f32 0.0, %v2733
  %2735 = vdwg.mxu0
  %v2736 = vadd.f32 %v2434, %v2570
  %v2737 = vadd.f32 %v2435, %v2593
  %v2738 = vadd.f32 %v2436, %v2616
  %v2739 = vadd.f32 %v2437, %v2639
  %v2740 = vadd.f32 %v2438, %v2662
  %v2741 = vadd.f32 %v2439, %v2685
  %v2742 = vadd.f32 %v2440, %v2708
  %v2743 = vadd.f32 %v2441, %v2731
  %v2744 = vadd.f32 %v2442, %v2573
  %v2745 = vadd.f32 %v2443, %v2596
  %v2746 = vadd.f32 %v2444, %v2619
  %v2747 = vadd.f32 %v2445, %v2642
  %v2748 = vadd.f32 %v2446, %v2665
  %v2749 = vadd.f32 %v2447, %v2688
  %v2750 = vadd.f32 %v2448, %v2711
  %v2751 = vadd.f32 %v2449, %v2734
  %v2760 = vrot.slane %v2490, 6
  %v2761 = vrot.slane %v2491, 6
  %v2762 = vrot.slane %v2492, 6
  %v2763 = vrot.slane %v2493, 6
  %v2764 = vrot.slane %v2494, 6
  %v2765 = vrot.slane %v2495, 6
  %v2766 = vrot.slane %v2496, 6
  %v2767 = vrot.slane %v2497, 6
  %v2776 = vmul.f32 %v855, %v2760
  %v2777 = vmul.f32 %v857, %v2761
  %v2778 = vmul.f32 %v859, %v2762
  %v2779 = vmul.f32 %v861, %v2763
  %v2780 = vmul.f32 %v863, %v2764
  %v2781 = vmul.f32 %v865, %v2765
  %v2782 = vmul.f32 %v867, %v2766
  %v2783 = vmul.f32 %v869, %v2767
  %v2784 = vld [vmem:[#allocation2 + $0x40] sm:$0x3]
  %v2785 = vld [vmem:[#allocation2 + $0x48] sm:$0x3]
  %v2786 = vld [vmem:[#allocation2 + $0x50] sm:$0x3]
  %v2787 = vld [vmem:[#allocation2 + $0x58] sm:$0x3]
  %v2788 = vld [vmem:[#allocation2 + $0x60] sm:$0x3]
  %v2789 = vld [vmem:[#allocation2 + $0x68] sm:$0x3]
  %v2790 = vld [vmem:[#allocation2 + $0x70] sm:$0x3]
  %v2791 = vld [vmem:[#allocation2 + $0x78] sm:$0x3]
  %v2792 = vadd.f32 %v2776, %v2784
  %v2793 = vadd.f32 %v2777, %v2785
  %v2794 = vadd.f32 %v2778, %v2786
  %v2795 = vadd.f32 %v2779, %v2787
  %v2796 = vadd.f32 %v2780, %v2788
  %v2797 = vadd.f32 %v2781, %v2789
  %v2798 = vadd.f32 %v2782, %v2790
  %v2799 = vadd.f32 %v2783, %v2791
  %v2800 = vld [vmem:[#allocation3 + $0x40] sm:$0x3]
  %v2801 = vld [vmem:[#allocation3 + $0x48] sm:$0x3]
  %v2802 = vld [vmem:[#allocation3 + $0x50] sm:$0x3]
  %v2803 = vld [vmem:[#allocation3 + $0x58] sm:$0x3]
  %v2804 = vld [vmem:[#allocation3 + $0x60] sm:$0x3]
  %v2805 = vld [vmem:[#allocation3 + $0x68] sm:$0x3]
  %v2806 = vld [vmem:[#allocation3 + $0x70] sm:$0x3]
  %v2807 = vld [vmem:[#allocation3 + $0x78] sm:$0x3]
  %v2808 = vmul.f32 %v2792, %v2800
  %v2809 = vmul.f32 %v2793, %v2801
  %v2810 = vmul.f32 %v2794, %v2802
  %v2811 = vmul.f32 %v2795, %v2803
  %v2812 = vmul.f32 %v2796, %v2804
  %v2813 = vmul.f32 %v2797, %v2805
  %v2814 = vmul.f32 %v2798, %v2806
  %v2815 = vmul.f32 %v2799, %v2807
  %v2817 = vsel %vm1726, %v177, 0
  %v2820 = vsel %vm1726, %v178, 0
  %v2823 = vsel %vm1733, %v2808, 0
  %v2826 = vsel %vm1733, %v2809, 0
  %v2829 = vsel %vm1733, %v2810, 0
  %v2832 = vsel %vm1733, %v2811, 0
  %v2835 = vsel %vm1733, %v2812, 0
  %v2838 = vsel %vm1733, %v2813, 0
  %v2841 = vsel %vm1733, %v2814, 0
  %v2844 = vsel %vm1733, %v2815, 0
  %2846 = vmatpush.msra.mxu0 0.0
  %2847 = vmatpush.msra.mxu0 0.0
  %2848 = vmatpush.msra.mxu0 0.0
  %2849 = vmatpush.msra.mxu0 0.0
  %2850 = vmatpush.msra.mxu0 0.0
  %2851 = vmatpush.msra.mxu0 0.0
  %2852 = vmatpush.msra.mxu0 0.0
  %2853 = vmatpush.msra.mxu0 0.0
  %2854 = vmatpush.msra.mxu0 0.0
  %2855 = vmatpush.msra.mxu0 0.0
  %2856 = vmatpush.msra.mxu0 0.0
  %2857 = vmatpush.msra.mxu0 0.0
  %2858 = vmatpush.msra.mxu0 0.0
  %2859 = vmatpush.msra.mxu0 0.0
  %2860 = vmatpush.msra.mxu0 0.0
  %2861 = vmatpush.msra.mxu0 %v2823
  %2862 = vmatmul.f32.gmra.mxu0 %v2817
  %v2863 = vpop.f32.mrf.mxu0
  %v2864 = vadd.f32 0.0, %v2863
  %2865 = vmatmul.f32.gmra.mxu0 %v2820
  %v2866 = vpop.f32.mrf.mxu0
  %v2867 = vadd.f32 0.0, %v2866
  %2868 = vdwg.mxu0
  %2869 = vmatpush.msra.mxu0 0.0
  %2870 = vmatpush.msra.mxu0 0.0
  %2871 = vmatpush.msra.mxu0 0.0
  %2872 = vmatpush.msra.mxu0 0.0
  %2873 = vmatpush.msra.mxu0 0.0
  %2874 = vmatpush.msra.mxu0 0.0
  %2875 = vmatpush.msra.mxu0 0.0
  %2876 = vmatpush.msra.mxu0 0.0
  %2877 = vmatpush.msra.mxu0 0.0
  %2878 = vmatpush.msra.mxu0 0.0
  %2879 = vmatpush.msra.mxu0 0.0
  %2880 = vmatpush.msra.mxu0 0.0
  %2881 = vmatpush.msra.mxu0 0.0
  %2882 = vmatpush.msra.mxu0 0.0
  %2883 = vmatpush.msra.mxu0 0.0
  %2884 = vmatpush.msra.mxu0 %v2826
  %2885 = vmatmul.f32.gmra.mxu0 %v2817
  %v2886 = vpop.f32.mrf.mxu0
  %v2887 = vadd.f32 0.0, %v2886
  %2888 = vmatmul.f32.gmra.mxu0 %v2820
  %v2889 = vpop.f32.mrf.mxu0
  %v2890 = vadd.f32 0.0, %v2889
  %2891 = vdwg.mxu0
  %2892 = vmatpush.msra.mxu0 0.0
  %2893 = vmatpush.msra.mxu0 0.0
  %2894 = vmatpush.msra.mxu0 0.0
  %2895 = vmatpush.msra.mxu0 0.0
  %2896 = vmatpush.msra.mxu0 0.0
  %2897 = vmatpush.msra.mxu0 0.0
  %2898 = vmatpush.msra.mxu0 0.0
  %2899 = vmatpush.msra.mxu0 0.0
  %2900 = vmatpush.msra.mxu0 0.0
  %2901 = vmatpush.msra.mxu0 0.0
  %2902 = vmatpush.msra.mxu0 0.0
  %2903 = vmatpush.msra.mxu0 0.0
  %2904 = vmatpush.msra.mxu0 0.0
  %2905 = vmatpush.msra.mxu0 0.0
  %2906 = vmatpush.msra.mxu0 0.0
  %2907 = vmatpush.msra.mxu0 %v2829
  %2908 = vmatmul.f32.gmra.mxu0 %v2817
  %v2909 = vpop.f32.mrf.mxu0
  %v2910 = vadd.f32 0.0, %v2909
  %2911 = vmatmul.f32.gmra.mxu0 %v2820
  %v2912 = vpop.f32.mrf.mxu0
  %v2913 = vadd.f32 0.0, %v2912
  %2914 = vdwg.mxu0
  %2915 = vmatpush.msra.mxu0 0.0
  %2916 = vmatpush.msra.mxu0 0.0
  %2917 = vmatpush.msra.mxu0 0.0
  %2918 = vmatpush.msra.mxu0 0.0
  %2919 = vmatpush.msra.mxu0 0.0
  %2920 = vmatpush.msra.mxu0 0.0
  %2921 = vmatpush.msra.mxu0 0.0
  %2922 = vmatpush.msra.mxu0 0.0
  %2923 = vmatpush.msra.mxu0 0.0
  %2924 = vmatpush.msra.mxu0 0.0
  %2925 = vmatpush.msra.mxu0 0.0
  %2926 = vmatpush.msra.mxu0 0.0
  %2927 = vmatpush.msra.mxu0 0.0
  %2928 = vmatpush.msra.mxu0 0.0
  %2929 = vmatpush.msra.mxu0 0.0
  %2930 = vmatpush.msra.mxu0 %v2832
  %2931 = vmatmul.f32.gmra.mxu0 %v2817
  %v2932 = vpop.f32.mrf.mxu0
  %v2933 = vadd.f32 0.0, %v2932
  %2934 = vmatmul.f32.gmra.mxu0 %v2820
  %v2935 = vpop.f32.mrf.mxu0
  %v2936 = vadd.f32 0.0, %v2935
  %2937 = vdwg.mxu0
  %2938 = vmatpush.msra.mxu0 0.0
  %2939 = vmatpush.msra.mxu0 0.0
  %2940 = vmatpush.msra.mxu0 0.0
  %2941 = vmatpush.msra.mxu0 0.0
  %2942 = vmatpush.msra.mxu0 0.0
  %2943 = vmatpush.msra.mxu0 0.0
  %2944 = vmatpush.msra.mxu0 0.0
  %2945 = vmatpush.msra.mxu0 0.0
  %2946 = vmatpush.msra.mxu0 0.0
  %2947 = vmatpush.msra.mxu0 0.0
  %2948 = vmatpush.msra.mxu0 0.0
  %2949 = vmatpush.msra.mxu0 0.0
  %2950 = vmatpush.msra.mxu0 0.0
  %2951 = vmatpush.msra.mxu0 0.0
  %2952 = vmatpush.msra.mxu0 0.0
  %2953 = vmatpush.msra.mxu0 %v2835
  %2954 = vmatmul.f32.gmra.mxu0 %v2817
  %v2955 = vpop.f32.mrf.mxu0
  %v2956 = vadd.f32 0.0, %v2955
  %2957 = vmatmul.f32.gmra.mxu0 %v2820
  %v2958 = vpop.f32.mrf.mxu0
  %v2959 = vadd.f32 0.0, %v2958
  %2960 = vdwg.mxu0
  %2961 = vmatpush.msra.mxu0 0.0
  %2962 = vmatpush.msra.mxu0 0.0
  %2963 = vmatpush.msra.mxu0 0.0
  %2964 = vmatpush.msra.mxu0 0.0
  %2965 = vmatpush.msra.mxu0 0.0
  %2966 = vmatpush.msra.mxu0 0.0
  %2967 = vmatpush.msra.mxu0 0.0
  %2968 = vmatpush.msra.mxu0 0.0
  %2969 = vmatpush.msra.mxu0 0.0
  %2970 = vmatpush.msra.mxu0 0.0
  %2971 = vmatpush.msra.mxu0 0.0
  %2972 = vmatpush.msra.mxu0 0.0
  %2973 = vmatpush.msra.mxu0 0.0
  %2974 = vmatpush.msra.mxu0 0.0
  %2975 = vmatpush.msra.mxu0 0.0
  %2976 = vmatpush.msra.mxu0 %v2838
  %2977 = vmatmul.f32.gmra.mxu0 %v2817
  %v2978 = vpop.f32.mrf.mxu0
  %v2979 = vadd.f32 0.0, %v2978
  %2980 = vmatmul.f32.gmra.mxu0 %v2820
  %v2981 = vpop.f32.mrf.mxu0
  %v2982 = vadd.f32 0.0, %v2981
  %2983 = vdwg.mxu0
  %2984 = vmatpush.msra.mxu0 0.0
  %2985 = vmatpush.msra.mxu0 0.0
  %2986 = vmatpush.msra.mxu0 0.0
  %2987 = vmatpush.msra.mxu0 0.0
  %2988 = vmatpush.msra.mxu0 0.0
  %2989 = vmatpush.msra.mxu0 0.0
  %2990 = vmatpush.msra.mxu0 0.0
  %2991 = vmatpush.msra.mxu0 0.0
  %2992 = vmatpush.msra.mxu0 0.0
  %2993 = vmatpush.msra.mxu0 0.0
  %2994 = vmatpush.msra.mxu0 0.0
  %2995 = vmatpush.msra.mxu0 0.0
  %2996 = vmatpush.msra.mxu0 0.0
  %2997 = vmatpush.msra.mxu0 0.0
  %2998 = vmatpush.msra.mxu0 0.0
  %2999 = vmatpush.msra.mxu0 %v2841
  %3000 = vmatmul.f32.gmra.mxu0 %v2817
  %v3001 = vpop.f32.mrf.mxu0
  %v3002 = vadd.f32 0.0, %v3001
  %3003 = vmatmul.f32.gmra.mxu0 %v2820
  %v3004 = vpop.f32.mrf.mxu0
  %v3005 = vadd.f32 0.0, %v3004
  %3006 = vdwg.mxu0
  %3007 = vmatpush.msra.mxu0 0.0
  %3008 = vmatpush.msra.mxu0 0.0
  %3009 = vmatpush.msra.mxu0 0.0
  %3010 = vmatpush.msra.mxu0 0.0
  %3011 = vmatpush.msra.mxu0 0.0
  %3012 = vmatpush.msra.mxu0 0.0
  %3013 = vmatpush.msra.mxu0 0.0
  %3014 = vmatpush.msra.mxu0 0.0
  %3015 = vmatpush.msra.mxu0 0.0
  %3016 = vmatpush.msra.mxu0 0.0
  %3017 = vmatpush.msra.mxu0 0.0
  %3018 = vmatpush.msra.mxu0 0.0
  %3019 = vmatpush.msra.mxu0 0.0
  %3020 = vmatpush.msra.mxu0 0.0
  %3021 = vmatpush.msra.mxu0 0.0
  %3022 = vmatpush.msra.mxu0 %v2844
  %3023 = vmatmul.f32.gmra.mxu0 %v2817
  %v3024 = vpop.f32.mrf.mxu0
  %v3025 = vadd.f32 0.0, %v3024
  %3026 = vmatmul.f32.gmra.mxu0 %v2820
  %v3027 = vpop.f32.mrf.mxu0
  %v3028 = vadd.f32 0.0, %v3027
  %3029 = vdwg.mxu0
  %v3030 = vadd.f32 %v2736, %v2864
  %v3031 = vadd.f32 %v2737, %v2887
  %v3032 = vadd.f32 %v2738, %v2910
  %v3033 = vadd.f32 %v2739, %v2933
  %v3034 = vadd.f32 %v2740, %v2956
  %v3035 = vadd.f32 %v2741, %v2979
  %v3036 = vadd.f32 %v2742, %v3002
  %v3037 = vadd.f32 %v2743, %v3025
  %v3038 = vadd.f32 %v2744, %v2867
  %v3039 = vadd.f32 %v2745, %v2890
  %v3040 = vadd.f32 %v2746, %v2913
  %v3041 = vadd.f32 %v2747, %v2936
  %v3042 = vadd.f32 %v2748, %v2959
  %v3043 = vadd.f32 %v2749, %v2982
  %v3044 = vadd.f32 %v2750, %v3005
  %v3045 = vadd.f32 %v2751, %v3028
  %v3054 = vrot.slane %v2792, 6
  %v3055 = vrot.slane %v2793, 6
  %v3056 = vrot.slane %v2794, 6
  %v3057 = vrot.slane %v2795, 6
  %v3058 = vrot.slane %v2796, 6
  %v3059 = vrot.slane %v2797, 6
  %v3060 = vrot.slane %v2798, 6
  %v3061 = vrot.slane %v2799, 6
  %v3070 = vmul.f32 %v855, %v3054
  %v3071 = vmul.f32 %v857, %v3055
  %v3072 = vmul.f32 %v859, %v3056
  %v3073 = vmul.f32 %v861, %v3057
  %v3074 = vmul.f32 %v863, %v3058
  %v3075 = vmul.f32 %v865, %v3059
  %v3076 = vmul.f32 %v867, %v3060
  %v3077 = vmul.f32 %v869, %v3061
  %v3078 = vld [vmem:[#allocation2 + $0x40] sm:$0xc]
  %v3079 = vld [vmem:[#allocation2 + $0x48] sm:$0xc]
  %v3080 = vld [vmem:[#allocation2 + $0x50] sm:$0xc]
  %v3081 = vld [vmem:[#allocation2 + $0x58] sm:$0xc]
  %v3082 = vld [vmem:[#allocation2 + $0x60] sm:$0xc]
  %v3083 = vld [vmem:[#allocation2 + $0x68] sm:$0xc]
  %v3084 = vld [vmem:[#allocation2 + $0x70] sm:$0xc]
  %v3085 = vld [vmem:[#allocation2 + $0x78] sm:$0xc]
  %v3086 = vadd.f32 %v3070, %v3078
  %v3087 = vadd.f32 %v3071, %v3079
  %v3088 = vadd.f32 %v3072, %v3080
  %v3089 = vadd.f32 %v3073, %v3081
  %v3090 = vadd.f32 %v3074, %v3082
  %v3091 = vadd.f32 %v3075, %v3083
  %v3092 = vadd.f32 %v3076, %v3084
  %v3093 = vadd.f32 %v3077, %v3085
  %v3094 = vld [vmem:[#allocation3 + $0x40] sm:$0xc]
  %v3095 = vld [vmem:[#allocation3 + $0x48] sm:$0xc]
  %v3096 = vld [vmem:[#allocation3 + $0x50] sm:$0xc]
  %v3097 = vld [vmem:[#allocation3 + $0x58] sm:$0xc]
  %v3098 = vld [vmem:[#allocation3 + $0x60] sm:$0xc]
  %v3099 = vld [vmem:[#allocation3 + $0x68] sm:$0xc]
  %v3100 = vld [vmem:[#allocation3 + $0x70] sm:$0xc]
  %v3101 = vld [vmem:[#allocation3 + $0x78] sm:$0xc]
  %v3102 = vmul.f32 %v3086, %v3094
  %v3103 = vmul.f32 %v3087, %v3095
  %v3104 = vmul.f32 %v3088, %v3096
  %v3105 = vmul.f32 %v3089, %v3097
  %v3106 = vmul.f32 %v3090, %v3098
  %v3107 = vmul.f32 %v3091, %v3099
  %v3108 = vmul.f32 %v3092, %v3100
  %v3109 = vmul.f32 %v3093, %v3101
  %v3118 = vrot.slane %v3102, 2
  %v3119 = vrot.slane %v3103, 2
  %v3120 = vrot.slane %v3104, 2
  %v3121 = vrot.slane %v3105, 2
  %v3122 = vrot.slane %v3106, 2
  %v3123 = vrot.slane %v3107, 2
  %v3124 = vrot.slane %v3108, 2
  %v3125 = vrot.slane %v3109, 2
  %v3127 = vsel %vm1726, %v184, 0
  %v3130 = vsel %vm1726, %v185, 0
  %v3132 = vsel %vm1733, %v3118, 0
  %v3134 = vsel %vm1733, %v3119, 0
  %v3136 = vsel %vm1733, %v3120, 0
  %v3138 = vsel %vm1733, %v3121, 0
  %v3140 = vsel %vm1733, %v3122, 0
  %v3142 = vsel %vm1733, %v3123, 0
  %v3144 = vsel %vm1733, %v3124, 0
  %v3146 = vsel %vm1733, %v3125, 0
  %3148 = vmatpush.msra.mxu0 0.0
  %3149 = vmatpush.msra.mxu0 0.0
  %3150 = vmatpush.msra.mxu0 0.0
  %3151 = vmatpush.msra.mxu0 0.0
  %3152 = vmatpush.msra.mxu0 0.0
  %3153 = vmatpush.msra.mxu0 0.0
  %3154 = vmatpush.msra.mxu0 0.0
  %3155 = vmatpush.msra.mxu0 0.0
  %3156 = vmatpush.msra.mxu0 0.0
  %3157 = vmatpush.msra.mxu0 0.0
  %3158 = vmatpush.msra.mxu0 0.0
  %3159 = vmatpush.msra.mxu0 0.0
  %3160 = vmatpush.msra.mxu0 0.0
  %3161 = vmatpush.msra.mxu0 0.0
  %3162 = vmatpush.msra.mxu0 0.0
  %3163 = vmatpush.msra.mxu0 %v3132
  %3164 = vmatmul.f32.gmra.mxu0 %v3127
  %v3165 = vpop.f32.mrf.mxu0
  %v3166 = vadd.f32 0.0, %v3165
  %3167 = vmatmul.f32.gmra.mxu0 %v3130
  %v3168 = vpop.f32.mrf.mxu0
  %v3169 = vadd.f32 0.0, %v3168
  %3170 = vdwg.mxu0
  %3171 = vmatpush.msra.mxu0 0.0
  %3172 = vmatpush.msra.mxu0 0.0
  %3173 = vmatpush.msra.mxu0 0.0
  %3174 = vmatpush.msra.mxu0 0.0
  %3175 = vmatpush.msra.mxu0 0.0
  %3176 = vmatpush.msra.mxu0 0.0
  %3177 = vmatpush.msra.mxu0 0.0
  %3178 = vmatpush.msra.mxu0 0.0
  %3179 = vmatpush.msra.mxu0 0.0
  %3180 = vmatpush.msra.mxu0 0.0
  %3181 = vmatpush.msra.mxu0 0.0
  %3182 = vmatpush.msra.mxu0 0.0
  %3183 = vmatpush.msra.mxu0 0.0
  %3184 = vmatpush.msra.mxu0 0.0
  %3185 = vmatpush.msra.mxu0 0.0
  %3186 = vmatpush.msra.mxu0 %v3134
  %3187 = vmatmul.f32.gmra.mxu0 %v3127
  %v3188 = vpop.f32.mrf.mxu0
  %v3189 = vadd.f32 0.0, %v3188
  %3190 = vmatmul.f32.gmra.mxu0 %v3130
  %v3191 = vpop.f32.mrf.mxu0
  %v3192 = vadd.f32 0.0, %v3191
  %3193 = vdwg.mxu0
  %3194 = vmatpush.msra.mxu0 0.0
  %3195 = vmatpush.msra.mxu0 0.0
  %3196 = vmatpush.msra.mxu0 0.0
  %3197 = vmatpush.msra.mxu0 0.0
  %3198 = vmatpush.msra.mxu0 0.0
  %3199 = vmatpush.msra.mxu0 0.0
  %3200 = vmatpush.msra.mxu0 0.0
  %3201 = vmatpush.msra.mxu0 0.0
  %3202 = vmatpush.msra.mxu0 0.0
  %3203 = vmatpush.msra.mxu0 0.0
  %3204 = vmatpush.msra.mxu0 0.0
  %3205 = vmatpush.msra.mxu0 0.0
  %3206 = vmatpush.msra.mxu0 0.0
  %3207 = vmatpush.msra.mxu0 0.0
  %3208 = vmatpush.msra.mxu0 0.0
  %3209 = vmatpush.msra.mxu0 %v3136
  %3210 = vmatmul.f32.gmra.mxu0 %v3127
  %v3211 = vpop.f32.mrf.mxu0
  %v3212 = vadd.f32 0.0, %v3211
  %3213 = vmatmul.f32.gmra.mxu0 %v3130
  %v3214 = vpop.f32.mrf.mxu0
  %v3215 = vadd.f32 0.0, %v3214
  %3216 = vdwg.mxu0
  %3217 = vmatpush.msra.mxu0 0.0
  %3218 = vmatpush.msra.mxu0 0.0
  %3219 = vmatpush.msra.mxu0 0.0
  %3220 = vmatpush.msra.mxu0 0.0
  %3221 = vmatpush.msra.mxu0 0.0
  %3222 = vmatpush.msra.mxu0 0.0
  %3223 = vmatpush.msra.mxu0 0.0
  %3224 = vmatpush.msra.mxu0 0.0
  %3225 = vmatpush.msra.mxu0 0.0
  %3226 = vmatpush.msra.mxu0 0.0
  %3227 = vmatpush.msra.mxu0 0.0
  %3228 = vmatpush.msra.mxu0 0.0
  %3229 = vmatpush.msra.mxu0 0.0
  %3230 = vmatpush.msra.mxu0 0.0
  %3231 = vmatpush.msra.mxu0 0.0
  %3232 = vmatpush.msra.mxu0 %v3138
  %3233 = vmatmul.f32.gmra.mxu0 %v3127
  %v3234 = vpop.f32.mrf.mxu0
  %v3235 = vadd.f32 0.0, %v3234
  %3236 = vmatmul.f32.gmra.mxu0 %v3130
  %v3237 = vpop.f32.mrf.mxu0
  %v3238 = vadd.f32 0.0, %v3237
  %3239 = vdwg.mxu0
  %3240 = vmatpush.msra.mxu0 0.0
  %3241 = vmatpush.msra.mxu0 0.0
  %3242 = vmatpush.msra.mxu0 0.0
  %3243 = vmatpush.msra.mxu0 0.0
  %3244 = vmatpush.msra.mxu0 0.0
  %3245 = vmatpush.msra.mxu0 0.0
  %3246 = vmatpush.msra.mxu0 0.0
  %3247 = vmatpush.msra.mxu0 0.0
  %3248 = vmatpush.msra.mxu0 0.0
  %3249 = vmatpush.msra.mxu0 0.0
  %3250 = vmatpush.msra.mxu0 0.0
  %3251 = vmatpush.msra.mxu0 0.0
  %3252 = vmatpush.msra.mxu0 0.0
  %3253 = vmatpush.msra.mxu0 0.0
  %3254 = vmatpush.msra.mxu0 0.0
  %3255 = vmatpush.msra.mxu0 %v3140
  %3256 = vmatmul.f32.gmra.mxu0 %v3127
  %v3257 = vpop.f32.mrf.mxu0
  %v3258 = vadd.f32 0.0, %v3257
  %3259 = vmatmul.f32.gmra.mxu0 %v3130
  %v3260 = vpop.f32.mrf.mxu0
  %v3261 = vadd.f32 0.0, %v3260
  %3262 = vdwg.mxu0
  %3263 = vmatpush.msra.mxu0 0.0
  %3264 = vmatpush.msra.mxu0 0.0
  %3265 = vmatpush.msra.mxu0 0.0
  %3266 = vmatpush.msra.mxu0 0.0
  %3267 = vmatpush.msra.mxu0 0.0
  %3268 = vmatpush.msra.mxu0 0.0
  %3269 = vmatpush.msra.mxu0 0.0
  %3270 = vmatpush.msra.mxu0 0.0
  %3271 = vmatpush.msra.mxu0 0.0
  %3272 = vmatpush.msra.mxu0 0.0
  %3273 = vmatpush.msra.mxu0 0.0
  %3274 = vmatpush.msra.mxu0 0.0
  %3275 = vmatpush.msra.mxu0 0.0
  %3276 = vmatpush.msra.mxu0 0.0
  %3277 = vmatpush.msra.mxu0 0.0
  %3278 = vmatpush.msra.mxu0 %v3142
  %3279 = vmatmul.f32.gmra.mxu0 %v3127
  %v3280 = vpop.f32.mrf.mxu0
  %v3281 = vadd.f32 0.0, %v3280
  %3282 = vmatmul.f32.gmra.mxu0 %v3130
  %v3283 = vpop.f32.mrf.mxu0
  %v3284 = vadd.f32 0.0, %v3283
  %3285 = vdwg.mxu0
  %3286 = vmatpush.msra.mxu0 0.0
  %3287 = vmatpush.msra.mxu0 0.0
  %3288 = vmatpush.msra.mxu0 0.0
  %3289 = vmatpush.msra.mxu0 0.0
  %3290 = vmatpush.msra.mxu0 0.0
  %3291 = vmatpush.msra.mxu0 0.0
  %3292 = vmatpush.msra.mxu0 0.0
  %3293 = vmatpush.msra.mxu0 0.0
  %3294 = vmatpush.msra.mxu0 0.0
  %3295 = vmatpush.msra.mxu0 0.0
  %3296 = vmatpush.msra.mxu0 0.0
  %3297 = vmatpush.msra.mxu0 0.0
  %3298 = vmatpush.msra.mxu0 0.0
  %3299 = vmatpush.msra.mxu0 0.0
  %3300 = vmatpush.msra.mxu0 0.0
  %3301 = vmatpush.msra.mxu0 %v3144
  %3302 = vmatmul.f32.gmra.mxu0 %v3127
  %v3303 = vpop.f32.mrf.mxu0
  %v3304 = vadd.f32 0.0, %v3303
  %3305 = vmatmul.f32.gmra.mxu0 %v3130
  %v3306 = vpop.f32.mrf.mxu0
  %v3307 = vadd.f32 0.0, %v3306
  %3308 = vdwg.mxu0
  %3309 = vmatpush.msra.mxu0 0.0
  %3310 = vmatpush.msra.mxu0 0.0
  %3311 = vmatpush.msra.mxu0 0.0
  %3312 = vmatpush.msra.mxu0 0.0
  %3313 = vmatpush.msra.mxu0 0.0
  %3314 = vmatpush.msra.mxu0 0.0
  %3315 = vmatpush.msra.mxu0 0.0
  %3316 = vmatpush.msra.mxu0 0.0
  %3317 = vmatpush.msra.mxu0 0.0
  %3318 = vmatpush.msra.mxu0 0.0
  %3319 = vmatpush.msra.mxu0 0.0
  %3320 = vmatpush.msra.mxu0 0.0
  %3321 = vmatpush.msra.mxu0 0.0
  %3322 = vmatpush.msra.mxu0 0.0
  %3323 = vmatpush.msra.mxu0 0.0
  %3324 = vmatpush.msra.mxu0 %v3146
  %3325 = vmatmul.f32.gmra.mxu0 %v3127
  %v3326 = vpop.f32.mrf.mxu0
  %v3327 = vadd.f32 0.0, %v3326
  %3328 = vmatmul.f32.gmra.mxu0 %v3130
  %v3329 = vpop.f32.mrf.mxu0
  %v3330 = vadd.f32 0.0, %v3329
  %3331 = vdwg.mxu0
  %v3332 = vadd.f32 %v3030, %v3166
  %v3333 = vadd.f32 %v3031, %v3189
  %v3334 = vadd.f32 %v3032, %v3212
  %v3335 = vadd.f32 %v3033, %v3235
  %v3336 = vadd.f32 %v3034, %v3258
  %v3337 = vadd.f32 %v3035, %v3281
  %v3338 = vadd.f32 %v3036, %v3304
  %v3339 = vadd.f32 %v3037, %v3327
  %v3340 = vadd.f32 %v3038, %v3169
  %v3341 = vadd.f32 %v3039, %v3192
  %v3342 = vadd.f32 %v3040, %v3215
  %v3343 = vadd.f32 %v3041, %v3238
  %v3344 = vadd.f32 %v3042, %v3261
  %v3345 = vadd.f32 %v3043, %v3284
  %v3346 = vadd.f32 %v3044, %v3307
  %v3347 = vadd.f32 %v3045, %v3330
  %v3356 = vrot.slane %v3086, 6
  %v3357 = vrot.slane %v3087, 6
  %v3358 = vrot.slane %v3088, 6
  %v3359 = vrot.slane %v3089, 6
  %v3360 = vrot.slane %v3090, 6
  %v3361 = vrot.slane %v3091, 6
  %v3362 = vrot.slane %v3092, 6
  %v3363 = vrot.slane %v3093, 6
  %v3372 = vmul.f32 %v855, %v3356
  %v3373 = vmul.f32 %v857, %v3357
  %v3374 = vmul.f32 %v859, %v3358
  %v3375 = vmul.f32 %v861, %v3359
  %v3376 = vmul.f32 %v863, %v3360
  %v3377 = vmul.f32 %v865, %v3361
  %v3378 = vmul.f32 %v867, %v3362
  %v3379 = vmul.f32 %v869, %v3363
  %v3380 = vld [vmem:[#allocation2 + $0x40] sm:$0x30]
  %v3381 = vld [vmem:[#allocation2 + $0x48] sm:$0x30]
  %v3382 = vld [vmem:[#allocation2 + $0x50] sm:$0x30]
  %v3383 = vld [vmem:[#allocation2 + $0x58] sm:$0x30]
  %v3384 = vld [vmem:[#allocation2 + $0x60] sm:$0x30]
  %v3385 = vld [vmem:[#allocation2 + $0x68] sm:$0x30]
  %v3386 = vld [vmem:[#allocation2 + $0x70] sm:$0x30]
  %v3387 = vld [vmem:[#allocation2 + $0x78] sm:$0x30]
  %v3388 = vadd.f32 %v3372, %v3380
  %v3389 = vadd.f32 %v3373, %v3381
  %v3390 = vadd.f32 %v3374, %v3382
  %v3391 = vadd.f32 %v3375, %v3383
  %v3392 = vadd.f32 %v3376, %v3384
  %v3393 = vadd.f32 %v3377, %v3385
  %v3394 = vadd.f32 %v3378, %v3386
  %v3395 = vadd.f32 %v3379, %v3387
  %v3396 = vld [vmem:[#allocation3 + $0x40] sm:$0x30]
  %v3397 = vld [vmem:[#allocation3 + $0x48] sm:$0x30]
  %v3398 = vld [vmem:[#allocation3 + $0x50] sm:$0x30]
  %v3399 = vld [vmem:[#allocation3 + $0x58] sm:$0x30]
  %v3400 = vld [vmem:[#allocation3 + $0x60] sm:$0x30]
  %v3401 = vld [vmem:[#allocation3 + $0x68] sm:$0x30]
  %v3402 = vld [vmem:[#allocation3 + $0x70] sm:$0x30]
  %v3403 = vld [vmem:[#allocation3 + $0x78] sm:$0x30]
  %v3404 = vmul.f32 %v3388, %v3396
  %v3405 = vmul.f32 %v3389, %v3397
  %v3406 = vmul.f32 %v3390, %v3398
  %v3407 = vmul.f32 %v3391, %v3399
  %v3408 = vmul.f32 %v3392, %v3400
  %v3409 = vmul.f32 %v3393, %v3401
  %v3410 = vmul.f32 %v3394, %v3402
  %v3411 = vmul.f32 %v3395, %v3403
  %v3420 = vrot.slane %v3404, 4
  %v3421 = vrot.slane %v3405, 4
  %v3422 = vrot.slane %v3406, 4
  %v3423 = vrot.slane %v3407, 4
  %v3424 = vrot.slane %v3408, 4
  %v3425 = vrot.slane %v3409, 4
  %v3426 = vrot.slane %v3410, 4
  %v3427 = vrot.slane %v3411, 4
  %v3429 = vsel %vm1726, %v191, 0
  %v3432 = vsel %vm1726, %v192, 0
  %v3434 = vsel %vm1733, %v3420, 0
  %v3436 = vsel %vm1733, %v3421, 0
  %v3438 = vsel %vm1733, %v3422, 0
  %v3440 = vsel %vm1733, %v3423, 0
  %v3442 = vsel %vm1733, %v3424, 0
  %v3444 = vsel %vm1733, %v3425, 0
  %v3446 = vsel %vm1733, %v3426, 0
  %v3448 = vsel %vm1733, %v3427, 0
  %3450 = vmatpush.msra.mxu0 0.0
  %3451 = vmatpush.msra.mxu0 0.0
  %3452 = vmatpush.msra.mxu0 0.0
  %3453 = vmatpush.msra.mxu0 0.0
  %3454 = vmatpush.msra.mxu0 0.0
  %3455 = vmatpush.msra.mxu0 0.0
  %3456 = vmatpush.msra.mxu0 0.0
  %3457 = vmatpush.msra.mxu0 0.0
  %3458 = vmatpush.msra.mxu0 0.0
  %3459 = vmatpush.msra.mxu0 0.0
  %3460 = vmatpush.msra.mxu0 0.0
  %3461 = vmatpush.msra.mxu0 0.0
  %3462 = vmatpush.msra.mxu0 0.0
  %3463 = vmatpush.msra.mxu0 0.0
  %3464 = vmatpush.msra.mxu0 0.0
  %3465 = vmatpush.msra.mxu0 %v3434
  %3466 = vmatmul.f32.gmra.mxu0 %v3429
  %v3467 = vpop.f32.mrf.mxu0
  %v3468 = vadd.f32 0.0, %v3467
  %3469 = vmatmul.f32.gmra.mxu0 %v3432
  %v3470 = vpop.f32.mrf.mxu0
  %v3471 = vadd.f32 0.0, %v3470
  %3472 = vdwg.mxu0
  %3473 = vmatpush.msra.mxu0 0.0
  %3474 = vmatpush.msra.mxu0 0.0
  %3475 = vmatpush.msra.mxu0 0.0
  %3476 = vmatpush.msra.mxu0 0.0
  %3477 = vmatpush.msra.mxu0 0.0
  %3478 = vmatpush.msra.mxu0 0.0
  %3479 = vmatpush.msra.mxu0 0.0
  %3480 = vmatpush.msra.mxu0 0.0
  %3481 = vmatpush.msra.mxu0 0.0
  %3482 = vmatpush.msra.mxu0 0.0
  %3483 = vmatpush.msra.mxu0 0.0
  %3484 = vmatpush.msra.mxu0 0.0
  %3485 = vmatpush.msra.mxu0 0.0
  %3486 = vmatpush.msra.mxu0 0.0
  %3487 = vmatpush.msra.mxu0 0.0
  %3488 = vmatpush.msra.mxu0 %v3436
  %3489 = vmatmul.f32.gmra.mxu0 %v3429
  %v3490 = vpop.f32.mrf.mxu0
  %v3491 = vadd.f32 0.0, %v3490
  %3492 = vmatmul.f32.gmra.mxu0 %v3432
  %v3493 = vpop.f32.mrf.mxu0
  %v3494 = vadd.f32 0.0, %v3493
  %3495 = vdwg.mxu0
  %3496 = vmatpush.msra.mxu0 0.0
  %3497 = vmatpush.msra.mxu0 0.0
  %3498 = vmatpush.msra.mxu0 0.0
  %3499 = vmatpush.msra.mxu0 0.0
  %3500 = vmatpush.msra.mxu0 0.0
  %3501 = vmatpush.msra.mxu0 0.0
  %3502 = vmatpush.msra.mxu0 0.0
  %3503 = vmatpush.msra.mxu0 0.0
  %3504 = vmatpush.msra.mxu0 0.0
  %3505 = vmatpush.msra.mxu0 0.0
  %3506 = vmatpush.msra.mxu0 0.0
  %3507 = vmatpush.msra.mxu0 0.0
  %3508 = vmatpush.msra.mxu0 0.0
  %3509 = vmatpush.msra.mxu0 0.0
  %3510 = vmatpush.msra.mxu0 0.0
  %3511 = vmatpush.msra.mxu0 %v3438
  %3512 = vmatmul.f32.gmra.mxu0 %v3429
  %v3513 = vpop.f32.mrf.mxu0
  %v3514 = vadd.f32 0.0, %v3513
  %3515 = vmatmul.f32.gmra.mxu0 %v3432
  %v3516 = vpop.f32.mrf.mxu0
  %v3517 = vadd.f32 0.0, %v3516
  %3518 = vdwg.mxu0
  %3519 = vmatpush.msra.mxu0 0.0
  %3520 = vmatpush.msra.mxu0 0.0
  %3521 = vmatpush.msra.mxu0 0.0
  %3522 = vmatpush.msra.mxu0 0.0
  %3523 = vmatpush.msra.mxu0 0.0
  %3524 = vmatpush.msra.mxu0 0.0
  %3525 = vmatpush.msra.mxu0 0.0
  %3526 = vmatpush.msra.mxu0 0.0
  %3527 = vmatpush.msra.mxu0 0.0
  %3528 = vmatpush.msra.mxu0 0.0
  %3529 = vmatpush.msra.mxu0 0.0
  %3530 = vmatpush.msra.mxu0 0.0
  %3531 = vmatpush.msra.mxu0 0.0
  %3532 = vmatpush.msra.mxu0 0.0
  %3533 = vmatpush.msra.mxu0 0.0
  %3534 = vmatpush.msra.mxu0 %v3440
  %3535 = vmatmul.f32.gmra.mxu0 %v3429
  %v3536 = vpop.f32.mrf.mxu0
  %v3537 = vadd.f32 0.0, %v3536
  %3538 = vmatmul.f32.gmra.mxu0 %v3432
  %v3539 = vpop.f32.mrf.mxu0
  %v3540 = vadd.f32 0.0, %v3539
  %3541 = vdwg.mxu0
  %3542 = vmatpush.msra.mxu0 0.0
  %3543 = vmatpush.msra.mxu0 0.0
  %3544 = vmatpush.msra.mxu0 0.0
  %3545 = vmatpush.msra.mxu0 0.0
  %3546 = vmatpush.msra.mxu0 0.0
  %3547 = vmatpush.msra.mxu0 0.0
  %3548 = vmatpush.msra.mxu0 0.0
  %3549 = vmatpush.msra.mxu0 0.0
  %3550 = vmatpush.msra.mxu0 0.0
  %3551 = vmatpush.msra.mxu0 0.0
  %3552 = vmatpush.msra.mxu0 0.0
  %3553 = vmatpush.msra.mxu0 0.0
  %3554 = vmatpush.msra.mxu0 0.0
  %3555 = vmatpush.msra.mxu0 0.0
  %3556 = vmatpush.msra.mxu0 0.0
  %3557 = vmatpush.msra.mxu0 %v3442
  %3558 = vmatmul.f32.gmra.mxu0 %v3429
  %v3559 = vpop.f32.mrf.mxu0
  %v3560 = vadd.f32 0.0, %v3559
  %3561 = vmatmul.f32.gmra.mxu0 %v3432
  %v3562 = vpop.f32.mrf.mxu0
  %v3563 = vadd.f32 0.0, %v3562
  %3564 = vdwg.mxu0
  %3565 = vmatpush.msra.mxu0 0.0
  %3566 = vmatpush.msra.mxu0 0.0
  %3567 = vmatpush.msra.mxu0 0.0
  %3568 = vmatpush.msra.mxu0 0.0
  %3569 = vmatpush.msra.mxu0 0.0
  %3570 = vmatpush.msra.mxu0 0.0
  %3571 = vmatpush.msra.mxu0 0.0
  %3572 = vmatpush.msra.mxu0 0.0
  %3573 = vmatpush.msra.mxu0 0.0
  %3574 = vmatpush.msra.mxu0 0.0
  %3575 = vmatpush.msra.mxu0 0.0
  %3576 = vmatpush.msra.mxu0 0.0
  %3577 = vmatpush.msra.mxu0 0.0
  %3578 = vmatpush.msra.mxu0 0.0
  %3579 = vmatpush.msra.mxu0 0.0
  %3580 = vmatpush.msra.mxu0 %v3444
  %3581 = vmatmul.f32.gmra.mxu0 %v3429
  %v3582 = vpop.f32.mrf.mxu0
  %v3583 = vadd.f32 0.0, %v3582
  %3584 = vmatmul.f32.gmra.mxu0 %v3432
  %v3585 = vpop.f32.mrf.mxu0
  %v3586 = vadd.f32 0.0, %v3585
  %3587 = vdwg.mxu0
  %3588 = vmatpush.msra.mxu0 0.0
  %3589 = vmatpush.msra.mxu0 0.0
  %3590 = vmatpush.msra.mxu0 0.0
  %3591 = vmatpush.msra.mxu0 0.0
  %3592 = vmatpush.msra.mxu0 0.0
  %3593 = vmatpush.msra.mxu0 0.0
  %3594 = vmatpush.msra.mxu0 0.0
  %3595 = vmatpush.msra.mxu0 0.0
  %3596 = vmatpush.msra.mxu0 0.0
  %3597 = vmatpush.msra.mxu0 0.0
  %3598 = vmatpush.msra.mxu0 0.0
  %3599 = vmatpush.msra.mxu0 0.0
  %3600 = vmatpush.msra.mxu0 0.0
  %3601 = vmatpush.msra.mxu0 0.0
  %3602 = vmatpush.msra.mxu0 0.0
  %3603 = vmatpush.msra.mxu0 %v3446
  %3604 = vmatmul.f32.gmra.mxu0 %v3429
  %v3605 = vpop.f32.mrf.mxu0
  %v3606 = vadd.f32 0.0, %v3605
  %3607 = vmatmul.f32.gmra.mxu0 %v3432
  %v3608 = vpop.f32.mrf.mxu0
  %v3609 = vadd.f32 0.0, %v3608
  %3610 = vdwg.mxu0
  %3611 = vmatpush.msra.mxu0 0.0
  %3612 = vmatpush.msra.mxu0 0.0
  %3613 = vmatpush.msra.mxu0 0.0
  %3614 = vmatpush.msra.mxu0 0.0
  %3615 = vmatpush.msra.mxu0 0.0
  %3616 = vmatpush.msra.mxu0 0.0
  %3617 = vmatpush.msra.mxu0 0.0
  %3618 = vmatpush.msra.mxu0 0.0
  %3619 = vmatpush.msra.mxu0 0.0
  %3620 = vmatpush.msra.mxu0 0.0
  %3621 = vmatpush.msra.mxu0 0.0
  %3622 = vmatpush.msra.mxu0 0.0
  %3623 = vmatpush.msra.mxu0 0.0
  %3624 = vmatpush.msra.mxu0 0.0
  %3625 = vmatpush.msra.mxu0 0.0
  %3626 = vmatpush.msra.mxu0 %v3448
  %3627 = vmatmul.f32.gmra.mxu0 %v3429
  %v3628 = vpop.f32.mrf.mxu0
  %v3629 = vadd.f32 0.0, %v3628
  %3630 = vmatmul.f32.gmra.mxu0 %v3432
  %v3631 = vpop.f32.mrf.mxu0
  %v3632 = vadd.f32 0.0, %v3631
  %3633 = vdwg.mxu0
  %v3634 = vadd.f32 %v3332, %v3468
  %v3635 = vadd.f32 %v3333, %v3491
  %v3636 = vadd.f32 %v3334, %v3514
  %v3637 = vadd.f32 %v3335, %v3537
  %v3638 = vadd.f32 %v3336, %v3560
  %v3639 = vadd.f32 %v3337, %v3583
  %v3640 = vadd.f32 %v3338, %v3606
  %v3641 = vadd.f32 %v3339, %v3629
  %v3642 = vadd.f32 %v3340, %v3471
  %v3643 = vadd.f32 %v3341, %v3494
  %v3644 = vadd.f32 %v3342, %v3517
  %v3645 = vadd.f32 %v3343, %v3540
  %v3646 = vadd.f32 %v3344, %v3563
  %v3647 = vadd.f32 %v3345, %v3586
  %v3648 = vadd.f32 %v3346, %v3609
  %v3649 = vadd.f32 %v3347, %v3632
  %v3658 = vrot.slane %v3388, 6
  %v3659 = vrot.slane %v3389, 6
  %v3660 = vrot.slane %v3390, 6
  %v3661 = vrot.slane %v3391, 6
  %v3662 = vrot.slane %v3392, 6
  %v3663 = vrot.slane %v3393, 6
  %v3664 = vrot.slane %v3394, 6
  %v3665 = vrot.slane %v3395, 6
  %v3674 = vmul.f32 %v855, %v3658
  %v3675 = vmul.f32 %v857, %v3659
  %v3676 = vmul.f32 %v859, %v3660
  %v3677 = vmul.f32 %v861, %v3661
  %v3678 = vmul.f32 %v863, %v3662
  %v3679 = vmul.f32 %v865, %v3663
  %v3680 = vmul.f32 %v867, %v3664
  %v3681 = vmul.f32 %v869, %v3665
  %v3682 = vld [vmem:[#allocation2 + $0x40] sm:$0xc0]
  %v3683 = vld [vmem:[#allocation2 + $0x48] sm:$0xc0]
  %v3684 = vld [vmem:[#allocation2 + $0x50] sm:$0xc0]
  %v3685 = vld [vmem:[#allocation2 + $0x58] sm:$0xc0]
  %v3686 = vld [vmem:[#allocation2 + $0x60] sm:$0xc0]
  %v3687 = vld [vmem:[#allocation2 + $0x68] sm:$0xc0]
  %v3688 = vld [vmem:[#allocation2 + $0x70] sm:$0xc0]
  %v3689 = vld [vmem:[#allocation2 + $0x78] sm:$0xc0]
  %v3690 = vadd.f32 %v3674, %v3682
  %v3691 = vadd.f32 %v3675, %v3683
  %v3692 = vadd.f32 %v3676, %v3684
  %v3693 = vadd.f32 %v3677, %v3685
  %v3694 = vadd.f32 %v3678, %v3686
  %v3695 = vadd.f32 %v3679, %v3687
  %v3696 = vadd.f32 %v3680, %v3688
  %v3697 = vadd.f32 %v3681, %v3689
  %v3698 = vld [vmem:[#allocation3 + $0x40] sm:$0xc0]
  %v3699 = vld [vmem:[#allocation3 + $0x48] sm:$0xc0]
  %v3700 = vld [vmem:[#allocation3 + $0x50] sm:$0xc0]
  %v3701 = vld [vmem:[#allocation3 + $0x58] sm:$0xc0]
  %v3702 = vld [vmem:[#allocation3 + $0x60] sm:$0xc0]
  %v3703 = vld [vmem:[#allocation3 + $0x68] sm:$0xc0]
  %v3704 = vld [vmem:[#allocation3 + $0x70] sm:$0xc0]
  %v3705 = vld [vmem:[#allocation3 + $0x78] sm:$0xc0]
  %v3706 = vmul.f32 %v3690, %v3698
  %v3707 = vmul.f32 %v3691, %v3699
  %v3708 = vmul.f32 %v3692, %v3700
  %v3709 = vmul.f32 %v3693, %v3701
  %v3710 = vmul.f32 %v3694, %v3702
  %v3711 = vmul.f32 %v3695, %v3703
  %v3712 = vmul.f32 %v3696, %v3704
  %v3713 = vmul.f32 %v3697, %v3705
  %v3722 = vrot.slane %v3706, 6
  %v3723 = vrot.slane %v3707, 6
  %v3724 = vrot.slane %v3708, 6
  %v3725 = vrot.slane %v3709, 6
  %v3726 = vrot.slane %v3710, 6
  %v3727 = vrot.slane %v3711, 6
  %v3728 = vrot.slane %v3712, 6
  %v3729 = vrot.slane %v3713, 6
  %v3731 = vsel %vm1726, %v198, 0
  %v3734 = vsel %vm1726, %v199, 0
  %v3736 = vsel %vm1733, %v3722, 0
  %v3738 = vsel %vm1733, %v3723, 0
  %v3740 = vsel %vm1733, %v3724, 0
  %v3742 = vsel %vm1733, %v3725, 0
  %v3744 = vsel %vm1733, %v3726, 0
  %v3746 = vsel %vm1733, %v3727, 0
  %v3748 = vsel %vm1733, %v3728, 0
  %v3750 = vsel %vm1733, %v3729, 0
  %3752 = vmatpush.msra.mxu0 0.0
  %3753 = vmatpush.msra.mxu0 0.0
  %3754 = vmatpush.msra.mxu0 0.0
  %3755 = vmatpush.msra.mxu0 0.0
  %3756 = vmatpush.msra.mxu0 0.0
  %3757 = vmatpush.msra.mxu0 0.0
  %3758 = vmatpush.msra.mxu0 0.0
  %3759 = vmatpush.msra.mxu0 0.0
  %3760 = vmatpush.msra.mxu0 0.0
  %3761 = vmatpush.msra.mxu0 0.0
  %3762 = vmatpush.msra.mxu0 0.0
  %3763 = vmatpush.msra.mxu0 0.0
  %3764 = vmatpush.msra.mxu0 0.0
  %3765 = vmatpush.msra.mxu0 0.0
  %3766 = vmatpush.msra.mxu0 0.0
  %3767 = vmatpush.msra.mxu0 %v3736
  %3768 = vmatmul.f32.gmra.mxu0 %v3731
  %v3769 = vpop.f32.mrf.mxu0
  %v3770 = vadd.f32 0.0, %v3769
  %3771 = vmatmul.f32.gmra.mxu0 %v3734
  %v3772 = vpop.f32.mrf.mxu0
  %v3773 = vadd.f32 0.0, %v3772
  %3774 = vdwg.mxu0
  %3775 = vmatpush.msra.mxu0 0.0
  %3776 = vmatpush.msra.mxu0 0.0
  %3777 = vmatpush.msra.mxu0 0.0
  %3778 = vmatpush.msra.mxu0 0.0
  %3779 = vmatpush.msra.mxu0 0.0
  %3780 = vmatpush.msra.mxu0 0.0
  %3781 = vmatpush.msra.mxu0 0.0
  %3782 = vmatpush.msra.mxu0 0.0
  %3783 = vmatpush.msra.mxu0 0.0
  %3784 = vmatpush.msra.mxu0 0.0
  %3785 = vmatpush.msra.mxu0 0.0
  %3786 = vmatpush.msra.mxu0 0.0
  %3787 = vmatpush.msra.mxu0 0.0
  %3788 = vmatpush.msra.mxu0 0.0
  %3789 = vmatpush.msra.mxu0 0.0
  %3790 = vmatpush.msra.mxu0 %v3738
  %3791 = vmatmul.f32.gmra.mxu0 %v3731
  %v3792 = vpop.f32.mrf.mxu0
  %v3793 = vadd.f32 0.0, %v3792
  %3794 = vmatmul.f32.gmra.mxu0 %v3734
  %v3795 = vpop.f32.mrf.mxu0
  %v3796 = vadd.f32 0.0, %v3795
  %3797 = vdwg.mxu0
  %3798 = vmatpush.msra.mxu0 0.0
  %3799 = vmatpush.msra.mxu0 0.0
  %3800 = vmatpush.msra.mxu0 0.0
  %3801 = vmatpush.msra.mxu0 0.0
  %3802 = vmatpush.msra.mxu0 0.0
  %3803 = vmatpush.msra.mxu0 0.0
  %3804 = vmatpush.msra.mxu0 0.0
  %3805 = vmatpush.msra.mxu0 0.0
  %3806 = vmatpush.msra.mxu0 0.0
  %3807 = vmatpush.msra.mxu0 0.0
  %3808 = vmatpush.msra.mxu0 0.0
  %3809 = vmatpush.msra.mxu0 0.0
  %3810 = vmatpush.msra.mxu0 0.0
  %3811 = vmatpush.msra.mxu0 0.0
  %3812 = vmatpush.msra.mxu0 0.0
  %3813 = vmatpush.msra.mxu0 %v3740
  %3814 = vmatmul.f32.gmra.mxu0 %v3731
  %v3815 = vpop.f32.mrf.mxu0
  %v3816 = vadd.f32 0.0, %v3815
  %3817 = vmatmul.f32.gmra.mxu0 %v3734
  %v3818 = vpop.f32.mrf.mxu0
  %v3819 = vadd.f32 0.0, %v3818
  %3820 = vdwg.mxu0
  %3821 = vmatpush.msra.mxu0 0.0
  %3822 = vmatpush.msra.mxu0 0.0
  %3823 = vmatpush.msra.mxu0 0.0
  %3824 = vmatpush.msra.mxu0 0.0
  %3825 = vmatpush.msra.mxu0 0.0
  %3826 = vmatpush.msra.mxu0 0.0
  %3827 = vmatpush.msra.mxu0 0.0
  %3828 = vmatpush.msra.mxu0 0.0
  %3829 = vmatpush.msra.mxu0 0.0
  %3830 = vmatpush.msra.mxu0 0.0
  %3831 = vmatpush.msra.mxu0 0.0
  %3832 = vmatpush.msra.mxu0 0.0
  %3833 = vmatpush.msra.mxu0 0.0
  %3834 = vmatpush.msra.mxu0 0.0
  %3835 = vmatpush.msra.mxu0 0.0
  %3836 = vmatpush.msra.mxu0 %v3742
  %3837 = vmatmul.f32.gmra.mxu0 %v3731
  %v3838 = vpop.f32.mrf.mxu0
  %v3839 = vadd.f32 0.0, %v3838
  %3840 = vmatmul.f32.gmra.mxu0 %v3734
  %v3841 = vpop.f32.mrf.mxu0
  %v3842 = vadd.f32 0.0, %v3841
  %3843 = vdwg.mxu0
  %3844 = vmatpush.msra.mxu0 0.0
  %3845 = vmatpush.msra.mxu0 0.0
  %3846 = vmatpush.msra.mxu0 0.0
  %3847 = vmatpush.msra.mxu0 0.0
  %3848 = vmatpush.msra.mxu0 0.0
  %3849 = vmatpush.msra.mxu0 0.0
  %3850 = vmatpush.msra.mxu0 0.0
  %3851 = vmatpush.msra.mxu0 0.0
  %3852 = vmatpush.msra.mxu0 0.0
  %3853 = vmatpush.msra.mxu0 0.0
  %3854 = vmatpush.msra.mxu0 0.0
  %3855 = vmatpush.msra.mxu0 0.0
  %3856 = vmatpush.msra.mxu0 0.0
  %3857 = vmatpush.msra.mxu0 0.0
  %3858 = vmatpush.msra.mxu0 0.0
  %3859 = vmatpush.msra.mxu0 %v3744
  %3860 = vmatmul.f32.gmra.mxu0 %v3731
  %v3861 = vpop.f32.mrf.mxu0
  %v3862 = vadd.f32 0.0, %v3861
  %3863 = vmatmul.f32.gmra.mxu0 %v3734
  %v3864 = vpop.f32.mrf.mxu0
  %v3865 = vadd.f32 0.0, %v3864
  %3866 = vdwg.mxu0
  %3867 = vmatpush.msra.mxu0 0.0
  %3868 = vmatpush.msra.mxu0 0.0
  %3869 = vmatpush.msra.mxu0 0.0
  %3870 = vmatpush.msra.mxu0 0.0
  %3871 = vmatpush.msra.mxu0 0.0
  %3872 = vmatpush.msra.mxu0 0.0
  %3873 = vmatpush.msra.mxu0 0.0
  %3874 = vmatpush.msra.mxu0 0.0
  %3875 = vmatpush.msra.mxu0 0.0
  %3876 = vmatpush.msra.mxu0 0.0
  %3877 = vmatpush.msra.mxu0 0.0
  %3878 = vmatpush.msra.mxu0 0.0
  %3879 = vmatpush.msra.mxu0 0.0
  %3880 = vmatpush.msra.mxu0 0.0
  %3881 = vmatpush.msra.mxu0 0.0
  %3882 = vmatpush.msra.mxu0 %v3746
  %3883 = vmatmul.f32.gmra.mxu0 %v3731
  %v3884 = vpop.f32.mrf.mxu0
  %v3885 = vadd.f32 0.0, %v3884
  %3886 = vmatmul.f32.gmra.mxu0 %v3734
  %v3887 = vpop.f32.mrf.mxu0
  %v3888 = vadd.f32 0.0, %v3887
  %3889 = vdwg.mxu0
  %3890 = vmatpush.msra.mxu0 0.0
  %3891 = vmatpush.msra.mxu0 0.0
  %3892 = vmatpush.msra.mxu0 0.0
  %3893 = vmatpush.msra.mxu0 0.0
  %3894 = vmatpush.msra.mxu0 0.0
  %3895 = vmatpush.msra.mxu0 0.0
  %3896 = vmatpush.msra.mxu0 0.0
  %3897 = vmatpush.msra.mxu0 0.0
  %3898 = vmatpush.msra.mxu0 0.0
  %3899 = vmatpush.msra.mxu0 0.0
  %3900 = vmatpush.msra.mxu0 0.0
  %3901 = vmatpush.msra.mxu0 0.0
  %3902 = vmatpush.msra.mxu0 0.0
  %3903 = vmatpush.msra.mxu0 0.0
  %3904 = vmatpush.msra.mxu0 0.0
  %3905 = vmatpush.msra.mxu0 %v3748
  %3906 = vmatmul.f32.gmra.mxu0 %v3731
  %v3907 = vpop.f32.mrf.mxu0
  %v3908 = vadd.f32 0.0, %v3907
  %3909 = vmatmul.f32.gmra.mxu0 %v3734
  %v3910 = vpop.f32.mrf.mxu0
  %v3911 = vadd.f32 0.0, %v3910
  %3912 = vdwg.mxu0
  %3913 = vmatpush.msra.mxu0 0.0
  %3914 = vmatpush.msra.mxu0 0.0
  %3915 = vmatpush.msra.mxu0 0.0
  %3916 = vmatpush.msra.mxu0 0.0
  %3917 = vmatpush.msra.mxu0 0.0
  %3918 = vmatpush.msra.mxu0 0.0
  %3919 = vmatpush.msra.mxu0 0.0
  %3920 = vmatpush.msra.mxu0 0.0
  %3921 = vmatpush.msra.mxu0 0.0
  %3922 = vmatpush.msra.mxu0 0.0
  %3923 = vmatpush.msra.mxu0 0.0
  %3924 = vmatpush.msra.mxu0 0.0
  %3925 = vmatpush.msra.mxu0 0.0
  %3926 = vmatpush.msra.mxu0 0.0
  %3927 = vmatpush.msra.mxu0 0.0
  %3928 = vmatpush.msra.mxu0 %v3750
  %3929 = vmatmul.f32.gmra.mxu0 %v3731
  %v3930 = vpop.f32.mrf.mxu0
  %v3931 = vadd.f32 0.0, %v3930
  %3932 = vmatmul.f32.gmra.mxu0 %v3734
  %v3933 = vpop.f32.mrf.mxu0
  %v3934 = vadd.f32 0.0, %v3933
  %3935 = vdwg.mxu0
  %v3936 = vadd.f32 %v3634, %v3770
  %v3937 = vadd.f32 %v3635, %v3793
  %v3938 = vadd.f32 %v3636, %v3816
  %v3939 = vadd.f32 %v3637, %v3839
  %v3940 = vadd.f32 %v3638, %v3862
  %v3941 = vadd.f32 %v3639, %v3885
  %v3942 = vadd.f32 %v3640, %v3908
  %v3943 = vadd.f32 %v3641, %v3931
  %v3944 = vadd.f32 %v3642, %v3773
  %v3945 = vadd.f32 %v3643, %v3796
  %v3946 = vadd.f32 %v3644, %v3819
  %v3947 = vadd.f32 %v3645, %v3842
  %v3948 = vadd.f32 %v3646, %v3865
  %v3949 = vadd.f32 %v3647, %v3888
  %v3950 = vadd.f32 %v3648, %v3911
  %v3951 = vadd.f32 %v3649, %v3934
  %v3952 = vld [vmem:[%s13] sm:$0x1]
  %v3954 = vperm.slane %v3952, 0
  %v3956 = vmul.f32 %v3954, %v515
  %v3957 = vmul.f32 %v3954, %v516
  %3958 = vmatpush.xpose.msra.mxu0 0.0
  %3959 = vmatpush.xpose.msra.mxu0 0.0
  %3960 = vmatpush.xpose.msra.mxu0 0.0
  %3961 = vmatpush.xpose.msra.mxu0 0.0
  %3962 = vmatpush.xpose.msra.mxu0 0.0
  %3963 = vmatpush.xpose.msra.mxu0 0.0
  %3964 = vmatpush.xpose.msra.mxu0 0.0
  %3965 = vmatpush.xpose.msra.mxu0 0.0
  %3966 = vmatpush.xpose.msra.mxu0 %v137
  %3967 = vmatpush.xpose.msra.mxu0 %v129
  %3968 = vmatpush.xpose.msra.mxu0 %v121
  %3969 = vmatpush.xpose.msra.mxu0 %v113
  %3970 = vmatpush.xpose.msra.mxu0 %v105
  %3971 = vmatpush.xpose.msra.mxu0 %v97
  %3972 = vmatpush.xpose.msra.mxu0 %v89
  %3973 = vmatpush.xpose.msra.mxu0 %v81
  %3974 = vmatmul.f32.gmra.mxu0 %v3936
  %v3975 = vpop.f32.mrf.mxu0
  %v3976 = vadd.f32 %v3956, %v3975
  %3977 = vmatmul.f32.gmra.mxu0 %v3944
  %v3978 = vpop.f32.mrf.mxu0
  %v3979 = vadd.f32 %v3957, %v3978
  %3980 = vdwg.mxu0
  %3981 = vmatpush.xpose.msra.mxu0 0.0
  %3982 = vmatpush.xpose.msra.mxu0 0.0
  %3983 = vmatpush.xpose.msra.mxu0 0.0
  %3984 = vmatpush.xpose.msra.mxu0 0.0
  %3985 = vmatpush.xpose.msra.mxu0 0.0
  %3986 = vmatpush.xpose.msra.mxu0 0.0
  %3987 = vmatpush.xpose.msra.mxu0 0.0
  %3988 = vmatpush.xpose.msra.mxu0 0.0
  %3989 = vmatpush.xpose.msra.mxu0 %v138
  %3990 = vmatpush.xpose.msra.mxu0 %v130
  %3991 = vmatpush.xpose.msra.mxu0 %v122
  %3992 = vmatpush.xpose.msra.mxu0 %v114
  %3993 = vmatpush.xpose.msra.mxu0 %v106
  %3994 = vmatpush.xpose.msra.mxu0 %v98
  %3995 = vmatpush.xpose.msra.mxu0 %v90
  %3996 = vmatpush.xpose.msra.mxu0 %v82
  %3997 = vmatmul.f32.gmra.mxu0 %v3937
  %v3998 = vpop.f32.mrf.mxu0
  %v3999 = vadd.f32 %v3976, %v3998
  %4000 = vmatmul.f32.gmra.mxu0 %v3945
  %v4001 = vpop.f32.mrf.mxu0
  %v4002 = vadd.f32 %v3979, %v4001
  %4003 = vdwg.mxu0
  %4004 = vmatpush.xpose.msra.mxu0 0.0
  %4005 = vmatpush.xpose.msra.mxu0 0.0
  %4006 = vmatpush.xpose.msra.mxu0 0.0
  %4007 = vmatpush.xpose.msra.mxu0 0.0
  %4008 = vmatpush.xpose.msra.mxu0 0.0
  %4009 = vmatpush.xpose.msra.mxu0 0.0
  %4010 = vmatpush.xpose.msra.mxu0 0.0
  %4011 = vmatpush.xpose.msra.mxu0 0.0
  %4012 = vmatpush.xpose.msra.mxu0 %v139
  %4013 = vmatpush.xpose.msra.mxu0 %v131
  %4014 = vmatpush.xpose.msra.mxu0 %v123
  %4015 = vmatpush.xpose.msra.mxu0 %v115
  %4016 = vmatpush.xpose.msra.mxu0 %v107
  %4017 = vmatpush.xpose.msra.mxu0 %v99
  %4018 = vmatpush.xpose.msra.mxu0 %v91
  %4019 = vmatpush.xpose.msra.mxu0 %v83
  %4020 = vmatmul.f32.gmra.mxu0 %v3938
  %v4021 = vpop.f32.mrf.mxu0
  %v4022 = vadd.f32 %v3999, %v4021
  %4023 = vmatmul.f32.gmra.mxu0 %v3946
  %v4024 = vpop.f32.mrf.mxu0
  %v4025 = vadd.f32 %v4002, %v4024
  %4026 = vdwg.mxu0
  %4027 = vmatpush.xpose.msra.mxu0 0.0
  %4028 = vmatpush.xpose.msra.mxu0 0.0
  %4029 = vmatpush.xpose.msra.mxu0 0.0
  %4030 = vmatpush.xpose.msra.mxu0 0.0
  %4031 = vmatpush.xpose.msra.mxu0 0.0
  %4032 = vmatpush.xpose.msra.mxu0 0.0
  %4033 = vmatpush.xpose.msra.mxu0 0.0
  %4034 = vmatpush.xpose.msra.mxu0 0.0
  %4035 = vmatpush.xpose.msra.mxu0 %v140
  %4036 = vmatpush.xpose.msra.mxu0 %v132
  %4037 = vmatpush.xpose.msra.mxu0 %v124
  %4038 = vmatpush.xpose.msra.mxu0 %v116
  %4039 = vmatpush.xpose.msra.mxu0 %v108
  %4040 = vmatpush.xpose.msra.mxu0 %v100
  %4041 = vmatpush.xpose.msra.mxu0 %v92
  %4042 = vmatpush.xpose.msra.mxu0 %v84
  %4043 = vmatmul.f32.gmra.mxu0 %v3939
  %v4044 = vpop.f32.mrf.mxu0
  %v4045 = vadd.f32 %v4022, %v4044
  %4046 = vmatmul.f32.gmra.mxu0 %v3947
  %v4047 = vpop.f32.mrf.mxu0
  %v4048 = vadd.f32 %v4025, %v4047
  %4049 = vdwg.mxu0
  %4050 = vmatpush.xpose.msra.mxu0 0.0
  %4051 = vmatpush.xpose.msra.mxu0 0.0
  %4052 = vmatpush.xpose.msra.mxu0 0.0
  %4053 = vmatpush.xpose.msra.mxu0 0.0
  %4054 = vmatpush.xpose.msra.mxu0 0.0
  %4055 = vmatpush.xpose.msra.mxu0 0.0
  %4056 = vmatpush.xpose.msra.mxu0 0.0
  %4057 = vmatpush.xpose.msra.mxu0 0.0
  %4058 = vmatpush.xpose.msra.mxu0 %v141
  %4059 = vmatpush.xpose.msra.mxu0 %v133
  %4060 = vmatpush.xpose.msra.mxu0 %v125
  %4061 = vmatpush.xpose.msra.mxu0 %v117
  %4062 = vmatpush.xpose.msra.mxu0 %v109
  %4063 = vmatpush.xpose.msra.mxu0 %v101
  %4064 = vmatpush.xpose.msra.mxu0 %v93
  %4065 = vmatpush.xpose.msra.mxu0 %v85
  %4066 = vmatmul.f32.gmra.mxu0 %v3940
  %v4067 = vpop.f32.mrf.mxu0
  %v4068 = vadd.f32 %v4045, %v4067
  %4069 = vmatmul.f32.gmra.mxu0 %v3948
  %v4070 = vpop.f32.mrf.mxu0
  %v4071 = vadd.f32 %v4048, %v4070
  %4072 = vdwg.mxu0
  %4073 = vmatpush.xpose.msra.mxu0 0.0
  %4074 = vmatpush.xpose.msra.mxu0 0.0
  %4075 = vmatpush.xpose.msra.mxu0 0.0
  %4076 = vmatpush.xpose.msra.mxu0 0.0
  %4077 = vmatpush.xpose.msra.mxu0 0.0
  %4078 = vmatpush.xpose.msra.mxu0 0.0
  %4079 = vmatpush.xpose.msra.mxu0 0.0
  %4080 = vmatpush.xpose.msra.mxu0 0.0
  %4081 = vmatpush.xpose.msra.mxu0 %v142
  %4082 = vmatpush.xpose.msra.mxu0 %v134
  %4083 = vmatpush.xpose.msra.mxu0 %v126
  %4084 = vmatpush.xpose.msra.mxu0 %v118
  %4085 = vmatpush.xpose.msra.mxu0 %v110
  %4086 = vmatpush.xpose.msra.mxu0 %v102
  %4087 = vmatpush.xpose.msra.mxu0 %v94
  %4088 = vmatpush.xpose.msra.mxu0 %v86
  %4089 = vmatmul.f32.gmra.mxu0 %v3941
  %v4090 = vpop.f32.mrf.mxu0
  %v4091 = vadd.f32 %v4068, %v4090
  %4092 = vmatmul.f32.gmra.mxu0 %v3949
  %v4093 = vpop.f32.mrf.mxu0
  %v4094 = vadd.f32 %v4071, %v4093
  %4095 = vdwg.mxu0
  %4096 = vmatpush.xpose.msra.mxu0 0.0
  %4097 = vmatpush.xpose.msra.mxu0 0.0
  %4098 = vmatpush.xpose.msra.mxu0 0.0
  %4099 = vmatpush.xpose.msra.mxu0 0.0
  %4100 = vmatpush.xpose.msra.mxu0 0.0
  %4101 = vmatpush.xpose.msra.mxu0 0.0
  %4102 = vmatpush.xpose.msra.mxu0 0.0
  %4103 = vmatpush.xpose.msra.mxu0 0.0
  %4104 = vmatpush.xpose.msra.mxu0 %v143
  %4105 = vmatpush.xpose.msra.mxu0 %v135
  %4106 = vmatpush.xpose.msra.mxu0 %v127
  %4107 = vmatpush.xpose.msra.mxu0 %v119
  %4108 = vmatpush.xpose.msra.mxu0 %v111
  %4109 = vmatpush.xpose.msra.mxu0 %v103
  %4110 = vmatpush.xpose.msra.mxu0 %v95
  %4111 = vmatpush.xpose.msra.mxu0 %v87
  %4112 = vmatmul.f32.gmra.mxu0 %v3942
  %v4113 = vpop.f32.mrf.mxu0
  %v4114 = vadd.f32 %v4091, %v4113
  %4115 = vmatmul.f32.gmra.mxu0 %v3950
  %v4116 = vpop.f32.mrf.mxu0
  %v4117 = vadd.f32 %v4094, %v4116
  %4118 = vdwg.mxu0
  %4119 = vmatpush.xpose.msra.mxu0 0.0
  %4120 = vmatpush.xpose.msra.mxu0 0.0
  %4121 = vmatpush.xpose.msra.mxu0 0.0
  %4122 = vmatpush.xpose.msra.mxu0 0.0
  %4123 = vmatpush.xpose.msra.mxu0 0.0
  %4124 = vmatpush.xpose.msra.mxu0 0.0
  %4125 = vmatpush.xpose.msra.mxu0 0.0
  %4126 = vmatpush.xpose.msra.mxu0 0.0
  %4127 = vmatpush.xpose.msra.mxu0 %v144
  %4128 = vmatpush.xpose.msra.mxu0 %v136
  %4129 = vmatpush.xpose.msra.mxu0 %v128
  %4130 = vmatpush.xpose.msra.mxu0 %v120
  %4131 = vmatpush.xpose.msra.mxu0 %v112
  %4132 = vmatpush.xpose.msra.mxu0 %v104
  %4133 = vmatpush.xpose.msra.mxu0 %v96
  %4134 = vmatpush.xpose.msra.mxu0 %v88
  %4135 = vmatmul.f32.gmra.mxu0 %v3943
  %v4136 = vpop.f32.mrf.mxu0
  %v4137 = vadd.f32 %v4114, %v4136
  %4138 = vmatmul.f32.gmra.mxu0 %v3951
  %v4139 = vpop.f32.mrf.mxu0
  %v4140 = vadd.f32 %v4117, %v4139
  %4141 = vdwg.mxu0
  %v4142 = vsub.f32 0.0, %v359
  %v4143 = vsub.f32 0.0, %v362
  %v4144 = vmul.f32 %v4142, 1.442695
  %v4145 = vpow.pop %v4144
  %v4146 = vmul.f32 %v4143, 1.442695
  %v4147 = vpow.pop %v4146
  %v4148 = vadd.f32 %v4145, 1.0
  %v4149 = vadd.f32 %v4147, 1.0
  %v4150 = vrcp.pop %v4148
  %v4151 = vmul.f32 %v4148, %v4150
  %v4152 = vsub.f32 1.0, %v4151
  %v4153 = vmul.f32 %v4150, %v4152
  %v4154 = vadd.f32 %v4150, %v4153
  %vm4155 = vweird.f32 %v4148
  %vm4156 = vweird.f32 %v4150
  %vm4157 = vmor %vm4155, %vm4156
  %v4158 = vsel %vm4157, %v4150, %v4154
  %v4159 = vand.u32 2147483647, %v4148
  %vm4160 = vcmp.eq.f32.partialorder %v4159, 8.507059e+37
  %v4161 = vand.u32 %v4148, 2147483648
  %v4162 = vor.u32 1.1754944e-38, %v4161
  %v4163 = vsel %vm4160, %v4162, %v4158
  %v4164 = vmul.f32 1.0, %v4163
  %v4165 = vrcp.pop %v4149
  %v4166 = vmul.f32 %v4149, %v4165
  %v4167 = vsub.f32 1.0, %v4166
  %v4168 = vmul.f32 %v4165, %v4167
  %v4169 = vadd.f32 %v4165, %v4168
  %vm4170 = vweird.f32 %v4149
  %vm4171 = vweird.f32 %v4165
  %vm4172 = vmor %vm4170, %vm4171
  %v4173 = vsel %vm4172, %v4165, %v4169
  %v4174 = vand.u32 2147483647, %v4149
  %vm4175 = vcmp.eq.f32.partialorder %v4174, 8.507059e+37
  %v4176 = vand.u32 %v4149, 2147483648
  %v4177 = vor.u32 1.1754944e-38, %v4176
  %v4178 = vsel %vm4175, %v4177, %v4173
  %v4179 = vmul.f32 1.0, %v4178
  %v4180 = vmul.f32 %v359, %v4164
  %v4181 = vmul.f32 %v362, %v4179
  %v4182 = vmul.f32 %v4137, %v4180
  %v4183 = vmul.f32 %v4140, %v4181
  %v4184 = vld [vmem:[%s14] sm:$0xff]
  %v4185 = vld [vmem:[%s14 + $0x8] sm:$0xff]
  %v4186 = vld [vmem:[%s14 + $0x10] sm:$0xff]
  %v4187 = vld [vmem:[%s14 + $0x18] sm:$0xff]
  %v4189 = vsel %vm518, %v4182, 0
  %v4192 = vsel %vm518, %v4183, 0
  %v4195 = vsel %vm518, %v4184, 0
  %v4198 = vsel %vm518, %v4185, 0
  %v4201 = vsel %vm518, %v4186, 0
  %v4204 = vsel %vm518, %v4187, 0
  %4206 = vmatpush.xpose.msra.mxu0 0.0
  %4207 = vmatpush.xpose.msra.mxu0 0.0
  %4208 = vmatpush.xpose.msra.mxu0 0.0
  %4209 = vmatpush.xpose.msra.mxu0 0.0
  %4210 = vmatpush.xpose.msra.mxu0 0.0
  %4211 = vmatpush.xpose.msra.mxu0 0.0
  %4212 = vmatpush.xpose.msra.mxu0 0.0
  %4213 = vmatpush.xpose.msra.mxu0 0.0
  %4214 = vmatpush.xpose.msra.mxu0 0.0
  %4215 = vmatpush.xpose.msra.mxu0 0.0
  %4216 = vmatpush.xpose.msra.mxu0 0.0
  %4217 = vmatpush.xpose.msra.mxu0 0.0
  %4218 = vmatpush.xpose.msra.mxu0 %v4204
  %4219 = vmatpush.xpose.msra.mxu0 %v4201
  %4220 = vmatpush.xpose.msra.mxu0 %v4198
  %4221 = vmatpush.xpose.msra.mxu0 %v4195
  %4222 = vmatmul.f32.gmra.mxu0 %v4189
  %v4223 = vpop.f32.mrf.mxu0
  %v4224 = vadd.f32 %v50, %v4223
  %4225 = vmatmul.f32.gmra.mxu0 %v4192
  %v4226 = vpop.f32.mrf.mxu0
  %v4227 = vadd.f32 %v51, %v4226
  %4228 = vdwg.mxu0
  %v4229 = vmul.f32 %v4224, %v4224
  %v4230 = vmul.f32 %v4227, %v4227
  %v4231 = vsel %vm202, %v4229, 0.0
  %4232 = vadd.xlane.f32.xlu0 %v4231
  %v4233 = vpop.xlane.xlu0 %4232
  %v4234 = vsel %vm202, %v4230, 0.0
  %4235 = vadd.xlane.f32.xlu0 %v4234
  %v4236 = vpop.xlane.xlu0 %4235
  %v4237 = vmul.f32 %v4233, %v215
  %v4238 = vmul.f32 %v4236, %v215
  %v4239 = vadd.f32 %v4237, 1e-05
  %v4240 = vadd.f32 %v4238, 1e-05
  %v4241 = vrsqrt.pop %v4239
  %v4242 = vmul.f32 %v4241, %v4239
  %v4243 = vmul.f32 %v4242, %v4241
  %v4244 = vmul.f32 0.5, %v4243
  %v4245 = vsub.f32 1.5, %v4244
  %v4246 = vmul.f32 %v4241, %v4245
  %vm4247 = vweird.f32 %v4239
  %vm4248 = vweird.f32 %v4241
  %vm4249 = vmor %vm4247, %vm4248
  %v4250 = vsel %vm4249, %v4241, %v4246
  %v4251 = vrsqrt.pop %v4240
  %v4252 = vmul.f32 %v4251, %v4240
  %v4253 = vmul.f32 %v4252, %v4251
  %v4254 = vmul.f32 0.5, %v4253
  %v4255 = vsub.f32 1.5, %v4254
  %v4256 = vmul.f32 %v4251, %v4255
  %vm4257 = vweird.f32 %v4240
  %vm4258 = vweird.f32 %v4251
  %vm4259 = vmor %vm4257, %vm4258
  %v4260 = vsel %vm4259, %v4251, %v4256
  %v4261 = vmul.f32 %v4224, %v4250
  %v4262 = vmul.f32 %v4227, %v4260
  %s4263 = scalar_lea.vmem %s2, 1
  %v4264 = vld [vmem:[%s4263] sm:$0x1]
  %v4266 = vperm.slane %v4264, 0
  %v4268 = vmul.f32 %v4261, %v4266
  %v4269 = vmul.f32 %v4262, %v4266
  %s4270 = scalar_lea.vmem %s3, 64
  %v4271 = vld [vmem:[%s4270] sm:$0xff]
  %v4272 = vld [vmem:[%s4270 + $0x8] sm:$0xff]
  %v4273 = vld [vmem:[%s4270 + $0x10] sm:$0xff]
  %v4274 = vld [vmem:[%s4270 + $0x18] sm:$0xff]
  %v4275 = vld [vmem:[%s4270 + $0x20] sm:$0xff]
  %v4276 = vld [vmem:[%s4270 + $0x28] sm:$0xff]
  %v4277 = vld [vmem:[%s4270 + $0x30] sm:$0xff]
  %v4278 = vld [vmem:[%s4270 + $0x38] sm:$0xff]
  %v4280 = vsel %vm202, %v4268, 0
  %v4283 = vsel %vm202, %v4269, 0
  %v4286 = vsel %vm202, %v4271, 0
  %v4289 = vsel %vm202, %v4272, 0
  %v4292 = vsel %vm202, %v4273, 0
  %v4295 = vsel %vm202, %v4274, 0
  %v4298 = vsel %vm202, %v4275, 0
  %v4301 = vsel %vm202, %v4276, 0
  %v4304 = vsel %vm202, %v4277, 0
  %v4307 = vsel %vm202, %v4278, 0
  %4309 = vmatpush.xpose.msra.mxu0 0.0
  %4310 = vmatpush.xpose.msra.mxu0 0.0
  %4311 = vmatpush.xpose.msra.mxu0 0.0
  %4312 = vmatpush.xpose.msra.mxu0 0.0
  %4313 = vmatpush.xpose.msra.mxu0 0.0
  %4314 = vmatpush.xpose.msra.mxu0 0.0
  %4315 = vmatpush.xpose.msra.mxu0 0.0
  %4316 = vmatpush.xpose.msra.mxu0 0.0
  %4317 = vmatpush.xpose.msra.mxu0 %v4307
  %4318 = vmatpush.xpose.msra.mxu0 %v4304
  %4319 = vmatpush.xpose.msra.mxu0 %v4301
  %4320 = vmatpush.xpose.msra.mxu0 %v4298
  %4321 = vmatpush.xpose.msra.mxu0 %v4295
  %4322 = vmatpush.xpose.msra.mxu0 %v4292
  %4323 = vmatpush.xpose.msra.mxu0 %v4289
  %4324 = vmatpush.xpose.msra.mxu0 %v4286
  %4325 = vmatmul.f32.gmra.mxu0 %v4280
  %v4326 = vpop.f32.mrf.mxu0
  %v4327 = vadd.f32 0.0, %v4326
  %4328 = vmatmul.f32.gmra.mxu0 %v4283
  %v4329 = vpop.f32.mrf.mxu0
  %v4330 = vadd.f32 0.0, %v4329
  %4331 = vdwg.mxu0
  %s4332 = scalar_lea.vmem %s4, 64
  %v4333 = vld [vmem:[%s4332] sm:$0xff]
  %v4334 = vld [vmem:[%s4332 + $0x8] sm:$0xff]
  %v4335 = vld [vmem:[%s4332 + $0x10] sm:$0xff]
  %v4336 = vld [vmem:[%s4332 + $0x18] sm:$0xff]
  %v4337 = vld [vmem:[%s4332 + $0x20] sm:$0xff]
  %v4338 = vld [vmem:[%s4332 + $0x28] sm:$0xff]
  %v4339 = vld [vmem:[%s4332 + $0x30] sm:$0xff]
  %v4340 = vld [vmem:[%s4332 + $0x38] sm:$0xff]
  %v4342 = vsel %vm202, %v4333, 0
  %v4345 = vsel %vm202, %v4334, 0
  %v4348 = vsel %vm202, %v4335, 0
  %v4351 = vsel %vm202, %v4336, 0
  %v4354 = vsel %vm202, %v4337, 0
  %v4357 = vsel %vm202, %v4338, 0
  %v4360 = vsel %vm202, %v4339, 0
  %v4363 = vsel %vm202, %v4340, 0
  %4365 = vmatpush.xpose.msra.mxu0 0.0
  %4366 = vmatpush.xpose.msra.mxu0 0.0
  %4367 = vmatpush.xpose.msra.mxu0 0.0
  %4368 = vmatpush.xpose.msra.mxu0 0.0
  %4369 = vmatpush.xpose.msra.mxu0 0.0
  %4370 = vmatpush.xpose.msra.mxu0 0.0
  %4371 = vmatpush.xpose.msra.mxu0 0.0
  %4372 = vmatpush.xpose.msra.mxu0 0.0
  %4373 = vmatpush.xpose.msra.mxu0 %v4363
  %4374 = vmatpush.xpose.msra.mxu0 %v4360
  %4375 = vmatpush.xpose.msra.mxu0 %v4357
  %4376 = vmatpush.xpose.msra.mxu0 %v4354
  %4377 = vmatpush.xpose.msra.mxu0 %v4351
  %4378 = vmatpush.xpose.msra.mxu0 %v4348
  %4379 = vmatpush.xpose.msra.mxu0 %v4345
  %4380 = vmatpush.xpose.msra.mxu0 %v4342
  %4381 = vmatmul.f32.gmra.mxu0 %v4280
  %v4382 = vpop.f32.mrf.mxu0
  %v4383 = vadd.f32 0.0, %v4382
  %4384 = vmatmul.f32.gmra.mxu0 %v4283
  %v4385 = vpop.f32.mrf.mxu0
  %v4386 = vadd.f32 0.0, %v4385
  %4387 = vdwg.mxu0
  %s4388 = scalar_lea.vmem %s5, 4
  %v4389 = vld [vmem:[%s4388] sm:$0xf]
  %s4390 = scalar_lea.vmem %s6, 1
  %v4391 = vld [vmem:[%s4390] sm:$0x1]
  %v4392 = vperm.slane %v4389, 3
  %v4393 = vmul.f32 %v4327, %v4392
  %v4394 = vmul.f32 %v4330, %v4392
  %v4396 = vperm.slane %v4391, 0
  %v4398 = vadd.f32 %v4396, %v4393
  %v4399 = vadd.f32 %v4396, %v4394
  %4400 = vmatpush.msra.mxu0 0.0
  %4401 = vmatpush.msra.mxu0 0.0
  %4402 = vmatpush.msra.mxu0 0.0
  %4403 = vmatpush.msra.mxu0 0.0
  %4404 = vmatpush.msra.mxu0 0.0
  %4405 = vmatpush.msra.mxu0 0.0
  %4406 = vmatpush.msra.mxu0 0.0
  %4407 = vmatpush.msra.mxu0 0.0
  %4408 = vmatpush.msra.mxu0 0.0
  %4409 = vmatpush.msra.mxu0 0.0
  %4410 = vmatpush.msra.mxu0 0.0
  %4411 = vmatpush.msra.mxu0 0.0
  %4412 = vmatpush.msra.mxu0 0.0
  %4413 = vmatpush.msra.mxu0 0.0
  %4414 = vmatpush.msra.mxu0 %v4330
  %4415 = vmatpush.msra.mxu0 %v4327
  %4416 = vmatmul.f32.gmra.mxu0 %v376
  %v4417 = vpop.f32.mrf.mxu0
  %v4418 = vadd.f32 0.0, %v4417
  %4419 = vmatmul.f32.gmra.mxu0 %v379
  %v4420 = vpop.f32.mrf.mxu0
  %v4421 = vadd.f32 0.0, %v4420
  %4422 = vdwg.mxu0
  %v4423 = vperm.slane %v4389, 2
  %v4424 = vmul.f32 %v4418, %v4423
  %v4425 = vmul.f32 %v4421, %v4423
  %v4426 = vadd.f32 %v4398, %v4424
  %v4427 = vadd.f32 %v4399, %v4425
  %4428 = vmatpush.msra.mxu0 0.0
  %4429 = vmatpush.msra.mxu0 0.0
  %4430 = vmatpush.msra.mxu0 0.0
  %4431 = vmatpush.msra.mxu0 0.0
  %4432 = vmatpush.msra.mxu0 0.0
  %4433 = vmatpush.msra.mxu0 0.0
  %4434 = vmatpush.msra.mxu0 0.0
  %4435 = vmatpush.msra.mxu0 0.0
  %4436 = vmatpush.msra.mxu0 0.0
  %4437 = vmatpush.msra.mxu0 0.0
  %4438 = vmatpush.msra.mxu0 0.0
  %4439 = vmatpush.msra.mxu0 0.0
  %4440 = vmatpush.msra.mxu0 0.0
  %4441 = vmatpush.msra.mxu0 0.0
  %4442 = vmatpush.msra.mxu0 %v4330
  %4443 = vmatpush.msra.mxu0 %v4327
  %4444 = vmatmul.f32.gmra.mxu0 %v410
  %v4445 = vpop.f32.mrf.mxu0
  %v4446 = vadd.f32 0.0, %v4445
  %4447 = vmatmul.f32.gmra.mxu0 %v413
  %v4448 = vpop.f32.mrf.mxu0
  %v4449 = vadd.f32 0.0, %v4448
  %4450 = vdwg.mxu0
  %v4451 = vperm.slane %v4389, 1
  %v4452 = vmul.f32 %v4446, %v4451
  %v4453 = vmul.f32 %v4449, %v4451
  %v4454 = vadd.f32 %v4426, %v4452
  %v4455 = vadd.f32 %v4427, %v4453
  %4456 = vmatpush.msra.mxu0 0.0
  %4457 = vmatpush.msra.mxu0 0.0
  %4458 = vmatpush.msra.mxu0 0.0
  %4459 = vmatpush.msra.mxu0 0.0
  %4460 = vmatpush.msra.mxu0 0.0
  %4461 = vmatpush.msra.mxu0 0.0
  %4462 = vmatpush.msra.mxu0 0.0
  %4463 = vmatpush.msra.mxu0 0.0
  %4464 = vmatpush.msra.mxu0 0.0
  %4465 = vmatpush.msra.mxu0 0.0
  %4466 = vmatpush.msra.mxu0 0.0
  %4467 = vmatpush.msra.mxu0 0.0
  %4468 = vmatpush.msra.mxu0 0.0
  %4469 = vmatpush.msra.mxu0 0.0
  %4470 = vmatpush.msra.mxu0 %v4330
  %4471 = vmatpush.msra.mxu0 %v4327
  %4472 = vmatmul.f32.gmra.mxu0 %v444
  %v4473 = vpop.f32.mrf.mxu0
  %v4474 = vadd.f32 0.0, %v4473
  %4475 = vmatmul.f32.gmra.mxu0 %v447
  %v4476 = vpop.f32.mrf.mxu0
  %v4477 = vadd.f32 0.0, %v4476
  %4478 = vdwg.mxu0
  %v4479 = vperm.slane %v4389, 0
  %v4480 = vmul.f32 %v4474, %v4479
  %v4481 = vmul.f32 %v4477, %v4479
  %v4482 = vadd.f32 %v4454, %v4480
  %v4483 = vadd.f32 %v4455, %v4481
  %v4484 = vsub.f32 0.0, %v4482
  %v4485 = vsub.f32 0.0, %v4483
  %v4486 = vmul.f32 %v4484, 1.442695
  %v4487 = vpow.pop %v4486
  %v4488 = vmul.f32 %v4485, 1.442695
  %v4489 = vpow.pop %v4488
  %v4490 = vadd.f32 %v4487, 1.0
  %v4491 = vadd.f32 %v4489, 1.0
  %v4492 = vrcp.pop %v4490
  %v4493 = vmul.f32 %v4490, %v4492
  %v4494 = vsub.f32 1.0, %v4493
  %v4495 = vmul.f32 %v4492, %v4494
  %v4496 = vadd.f32 %v4492, %v4495
  %vm4497 = vweird.f32 %v4490
  %vm4498 = vweird.f32 %v4492
  %vm4499 = vmor %vm4497, %vm4498
  %v4500 = vsel %vm4499, %v4492, %v4496
  %v4501 = vand.u32 2147483647, %v4490
  %vm4502 = vcmp.eq.f32.partialorder %v4501, 8.507059e+37
  %v4503 = vand.u32 %v4490, 2147483648
  %v4504 = vor.u32 1.1754944e-38, %v4503
  %v4505 = vsel %vm4502, %v4504, %v4500
  %v4506 = vmul.f32 1.0, %v4505
  %v4507 = vrcp.pop %v4491
  %v4508 = vmul.f32 %v4491, %v4507
  %v4509 = vsub.f32 1.0, %v4508
  %v4510 = vmul.f32 %v4507, %v4509
  %v4511 = vadd.f32 %v4507, %v4510
  %vm4512 = vweird.f32 %v4491
  %vm4513 = vweird.f32 %v4507
  %vm4514 = vmor %vm4512, %vm4513
  %v4515 = vsel %vm4514, %v4507, %v4511
  %v4516 = vand.u32 2147483647, %v4491
  %vm4517 = vcmp.eq.f32.partialorder %v4516, 8.507059e+37
  %v4518 = vand.u32 %v4491, 2147483648
  %v4519 = vor.u32 1.1754944e-38, %v4518
  %v4520 = vsel %vm4517, %v4519, %v4515
  %v4521 = vmul.f32 1.0, %v4520
  %v4522 = vmul.f32 %v4482, %v4506
  %v4523 = vmul.f32 %v4483, %v4521
  %s4524 = scalar_lea.vmem %s7, 2
  %v4525 = vld [vmem:[%s4524] sm:$0x3]
  %v4527 = vsel %vm518, %v4522, 0
  %v4530 = vsel %vm518, %v4523, 0
  %v4533 = vsel %vm518, %v4525, 0
  %4535 = vmatpush.xpose.msra.mxu0 0.0
  %4536 = vmatpush.xpose.msra.mxu0 0.0
  %4537 = vmatpush.xpose.msra.mxu0 0.0
  %4538 = vmatpush.xpose.msra.mxu0 0.0
  %4539 = vmatpush.xpose.msra.mxu0 0.0
  %4540 = vmatpush.xpose.msra.mxu0 0.0
  %4541 = vmatpush.xpose.msra.mxu0 0.0
  %4542 = vmatpush.xpose.msra.mxu0 0.0
  %4543 = vmatpush.xpose.msra.mxu0 0.0
  %4544 = vmatpush.xpose.msra.mxu0 0.0
  %4545 = vmatpush.xpose.msra.mxu0 0.0
  %4546 = vmatpush.xpose.msra.mxu0 0.0
  %4547 = vmatpush.xpose.msra.mxu0 0.0
  %4548 = vmatpush.xpose.msra.mxu0 0.0
  %4549 = vmatpush.xpose.msra.mxu0 0.0
  %4550 = vmatpush.xpose.msra.mxu0 %v4533
  %4551 = vmatmul.f32.gmra.mxu0 %v4527
  %v4552 = vpop.f32.mrf.mxu0
  %v4553 = vadd.f32 0.0, %v4552
  %4554 = vmatmul.f32.gmra.mxu0 %v4530
  %v4555 = vpop.f32.mrf.mxu0
  %v4556 = vadd.f32 0.0, %v4555
  %4557 = vdwg.mxu0
  %s4558 = scalar_lea.vmem %s8, 2
  %v4559 = vld [vmem:[%s4558] sm:$0x3]
  %s4560 = scalar_lea.vmem %s9, 1
  %v4561 = vld [vmem:[%s4560] sm:$0x1]
  %4563 = vset.pattern.permute.xlu0 0
  %4564 = vperm.xlu0 %4563, %v4553
  %v4565 = vpop.permute.xlu0 %4564
  %4568 = vset.pattern.permute.xlu0 0
  %4569 = vperm.xlu0 %4568, %v4556
  %v4570 = vpop.permute.xlu0 %4569
  %v4572 = vperm.slane %v4559, 0
  %v4573 = vmul.f32 %v4565, %v4572
  %v4574 = vmul.f32 %v4570, %v4572
  %v4576 = vperm.slane %v4561, 0
  %v4578 = vadd.f32 %v4576, %v4573
  %v4579 = vadd.f32 %v4576, %v4574
  %4580 = vset.pattern.permute.xlu0 1
  %4581 = vperm.xlu0 %4580, %v4553
  %v4582 = vpop.permute.xlu0 %4581
  %4584 = vset.pattern.permute.xlu0 1
  %4585 = vperm.xlu0 %4584, %v4556
  %v4586 = vpop.permute.xlu0 %4585
  %v4588 = vperm.slane %v4559, 1
  %v4589 = vmul.f32 %v4582, %v4588
  %v4590 = vmul.f32 %v4586, %v4588
  %v4591 = vadd.f32 %v4578, %v4589
  %v4592 = vadd.f32 %v4579, %v4590
  %v4593 = vmax.f32 %v4591, 0.0
  %v4594 = vmax.f32 %v4592, 0.0
  %v4595 = vand.u32 2147483647, %v4591
  %v4596 = vand.u32 2147483647, %v4592
  %v4597 = vsub.f32 0.0, %v4595
  %v4598 = vsub.f32 0.0, %v4596
  %v4599 = vmul.f32 %v4597, 1.442695
  %v4600 = vpow.pop %v4599
  %v4601 = vmul.f32 %v4598, 1.442695
  %v4602 = vpow.pop %v4601
  %v4603 = vadd.f32 %v4600, 1.0
  %v4604 = vlog2.pop %v4603
  %v4605 = vmul.f32 %v4604, 0.6931472
  %v4606 = vmul.f32 -0.5, %v4600
  %v4607 = vadd.f32 %v4606, 1.0
  %v4608 = vmul.f32 %v4607, %v4600
  %v4609 = vand.u32 2147483647, %v4600
  %vm4610 = vcmp.lt.f32.partialorder %v4609, 0.0004427343
  %v4611 = vsel %vm4610, %v4608, %v4605
  %v4612 = vadd.f32 %v4602, 1.0
  %v4613 = vlog2.pop %v4612
  %v4614 = vmul.f32 %v4613, 0.6931472
  %v4615 = vmul.f32 -0.5, %v4602
  %v4616 = vadd.f32 %v4615, 1.0
  %v4617 = vmul.f32 %v4616, %v4602
  %v4618 = vand.u32 2147483647, %v4602
  %vm4619 = vcmp.lt.f32.partialorder %v4618, 0.0004427343
  %v4620 = vsel %vm4619, %v4617, %v4614
  %v4621 = vadd.f32 %v4593, %v4611
  %v4622 = vadd.f32 %v4594, %v4620
  %v4624 = vsel %vm518, %v4621, 0
  %v4627 = vsel %vm518, %v4622, 0
  %4629 = vmatpush.msra.mxu0 0.0
  %4630 = vmatpush.msra.mxu0 0.0
  %4631 = vmatpush.msra.mxu0 0.0
  %4632 = vmatpush.msra.mxu0 0.0
  %4633 = vmatpush.msra.mxu0 0.0
  %4634 = vmatpush.msra.mxu0 0.0
  %4635 = vmatpush.msra.mxu0 0.0
  %4636 = vmatpush.msra.mxu0 0.0
  %4637 = vmatpush.msra.mxu0 %v137
  %4638 = vmatpush.msra.mxu0 %v129
  %4639 = vmatpush.msra.mxu0 %v121
  %4640 = vmatpush.msra.mxu0 %v113
  %4641 = vmatpush.msra.mxu0 %v105
  %4642 = vmatpush.msra.mxu0 %v97
  %4643 = vmatpush.msra.mxu0 %v89
  %4644 = vmatpush.msra.mxu0 %v81
  %4645 = vmatmul.f32.gmra.mxu0 %v4624
  %v4646 = vpop.f32.mrf.mxu0
  %v4647 = vadd.f32 0.0, %v4646
  %4648 = vmatmul.f32.gmra.mxu0 %v4627
  %v4649 = vpop.f32.mrf.mxu0
  %v4650 = vadd.f32 0.0, %v4649
  %4651 = vdwg.mxu0
  %4652 = vmatpush.msra.mxu0 0.0
  %4653 = vmatpush.msra.mxu0 0.0
  %4654 = vmatpush.msra.mxu0 0.0
  %4655 = vmatpush.msra.mxu0 0.0
  %4656 = vmatpush.msra.mxu0 0.0
  %4657 = vmatpush.msra.mxu0 0.0
  %4658 = vmatpush.msra.mxu0 0.0
  %4659 = vmatpush.msra.mxu0 0.0
  %4660 = vmatpush.msra.mxu0 %v138
  %4661 = vmatpush.msra.mxu0 %v130
  %4662 = vmatpush.msra.mxu0 %v122
  %4663 = vmatpush.msra.mxu0 %v114
  %4664 = vmatpush.msra.mxu0 %v106
  %4665 = vmatpush.msra.mxu0 %v98
  %4666 = vmatpush.msra.mxu0 %v90
  %4667 = vmatpush.msra.mxu0 %v82
  %4668 = vmatmul.f32.gmra.mxu0 %v4624
  %v4669 = vpop.f32.mrf.mxu0
  %v4670 = vadd.f32 0.0, %v4669
  %4671 = vmatmul.f32.gmra.mxu0 %v4627
  %v4672 = vpop.f32.mrf.mxu0
  %v4673 = vadd.f32 0.0, %v4672
  %4674 = vdwg.mxu0
  %4675 = vmatpush.msra.mxu0 0.0
  %4676 = vmatpush.msra.mxu0 0.0
  %4677 = vmatpush.msra.mxu0 0.0
  %4678 = vmatpush.msra.mxu0 0.0
  %4679 = vmatpush.msra.mxu0 0.0
  %4680 = vmatpush.msra.mxu0 0.0
  %4681 = vmatpush.msra.mxu0 0.0
  %4682 = vmatpush.msra.mxu0 0.0
  %4683 = vmatpush.msra.mxu0 %v139
  %4684 = vmatpush.msra.mxu0 %v131
  %4685 = vmatpush.msra.mxu0 %v123
  %4686 = vmatpush.msra.mxu0 %v115
  %4687 = vmatpush.msra.mxu0 %v107
  %4688 = vmatpush.msra.mxu0 %v99
  %4689 = vmatpush.msra.mxu0 %v91
  %4690 = vmatpush.msra.mxu0 %v83
  %4691 = vmatmul.f32.gmra.mxu0 %v4624
  %v4692 = vpop.f32.mrf.mxu0
  %v4693 = vadd.f32 0.0, %v4692
  %4694 = vmatmul.f32.gmra.mxu0 %v4627
  %v4695 = vpop.f32.mrf.mxu0
  %v4696 = vadd.f32 0.0, %v4695
  %4697 = vdwg.mxu0
  %4698 = vmatpush.msra.mxu0 0.0
  %4699 = vmatpush.msra.mxu0 0.0
  %4700 = vmatpush.msra.mxu0 0.0
  %4701 = vmatpush.msra.mxu0 0.0
  %4702 = vmatpush.msra.mxu0 0.0
  %4703 = vmatpush.msra.mxu0 0.0
  %4704 = vmatpush.msra.mxu0 0.0
  %4705 = vmatpush.msra.mxu0 0.0
  %4706 = vmatpush.msra.mxu0 %v140
  %4707 = vmatpush.msra.mxu0 %v132
  %4708 = vmatpush.msra.mxu0 %v124
  %4709 = vmatpush.msra.mxu0 %v116
  %4710 = vmatpush.msra.mxu0 %v108
  %4711 = vmatpush.msra.mxu0 %v100
  %4712 = vmatpush.msra.mxu0 %v92
  %4713 = vmatpush.msra.mxu0 %v84
  %4714 = vmatmul.f32.gmra.mxu0 %v4624
  %v4715 = vpop.f32.mrf.mxu0
  %v4716 = vadd.f32 0.0, %v4715
  %4717 = vmatmul.f32.gmra.mxu0 %v4627
  %v4718 = vpop.f32.mrf.mxu0
  %v4719 = vadd.f32 0.0, %v4718
  %4720 = vdwg.mxu0
  %4721 = vmatpush.msra.mxu0 0.0
  %4722 = vmatpush.msra.mxu0 0.0
  %4723 = vmatpush.msra.mxu0 0.0
  %4724 = vmatpush.msra.mxu0 0.0
  %4725 = vmatpush.msra.mxu0 0.0
  %4726 = vmatpush.msra.mxu0 0.0
  %4727 = vmatpush.msra.mxu0 0.0
  %4728 = vmatpush.msra.mxu0 0.0
  %4729 = vmatpush.msra.mxu0 %v141
  %4730 = vmatpush.msra.mxu0 %v133
  %4731 = vmatpush.msra.mxu0 %v125
  %4732 = vmatpush.msra.mxu0 %v117
  %4733 = vmatpush.msra.mxu0 %v109
  %4734 = vmatpush.msra.mxu0 %v101
  %4735 = vmatpush.msra.mxu0 %v93
  %4736 = vmatpush.msra.mxu0 %v85
  %4737 = vmatmul.f32.gmra.mxu0 %v4624
  %v4738 = vpop.f32.mrf.mxu0
  %v4739 = vadd.f32 0.0, %v4738
  %4740 = vmatmul.f32.gmra.mxu0 %v4627
  %v4741 = vpop.f32.mrf.mxu0
  %v4742 = vadd.f32 0.0, %v4741
  %4743 = vdwg.mxu0
  %4744 = vmatpush.msra.mxu0 0.0
  %4745 = vmatpush.msra.mxu0 0.0
  %4746 = vmatpush.msra.mxu0 0.0
  %4747 = vmatpush.msra.mxu0 0.0
  %4748 = vmatpush.msra.mxu0 0.0
  %4749 = vmatpush.msra.mxu0 0.0
  %4750 = vmatpush.msra.mxu0 0.0
  %4751 = vmatpush.msra.mxu0 0.0
  %4752 = vmatpush.msra.mxu0 %v142
  %4753 = vmatpush.msra.mxu0 %v134
  %4754 = vmatpush.msra.mxu0 %v126
  %4755 = vmatpush.msra.mxu0 %v118
  %4756 = vmatpush.msra.mxu0 %v110
  %4757 = vmatpush.msra.mxu0 %v102
  %4758 = vmatpush.msra.mxu0 %v94
  %4759 = vmatpush.msra.mxu0 %v86
  %4760 = vmatmul.f32.gmra.mxu0 %v4624
  %v4761 = vpop.f32.mrf.mxu0
  %v4762 = vadd.f32 0.0, %v4761
  %4763 = vmatmul.f32.gmra.mxu0 %v4627
  %v4764 = vpop.f32.mrf.mxu0
  %v4765 = vadd.f32 0.0, %v4764
  %4766 = vdwg.mxu0
  %4767 = vmatpush.msra.mxu0 0.0
  %4768 = vmatpush.msra.mxu0 0.0
  %4769 = vmatpush.msra.mxu0 0.0
  %4770 = vmatpush.msra.mxu0 0.0
  %4771 = vmatpush.msra.mxu0 0.0
  %4772 = vmatpush.msra.mxu0 0.0
  %4773 = vmatpush.msra.mxu0 0.0
  %4774 = vmatpush.msra.mxu0 0.0
  %4775 = vmatpush.msra.mxu0 %v143
  %4776 = vmatpush.msra.mxu0 %v135
  %4777 = vmatpush.msra.mxu0 %v127
  %4778 = vmatpush.msra.mxu0 %v119
  %4779 = vmatpush.msra.mxu0 %v111
  %4780 = vmatpush.msra.mxu0 %v103
  %4781 = vmatpush.msra.mxu0 %v95
  %4782 = vmatpush.msra.mxu0 %v87
  %4783 = vmatmul.f32.gmra.mxu0 %v4624
  %v4784 = vpop.f32.mrf.mxu0
  %v4785 = vadd.f32 0.0, %v4784
  %4786 = vmatmul.f32.gmra.mxu0 %v4627
  %v4787 = vpop.f32.mrf.mxu0
  %v4788 = vadd.f32 0.0, %v4787
  %4789 = vdwg.mxu0
  %4790 = vmatpush.msra.mxu0 0.0
  %4791 = vmatpush.msra.mxu0 0.0
  %4792 = vmatpush.msra.mxu0 0.0
  %4793 = vmatpush.msra.mxu0 0.0
  %4794 = vmatpush.msra.mxu0 0.0
  %4795 = vmatpush.msra.mxu0 0.0
  %4796 = vmatpush.msra.mxu0 0.0
  %4797 = vmatpush.msra.mxu0 0.0
  %4798 = vmatpush.msra.mxu0 %v144
  %4799 = vmatpush.msra.mxu0 %v136
  %4800 = vmatpush.msra.mxu0 %v128
  %4801 = vmatpush.msra.mxu0 %v120
  %4802 = vmatpush.msra.mxu0 %v112
  %4803 = vmatpush.msra.mxu0 %v104
  %4804 = vmatpush.msra.mxu0 %v96
  %4805 = vmatpush.msra.mxu0 %v88
  %4806 = vmatmul.f32.gmra.mxu0 %v4624
  %v4807 = vpop.f32.mrf.mxu0
  %v4808 = vadd.f32 0.0, %v4807
  %4809 = vmatmul.f32.gmra.mxu0 %v4627
  %v4810 = vpop.f32.mrf.mxu0
  %v4811 = vadd.f32 0.0, %v4810
  %4812 = vdwg.mxu0
  %s4813 = scalar_lea.vmem %s12, 8
  %v4814 = vld [vmem:[%s4813] sm:$0xff]
  %v4816 = vperm.slane %v4814, 0
  %v4817 = vperm.slane %v4814, 1
  %v4818 = vperm.slane %v4814, 2
  %v4819 = vperm.slane %v4814, 3
  %v4820 = vperm.slane %v4814, 4
  %v4821 = vperm.slane %v4814, 5
  %v4822 = vperm.slane %v4814, 6
  %v4823 = vperm.slane %v4814, 7
  %v4832 = vmul.f32 %v4647, %v4816
  %v4833 = vmul.f32 %v4670, %v4817
  %v4834 = vmul.f32 %v4693, %v4818
  %v4835 = vmul.f32 %v4716, %v4819
  %v4836 = vmul.f32 %v4739, %v4820
  %v4837 = vmul.f32 %v4762, %v4821
  %v4838 = vmul.f32 %v4785, %v4822
  %v4839 = vmul.f32 %v4808, %v4823
  %v4840 = vmul.f32 %v4650, %v4816
  %v4841 = vmul.f32 %v4673, %v4817
  %v4842 = vmul.f32 %v4696, %v4818
  %v4843 = vmul.f32 %v4719, %v4819
  %v4844 = vmul.f32 %v4742, %v4820
  %v4845 = vmul.f32 %v4765, %v4821
  %v4846 = vmul.f32 %v4788, %v4822
  %v4847 = vmul.f32 %v4811, %v4823
  %v4848 = vmul.f32 %v4832, 1.442695
  %v4849 = vpow.pop %v4848
  %v4850 = vmul.f32 %v4833, 1.442695
  %v4851 = vpow.pop %v4850
  %v4852 = vmul.f32 %v4834, 1.442695
  %v4853 = vpow.pop %v4852
  %v4854 = vmul.f32 %v4835, 1.442695
  %v4855 = vpow.pop %v4854
  %v4856 = vmul.f32 %v4836, 1.442695
  %v4857 = vpow.pop %v4856
  %v4858 = vmul.f32 %v4837, 1.442695
  %v4859 = vpow.pop %v4858
  %v4860 = vmul.f32 %v4838, 1.442695
  %v4861 = vpow.pop %v4860
  %v4862 = vmul.f32 %v4839, 1.442695
  %v4863 = vpow.pop %v4862
  %v4864 = vmul.f32 %v4840, 1.442695
  %v4865 = vpow.pop %v4864
  %v4866 = vmul.f32 %v4841, 1.442695
  %v4867 = vpow.pop %v4866
  %v4868 = vmul.f32 %v4842, 1.442695
  %v4869 = vpow.pop %v4868
  %v4870 = vmul.f32 %v4843, 1.442695
  %v4871 = vpow.pop %v4870
  %v4872 = vmul.f32 %v4844, 1.442695
  %v4873 = vpow.pop %v4872
  %v4874 = vmul.f32 %v4845, 1.442695
  %v4875 = vpow.pop %v4874
  %v4876 = vmul.f32 %v4846, 1.442695
  %v4877 = vpow.pop %v4876
  %v4878 = vmul.f32 %v4847, 1.442695
  %v4879 = vpow.pop %v4878
  %v4880 = vmul.f32 %v4621, %v4522
  %v4881 = vmul.f32 %v4622, %v4523
  %v4883 = vsel %vm518, %v4880, 0
  %v4886 = vsel %vm518, %v4881, 0
  %4888 = vmatpush.msra.mxu0 0.0
  %4889 = vmatpush.msra.mxu0 0.0
  %4890 = vmatpush.msra.mxu0 0.0
  %4891 = vmatpush.msra.mxu0 0.0
  %4892 = vmatpush.msra.mxu0 0.0
  %4893 = vmatpush.msra.mxu0 0.0
  %4894 = vmatpush.msra.mxu0 0.0
  %4895 = vmatpush.msra.mxu0 0.0
  %4896 = vmatpush.msra.mxu0 %v137
  %4897 = vmatpush.msra.mxu0 %v129
  %4898 = vmatpush.msra.mxu0 %v121
  %4899 = vmatpush.msra.mxu0 %v113
  %4900 = vmatpush.msra.mxu0 %v105
  %4901 = vmatpush.msra.mxu0 %v97
  %4902 = vmatpush.msra.mxu0 %v89
  %4903 = vmatpush.msra.mxu0 %v81
  %4904 = vmatmul.f32.gmra.mxu0 %v4883
  %v4905 = vpop.f32.mrf.mxu0
  %v4906 = vadd.f32 0.0, %v4905
  %4907 = vmatmul.f32.gmra.mxu0 %v4886
  %v4908 = vpop.f32.mrf.mxu0
  %v4909 = vadd.f32 0.0, %v4908
  %4910 = vdwg.mxu0
  %4911 = vmatpush.msra.mxu0 0.0
  %4912 = vmatpush.msra.mxu0 0.0
  %4913 = vmatpush.msra.mxu0 0.0
  %4914 = vmatpush.msra.mxu0 0.0
  %4915 = vmatpush.msra.mxu0 0.0
  %4916 = vmatpush.msra.mxu0 0.0
  %4917 = vmatpush.msra.mxu0 0.0
  %4918 = vmatpush.msra.mxu0 0.0
  %4919 = vmatpush.msra.mxu0 %v138
  %4920 = vmatpush.msra.mxu0 %v130
  %4921 = vmatpush.msra.mxu0 %v122
  %4922 = vmatpush.msra.mxu0 %v114
  %4923 = vmatpush.msra.mxu0 %v106
  %4924 = vmatpush.msra.mxu0 %v98
  %4925 = vmatpush.msra.mxu0 %v90
  %4926 = vmatpush.msra.mxu0 %v82
  %4927 = vmatmul.f32.gmra.mxu0 %v4883
  %v4928 = vpop.f32.mrf.mxu0
  %v4929 = vadd.f32 0.0, %v4928
  %4930 = vmatmul.f32.gmra.mxu0 %v4886
  %v4931 = vpop.f32.mrf.mxu0
  %v4932 = vadd.f32 0.0, %v4931
  %4933 = vdwg.mxu0
  %4934 = vmatpush.msra.mxu0 0.0
  %4935 = vmatpush.msra.mxu0 0.0
  %4936 = vmatpush.msra.mxu0 0.0
  %4937 = vmatpush.msra.mxu0 0.0
  %4938 = vmatpush.msra.mxu0 0.0
  %4939 = vmatpush.msra.mxu0 0.0
  %4940 = vmatpush.msra.mxu0 0.0
  %4941 = vmatpush.msra.mxu0 0.0
  %4942 = vmatpush.msra.mxu0 %v139
  %4943 = vmatpush.msra.mxu0 %v131
  %4944 = vmatpush.msra.mxu0 %v123
  %4945 = vmatpush.msra.mxu0 %v115
  %4946 = vmatpush.msra.mxu0 %v107
  %4947 = vmatpush.msra.mxu0 %v99
  %4948 = vmatpush.msra.mxu0 %v91
  %4949 = vmatpush.msra.mxu0 %v83
  %4950 = vmatmul.f32.gmra.mxu0 %v4883
  %v4951 = vpop.f32.mrf.mxu0
  %v4952 = vadd.f32 0.0, %v4951
  %4953 = vmatmul.f32.gmra.mxu0 %v4886
  %v4954 = vpop.f32.mrf.mxu0
  %v4955 = vadd.f32 0.0, %v4954
  %4956 = vdwg.mxu0
  %4957 = vmatpush.msra.mxu0 0.0
  %4958 = vmatpush.msra.mxu0 0.0
  %4959 = vmatpush.msra.mxu0 0.0
  %4960 = vmatpush.msra.mxu0 0.0
  %4961 = vmatpush.msra.mxu0 0.0
  %4962 = vmatpush.msra.mxu0 0.0
  %4963 = vmatpush.msra.mxu0 0.0
  %4964 = vmatpush.msra.mxu0 0.0
  %4965 = vmatpush.msra.mxu0 %v140
  %4966 = vmatpush.msra.mxu0 %v132
  %4967 = vmatpush.msra.mxu0 %v124
  %4968 = vmatpush.msra.mxu0 %v116
  %4969 = vmatpush.msra.mxu0 %v108
  %4970 = vmatpush.msra.mxu0 %v100
  %4971 = vmatpush.msra.mxu0 %v92
  %4972 = vmatpush.msra.mxu0 %v84
  %4973 = vmatmul.f32.gmra.mxu0 %v4883
  %v4974 = vpop.f32.mrf.mxu0
  %v4975 = vadd.f32 0.0, %v4974
  %4976 = vmatmul.f32.gmra.mxu0 %v4886
  %v4977 = vpop.f32.mrf.mxu0
  %v4978 = vadd.f32 0.0, %v4977
  %4979 = vdwg.mxu0
  %4980 = vmatpush.msra.mxu0 0.0
  %4981 = vmatpush.msra.mxu0 0.0
  %4982 = vmatpush.msra.mxu0 0.0
  %4983 = vmatpush.msra.mxu0 0.0
  %4984 = vmatpush.msra.mxu0 0.0
  %4985 = vmatpush.msra.mxu0 0.0
  %4986 = vmatpush.msra.mxu0 0.0
  %4987 = vmatpush.msra.mxu0 0.0
  %4988 = vmatpush.msra.mxu0 %v141
  %4989 = vmatpush.msra.mxu0 %v133
  %4990 = vmatpush.msra.mxu0 %v125
  %4991 = vmatpush.msra.mxu0 %v117
  %4992 = vmatpush.msra.mxu0 %v109
  %4993 = vmatpush.msra.mxu0 %v101
  %4994 = vmatpush.msra.mxu0 %v93
  %4995 = vmatpush.msra.mxu0 %v85
  %4996 = vmatmul.f32.gmra.mxu0 %v4883
  %v4997 = vpop.f32.mrf.mxu0
  %v4998 = vadd.f32 0.0, %v4997
  %4999 = vmatmul.f32.gmra.mxu0 %v4886
  %v5000 = vpop.f32.mrf.mxu0
  %v5001 = vadd.f32 0.0, %v5000
  %5002 = vdwg.mxu0
  %5003 = vmatpush.msra.mxu0 0.0
  %5004 = vmatpush.msra.mxu0 0.0
  %5005 = vmatpush.msra.mxu0 0.0
  %5006 = vmatpush.msra.mxu0 0.0
  %5007 = vmatpush.msra.mxu0 0.0
  %5008 = vmatpush.msra.mxu0 0.0
  %5009 = vmatpush.msra.mxu0 0.0
  %5010 = vmatpush.msra.mxu0 0.0
  %5011 = vmatpush.msra.mxu0 %v142
  %5012 = vmatpush.msra.mxu0 %v134
  %5013 = vmatpush.msra.mxu0 %v126
  %5014 = vmatpush.msra.mxu0 %v118
  %5015 = vmatpush.msra.mxu0 %v110
  %5016 = vmatpush.msra.mxu0 %v102
  %5017 = vmatpush.msra.mxu0 %v94
  %5018 = vmatpush.msra.mxu0 %v86
  %5019 = vmatmul.f32.gmra.mxu0 %v4883
  %v5020 = vpop.f32.mrf.mxu0
  %v5021 = vadd.f32 0.0, %v5020
  %5022 = vmatmul.f32.gmra.mxu0 %v4886
  %v5023 = vpop.f32.mrf.mxu0
  %v5024 = vadd.f32 0.0, %v5023
  %5025 = vdwg.mxu0
  %5026 = vmatpush.msra.mxu0 0.0
  %5027 = vmatpush.msra.mxu0 0.0
  %5028 = vmatpush.msra.mxu0 0.0
  %5029 = vmatpush.msra.mxu0 0.0
  %5030 = vmatpush.msra.mxu0 0.0
  %5031 = vmatpush.msra.mxu0 0.0
  %5032 = vmatpush.msra.mxu0 0.0
  %5033 = vmatpush.msra.mxu0 0.0
  %5034 = vmatpush.msra.mxu0 %v143
  %5035 = vmatpush.msra.mxu0 %v135
  %5036 = vmatpush.msra.mxu0 %v127
  %5037 = vmatpush.msra.mxu0 %v119
  %5038 = vmatpush.msra.mxu0 %v111
  %5039 = vmatpush.msra.mxu0 %v103
  %5040 = vmatpush.msra.mxu0 %v95
  %5041 = vmatpush.msra.mxu0 %v87
  %5042 = vmatmul.f32.gmra.mxu0 %v4883
  %v5043 = vpop.f32.mrf.mxu0
  %v5044 = vadd.f32 0.0, %v5043
  %5045 = vmatmul.f32.gmra.mxu0 %v4886
  %v5046 = vpop.f32.mrf.mxu0
  %v5047 = vadd.f32 0.0, %v5046
  %5048 = vdwg.mxu0
  %5049 = vmatpush.msra.mxu0 0.0
  %5050 = vmatpush.msra.mxu0 0.0
  %5051 = vmatpush.msra.mxu0 0.0
  %5052 = vmatpush.msra.mxu0 0.0
  %5053 = vmatpush.msra.mxu0 0.0
  %5054 = vmatpush.msra.mxu0 0.0
  %5055 = vmatpush.msra.mxu0 0.0
  %5056 = vmatpush.msra.mxu0 0.0
  %5057 = vmatpush.msra.mxu0 %v144
  %5058 = vmatpush.msra.mxu0 %v136
  %5059 = vmatpush.msra.mxu0 %v128
  %5060 = vmatpush.msra.mxu0 %v120
  %5061 = vmatpush.msra.mxu0 %v112
  %5062 = vmatpush.msra.mxu0 %v104
  %5063 = vmatpush.msra.mxu0 %v96
  %5064 = vmatpush.msra.mxu0 %v88
  %5065 = vmatmul.f32.gmra.mxu0 %v4883
  %v5066 = vpop.f32.mrf.mxu0
  %v5067 = vadd.f32 0.0, %v5066
  %5068 = vmatmul.f32.gmra.mxu0 %v4886
  %v5069 = vpop.f32.mrf.mxu0
  %v5070 = vadd.f32 0.0, %v5069
  %5071 = vdwg.mxu0
  %s5072 = scalar_lea.vmem %s10, 512
  %v5073 = vld [vmem:[%s5072] sm:$0xff]
  %v5074 = vld [vmem:[%s5072 + $0x8] sm:$0xff]
  %v5075 = vld [vmem:[%s5072 + $0x10] sm:$0xff]
  %v5076 = vld [vmem:[%s5072 + $0x18] sm:$0xff]
  %v5077 = vld [vmem:[%s5072 + $0x20] sm:$0xff]
  %v5078 = vld [vmem:[%s5072 + $0x28] sm:$0xff]
  %v5079 = vld [vmem:[%s5072 + $0x30] sm:$0xff]
  %v5080 = vld [vmem:[%s5072 + $0x38] sm:$0xff]
  %v5081 = vld [vmem:[%s5072 + $0x40] sm:$0xff]
  %v5082 = vld [vmem:[%s5072 + $0x48] sm:$0xff]
  %v5083 = vld [vmem:[%s5072 + $0x50] sm:$0xff]
  %v5084 = vld [vmem:[%s5072 + $0x58] sm:$0xff]
  %v5085 = vld [vmem:[%s5072 + $0x60] sm:$0xff]
  %v5086 = vld [vmem:[%s5072 + $0x68] sm:$0xff]
  %v5087 = vld [vmem:[%s5072 + $0x70] sm:$0xff]
  %v5088 = vld [vmem:[%s5072 + $0x78] sm:$0xff]
  %v5089 = vld [vmem:[%s5072 + $0x80] sm:$0xff]
  %v5090 = vld [vmem:[%s5072 + $0x88] sm:$0xff]
  %v5091 = vld [vmem:[%s5072 + $0x90] sm:$0xff]
  %v5092 = vld [vmem:[%s5072 + $0x98] sm:$0xff]
  %v5093 = vld [vmem:[%s5072 + $0xa0] sm:$0xff]
  %v5094 = vld [vmem:[%s5072 + $0xa8] sm:$0xff]
  %v5095 = vld [vmem:[%s5072 + $0xb0] sm:$0xff]
  %v5096 = vld [vmem:[%s5072 + $0xb8] sm:$0xff]
  %v5097 = vld [vmem:[%s5072 + $0xc0] sm:$0xff]
  %v5098 = vld [vmem:[%s5072 + $0xc8] sm:$0xff]
  %v5099 = vld [vmem:[%s5072 + $0xd0] sm:$0xff]
  %v5100 = vld [vmem:[%s5072 + $0xd8] sm:$0xff]
  %v5101 = vld [vmem:[%s5072 + $0xe0] sm:$0xff]
  %v5102 = vld [vmem:[%s5072 + $0xe8] sm:$0xff]
  %v5103 = vld [vmem:[%s5072 + $0xf0] sm:$0xff]
  %v5104 = vld [vmem:[%s5072 + $0xf8] sm:$0xff]
  %v5105 = vld [vmem:[%s5072 + $0x100] sm:$0xff]
  %v5106 = vld [vmem:[%s5072 + $0x108] sm:$0xff]
  %v5107 = vld [vmem:[%s5072 + $0x110] sm:$0xff]
  %v5108 = vld [vmem:[%s5072 + $0x118] sm:$0xff]
  %v5109 = vld [vmem:[%s5072 + $0x120] sm:$0xff]
  %v5110 = vld [vmem:[%s5072 + $0x128] sm:$0xff]
  %v5111 = vld [vmem:[%s5072 + $0x130] sm:$0xff]
  %v5112 = vld [vmem:[%s5072 + $0x138] sm:$0xff]
  %v5113 = vld [vmem:[%s5072 + $0x140] sm:$0xff]
  %v5114 = vld [vmem:[%s5072 + $0x148] sm:$0xff]
  %v5115 = vld [vmem:[%s5072 + $0x150] sm:$0xff]
  %v5116 = vld [vmem:[%s5072 + $0x158] sm:$0xff]
  %v5117 = vld [vmem:[%s5072 + $0x160] sm:$0xff]
  %v5118 = vld [vmem:[%s5072 + $0x168] sm:$0xff]
  %v5119 = vld [vmem:[%s5072 + $0x170] sm:$0xff]
  %v5120 = vld [vmem:[%s5072 + $0x178] sm:$0xff]
  %v5121 = vld [vmem:[%s5072 + $0x180] sm:$0xff]
  %v5122 = vld [vmem:[%s5072 + $0x188] sm:$0xff]
  %v5123 = vld [vmem:[%s5072 + $0x190] sm:$0xff]
  %v5124 = vld [vmem:[%s5072 + $0x198] sm:$0xff]
  %v5125 = vld [vmem:[%s5072 + $0x1a0] sm:$0xff]
  %v5126 = vld [vmem:[%s5072 + $0x1a8] sm:$0xff]
  %v5127 = vld [vmem:[%s5072 + $0x1b0] sm:$0xff]
  %v5128 = vld [vmem:[%s5072 + $0x1b8] sm:$0xff]
  %v5129 = vld [vmem:[%s5072 + $0x1c0] sm:$0xff]
  %v5130 = vld [vmem:[%s5072 + $0x1c8] sm:$0xff]
  %v5131 = vld [vmem:[%s5072 + $0x1d0] sm:$0xff]
  %v5132 = vld [vmem:[%s5072 + $0x1d8] sm:$0xff]
  %v5133 = vld [vmem:[%s5072 + $0x1e0] sm:$0xff]
  %v5134 = vld [vmem:[%s5072 + $0x1e8] sm:$0xff]
  %v5135 = vld [vmem:[%s5072 + $0x1f0] sm:$0xff]
  %v5136 = vld [vmem:[%s5072 + $0x1f8] sm:$0xff]
  %5137 = vmatpush.msra.mxu0 0.0
  %5138 = vmatpush.msra.mxu0 0.0
  %5139 = vmatpush.msra.mxu0 0.0
  %5140 = vmatpush.msra.mxu0 0.0
  %5141 = vmatpush.msra.mxu0 0.0
  %5142 = vmatpush.msra.mxu0 0.0
  %5143 = vmatpush.msra.mxu0 0.0
  %5144 = vmatpush.msra.mxu0 0.0
  %5145 = vmatpush.msra.mxu0 %v5129
  %5146 = vmatpush.msra.mxu0 %v5121
  %5147 = vmatpush.msra.mxu0 %v5113
  %5148 = vmatpush.msra.mxu0 %v5105
  %5149 = vmatpush.msra.mxu0 %v5097
  %5150 = vmatpush.msra.mxu0 %v5089
  %5151 = vmatpush.msra.mxu0 %v5081
  %5152 = vmatpush.msra.mxu0 %v5073
  %5153 = vmatmul.f32.gmra.mxu0 %v4527
  %v5154 = vpop.f32.mrf.mxu0
  %v5155 = vadd.f32 0.0, %v5154
  %5156 = vmatmul.f32.gmra.mxu0 %v4530
  %v5157 = vpop.f32.mrf.mxu0
  %v5158 = vadd.f32 0.0, %v5157
  %5159 = vdwg.mxu0
  %5160 = vmatpush.msra.mxu0 0.0
  %5161 = vmatpush.msra.mxu0 0.0
  %5162 = vmatpush.msra.mxu0 0.0
  %5163 = vmatpush.msra.mxu0 0.0
  %5164 = vmatpush.msra.mxu0 0.0
  %5165 = vmatpush.msra.mxu0 0.0
  %5166 = vmatpush.msra.mxu0 0.0
  %5167 = vmatpush.msra.mxu0 0.0
  %5168 = vmatpush.msra.mxu0 %v5130
  %5169 = vmatpush.msra.mxu0 %v5122
  %5170 = vmatpush.msra.mxu0 %v5114
  %5171 = vmatpush.msra.mxu0 %v5106
  %5172 = vmatpush.msra.mxu0 %v5098
  %5173 = vmatpush.msra.mxu0 %v5090
  %5174 = vmatpush.msra.mxu0 %v5082
  %5175 = vmatpush.msra.mxu0 %v5074
  %5176 = vmatmul.f32.gmra.mxu0 %v4527
  %v5177 = vpop.f32.mrf.mxu0
  %v5178 = vadd.f32 0.0, %v5177
  %5179 = vmatmul.f32.gmra.mxu0 %v4530
  %v5180 = vpop.f32.mrf.mxu0
  %v5181 = vadd.f32 0.0, %v5180
  %5182 = vdwg.mxu0
  %5183 = vmatpush.msra.mxu0 0.0
  %5184 = vmatpush.msra.mxu0 0.0
  %5185 = vmatpush.msra.mxu0 0.0
  %5186 = vmatpush.msra.mxu0 0.0
  %5187 = vmatpush.msra.mxu0 0.0
  %5188 = vmatpush.msra.mxu0 0.0
  %5189 = vmatpush.msra.mxu0 0.0
  %5190 = vmatpush.msra.mxu0 0.0
  %5191 = vmatpush.msra.mxu0 %v5131
  %5192 = vmatpush.msra.mxu0 %v5123
  %5193 = vmatpush.msra.mxu0 %v5115
  %5194 = vmatpush.msra.mxu0 %v5107
  %5195 = vmatpush.msra.mxu0 %v5099
  %5196 = vmatpush.msra.mxu0 %v5091
  %5197 = vmatpush.msra.mxu0 %v5083
  %5198 = vmatpush.msra.mxu0 %v5075
  %5199 = vmatmul.f32.gmra.mxu0 %v4527
  %v5200 = vpop.f32.mrf.mxu0
  %v5201 = vadd.f32 0.0, %v5200
  %5202 = vmatmul.f32.gmra.mxu0 %v4530
  %v5203 = vpop.f32.mrf.mxu0
  %v5204 = vadd.f32 0.0, %v5203
  %5205 = vdwg.mxu0
  %5206 = vmatpush.msra.mxu0 0.0
  %5207 = vmatpush.msra.mxu0 0.0
  %5208 = vmatpush.msra.mxu0 0.0
  %5209 = vmatpush.msra.mxu0 0.0
  %5210 = vmatpush.msra.mxu0 0.0
  %5211 = vmatpush.msra.mxu0 0.0
  %5212 = vmatpush.msra.mxu0 0.0
  %5213 = vmatpush.msra.mxu0 0.0
  %5214 = vmatpush.msra.mxu0 %v5132
  %5215 = vmatpush.msra.mxu0 %v5124
  %5216 = vmatpush.msra.mxu0 %v5116
  %5217 = vmatpush.msra.mxu0 %v5108
  %5218 = vmatpush.msra.mxu0 %v5100
  %5219 = vmatpush.msra.mxu0 %v5092
  %5220 = vmatpush.msra.mxu0 %v5084
  %5221 = vmatpush.msra.mxu0 %v5076
  %5222 = vmatmul.f32.gmra.mxu0 %v4527
  %v5223 = vpop.f32.mrf.mxu0
  %v5224 = vadd.f32 0.0, %v5223
  %5225 = vmatmul.f32.gmra.mxu0 %v4530
  %v5226 = vpop.f32.mrf.mxu0
  %v5227 = vadd.f32 0.0, %v5226
  %5228 = vdwg.mxu0
  %5229 = vmatpush.msra.mxu0 0.0
  %5230 = vmatpush.msra.mxu0 0.0
  %5231 = vmatpush.msra.mxu0 0.0
  %5232 = vmatpush.msra.mxu0 0.0
  %5233 = vmatpush.msra.mxu0 0.0
  %5234 = vmatpush.msra.mxu0 0.0
  %5235 = vmatpush.msra.mxu0 0.0
  %5236 = vmatpush.msra.mxu0 0.0
  %5237 = vmatpush.msra.mxu0 %v5133
  %5238 = vmatpush.msra.mxu0 %v5125
  %5239 = vmatpush.msra.mxu0 %v5117
  %5240 = vmatpush.msra.mxu0 %v5109
  %5241 = vmatpush.msra.mxu0 %v5101
  %5242 = vmatpush.msra.mxu0 %v5093
  %5243 = vmatpush.msra.mxu0 %v5085
  %5244 = vmatpush.msra.mxu0 %v5077
  %5245 = vmatmul.f32.gmra.mxu0 %v4527
  %v5246 = vpop.f32.mrf.mxu0
  %v5247 = vadd.f32 0.0, %v5246
  %5248 = vmatmul.f32.gmra.mxu0 %v4530
  %v5249 = vpop.f32.mrf.mxu0
  %v5250 = vadd.f32 0.0, %v5249
  %5251 = vdwg.mxu0
  %5252 = vmatpush.msra.mxu0 0.0
  %5253 = vmatpush.msra.mxu0 0.0
  %5254 = vmatpush.msra.mxu0 0.0
  %5255 = vmatpush.msra.mxu0 0.0
  %5256 = vmatpush.msra.mxu0 0.0
  %5257 = vmatpush.msra.mxu0 0.0
  %5258 = vmatpush.msra.mxu0 0.0
  %5259 = vmatpush.msra.mxu0 0.0
  %5260 = vmatpush.msra.mxu0 %v5134
  %5261 = vmatpush.msra.mxu0 %v5126
  %5262 = vmatpush.msra.mxu0 %v5118
  %5263 = vmatpush.msra.mxu0 %v5110
  %5264 = vmatpush.msra.mxu0 %v5102
  %5265 = vmatpush.msra.mxu0 %v5094
  %5266 = vmatpush.msra.mxu0 %v5086
  %5267 = vmatpush.msra.mxu0 %v5078
  %5268 = vmatmul.f32.gmra.mxu0 %v4527
  %v5269 = vpop.f32.mrf.mxu0
  %v5270 = vadd.f32 0.0, %v5269
  %5271 = vmatmul.f32.gmra.mxu0 %v4530
  %v5272 = vpop.f32.mrf.mxu0
  %v5273 = vadd.f32 0.0, %v5272
  %5274 = vdwg.mxu0
  %5275 = vmatpush.msra.mxu0 0.0
  %5276 = vmatpush.msra.mxu0 0.0
  %5277 = vmatpush.msra.mxu0 0.0
  %5278 = vmatpush.msra.mxu0 0.0
  %5279 = vmatpush.msra.mxu0 0.0
  %5280 = vmatpush.msra.mxu0 0.0
  %5281 = vmatpush.msra.mxu0 0.0
  %5282 = vmatpush.msra.mxu0 0.0
  %5283 = vmatpush.msra.mxu0 %v5135
  %5284 = vmatpush.msra.mxu0 %v5127
  %5285 = vmatpush.msra.mxu0 %v5119
  %5286 = vmatpush.msra.mxu0 %v5111
  %5287 = vmatpush.msra.mxu0 %v5103
  %5288 = vmatpush.msra.mxu0 %v5095
  %5289 = vmatpush.msra.mxu0 %v5087
  %5290 = vmatpush.msra.mxu0 %v5079
  %5291 = vmatmul.f32.gmra.mxu0 %v4527
  %v5292 = vpop.f32.mrf.mxu0
  %v5293 = vadd.f32 0.0, %v5292
  %5294 = vmatmul.f32.gmra.mxu0 %v4530
  %v5295 = vpop.f32.mrf.mxu0
  %v5296 = vadd.f32 0.0, %v5295
  %5297 = vdwg.mxu0
  %5298 = vmatpush.msra.mxu0 0.0
  %5299 = vmatpush.msra.mxu0 0.0
  %5300 = vmatpush.msra.mxu0 0.0
  %5301 = vmatpush.msra.mxu0 0.0
  %5302 = vmatpush.msra.mxu0 0.0
  %5303 = vmatpush.msra.mxu0 0.0
  %5304 = vmatpush.msra.mxu0 0.0
  %5305 = vmatpush.msra.mxu0 0.0
  %5306 = vmatpush.msra.mxu0 %v5136
  %5307 = vmatpush.msra.mxu0 %v5128
  %5308 = vmatpush.msra.mxu0 %v5120
  %5309 = vmatpush.msra.mxu0 %v5112
  %5310 = vmatpush.msra.mxu0 %v5104
  %5311 = vmatpush.msra.mxu0 %v5096
  %5312 = vmatpush.msra.mxu0 %v5088
  %5313 = vmatpush.msra.mxu0 %v5080
  %5314 = vmatmul.f32.gmra.mxu0 %v4527
  %v5315 = vpop.f32.mrf.mxu0
  %v5316 = vadd.f32 0.0, %v5315
  %5317 = vmatmul.f32.gmra.mxu0 %v4530
  %v5318 = vpop.f32.mrf.mxu0
  %v5319 = vadd.f32 0.0, %v5318
  %5320 = vdwg.mxu0
  %v5321 = vmul.f32 %v4906, %v5155
  %v5322 = vmul.f32 %v4929, %v5178
  %v5323 = vmul.f32 %v4952, %v5201
  %v5324 = vmul.f32 %v4975, %v5224
  %v5325 = vmul.f32 %v4998, %v5247
  %v5326 = vmul.f32 %v5021, %v5270
  %v5327 = vmul.f32 %v5044, %v5293
  %v5328 = vmul.f32 %v5067, %v5316
  %v5329 = vmul.f32 %v4909, %v5158
  %v5330 = vmul.f32 %v4932, %v5181
  %v5331 = vmul.f32 %v4955, %v5204
  %v5332 = vmul.f32 %v4978, %v5227
  %v5333 = vmul.f32 %v5001, %v5250
  %v5334 = vmul.f32 %v5024, %v5273
  %v5335 = vmul.f32 %v5047, %v5296
  %v5336 = vmul.f32 %v5070, %v5319
  %s5337 = scalar_lea.vmem %s11, 512
  %v5338 = vld [vmem:[%s5337] sm:$0xff]
  %v5339 = vld [vmem:[%s5337 + $0x8] sm:$0xff]
  %v5340 = vld [vmem:[%s5337 + $0x10] sm:$0xff]
  %v5341 = vld [vmem:[%s5337 + $0x18] sm:$0xff]
  %v5342 = vld [vmem:[%s5337 + $0x20] sm:$0xff]
  %v5343 = vld [vmem:[%s5337 + $0x28] sm:$0xff]
  %v5344 = vld [vmem:[%s5337 + $0x30] sm:$0xff]
  %v5345 = vld [vmem:[%s5337 + $0x38] sm:$0xff]
  %v5346 = vld [vmem:[%s5337 + $0x40] sm:$0xff]
  %v5347 = vld [vmem:[%s5337 + $0x48] sm:$0xff]
  %v5348 = vld [vmem:[%s5337 + $0x50] sm:$0xff]
  %v5349 = vld [vmem:[%s5337 + $0x58] sm:$0xff]
  %v5350 = vld [vmem:[%s5337 + $0x60] sm:$0xff]
  %v5351 = vld [vmem:[%s5337 + $0x68] sm:$0xff]
  %v5352 = vld [vmem:[%s5337 + $0x70] sm:$0xff]
  %v5353 = vld [vmem:[%s5337 + $0x78] sm:$0xff]
  %v5354 = vld [vmem:[%s5337 + $0x80] sm:$0xff]
  %v5355 = vld [vmem:[%s5337 + $0x88] sm:$0xff]
  %v5356 = vld [vmem:[%s5337 + $0x90] sm:$0xff]
  %v5357 = vld [vmem:[%s5337 + $0x98] sm:$0xff]
  %v5358 = vld [vmem:[%s5337 + $0xa0] sm:$0xff]
  %v5359 = vld [vmem:[%s5337 + $0xa8] sm:$0xff]
  %v5360 = vld [vmem:[%s5337 + $0xb0] sm:$0xff]
  %v5361 = vld [vmem:[%s5337 + $0xb8] sm:$0xff]
  %v5362 = vld [vmem:[%s5337 + $0xc0] sm:$0xff]
  %v5363 = vld [vmem:[%s5337 + $0xc8] sm:$0xff]
  %v5364 = vld [vmem:[%s5337 + $0xd0] sm:$0xff]
  %v5365 = vld [vmem:[%s5337 + $0xd8] sm:$0xff]
  %v5366 = vld [vmem:[%s5337 + $0xe0] sm:$0xff]
  %v5367 = vld [vmem:[%s5337 + $0xe8] sm:$0xff]
  %v5368 = vld [vmem:[%s5337 + $0xf0] sm:$0xff]
  %v5369 = vld [vmem:[%s5337 + $0xf8] sm:$0xff]
  %v5370 = vld [vmem:[%s5337 + $0x100] sm:$0xff]
  %v5371 = vld [vmem:[%s5337 + $0x108] sm:$0xff]
  %v5372 = vld [vmem:[%s5337 + $0x110] sm:$0xff]
  %v5373 = vld [vmem:[%s5337 + $0x118] sm:$0xff]
  %v5374 = vld [vmem:[%s5337 + $0x120] sm:$0xff]
  %v5375 = vld [vmem:[%s5337 + $0x128] sm:$0xff]
  %v5376 = vld [vmem:[%s5337 + $0x130] sm:$0xff]
  %v5377 = vld [vmem:[%s5337 + $0x138] sm:$0xff]
  %v5378 = vld [vmem:[%s5337 + $0x140] sm:$0xff]
  %v5379 = vld [vmem:[%s5337 + $0x148] sm:$0xff]
  %v5380 = vld [vmem:[%s5337 + $0x150] sm:$0xff]
  %v5381 = vld [vmem:[%s5337 + $0x158] sm:$0xff]
  %v5382 = vld [vmem:[%s5337 + $0x160] sm:$0xff]
  %v5383 = vld [vmem:[%s5337 + $0x168] sm:$0xff]
  %v5384 = vld [vmem:[%s5337 + $0x170] sm:$0xff]
  %v5385 = vld [vmem:[%s5337 + $0x178] sm:$0xff]
  %v5386 = vld [vmem:[%s5337 + $0x180] sm:$0xff]
  %v5387 = vld [vmem:[%s5337 + $0x188] sm:$0xff]
  %v5388 = vld [vmem:[%s5337 + $0x190] sm:$0xff]
  %v5389 = vld [vmem:[%s5337 + $0x198] sm:$0xff]
  %v5390 = vld [vmem:[%s5337 + $0x1a0] sm:$0xff]
  %v5391 = vld [vmem:[%s5337 + $0x1a8] sm:$0xff]
  %v5392 = vld [vmem:[%s5337 + $0x1b0] sm:$0xff]
  %v5393 = vld [vmem:[%s5337 + $0x1b8] sm:$0xff]
  %v5394 = vld [vmem:[%s5337 + $0x1c0] sm:$0xff]
  %v5395 = vld [vmem:[%s5337 + $0x1c8] sm:$0xff]
  %v5396 = vld [vmem:[%s5337 + $0x1d0] sm:$0xff]
  %v5397 = vld [vmem:[%s5337 + $0x1d8] sm:$0xff]
  %v5398 = vld [vmem:[%s5337 + $0x1e0] sm:$0xff]
  %v5399 = vld [vmem:[%s5337 + $0x1e8] sm:$0xff]
  %v5400 = vld [vmem:[%s5337 + $0x1f0] sm:$0xff]
  %v5401 = vld [vmem:[%s5337 + $0x1f8] sm:$0xff]
  %5402 = vmatpush.msra.mxu0 0.0
  %5403 = vmatpush.msra.mxu0 0.0
  %5404 = vmatpush.msra.mxu0 0.0
  %5405 = vmatpush.msra.mxu0 0.0
  %5406 = vmatpush.msra.mxu0 0.0
  %5407 = vmatpush.msra.mxu0 0.0
  %5408 = vmatpush.msra.mxu0 0.0
  %5409 = vmatpush.msra.mxu0 0.0
  %5410 = vmatpush.msra.mxu0 %v5394
  %5411 = vmatpush.msra.mxu0 %v5386
  %5412 = vmatpush.msra.mxu0 %v5378
  %5413 = vmatpush.msra.mxu0 %v5370
  %5414 = vmatpush.msra.mxu0 %v5362
  %5415 = vmatpush.msra.mxu0 %v5354
  %5416 = vmatpush.msra.mxu0 %v5346
  %5417 = vmatpush.msra.mxu0 %v5338
  %5418 = vmatmul.f32.gmra.mxu0 %v4527
  %v5419 = vpop.f32.mrf.mxu0
  %v5420 = vadd.f32 0.0, %v5419
  %5421 = vmatmul.f32.gmra.mxu0 %v4530
  %v5422 = vpop.f32.mrf.mxu0
  %v5423 = vadd.f32 0.0, %v5422
  %5424 = vdwg.mxu0
  %5425 = vmatpush.msra.mxu0 0.0
  %5426 = vmatpush.msra.mxu0 0.0
  %5427 = vmatpush.msra.mxu0 0.0
  %5428 = vmatpush.msra.mxu0 0.0
  %5429 = vmatpush.msra.mxu0 0.0
  %5430 = vmatpush.msra.mxu0 0.0
  %5431 = vmatpush.msra.mxu0 0.0
  %5432 = vmatpush.msra.mxu0 0.0
  %5433 = vmatpush.msra.mxu0 %v5395
  %5434 = vmatpush.msra.mxu0 %v5387
  %5435 = vmatpush.msra.mxu0 %v5379
  %5436 = vmatpush.msra.mxu0 %v5371
  %5437 = vmatpush.msra.mxu0 %v5363
  %5438 = vmatpush.msra.mxu0 %v5355
  %5439 = vmatpush.msra.mxu0 %v5347
  %5440 = vmatpush.msra.mxu0 %v5339
  %5441 = vmatmul.f32.gmra.mxu0 %v4527
  %v5442 = vpop.f32.mrf.mxu0
  %v5443 = vadd.f32 0.0, %v5442
  %5444 = vmatmul.f32.gmra.mxu0 %v4530
  %v5445 = vpop.f32.mrf.mxu0
  %v5446 = vadd.f32 0.0, %v5445
  %5447 = vdwg.mxu0
  %5448 = vmatpush.msra.mxu0 0.0
  %5449 = vmatpush.msra.mxu0 0.0
  %5450 = vmatpush.msra.mxu0 0.0
  %5451 = vmatpush.msra.mxu0 0.0
  %5452 = vmatpush.msra.mxu0 0.0
  %5453 = vmatpush.msra.mxu0 0.0
  %5454 = vmatpush.msra.mxu0 0.0
  %5455 = vmatpush.msra.mxu0 0.0
  %5456 = vmatpush.msra.mxu0 %v5396
  %5457 = vmatpush.msra.mxu0 %v5388
  %5458 = vmatpush.msra.mxu0 %v5380
  %5459 = vmatpush.msra.mxu0 %v5372
  %5460 = vmatpush.msra.mxu0 %v5364
  %5461 = vmatpush.msra.mxu0 %v5356
  %5462 = vmatpush.msra.mxu0 %v5348
  %5463 = vmatpush.msra.mxu0 %v5340
  %5464 = vmatmul.f32.gmra.mxu0 %v4527
  %v5465 = vpop.f32.mrf.mxu0
  %v5466 = vadd.f32 0.0, %v5465
  %5467 = vmatmul.f32.gmra.mxu0 %v4530
  %v5468 = vpop.f32.mrf.mxu0
  %v5469 = vadd.f32 0.0, %v5468
  %5470 = vdwg.mxu0
  %5471 = vmatpush.msra.mxu0 0.0
  %5472 = vmatpush.msra.mxu0 0.0
  %5473 = vmatpush.msra.mxu0 0.0
  %5474 = vmatpush.msra.mxu0 0.0
  %5475 = vmatpush.msra.mxu0 0.0
  %5476 = vmatpush.msra.mxu0 0.0
  %5477 = vmatpush.msra.mxu0 0.0
  %5478 = vmatpush.msra.mxu0 0.0
  %5479 = vmatpush.msra.mxu0 %v5397
  %5480 = vmatpush.msra.mxu0 %v5389
  %5481 = vmatpush.msra.mxu0 %v5381
  %5482 = vmatpush.msra.mxu0 %v5373
  %5483 = vmatpush.msra.mxu0 %v5365
  %5484 = vmatpush.msra.mxu0 %v5357
  %5485 = vmatpush.msra.mxu0 %v5349
  %5486 = vmatpush.msra.mxu0 %v5341
  %5487 = vmatmul.f32.gmra.mxu0 %v4527
  %v5488 = vpop.f32.mrf.mxu0
  %v5489 = vadd.f32 0.0, %v5488
  %5490 = vmatmul.f32.gmra.mxu0 %v4530
  %v5491 = vpop.f32.mrf.mxu0
  %v5492 = vadd.f32 0.0, %v5491
  %5493 = vdwg.mxu0
  %5494 = vmatpush.msra.mxu0 0.0
  %5495 = vmatpush.msra.mxu0 0.0
  %5496 = vmatpush.msra.mxu0 0.0
  %5497 = vmatpush.msra.mxu0 0.0
  %5498 = vmatpush.msra.mxu0 0.0
  %5499 = vmatpush.msra.mxu0 0.0
  %5500 = vmatpush.msra.mxu0 0.0
  %5501 = vmatpush.msra.mxu0 0.0
  %5502 = vmatpush.msra.mxu0 %v5398
  %5503 = vmatpush.msra.mxu0 %v5390
  %5504 = vmatpush.msra.mxu0 %v5382
  %5505 = vmatpush.msra.mxu0 %v5374
  %5506 = vmatpush.msra.mxu0 %v5366
  %5507 = vmatpush.msra.mxu0 %v5358
  %5508 = vmatpush.msra.mxu0 %v5350
  %5509 = vmatpush.msra.mxu0 %v5342
  %5510 = vmatmul.f32.gmra.mxu0 %v4527
  %v5511 = vpop.f32.mrf.mxu0
  %v5512 = vadd.f32 0.0, %v5511
  %5513 = vmatmul.f32.gmra.mxu0 %v4530
  %v5514 = vpop.f32.mrf.mxu0
  %v5515 = vadd.f32 0.0, %v5514
  %5516 = vdwg.mxu0
  %5517 = vmatpush.msra.mxu0 0.0
  %5518 = vmatpush.msra.mxu0 0.0
  %5519 = vmatpush.msra.mxu0 0.0
  %5520 = vmatpush.msra.mxu0 0.0
  %5521 = vmatpush.msra.mxu0 0.0
  %5522 = vmatpush.msra.mxu0 0.0
  %5523 = vmatpush.msra.mxu0 0.0
  %5524 = vmatpush.msra.mxu0 0.0
  %5525 = vmatpush.msra.mxu0 %v5399
  %5526 = vmatpush.msra.mxu0 %v5391
  %5527 = vmatpush.msra.mxu0 %v5383
  %5528 = vmatpush.msra.mxu0 %v5375
  %5529 = vmatpush.msra.mxu0 %v5367
  %5530 = vmatpush.msra.mxu0 %v5359
  %5531 = vmatpush.msra.mxu0 %v5351
  %5532 = vmatpush.msra.mxu0 %v5343
  %5533 = vmatmul.f32.gmra.mxu0 %v4527
  %v5534 = vpop.f32.mrf.mxu0
  %v5535 = vadd.f32 0.0, %v5534
  %5536 = vmatmul.f32.gmra.mxu0 %v4530
  %v5537 = vpop.f32.mrf.mxu0
  %v5538 = vadd.f32 0.0, %v5537
  %5539 = vdwg.mxu0
  %5540 = vmatpush.msra.mxu0 0.0
  %5541 = vmatpush.msra.mxu0 0.0
  %5542 = vmatpush.msra.mxu0 0.0
  %5543 = vmatpush.msra.mxu0 0.0
  %5544 = vmatpush.msra.mxu0 0.0
  %5545 = vmatpush.msra.mxu0 0.0
  %5546 = vmatpush.msra.mxu0 0.0
  %5547 = vmatpush.msra.mxu0 0.0
  %5548 = vmatpush.msra.mxu0 %v5400
  %5549 = vmatpush.msra.mxu0 %v5392
  %5550 = vmatpush.msra.mxu0 %v5384
  %5551 = vmatpush.msra.mxu0 %v5376
  %5552 = vmatpush.msra.mxu0 %v5368
  %5553 = vmatpush.msra.mxu0 %v5360
  %5554 = vmatpush.msra.mxu0 %v5352
  %5555 = vmatpush.msra.mxu0 %v5344
  %5556 = vmatmul.f32.gmra.mxu0 %v4527
  %v5557 = vpop.f32.mrf.mxu0
  %v5558 = vadd.f32 0.0, %v5557
  %5559 = vmatmul.f32.gmra.mxu0 %v4530
  %v5560 = vpop.f32.mrf.mxu0
  %v5561 = vadd.f32 0.0, %v5560
  %5562 = vdwg.mxu0
  %5563 = vmatpush.msra.mxu0 0.0
  %5564 = vmatpush.msra.mxu0 0.0
  %5565 = vmatpush.msra.mxu0 0.0
  %5566 = vmatpush.msra.mxu0 0.0
  %5567 = vmatpush.msra.mxu0 0.0
  %5568 = vmatpush.msra.mxu0 0.0
  %5569 = vmatpush.msra.mxu0 0.0
  %5570 = vmatpush.msra.mxu0 0.0
  %5571 = vmatpush.msra.mxu0 %v5401
  %5572 = vmatpush.msra.mxu0 %v5393
  %5573 = vmatpush.msra.mxu0 %v5385
  %5574 = vmatpush.msra.mxu0 %v5377
  %5575 = vmatpush.msra.mxu0 %v5369
  %5576 = vmatpush.msra.mxu0 %v5361
  %5577 = vmatpush.msra.mxu0 %v5353
  %5578 = vmatpush.msra.mxu0 %v5345
  %5579 = vmatmul.f32.gmra.mxu0 %v4527
  %v5580 = vpop.f32.mrf.mxu0
  %v5581 = vadd.f32 0.0, %v5580
  %5582 = vmatmul.f32.gmra.mxu0 %v4530
  %v5583 = vpop.f32.mrf.mxu0
  %v5584 = vadd.f32 0.0, %v5583
  %5585 = vdwg.mxu0
  %5586 = vst [vmem:[#allocation2] sm:$0xff] %v5321
  %5587 = vst [vmem:[#allocation2 + $0x8] sm:$0xff] %v5322
  %5588 = vst [vmem:[#allocation2 + $0x10] sm:$0xff] %v5323
  %5589 = vst [vmem:[#allocation2 + $0x18] sm:$0xff] %v5324
  %5590 = vst [vmem:[#allocation2 + $0x20] sm:$0xff] %v5325
  %5591 = vst [vmem:[#allocation2 + $0x28] sm:$0xff] %v5326
  %5592 = vst [vmem:[#allocation2 + $0x30] sm:$0xff] %v5327
  %5593 = vst [vmem:[#allocation2 + $0x38] sm:$0xff] %v5328
  %5594 = vst [vmem:[#allocation2 + $0x40] sm:$0xff] %v5329
  %5595 = vst [vmem:[#allocation2 + $0x48] sm:$0xff] %v5330
  %5596 = vst [vmem:[#allocation2 + $0x50] sm:$0xff] %v5331
  %5597 = vst [vmem:[#allocation2 + $0x58] sm:$0xff] %v5332
  %5598 = vst [vmem:[#allocation2 + $0x60] sm:$0xff] %v5333
  %5599 = vst [vmem:[#allocation2 + $0x68] sm:$0xff] %v5334
  %5600 = vst [vmem:[#allocation2 + $0x70] sm:$0xff] %v5335
  %5601 = vst [vmem:[#allocation2 + $0x78] sm:$0xff] %v5336
  %5602 = vst [vmem:[#allocation3] sm:$0xff] %v5420
  %5603 = vst [vmem:[#allocation3 + $0x8] sm:$0xff] %v5443
  %5604 = vst [vmem:[#allocation3 + $0x10] sm:$0xff] %v5466
  %5605 = vst [vmem:[#allocation3 + $0x18] sm:$0xff] %v5489
  %5606 = vst [vmem:[#allocation3 + $0x20] sm:$0xff] %v5512
  %5607 = vst [vmem:[#allocation3 + $0x28] sm:$0xff] %v5535
  %5608 = vst [vmem:[#allocation3 + $0x30] sm:$0xff] %v5558
  %5609 = vst [vmem:[#allocation3 + $0x38] sm:$0xff] %v5581
  %5610 = vst [vmem:[#allocation3 + $0x40] sm:$0xff] %v5423
  %5611 = vst [vmem:[#allocation3 + $0x48] sm:$0xff] %v5446
  %5612 = vst [vmem:[#allocation3 + $0x50] sm:$0xff] %v5469
  %5613 = vst [vmem:[#allocation3 + $0x58] sm:$0xff] %v5492
  %5614 = vst [vmem:[#allocation3 + $0x60] sm:$0xff] %v5515
  %5615 = vst [vmem:[#allocation3 + $0x68] sm:$0xff] %v5538
  %5616 = vst [vmem:[#allocation3 + $0x70] sm:$0xff] %v5561
  %5617 = vst [vmem:[#allocation3 + $0x78] sm:$0xff] %v5584
  %v5618 = vmul.f32 %v4849, 0.0
  %v5619 = vmul.f32 %v4851, 0.0
  %v5620 = vmul.f32 %v4853, 0.0
  %v5621 = vmul.f32 %v4855, 0.0
  %v5622 = vmul.f32 %v4857, 0.0
  %v5623 = vmul.f32 %v4859, 0.0
  %v5624 = vmul.f32 %v4861, 0.0
  %v5625 = vmul.f32 %v4863, 0.0
  %v5626 = vld [vmem:[#allocation2] sm:$0x3]
  %v5627 = vld [vmem:[#allocation2 + $0x8] sm:$0x3]
  %v5628 = vld [vmem:[#allocation2 + $0x10] sm:$0x3]
  %v5629 = vld [vmem:[#allocation2 + $0x18] sm:$0x3]
  %v5630 = vld [vmem:[#allocation2 + $0x20] sm:$0x3]
  %v5631 = vld [vmem:[#allocation2 + $0x28] sm:$0x3]
  %v5632 = vld [vmem:[#allocation2 + $0x30] sm:$0x3]
  %v5633 = vld [vmem:[#allocation2 + $0x38] sm:$0x3]
  %v5634 = vadd.f32 %v5618, %v5626
  %v5635 = vadd.f32 %v5619, %v5627
  %v5636 = vadd.f32 %v5620, %v5628
  %v5637 = vadd.f32 %v5621, %v5629
  %v5638 = vadd.f32 %v5622, %v5630
  %v5639 = vadd.f32 %v5623, %v5631
  %v5640 = vadd.f32 %v5624, %v5632
  %v5641 = vadd.f32 %v5625, %v5633
  %v5642 = vld [vmem:[#allocation3] sm:$0x3]
  %v5643 = vld [vmem:[#allocation3 + $0x8] sm:$0x3]
  %v5644 = vld [vmem:[#allocation3 + $0x10] sm:$0x3]
  %v5645 = vld [vmem:[#allocation3 + $0x18] sm:$0x3]
  %v5646 = vld [vmem:[#allocation3 + $0x20] sm:$0x3]
  %v5647 = vld [vmem:[#allocation3 + $0x28] sm:$0x3]
  %v5648 = vld [vmem:[#allocation3 + $0x30] sm:$0x3]
  %v5649 = vld [vmem:[#allocation3 + $0x38] sm:$0x3]
  %v5650 = vmul.f32 %v5634, %v5642
  %v5651 = vmul.f32 %v5635, %v5643
  %v5652 = vmul.f32 %v5636, %v5644
  %v5653 = vmul.f32 %v5637, %v5645
  %v5654 = vmul.f32 %v5638, %v5646
  %v5655 = vmul.f32 %v5639, %v5647
  %v5656 = vmul.f32 %v5640, %v5648
  %v5657 = vmul.f32 %v5641, %v5649
  %v5666 = vrot.slane %v5634, 6
  %v5667 = vrot.slane %v5635, 6
  %v5668 = vrot.slane %v5636, 6
  %v5669 = vrot.slane %v5637, 6
  %v5670 = vrot.slane %v5638, 6
  %v5671 = vrot.slane %v5639, 6
  %v5672 = vrot.slane %v5640, 6
  %v5673 = vrot.slane %v5641, 6
  %v5682 = vmul.f32 %v4849, %v5666
  %v5683 = vmul.f32 %v4851, %v5667
  %v5684 = vmul.f32 %v4853, %v5668
  %v5685 = vmul.f32 %v4855, %v5669
  %v5686 = vmul.f32 %v4857, %v5670
  %v5687 = vmul.f32 %v4859, %v5671
  %v5688 = vmul.f32 %v4861, %v5672
  %v5689 = vmul.f32 %v4863, %v5673
  %v5690 = vld [vmem:[#allocation2] sm:$0xc]
  %v5691 = vld [vmem:[#allocation2 + $0x8] sm:$0xc]
  %v5692 = vld [vmem:[#allocation2 + $0x10] sm:$0xc]
  %v5693 = vld [vmem:[#allocation2 + $0x18] sm:$0xc]
  %v5694 = vld [vmem:[#allocation2 + $0x20] sm:$0xc]
  %v5695 = vld [vmem:[#allocation2 + $0x28] sm:$0xc]
  %v5696 = vld [vmem:[#allocation2 + $0x30] sm:$0xc]
  %v5697 = vld [vmem:[#allocation2 + $0x38] sm:$0xc]
  %v5698 = vadd.f32 %v5682, %v5690
  %v5699 = vadd.f32 %v5683, %v5691
  %v5700 = vadd.f32 %v5684, %v5692
  %v5701 = vadd.f32 %v5685, %v5693
  %v5702 = vadd.f32 %v5686, %v5694
  %v5703 = vadd.f32 %v5687, %v5695
  %v5704 = vadd.f32 %v5688, %v5696
  %v5705 = vadd.f32 %v5689, %v5697
  %v5706 = vld [vmem:[#allocation3] sm:$0xc]
  %v5707 = vld [vmem:[#allocation3 + $0x8] sm:$0xc]
  %v5708 = vld [vmem:[#allocation3 + $0x10] sm:$0xc]
  %v5709 = vld [vmem:[#allocation3 + $0x18] sm:$0xc]
  %v5710 = vld [vmem:[#allocation3 + $0x20] sm:$0xc]
  %v5711 = vld [vmem:[#allocation3 + $0x28] sm:$0xc]
  %v5712 = vld [vmem:[#allocation3 + $0x30] sm:$0xc]
  %v5713 = vld [vmem:[#allocation3 + $0x38] sm:$0xc]
  %v5714 = vmul.f32 %v5698, %v5706
  %v5715 = vmul.f32 %v5699, %v5707
  %v5716 = vmul.f32 %v5700, %v5708
  %v5717 = vmul.f32 %v5701, %v5709
  %v5718 = vmul.f32 %v5702, %v5710
  %v5719 = vmul.f32 %v5703, %v5711
  %v5720 = vmul.f32 %v5704, %v5712
  %v5721 = vmul.f32 %v5705, %v5713
  %v5730 = vrot.slane %v5714, 2
  %v5731 = vrot.slane %v5715, 2
  %v5732 = vrot.slane %v5716, 2
  %v5733 = vrot.slane %v5717, 2
  %v5734 = vrot.slane %v5718, 2
  %v5735 = vrot.slane %v5719, 2
  %v5736 = vrot.slane %v5720, 2
  %v5737 = vrot.slane %v5721, 2
  %v5738 = vsel %vm1733, %v5730, 0
  %v5740 = vsel %vm1733, %v5731, 0
  %v5742 = vsel %vm1733, %v5732, 0
  %v5744 = vsel %vm1733, %v5733, 0
  %v5746 = vsel %vm1733, %v5734, 0
  %v5748 = vsel %vm1733, %v5735, 0
  %v5750 = vsel %vm1733, %v5736, 0
  %v5752 = vsel %vm1733, %v5737, 0
  %5754 = vmatpush.msra.mxu0 0.0
  %5755 = vmatpush.msra.mxu0 0.0
  %5756 = vmatpush.msra.mxu0 0.0
  %5757 = vmatpush.msra.mxu0 0.0
  %5758 = vmatpush.msra.mxu0 0.0
  %5759 = vmatpush.msra.mxu0 0.0
  %5760 = vmatpush.msra.mxu0 0.0
  %5761 = vmatpush.msra.mxu0 0.0
  %5762 = vmatpush.msra.mxu0 0.0
  %5763 = vmatpush.msra.mxu0 0.0
  %5764 = vmatpush.msra.mxu0 0.0
  %5765 = vmatpush.msra.mxu0 0.0
  %5766 = vmatpush.msra.mxu0 0.0
  %5767 = vmatpush.msra.mxu0 0.0
  %5768 = vmatpush.msra.mxu0 0.0
  %5769 = vmatpush.msra.mxu0 %v5738
  %5770 = vmatmul.f32.gmra.mxu0 %v1728
  %v5771 = vpop.f32.mrf.mxu0
  %v5772 = vadd.f32 0.0, %v5771
  %5773 = vmatmul.f32.gmra.mxu0 %v1731
  %v5774 = vpop.f32.mrf.mxu0
  %v5775 = vadd.f32 0.0, %v5774
  %5776 = vdwg.mxu0
  %5777 = vmatpush.msra.mxu0 0.0
  %5778 = vmatpush.msra.mxu0 0.0
  %5779 = vmatpush.msra.mxu0 0.0
  %5780 = vmatpush.msra.mxu0 0.0
  %5781 = vmatpush.msra.mxu0 0.0
  %5782 = vmatpush.msra.mxu0 0.0
  %5783 = vmatpush.msra.mxu0 0.0
  %5784 = vmatpush.msra.mxu0 0.0
  %5785 = vmatpush.msra.mxu0 0.0
  %5786 = vmatpush.msra.mxu0 0.0
  %5787 = vmatpush.msra.mxu0 0.0
  %5788 = vmatpush.msra.mxu0 0.0
  %5789 = vmatpush.msra.mxu0 0.0
  %5790 = vmatpush.msra.mxu0 0.0
  %5791 = vmatpush.msra.mxu0 0.0
  %5792 = vmatpush.msra.mxu0 %v5740
  %5793 = vmatmul.f32.gmra.mxu0 %v1728
  %v5794 = vpop.f32.mrf.mxu0
  %v5795 = vadd.f32 0.0, %v5794
  %5796 = vmatmul.f32.gmra.mxu0 %v1731
  %v5797 = vpop.f32.mrf.mxu0
  %v5798 = vadd.f32 0.0, %v5797
  %5799 = vdwg.mxu0
  %5800 = vmatpush.msra.mxu0 0.0
  %5801 = vmatpush.msra.mxu0 0.0
  %5802 = vmatpush.msra.mxu0 0.0
  %5803 = vmatpush.msra.mxu0 0.0
  %5804 = vmatpush.msra.mxu0 0.0
  %5805 = vmatpush.msra.mxu0 0.0
  %5806 = vmatpush.msra.mxu0 0.0
  %5807 = vmatpush.msra.mxu0 0.0
  %5808 = vmatpush.msra.mxu0 0.0
  %5809 = vmatpush.msra.mxu0 0.0
  %5810 = vmatpush.msra.mxu0 0.0
  %5811 = vmatpush.msra.mxu0 0.0
  %5812 = vmatpush.msra.mxu0 0.0
  %5813 = vmatpush.msra.mxu0 0.0
  %5814 = vmatpush.msra.mxu0 0.0
  %5815 = vmatpush.msra.mxu0 %v5742
  %5816 = vmatmul.f32.gmra.mxu0 %v1728
  %v5817 = vpop.f32.mrf.mxu0
  %v5818 = vadd.f32 0.0, %v5817
  %5819 = vmatmul.f32.gmra.mxu0 %v1731
  %v5820 = vpop.f32.mrf.mxu0
  %v5821 = vadd.f32 0.0, %v5820
  %5822 = vdwg.mxu0
  %5823 = vmatpush.msra.mxu0 0.0
  %5824 = vmatpush.msra.mxu0 0.0
  %5825 = vmatpush.msra.mxu0 0.0
  %5826 = vmatpush.msra.mxu0 0.0
  %5827 = vmatpush.msra.mxu0 0.0
  %5828 = vmatpush.msra.mxu0 0.0
  %5829 = vmatpush.msra.mxu0 0.0
  %5830 = vmatpush.msra.mxu0 0.0
  %5831 = vmatpush.msra.mxu0 0.0
  %5832 = vmatpush.msra.mxu0 0.0
  %5833 = vmatpush.msra.mxu0 0.0
  %5834 = vmatpush.msra.mxu0 0.0
  %5835 = vmatpush.msra.mxu0 0.0
  %5836 = vmatpush.msra.mxu0 0.0
  %5837 = vmatpush.msra.mxu0 0.0
  %5838 = vmatpush.msra.mxu0 %v5744
  %5839 = vmatmul.f32.gmra.mxu0 %v1728
  %v5840 = vpop.f32.mrf.mxu0
  %v5841 = vadd.f32 0.0, %v5840
  %5842 = vmatmul.f32.gmra.mxu0 %v1731
  %v5843 = vpop.f32.mrf.mxu0
  %v5844 = vadd.f32 0.0, %v5843
  %5845 = vdwg.mxu0
  %5846 = vmatpush.msra.mxu0 0.0
  %5847 = vmatpush.msra.mxu0 0.0
  %5848 = vmatpush.msra.mxu0 0.0
  %5849 = vmatpush.msra.mxu0 0.0
  %5850 = vmatpush.msra.mxu0 0.0
  %5851 = vmatpush.msra.mxu0 0.0
  %5852 = vmatpush.msra.mxu0 0.0
  %5853 = vmatpush.msra.mxu0 0.0
  %5854 = vmatpush.msra.mxu0 0.0
  %5855 = vmatpush.msra.mxu0 0.0
  %5856 = vmatpush.msra.mxu0 0.0
  %5857 = vmatpush.msra.mxu0 0.0
  %5858 = vmatpush.msra.mxu0 0.0
  %5859 = vmatpush.msra.mxu0 0.0
  %5860 = vmatpush.msra.mxu0 0.0
  %5861 = vmatpush.msra.mxu0 %v5746
  %5862 = vmatmul.f32.gmra.mxu0 %v1728
  %v5863 = vpop.f32.mrf.mxu0
  %v5864 = vadd.f32 0.0, %v5863
  %5865 = vmatmul.f32.gmra.mxu0 %v1731
  %v5866 = vpop.f32.mrf.mxu0
  %v5867 = vadd.f32 0.0, %v5866
  %5868 = vdwg.mxu0
  %5869 = vmatpush.msra.mxu0 0.0
  %5870 = vmatpush.msra.mxu0 0.0
  %5871 = vmatpush.msra.mxu0 0.0
  %5872 = vmatpush.msra.mxu0 0.0
  %5873 = vmatpush.msra.mxu0 0.0
  %5874 = vmatpush.msra.mxu0 0.0
  %5875 = vmatpush.msra.mxu0 0.0
  %5876 = vmatpush.msra.mxu0 0.0
  %5877 = vmatpush.msra.mxu0 0.0
  %5878 = vmatpush.msra.mxu0 0.0
  %5879 = vmatpush.msra.mxu0 0.0
  %5880 = vmatpush.msra.mxu0 0.0
  %5881 = vmatpush.msra.mxu0 0.0
  %5882 = vmatpush.msra.mxu0 0.0
  %5883 = vmatpush.msra.mxu0 0.0
  %5884 = vmatpush.msra.mxu0 %v5748
  %5885 = vmatmul.f32.gmra.mxu0 %v1728
  %v5886 = vpop.f32.mrf.mxu0
  %v5887 = vadd.f32 0.0, %v5886
  %5888 = vmatmul.f32.gmra.mxu0 %v1731
  %v5889 = vpop.f32.mrf.mxu0
  %v5890 = vadd.f32 0.0, %v5889
  %5891 = vdwg.mxu0
  %5892 = vmatpush.msra.mxu0 0.0
  %5893 = vmatpush.msra.mxu0 0.0
  %5894 = vmatpush.msra.mxu0 0.0
  %5895 = vmatpush.msra.mxu0 0.0
  %5896 = vmatpush.msra.mxu0 0.0
  %5897 = vmatpush.msra.mxu0 0.0
  %5898 = vmatpush.msra.mxu0 0.0
  %5899 = vmatpush.msra.mxu0 0.0
  %5900 = vmatpush.msra.mxu0 0.0
  %5901 = vmatpush.msra.mxu0 0.0
  %5902 = vmatpush.msra.mxu0 0.0
  %5903 = vmatpush.msra.mxu0 0.0
  %5904 = vmatpush.msra.mxu0 0.0
  %5905 = vmatpush.msra.mxu0 0.0
  %5906 = vmatpush.msra.mxu0 0.0
  %5907 = vmatpush.msra.mxu0 %v5750
  %5908 = vmatmul.f32.gmra.mxu0 %v1728
  %v5909 = vpop.f32.mrf.mxu0
  %v5910 = vadd.f32 0.0, %v5909
  %5911 = vmatmul.f32.gmra.mxu0 %v1731
  %v5912 = vpop.f32.mrf.mxu0
  %v5913 = vadd.f32 0.0, %v5912
  %5914 = vdwg.mxu0
  %5915 = vmatpush.msra.mxu0 0.0
  %5916 = vmatpush.msra.mxu0 0.0
  %5917 = vmatpush.msra.mxu0 0.0
  %5918 = vmatpush.msra.mxu0 0.0
  %5919 = vmatpush.msra.mxu0 0.0
  %5920 = vmatpush.msra.mxu0 0.0
  %5921 = vmatpush.msra.mxu0 0.0
  %5922 = vmatpush.msra.mxu0 0.0
  %5923 = vmatpush.msra.mxu0 0.0
  %5924 = vmatpush.msra.mxu0 0.0
  %5925 = vmatpush.msra.mxu0 0.0
  %5926 = vmatpush.msra.mxu0 0.0
  %5927 = vmatpush.msra.mxu0 0.0
  %5928 = vmatpush.msra.mxu0 0.0
  %5929 = vmatpush.msra.mxu0 0.0
  %5930 = vmatpush.msra.mxu0 %v5752
  %5931 = vmatmul.f32.gmra.mxu0 %v1728
  %v5932 = vpop.f32.mrf.mxu0
  %v5933 = vadd.f32 0.0, %v5932
  %5934 = vmatmul.f32.gmra.mxu0 %v1731
  %v5935 = vpop.f32.mrf.mxu0
  %v5936 = vadd.f32 0.0, %v5935
  %5937 = vdwg.mxu0
  %v5939 = vsel %vm1733, %v5650, 0
  %v5942 = vsel %vm1733, %v5651, 0
  %v5945 = vsel %vm1733, %v5652, 0
  %v5948 = vsel %vm1733, %v5653, 0
  %v5951 = vsel %vm1733, %v5654, 0
  %v5954 = vsel %vm1733, %v5655, 0
  %v5957 = vsel %vm1733, %v5656, 0
  %v5960 = vsel %vm1733, %v5657, 0
  %5962 = vmatpush.msra.mxu0 0.0
  %5963 = vmatpush.msra.mxu0 0.0
  %5964 = vmatpush.msra.mxu0 0.0
  %5965 = vmatpush.msra.mxu0 0.0
  %5966 = vmatpush.msra.mxu0 0.0
  %5967 = vmatpush.msra.mxu0 0.0
  %5968 = vmatpush.msra.mxu0 0.0
  %5969 = vmatpush.msra.mxu0 0.0
  %5970 = vmatpush.msra.mxu0 0.0
  %5971 = vmatpush.msra.mxu0 0.0
  %5972 = vmatpush.msra.mxu0 0.0
  %5973 = vmatpush.msra.mxu0 0.0
  %5974 = vmatpush.msra.mxu0 0.0
  %5975 = vmatpush.msra.mxu0 0.0
  %5976 = vmatpush.msra.mxu0 0.0
  %5977 = vmatpush.msra.mxu0 %v5939
  %5978 = vmatmul.f32.gmra.mxu0 %v1935
  %v5979 = vpop.f32.mrf.mxu0
  %v5980 = vadd.f32 %v5772, %v5979
  %5981 = vmatmul.f32.gmra.mxu0 %v1938
  %v5982 = vpop.f32.mrf.mxu0
  %v5983 = vadd.f32 %v5775, %v5982
  %5984 = vdwg.mxu0
  %5985 = vmatpush.msra.mxu0 0.0
  %5986 = vmatpush.msra.mxu0 0.0
  %5987 = vmatpush.msra.mxu0 0.0
  %5988 = vmatpush.msra.mxu0 0.0
  %5989 = vmatpush.msra.mxu0 0.0
  %5990 = vmatpush.msra.mxu0 0.0
  %5991 = vmatpush.msra.mxu0 0.0
  %5992 = vmatpush.msra.mxu0 0.0
  %5993 = vmatpush.msra.mxu0 0.0
  %5994 = vmatpush.msra.mxu0 0.0
  %5995 = vmatpush.msra.mxu0 0.0
  %5996 = vmatpush.msra.mxu0 0.0
  %5997 = vmatpush.msra.mxu0 0.0
  %5998 = vmatpush.msra.mxu0 0.0
  %5999 = vmatpush.msra.mxu0 0.0
  %6000 = vmatpush.msra.mxu0 %v5942
  %6001 = vmatmul.f32.gmra.mxu0 %v1935
  %v6002 = vpop.f32.mrf.mxu0
  %v6003 = vadd.f32 %v5795, %v6002
  %6004 = vmatmul.f32.gmra.mxu0 %v1938
  %v6005 = vpop.f32.mrf.mxu0
  %v6006 = vadd.f32 %v5798, %v6005
  %6007 = vdwg.mxu0
  %6008 = vmatpush.msra.mxu0 0.0
  %6009 = vmatpush.msra.mxu0 0.0
  %6010 = vmatpush.msra.mxu0 0.0
  %6011 = vmatpush.msra.mxu0 0.0
  %6012 = vmatpush.msra.mxu0 0.0
  %6013 = vmatpush.msra.mxu0 0.0
  %6014 = vmatpush.msra.mxu0 0.0
  %6015 = vmatpush.msra.mxu0 0.0
  %6016 = vmatpush.msra.mxu0 0.0
  %6017 = vmatpush.msra.mxu0 0.0
  %6018 = vmatpush.msra.mxu0 0.0
  %6019 = vmatpush.msra.mxu0 0.0
  %6020 = vmatpush.msra.mxu0 0.0
  %6021 = vmatpush.msra.mxu0 0.0
  %6022 = vmatpush.msra.mxu0 0.0
  %6023 = vmatpush.msra.mxu0 %v5945
  %6024 = vmatmul.f32.gmra.mxu0 %v1935
  %v6025 = vpop.f32.mrf.mxu0
  %v6026 = vadd.f32 %v5818, %v6025
  %6027 = vmatmul.f32.gmra.mxu0 %v1938
  %v6028 = vpop.f32.mrf.mxu0
  %v6029 = vadd.f32 %v5821, %v6028
  %6030 = vdwg.mxu0
  %6031 = vmatpush.msra.mxu0 0.0
  %6032 = vmatpush.msra.mxu0 0.0
  %6033 = vmatpush.msra.mxu0 0.0
  %6034 = vmatpush.msra.mxu0 0.0
  %6035 = vmatpush.msra.mxu0 0.0
  %6036 = vmatpush.msra.mxu0 0.0
  %6037 = vmatpush.msra.mxu0 0.0
  %6038 = vmatpush.msra.mxu0 0.0
  %6039 = vmatpush.msra.mxu0 0.0
  %6040 = vmatpush.msra.mxu0 0.0
  %6041 = vmatpush.msra.mxu0 0.0
  %6042 = vmatpush.msra.mxu0 0.0
  %6043 = vmatpush.msra.mxu0 0.0
  %6044 = vmatpush.msra.mxu0 0.0
  %6045 = vmatpush.msra.mxu0 0.0
  %6046 = vmatpush.msra.mxu0 %v5948
  %6047 = vmatmul.f32.gmra.mxu0 %v1935
  %v6048 = vpop.f32.mrf.mxu0
  %v6049 = vadd.f32 %v5841, %v6048
  %6050 = vmatmul.f32.gmra.mxu0 %v1938
  %v6051 = vpop.f32.mrf.mxu0
  %v6052 = vadd.f32 %v5844, %v6051
  %6053 = vdwg.mxu0
  %6054 = vmatpush.msra.mxu0 0.0
  %6055 = vmatpush.msra.mxu0 0.0
  %6056 = vmatpush.msra.mxu0 0.0
  %6057 = vmatpush.msra.mxu0 0.0
  %6058 = vmatpush.msra.mxu0 0.0
  %6059 = vmatpush.msra.mxu0 0.0
  %6060 = vmatpush.msra.mxu0 0.0
  %6061 = vmatpush.msra.mxu0 0.0
  %6062 = vmatpush.msra.mxu0 0.0
  %6063 = vmatpush.msra.mxu0 0.0
  %6064 = vmatpush.msra.mxu0 0.0
  %6065 = vmatpush.msra.mxu0 0.0
  %6066 = vmatpush.msra.mxu0 0.0
  %6067 = vmatpush.msra.mxu0 0.0
  %6068 = vmatpush.msra.mxu0 0.0
  %6069 = vmatpush.msra.mxu0 %v5951
  %6070 = vmatmul.f32.gmra.mxu0 %v1935
  %v6071 = vpop.f32.mrf.mxu0
  %v6072 = vadd.f32 %v5864, %v6071
  %6073 = vmatmul.f32.gmra.mxu0 %v1938
  %v6074 = vpop.f32.mrf.mxu0
  %v6075 = vadd.f32 %v5867, %v6074
  %6076 = vdwg.mxu0
  %6077 = vmatpush.msra.mxu0 0.0
  %6078 = vmatpush.msra.mxu0 0.0
  %6079 = vmatpush.msra.mxu0 0.0
  %6080 = vmatpush.msra.mxu0 0.0
  %6081 = vmatpush.msra.mxu0 0.0
  %6082 = vmatpush.msra.mxu0 0.0
  %6083 = vmatpush.msra.mxu0 0.0
  %6084 = vmatpush.msra.mxu0 0.0
  %6085 = vmatpush.msra.mxu0 0.0
  %6086 = vmatpush.msra.mxu0 0.0
  %6087 = vmatpush.msra.mxu0 0.0
  %6088 = vmatpush.msra.mxu0 0.0
  %6089 = vmatpush.msra.mxu0 0.0
  %6090 = vmatpush.msra.mxu0 0.0
  %6091 = vmatpush.msra.mxu0 0.0
  %6092 = vmatpush.msra.mxu0 %v5954
  %6093 = vmatmul.f32.gmra.mxu0 %v1935
  %v6094 = vpop.f32.mrf.mxu0
  %v6095 = vadd.f32 %v5887, %v6094
  %6096 = vmatmul.f32.gmra.mxu0 %v1938
  %v6097 = vpop.f32.mrf.mxu0
  %v6098 = vadd.f32 %v5890, %v6097
  %6099 = vdwg.mxu0
  %6100 = vmatpush.msra.mxu0 0.0
  %6101 = vmatpush.msra.mxu0 0.0
  %6102 = vmatpush.msra.mxu0 0.0
  %6103 = vmatpush.msra.mxu0 0.0
  %6104 = vmatpush.msra.mxu0 0.0
  %6105 = vmatpush.msra.mxu0 0.0
  %6106 = vmatpush.msra.mxu0 0.0
  %6107 = vmatpush.msra.mxu0 0.0
  %6108 = vmatpush.msra.mxu0 0.0
  %6109 = vmatpush.msra.mxu0 0.0
  %6110 = vmatpush.msra.mxu0 0.0
  %6111 = vmatpush.msra.mxu0 0.0
  %6112 = vmatpush.msra.mxu0 0.0
  %6113 = vmatpush.msra.mxu0 0.0
  %6114 = vmatpush.msra.mxu0 0.0
  %6115 = vmatpush.msra.mxu0 %v5957
  %6116 = vmatmul.f32.gmra.mxu0 %v1935
  %v6117 = vpop.f32.mrf.mxu0
  %v6118 = vadd.f32 %v5910, %v6117
  %6119 = vmatmul.f32.gmra.mxu0 %v1938
  %v6120 = vpop.f32.mrf.mxu0
  %v6121 = vadd.f32 %v5913, %v6120
  %6122 = vdwg.mxu0
  %6123 = vmatpush.msra.mxu0 0.0
  %6124 = vmatpush.msra.mxu0 0.0
  %6125 = vmatpush.msra.mxu0 0.0
  %6126 = vmatpush.msra.mxu0 0.0
  %6127 = vmatpush.msra.mxu0 0.0
  %6128 = vmatpush.msra.mxu0 0.0
  %6129 = vmatpush.msra.mxu0 0.0
  %6130 = vmatpush.msra.mxu0 0.0
  %6131 = vmatpush.msra.mxu0 0.0
  %6132 = vmatpush.msra.mxu0 0.0
  %6133 = vmatpush.msra.mxu0 0.0
  %6134 = vmatpush.msra.mxu0 0.0
  %6135 = vmatpush.msra.mxu0 0.0
  %6136 = vmatpush.msra.mxu0 0.0
  %6137 = vmatpush.msra.mxu0 0.0
  %6138 = vmatpush.msra.mxu0 %v5960
  %6139 = vmatmul.f32.gmra.mxu0 %v1935
  %v6140 = vpop.f32.mrf.mxu0
  %v6141 = vadd.f32 %v5933, %v6140
  %6142 = vmatmul.f32.gmra.mxu0 %v1938
  %v6143 = vpop.f32.mrf.mxu0
  %v6144 = vadd.f32 %v5936, %v6143
  %6145 = vdwg.mxu0
  %v6154 = vrot.slane %v5698, 6
  %v6155 = vrot.slane %v5699, 6
  %v6156 = vrot.slane %v5700, 6
  %v6157 = vrot.slane %v5701, 6
  %v6158 = vrot.slane %v5702, 6
  %v6159 = vrot.slane %v5703, 6
  %v6160 = vrot.slane %v5704, 6
  %v6161 = vrot.slane %v5705, 6
  %v6170 = vmul.f32 %v4849, %v6154
  %v6171 = vmul.f32 %v4851, %v6155
  %v6172 = vmul.f32 %v4853, %v6156
  %v6173 = vmul.f32 %v4855, %v6157
  %v6174 = vmul.f32 %v4857, %v6158
  %v6175 = vmul.f32 %v4859, %v6159
  %v6176 = vmul.f32 %v4861, %v6160
  %v6177 = vmul.f32 %v4863, %v6161
  %v6178 = vld [vmem:[#allocation2] sm:$0x30]
  %v6179 = vld [vmem:[#allocation2 + $0x8] sm:$0x30]
  %v6180 = vld [vmem:[#allocation2 + $0x10] sm:$0x30]
  %v6181 = vld [vmem:[#allocation2 + $0x18] sm:$0x30]
  %v6182 = vld [vmem:[#allocation2 + $0x20] sm:$0x30]
  %v6183 = vld [vmem:[#allocation2 + $0x28] sm:$0x30]
  %v6184 = vld [vmem:[#allocation2 + $0x30] sm:$0x30]
  %v6185 = vld [vmem:[#allocation2 + $0x38] sm:$0x30]
  %v6186 = vadd.f32 %v6170, %v6178
  %v6187 = vadd.f32 %v6171, %v6179
  %v6188 = vadd.f32 %v6172, %v6180
  %v6189 = vadd.f32 %v6173, %v6181
  %v6190 = vadd.f32 %v6174, %v6182
  %v6191 = vadd.f32 %v6175, %v6183
  %v6192 = vadd.f32 %v6176, %v6184
  %v6193 = vadd.f32 %v6177, %v6185
  %v6194 = vld [vmem:[#allocation3] sm:$0x30]
  %v6195 = vld [vmem:[#allocation3 + $0x8] sm:$0x30]
  %v6196 = vld [vmem:[#allocation3 + $0x10] sm:$0x30]
  %v6197 = vld [vmem:[#allocation3 + $0x18] sm:$0x30]
  %v6198 = vld [vmem:[#allocation3 + $0x20] sm:$0x30]
  %v6199 = vld [vmem:[#allocation3 + $0x28] sm:$0x30]
  %v6200 = vld [vmem:[#allocation3 + $0x30] sm:$0x30]
  %v6201 = vld [vmem:[#allocation3 + $0x38] sm:$0x30]
  %v6202 = vmul.f32 %v6186, %v6194
  %v6203 = vmul.f32 %v6187, %v6195
  %v6204 = vmul.f32 %v6188, %v6196
  %v6205 = vmul.f32 %v6189, %v6197
  %v6206 = vmul.f32 %v6190, %v6198
  %v6207 = vmul.f32 %v6191, %v6199
  %v6208 = vmul.f32 %v6192, %v6200
  %v6209 = vmul.f32 %v6193, %v6201
  %v6218 = vrot.slane %v6202, 4
  %v6219 = vrot.slane %v6203, 4
  %v6220 = vrot.slane %v6204, 4
  %v6221 = vrot.slane %v6205, 4
  %v6222 = vrot.slane %v6206, 4
  %v6223 = vrot.slane %v6207, 4
  %v6224 = vrot.slane %v6208, 4
  %v6225 = vrot.slane %v6209, 4
  %v6226 = vsel %vm1733, %v6218, 0
  %v6228 = vsel %vm1733, %v6219, 0
  %v6230 = vsel %vm1733, %v6220, 0
  %v6232 = vsel %vm1733, %v6221, 0
  %v6234 = vsel %vm1733, %v6222, 0
  %v6236 = vsel %vm1733, %v6223, 0
  %v6238 = vsel %vm1733, %v6224, 0
  %v6240 = vsel %vm1733, %v6225, 0
  %6242 = vmatpush.msra.mxu0 0.0
  %6243 = vmatpush.msra.mxu0 0.0
  %6244 = vmatpush.msra.mxu0 0.0
  %6245 = vmatpush.msra.mxu0 0.0
  %6246 = vmatpush.msra.mxu0 0.0
  %6247 = vmatpush.msra.mxu0 0.0
  %6248 = vmatpush.msra.mxu0 0.0
  %6249 = vmatpush.msra.mxu0 0.0
  %6250 = vmatpush.msra.mxu0 0.0
  %6251 = vmatpush.msra.mxu0 0.0
  %6252 = vmatpush.msra.mxu0 0.0
  %6253 = vmatpush.msra.mxu0 0.0
  %6254 = vmatpush.msra.mxu0 0.0
  %6255 = vmatpush.msra.mxu0 0.0
  %6256 = vmatpush.msra.mxu0 0.0
  %6257 = vmatpush.msra.mxu0 %v6226
  %6258 = vmatmul.f32.gmra.mxu0 %v2229
  %v6259 = vpop.f32.mrf.mxu0
  %v6260 = vadd.f32 0.0, %v6259
  %6261 = vmatmul.f32.gmra.mxu0 %v2232
  %v6262 = vpop.f32.mrf.mxu0
  %v6263 = vadd.f32 0.0, %v6262
  %6264 = vdwg.mxu0
  %6265 = vmatpush.msra.mxu0 0.0
  %6266 = vmatpush.msra.mxu0 0.0
  %6267 = vmatpush.msra.mxu0 0.0
  %6268 = vmatpush.msra.mxu0 0.0
  %6269 = vmatpush.msra.mxu0 0.0
  %6270 = vmatpush.msra.mxu0 0.0
  %6271 = vmatpush.msra.mxu0 0.0
  %6272 = vmatpush.msra.mxu0 0.0
  %6273 = vmatpush.msra.mxu0 0.0
  %6274 = vmatpush.msra.mxu0 0.0
  %6275 = vmatpush.msra.mxu0 0.0
  %6276 = vmatpush.msra.mxu0 0.0
  %6277 = vmatpush.msra.mxu0 0.0
  %6278 = vmatpush.msra.mxu0 0.0
  %6279 = vmatpush.msra.mxu0 0.0
  %6280 = vmatpush.msra.mxu0 %v6228
  %6281 = vmatmul.f32.gmra.mxu0 %v2229
  %v6282 = vpop.f32.mrf.mxu0
  %v6283 = vadd.f32 0.0, %v6282
  %6284 = vmatmul.f32.gmra.mxu0 %v2232
  %v6285 = vpop.f32.mrf.mxu0
  %v6286 = vadd.f32 0.0, %v6285
  %6287 = vdwg.mxu0
  %6288 = vmatpush.msra.mxu0 0.0
  %6289 = vmatpush.msra.mxu0 0.0
  %6290 = vmatpush.msra.mxu0 0.0
  %6291 = vmatpush.msra.mxu0 0.0
  %6292 = vmatpush.msra.mxu0 0.0
  %6293 = vmatpush.msra.mxu0 0.0
  %6294 = vmatpush.msra.mxu0 0.0
  %6295 = vmatpush.msra.mxu0 0.0
  %6296 = vmatpush.msra.mxu0 0.0
  %6297 = vmatpush.msra.mxu0 0.0
  %6298 = vmatpush.msra.mxu0 0.0
  %6299 = vmatpush.msra.mxu0 0.0
  %6300 = vmatpush.msra.mxu0 0.0
  %6301 = vmatpush.msra.mxu0 0.0
  %6302 = vmatpush.msra.mxu0 0.0
  %6303 = vmatpush.msra.mxu0 %v6230
  %6304 = vmatmul.f32.gmra.mxu0 %v2229
  %v6305 = vpop.f32.mrf.mxu0
  %v6306 = vadd.f32 0.0, %v6305
  %6307 = vmatmul.f32.gmra.mxu0 %v2232
  %v6308 = vpop.f32.mrf.mxu0
  %v6309 = vadd.f32 0.0, %v6308
  %6310 = vdwg.mxu0
  %6311 = vmatpush.msra.mxu0 0.0
  %6312 = vmatpush.msra.mxu0 0.0
  %6313 = vmatpush.msra.mxu0 0.0
  %6314 = vmatpush.msra.mxu0 0.0
  %6315 = vmatpush.msra.mxu0 0.0
  %6316 = vmatpush.msra.mxu0 0.0
  %6317 = vmatpush.msra.mxu0 0.0
  %6318 = vmatpush.msra.mxu0 0.0
  %6319 = vmatpush.msra.mxu0 0.0
  %6320 = vmatpush.msra.mxu0 0.0
  %6321 = vmatpush.msra.mxu0 0.0
  %6322 = vmatpush.msra.mxu0 0.0
  %6323 = vmatpush.msra.mxu0 0.0
  %6324 = vmatpush.msra.mxu0 0.0
  %6325 = vmatpush.msra.mxu0 0.0
  %6326 = vmatpush.msra.mxu0 %v6232
  %6327 = vmatmul.f32.gmra.mxu0 %v2229
  %v6328 = vpop.f32.mrf.mxu0
  %v6329 = vadd.f32 0.0, %v6328
  %6330 = vmatmul.f32.gmra.mxu0 %v2232
  %v6331 = vpop.f32.mrf.mxu0
  %v6332 = vadd.f32 0.0, %v6331
  %6333 = vdwg.mxu0
  %6334 = vmatpush.msra.mxu0 0.0
  %6335 = vmatpush.msra.mxu0 0.0
  %6336 = vmatpush.msra.mxu0 0.0
  %6337 = vmatpush.msra.mxu0 0.0
  %6338 = vmatpush.msra.mxu0 0.0
  %6339 = vmatpush.msra.mxu0 0.0
  %6340 = vmatpush.msra.mxu0 0.0
  %6341 = vmatpush.msra.mxu0 0.0
  %6342 = vmatpush.msra.mxu0 0.0
  %6343 = vmatpush.msra.mxu0 0.0
  %6344 = vmatpush.msra.mxu0 0.0
  %6345 = vmatpush.msra.mxu0 0.0
  %6346 = vmatpush.msra.mxu0 0.0
  %6347 = vmatpush.msra.mxu0 0.0
  %6348 = vmatpush.msra.mxu0 0.0
  %6349 = vmatpush.msra.mxu0 %v6234
  %6350 = vmatmul.f32.gmra.mxu0 %v2229
  %v6351 = vpop.f32.mrf.mxu0
  %v6352 = vadd.f32 0.0, %v6351
  %6353 = vmatmul.f32.gmra.mxu0 %v2232
  %v6354 = vpop.f32.mrf.mxu0
  %v6355 = vadd.f32 0.0, %v6354
  %6356 = vdwg.mxu0
  %6357 = vmatpush.msra.mxu0 0.0
  %6358 = vmatpush.msra.mxu0 0.0
  %6359 = vmatpush.msra.mxu0 0.0
  %6360 = vmatpush.msra.mxu0 0.0
  %6361 = vmatpush.msra.mxu0 0.0
  %6362 = vmatpush.msra.mxu0 0.0
  %6363 = vmatpush.msra.mxu0 0.0
  %6364 = vmatpush.msra.mxu0 0.0
  %6365 = vmatpush.msra.mxu0 0.0
  %6366 = vmatpush.msra.mxu0 0.0
  %6367 = vmatpush.msra.mxu0 0.0
  %6368 = vmatpush.msra.mxu0 0.0
  %6369 = vmatpush.msra.mxu0 0.0
  %6370 = vmatpush.msra.mxu0 0.0
  %6371 = vmatpush.msra.mxu0 0.0
  %6372 = vmatpush.msra.mxu0 %v6236
  %6373 = vmatmul.f32.gmra.mxu0 %v2229
  %v6374 = vpop.f32.mrf.mxu0
  %v6375 = vadd.f32 0.0, %v6374
  %6376 = vmatmul.f32.gmra.mxu0 %v2232
  %v6377 = vpop.f32.mrf.mxu0
  %v6378 = vadd.f32 0.0, %v6377
  %6379 = vdwg.mxu0
  %6380 = vmatpush.msra.mxu0 0.0
  %6381 = vmatpush.msra.mxu0 0.0
  %6382 = vmatpush.msra.mxu0 0.0
  %6383 = vmatpush.msra.mxu0 0.0
  %6384 = vmatpush.msra.mxu0 0.0
  %6385 = vmatpush.msra.mxu0 0.0
  %6386 = vmatpush.msra.mxu0 0.0
  %6387 = vmatpush.msra.mxu0 0.0
  %6388 = vmatpush.msra.mxu0 0.0
  %6389 = vmatpush.msra.mxu0 0.0
  %6390 = vmatpush.msra.mxu0 0.0
  %6391 = vmatpush.msra.mxu0 0.0
  %6392 = vmatpush.msra.mxu0 0.0
  %6393 = vmatpush.msra.mxu0 0.0
  %6394 = vmatpush.msra.mxu0 0.0
  %6395 = vmatpush.msra.mxu0 %v6238
  %6396 = vmatmul.f32.gmra.mxu0 %v2229
  %v6397 = vpop.f32.mrf.mxu0
  %v6398 = vadd.f32 0.0, %v6397
  %6399 = vmatmul.f32.gmra.mxu0 %v2232
  %v6400 = vpop.f32.mrf.mxu0
  %v6401 = vadd.f32 0.0, %v6400
  %6402 = vdwg.mxu0
  %6403 = vmatpush.msra.mxu0 0.0
  %6404 = vmatpush.msra.mxu0 0.0
  %6405 = vmatpush.msra.mxu0 0.0
  %6406 = vmatpush.msra.mxu0 0.0
  %6407 = vmatpush.msra.mxu0 0.0
  %6408 = vmatpush.msra.mxu0 0.0
  %6409 = vmatpush.msra.mxu0 0.0
  %6410 = vmatpush.msra.mxu0 0.0
  %6411 = vmatpush.msra.mxu0 0.0
  %6412 = vmatpush.msra.mxu0 0.0
  %6413 = vmatpush.msra.mxu0 0.0
  %6414 = vmatpush.msra.mxu0 0.0
  %6415 = vmatpush.msra.mxu0 0.0
  %6416 = vmatpush.msra.mxu0 0.0
  %6417 = vmatpush.msra.mxu0 0.0
  %6418 = vmatpush.msra.mxu0 %v6240
  %6419 = vmatmul.f32.gmra.mxu0 %v2229
  %v6420 = vpop.f32.mrf.mxu0
  %v6421 = vadd.f32 0.0, %v6420
  %6422 = vmatmul.f32.gmra.mxu0 %v2232
  %v6423 = vpop.f32.mrf.mxu0
  %v6424 = vadd.f32 0.0, %v6423
  %6425 = vdwg.mxu0
  %v6426 = vadd.f32 %v5980, %v6260
  %v6427 = vadd.f32 %v6003, %v6283
  %v6428 = vadd.f32 %v6026, %v6306
  %v6429 = vadd.f32 %v6049, %v6329
  %v6430 = vadd.f32 %v6072, %v6352
  %v6431 = vadd.f32 %v6095, %v6375
  %v6432 = vadd.f32 %v6118, %v6398
  %v6433 = vadd.f32 %v6141, %v6421
  %v6434 = vadd.f32 %v5983, %v6263
  %v6435 = vadd.f32 %v6006, %v6286
  %v6436 = vadd.f32 %v6029, %v6309
  %v6437 = vadd.f32 %v6052, %v6332
  %v6438 = vadd.f32 %v6075, %v6355
  %v6439 = vadd.f32 %v6098, %v6378
  %v6440 = vadd.f32 %v6121, %v6401
  %v6441 = vadd.f32 %v6144, %v6424
  %v6450 = vrot.slane %v6186, 6
  %v6451 = vrot.slane %v6187, 6
  %v6452 = vrot.slane %v6188, 6
  %v6453 = vrot.slane %v6189, 6
  %v6454 = vrot.slane %v6190, 6
  %v6455 = vrot.slane %v6191, 6
  %v6456 = vrot.slane %v6192, 6
  %v6457 = vrot.slane %v6193, 6
  %v6466 = vmul.f32 %v4849, %v6450
  %v6467 = vmul.f32 %v4851, %v6451
  %v6468 = vmul.f32 %v4853, %v6452
  %v6469 = vmul.f32 %v4855, %v6453
  %v6470 = vmul.f32 %v4857, %v6454
  %v6471 = vmul.f32 %v4859, %v6455
  %v6472 = vmul.f32 %v4861, %v6456
  %v6473 = vmul.f32 %v4863, %v6457
  %v6474 = vld [vmem:[#allocation2] sm:$0xc0]
  %v6475 = vld [vmem:[#allocation2 + $0x8] sm:$0xc0]
  %v6476 = vld [vmem:[#allocation2 + $0x10] sm:$0xc0]
  %v6477 = vld [vmem:[#allocation2 + $0x18] sm:$0xc0]
  %v6478 = vld [vmem:[#allocation2 + $0x20] sm:$0xc0]
  %v6479 = vld [vmem:[#allocation2 + $0x28] sm:$0xc0]
  %v6480 = vld [vmem:[#allocation2 + $0x30] sm:$0xc0]
  %v6481 = vld [vmem:[#allocation2 + $0x38] sm:$0xc0]
  %v6482 = vadd.f32 %v6466, %v6474
  %v6483 = vadd.f32 %v6467, %v6475
  %v6484 = vadd.f32 %v6468, %v6476
  %v6485 = vadd.f32 %v6469, %v6477
  %v6486 = vadd.f32 %v6470, %v6478
  %v6487 = vadd.f32 %v6471, %v6479
  %v6488 = vadd.f32 %v6472, %v6480
  %v6489 = vadd.f32 %v6473, %v6481
  %v6490 = vld [vmem:[#allocation3] sm:$0xc0]
  %v6491 = vld [vmem:[#allocation3 + $0x8] sm:$0xc0]
  %v6492 = vld [vmem:[#allocation3 + $0x10] sm:$0xc0]
  %v6493 = vld [vmem:[#allocation3 + $0x18] sm:$0xc0]
  %v6494 = vld [vmem:[#allocation3 + $0x20] sm:$0xc0]
  %v6495 = vld [vmem:[#allocation3 + $0x28] sm:$0xc0]
  %v6496 = vld [vmem:[#allocation3 + $0x30] sm:$0xc0]
  %v6497 = vld [vmem:[#allocation3 + $0x38] sm:$0xc0]
  %v6498 = vmul.f32 %v6482, %v6490
  %v6499 = vmul.f32 %v6483, %v6491
  %v6500 = vmul.f32 %v6484, %v6492
  %v6501 = vmul.f32 %v6485, %v6493
  %v6502 = vmul.f32 %v6486, %v6494
  %v6503 = vmul.f32 %v6487, %v6495
  %v6504 = vmul.f32 %v6488, %v6496
  %v6505 = vmul.f32 %v6489, %v6497
  %v6514 = vrot.slane %v6498, 6
  %v6515 = vrot.slane %v6499, 6
  %v6516 = vrot.slane %v6500, 6
  %v6517 = vrot.slane %v6501, 6
  %v6518 = vrot.slane %v6502, 6
  %v6519 = vrot.slane %v6503, 6
  %v6520 = vrot.slane %v6504, 6
  %v6521 = vrot.slane %v6505, 6
  %v6522 = vsel %vm1733, %v6514, 0
  %v6524 = vsel %vm1733, %v6515, 0
  %v6526 = vsel %vm1733, %v6516, 0
  %v6528 = vsel %vm1733, %v6517, 0
  %v6530 = vsel %vm1733, %v6518, 0
  %v6532 = vsel %vm1733, %v6519, 0
  %v6534 = vsel %vm1733, %v6520, 0
  %v6536 = vsel %vm1733, %v6521, 0
  %6538 = vmatpush.msra.mxu0 0.0
  %6539 = vmatpush.msra.mxu0 0.0
  %6540 = vmatpush.msra.mxu0 0.0
  %6541 = vmatpush.msra.mxu0 0.0
  %6542 = vmatpush.msra.mxu0 0.0
  %6543 = vmatpush.msra.mxu0 0.0
  %6544 = vmatpush.msra.mxu0 0.0
  %6545 = vmatpush.msra.mxu0 0.0
  %6546 = vmatpush.msra.mxu0 0.0
  %6547 = vmatpush.msra.mxu0 0.0
  %6548 = vmatpush.msra.mxu0 0.0
  %6549 = vmatpush.msra.mxu0 0.0
  %6550 = vmatpush.msra.mxu0 0.0
  %6551 = vmatpush.msra.mxu0 0.0
  %6552 = vmatpush.msra.mxu0 0.0
  %6553 = vmatpush.msra.mxu0 %v6522
  %6554 = vmatmul.f32.gmra.mxu0 %v2531
  %v6555 = vpop.f32.mrf.mxu0
  %v6556 = vadd.f32 0.0, %v6555
  %6557 = vmatmul.f32.gmra.mxu0 %v2534
  %v6558 = vpop.f32.mrf.mxu0
  %v6559 = vadd.f32 0.0, %v6558
  %6560 = vdwg.mxu0
  %6561 = vmatpush.msra.mxu0 0.0
  %6562 = vmatpush.msra.mxu0 0.0
  %6563 = vmatpush.msra.mxu0 0.0
  %6564 = vmatpush.msra.mxu0 0.0
  %6565 = vmatpush.msra.mxu0 0.0
  %6566 = vmatpush.msra.mxu0 0.0
  %6567 = vmatpush.msra.mxu0 0.0
  %6568 = vmatpush.msra.mxu0 0.0
  %6569 = vmatpush.msra.mxu0 0.0
  %6570 = vmatpush.msra.mxu0 0.0
  %6571 = vmatpush.msra.mxu0 0.0
  %6572 = vmatpush.msra.mxu0 0.0
  %6573 = vmatpush.msra.mxu0 0.0
  %6574 = vmatpush.msra.mxu0 0.0
  %6575 = vmatpush.msra.mxu0 0.0
  %6576 = vmatpush.msra.mxu0 %v6524
  %6577 = vmatmul.f32.gmra.mxu0 %v2531
  %v6578 = vpop.f32.mrf.mxu0
  %v6579 = vadd.f32 0.0, %v6578
  %6580 = vmatmul.f32.gmra.mxu0 %v2534
  %v6581 = vpop.f32.mrf.mxu0
  %v6582 = vadd.f32 0.0, %v6581
  %6583 = vdwg.mxu0
  %6584 = vmatpush.msra.mxu0 0.0
  %6585 = vmatpush.msra.mxu0 0.0
  %6586 = vmatpush.msra.mxu0 0.0
  %6587 = vmatpush.msra.mxu0 0.0
  %6588 = vmatpush.msra.mxu0 0.0
  %6589 = vmatpush.msra.mxu0 0.0
  %6590 = vmatpush.msra.mxu0 0.0
  %6591 = vmatpush.msra.mxu0 0.0
  %6592 = vmatpush.msra.mxu0 0.0
  %6593 = vmatpush.msra.mxu0 0.0
  %6594 = vmatpush.msra.mxu0 0.0
  %6595 = vmatpush.msra.mxu0 0.0
  %6596 = vmatpush.msra.mxu0 0.0
  %6597 = vmatpush.msra.mxu0 0.0
  %6598 = vmatpush.msra.mxu0 0.0
  %6599 = vmatpush.msra.mxu0 %v6526
  %6600 = vmatmul.f32.gmra.mxu0 %v2531
  %v6601 = vpop.f32.mrf.mxu0
  %v6602 = vadd.f32 0.0, %v6601
  %6603 = vmatmul.f32.gmra.mxu0 %v2534
  %v6604 = vpop.f32.mrf.mxu0
  %v6605 = vadd.f32 0.0, %v6604
  %6606 = vdwg.mxu0
  %6607 = vmatpush.msra.mxu0 0.0
  %6608 = vmatpush.msra.mxu0 0.0
  %6609 = vmatpush.msra.mxu0 0.0
  %6610 = vmatpush.msra.mxu0 0.0
  %6611 = vmatpush.msra.mxu0 0.0
  %6612 = vmatpush.msra.mxu0 0.0
  %6613 = vmatpush.msra.mxu0 0.0
  %6614 = vmatpush.msra.mxu0 0.0
  %6615 = vmatpush.msra.mxu0 0.0
  %6616 = vmatpush.msra.mxu0 0.0
  %6617 = vmatpush.msra.mxu0 0.0
  %6618 = vmatpush.msra.mxu0 0.0
  %6619 = vmatpush.msra.mxu0 0.0
  %6620 = vmatpush.msra.mxu0 0.0
  %6621 = vmatpush.msra.mxu0 0.0
  %6622 = vmatpush.msra.mxu0 %v6528
  %6623 = vmatmul.f32.gmra.mxu0 %v2531
  %v6624 = vpop.f32.mrf.mxu0
  %v6625 = vadd.f32 0.0, %v6624
  %6626 = vmatmul.f32.gmra.mxu0 %v2534
  %v6627 = vpop.f32.mrf.mxu0
  %v6628 = vadd.f32 0.0, %v6627
  %6629 = vdwg.mxu0
  %6630 = vmatpush.msra.mxu0 0.0
  %6631 = vmatpush.msra.mxu0 0.0
  %6632 = vmatpush.msra.mxu0 0.0
  %6633 = vmatpush.msra.mxu0 0.0
  %6634 = vmatpush.msra.mxu0 0.0
  %6635 = vmatpush.msra.mxu0 0.0
  %6636 = vmatpush.msra.mxu0 0.0
  %6637 = vmatpush.msra.mxu0 0.0
  %6638 = vmatpush.msra.mxu0 0.0
  %6639 = vmatpush.msra.mxu0 0.0
  %6640 = vmatpush.msra.mxu0 0.0
  %6641 = vmatpush.msra.mxu0 0.0
  %6642 = vmatpush.msra.mxu0 0.0
  %6643 = vmatpush.msra.mxu0 0.0
  %6644 = vmatpush.msra.mxu0 0.0
  %6645 = vmatpush.msra.mxu0 %v6530
  %6646 = vmatmul.f32.gmra.mxu0 %v2531
  %v6647 = vpop.f32.mrf.mxu0
  %v6648 = vadd.f32 0.0, %v6647
  %6649 = vmatmul.f32.gmra.mxu0 %v2534
  %v6650 = vpop.f32.mrf.mxu0
  %v6651 = vadd.f32 0.0, %v6650
  %6652 = vdwg.mxu0
  %6653 = vmatpush.msra.mxu0 0.0
  %6654 = vmatpush.msra.mxu0 0.0
  %6655 = vmatpush.msra.mxu0 0.0
  %6656 = vmatpush.msra.mxu0 0.0
  %6657 = vmatpush.msra.mxu0 0.0
  %6658 = vmatpush.msra.mxu0 0.0
  %6659 = vmatpush.msra.mxu0 0.0
  %6660 = vmatpush.msra.mxu0 0.0
  %6661 = vmatpush.msra.mxu0 0.0
  %6662 = vmatpush.msra.mxu0 0.0
  %6663 = vmatpush.msra.mxu0 0.0
  %6664 = vmatpush.msra.mxu0 0.0
  %6665 = vmatpush.msra.mxu0 0.0
  %6666 = vmatpush.msra.mxu0 0.0
  %6667 = vmatpush.msra.mxu0 0.0
  %6668 = vmatpush.msra.mxu0 %v6532
  %6669 = vmatmul.f32.gmra.mxu0 %v2531
  %v6670 = vpop.f32.mrf.mxu0
  %v6671 = vadd.f32 0.0, %v6670
  %6672 = vmatmul.f32.gmra.mxu0 %v2534
  %v6673 = vpop.f32.mrf.mxu0
  %v6674 = vadd.f32 0.0, %v6673
  %6675 = vdwg.mxu0
  %6676 = vmatpush.msra.mxu0 0.0
  %6677 = vmatpush.msra.mxu0 0.0
  %6678 = vmatpush.msra.mxu0 0.0
  %6679 = vmatpush.msra.mxu0 0.0
  %6680 = vmatpush.msra.mxu0 0.0
  %6681 = vmatpush.msra.mxu0 0.0
  %6682 = vmatpush.msra.mxu0 0.0
  %6683 = vmatpush.msra.mxu0 0.0
  %6684 = vmatpush.msra.mxu0 0.0
  %6685 = vmatpush.msra.mxu0 0.0
  %6686 = vmatpush.msra.mxu0 0.0
  %6687 = vmatpush.msra.mxu0 0.0
  %6688 = vmatpush.msra.mxu0 0.0
  %6689 = vmatpush.msra.mxu0 0.0
  %6690 = vmatpush.msra.mxu0 0.0
  %6691 = vmatpush.msra.mxu0 %v6534
  %6692 = vmatmul.f32.gmra.mxu0 %v2531
  %v6693 = vpop.f32.mrf.mxu0
  %v6694 = vadd.f32 0.0, %v6693
  %6695 = vmatmul.f32.gmra.mxu0 %v2534
  %v6696 = vpop.f32.mrf.mxu0
  %v6697 = vadd.f32 0.0, %v6696
  %6698 = vdwg.mxu0
  %6699 = vmatpush.msra.mxu0 0.0
  %6700 = vmatpush.msra.mxu0 0.0
  %6701 = vmatpush.msra.mxu0 0.0
  %6702 = vmatpush.msra.mxu0 0.0
  %6703 = vmatpush.msra.mxu0 0.0
  %6704 = vmatpush.msra.mxu0 0.0
  %6705 = vmatpush.msra.mxu0 0.0
  %6706 = vmatpush.msra.mxu0 0.0
  %6707 = vmatpush.msra.mxu0 0.0
  %6708 = vmatpush.msra.mxu0 0.0
  %6709 = vmatpush.msra.mxu0 0.0
  %6710 = vmatpush.msra.mxu0 0.0
  %6711 = vmatpush.msra.mxu0 0.0
  %6712 = vmatpush.msra.mxu0 0.0
  %6713 = vmatpush.msra.mxu0 0.0
  %6714 = vmatpush.msra.mxu0 %v6536
  %6715 = vmatmul.f32.gmra.mxu0 %v2531
  %v6716 = vpop.f32.mrf.mxu0
  %v6717 = vadd.f32 0.0, %v6716
  %6718 = vmatmul.f32.gmra.mxu0 %v2534
  %v6719 = vpop.f32.mrf.mxu0
  %v6720 = vadd.f32 0.0, %v6719
  %6721 = vdwg.mxu0
  %v6722 = vadd.f32 %v6426, %v6556
  %v6723 = vadd.f32 %v6427, %v6579
  %v6724 = vadd.f32 %v6428, %v6602
  %v6725 = vadd.f32 %v6429, %v6625
  %v6726 = vadd.f32 %v6430, %v6648
  %v6727 = vadd.f32 %v6431, %v6671
  %v6728 = vadd.f32 %v6432, %v6694
  %v6729 = vadd.f32 %v6433, %v6717
  %v6730 = vadd.f32 %v6434, %v6559
  %v6731 = vadd.f32 %v6435, %v6582
  %v6732 = vadd.f32 %v6436, %v6605
  %v6733 = vadd.f32 %v6437, %v6628
  %v6734 = vadd.f32 %v6438, %v6651
  %v6735 = vadd.f32 %v6439, %v6674
  %v6736 = vadd.f32 %v6440, %v6697
  %v6737 = vadd.f32 %v6441, %v6720
  %v6746 = vrot.slane %v6482, 6
  %v6747 = vrot.slane %v6483, 6
  %v6748 = vrot.slane %v6484, 6
  %v6749 = vrot.slane %v6485, 6
  %v6750 = vrot.slane %v6486, 6
  %v6751 = vrot.slane %v6487, 6
  %v6752 = vrot.slane %v6488, 6
  %v6753 = vrot.slane %v6489, 6
  %v6762 = vmul.f32 %v4865, %v6746
  %v6763 = vmul.f32 %v4867, %v6747
  %v6764 = vmul.f32 %v4869, %v6748
  %v6765 = vmul.f32 %v4871, %v6749
  %v6766 = vmul.f32 %v4873, %v6750
  %v6767 = vmul.f32 %v4875, %v6751
  %v6768 = vmul.f32 %v4877, %v6752
  %v6769 = vmul.f32 %v4879, %v6753
  %v6770 = vld [vmem:[#allocation2 + $0x40] sm:$0x3]
  %v6771 = vld [vmem:[#allocation2 + $0x48] sm:$0x3]
  %v6772 = vld [vmem:[#allocation2 + $0x50] sm:$0x3]
  %v6773 = vld [vmem:[#allocation2 + $0x58] sm:$0x3]
  %v6774 = vld [vmem:[#allocation2 + $0x60] sm:$0x3]
  %v6775 = vld [vmem:[#allocation2 + $0x68] sm:$0x3]
  %v6776 = vld [vmem:[#allocation2 + $0x70] sm:$0x3]
  %v6777 = vld [vmem:[#allocation2 + $0x78] sm:$0x3]
  %v6778 = vadd.f32 %v6762, %v6770
  %v6779 = vadd.f32 %v6763, %v6771
  %v6780 = vadd.f32 %v6764, %v6772
  %v6781 = vadd.f32 %v6765, %v6773
  %v6782 = vadd.f32 %v6766, %v6774
  %v6783 = vadd.f32 %v6767, %v6775
  %v6784 = vadd.f32 %v6768, %v6776
  %v6785 = vadd.f32 %v6769, %v6777
  %v6786 = vld [vmem:[#allocation3 + $0x40] sm:$0x3]
  %v6787 = vld [vmem:[#allocation3 + $0x48] sm:$0x3]
  %v6788 = vld [vmem:[#allocation3 + $0x50] sm:$0x3]
  %v6789 = vld [vmem:[#allocation3 + $0x58] sm:$0x3]
  %v6790 = vld [vmem:[#allocation3 + $0x60] sm:$0x3]
  %v6791 = vld [vmem:[#allocation3 + $0x68] sm:$0x3]
  %v6792 = vld [vmem:[#allocation3 + $0x70] sm:$0x3]
  %v6793 = vld [vmem:[#allocation3 + $0x78] sm:$0x3]
  %v6794 = vmul.f32 %v6778, %v6786
  %v6795 = vmul.f32 %v6779, %v6787
  %v6796 = vmul.f32 %v6780, %v6788
  %v6797 = vmul.f32 %v6781, %v6789
  %v6798 = vmul.f32 %v6782, %v6790
  %v6799 = vmul.f32 %v6783, %v6791
  %v6800 = vmul.f32 %v6784, %v6792
  %v6801 = vmul.f32 %v6785, %v6793
  %v6803 = vsel %vm1733, %v6794, 0
  %v6806 = vsel %vm1733, %v6795, 0
  %v6809 = vsel %vm1733, %v6796, 0
  %v6812 = vsel %vm1733, %v6797, 0
  %v6815 = vsel %vm1733, %v6798, 0
  %v6818 = vsel %vm1733, %v6799, 0
  %v6821 = vsel %vm1733, %v6800, 0
  %v6824 = vsel %vm1733, %v6801, 0
  %6826 = vmatpush.msra.mxu0 0.0
  %6827 = vmatpush.msra.mxu0 0.0
  %6828 = vmatpush.msra.mxu0 0.0
  %6829 = vmatpush.msra.mxu0 0.0
  %6830 = vmatpush.msra.mxu0 0.0
  %6831 = vmatpush.msra.mxu0 0.0
  %6832 = vmatpush.msra.mxu0 0.0
  %6833 = vmatpush.msra.mxu0 0.0
  %6834 = vmatpush.msra.mxu0 0.0
  %6835 = vmatpush.msra.mxu0 0.0
  %6836 = vmatpush.msra.mxu0 0.0
  %6837 = vmatpush.msra.mxu0 0.0
  %6838 = vmatpush.msra.mxu0 0.0
  %6839 = vmatpush.msra.mxu0 0.0
  %6840 = vmatpush.msra.mxu0 0.0
  %6841 = vmatpush.msra.mxu0 %v6803
  %6842 = vmatmul.f32.gmra.mxu0 %v2817
  %v6843 = vpop.f32.mrf.mxu0
  %v6844 = vadd.f32 0.0, %v6843
  %6845 = vmatmul.f32.gmra.mxu0 %v2820
  %v6846 = vpop.f32.mrf.mxu0
  %v6847 = vadd.f32 0.0, %v6846
  %6848 = vdwg.mxu0
  %6849 = vmatpush.msra.mxu0 0.0
  %6850 = vmatpush.msra.mxu0 0.0
  %6851 = vmatpush.msra.mxu0 0.0
  %6852 = vmatpush.msra.mxu0 0.0
  %6853 = vmatpush.msra.mxu0 0.0
  %6854 = vmatpush.msra.mxu0 0.0
  %6855 = vmatpush.msra.mxu0 0.0
  %6856 = vmatpush.msra.mxu0 0.0
  %6857 = vmatpush.msra.mxu0 0.0
  %6858 = vmatpush.msra.mxu0 0.0
  %6859 = vmatpush.msra.mxu0 0.0
  %6860 = vmatpush.msra.mxu0 0.0
  %6861 = vmatpush.msra.mxu0 0.0
  %6862 = vmatpush.msra.mxu0 0.0
  %6863 = vmatpush.msra.mxu0 0.0
  %6864 = vmatpush.msra.mxu0 %v6806
  %6865 = vmatmul.f32.gmra.mxu0 %v2817
  %v6866 = vpop.f32.mrf.mxu0
  %v6867 = vadd.f32 0.0, %v6866
  %6868 = vmatmul.f32.gmra.mxu0 %v2820
  %v6869 = vpop.f32.mrf.mxu0
  %v6870 = vadd.f32 0.0, %v6869
  %6871 = vdwg.mxu0
  %6872 = vmatpush.msra.mxu0 0.0
  %6873 = vmatpush.msra.mxu0 0.0
  %6874 = vmatpush.msra.mxu0 0.0
  %6875 = vmatpush.msra.mxu0 0.0
  %6876 = vmatpush.msra.mxu0 0.0
  %6877 = vmatpush.msra.mxu0 0.0
  %6878 = vmatpush.msra.mxu0 0.0
  %6879 = vmatpush.msra.mxu0 0.0
  %6880 = vmatpush.msra.mxu0 0.0
  %6881 = vmatpush.msra.mxu0 0.0
  %6882 = vmatpush.msra.mxu0 0.0
  %6883 = vmatpush.msra.mxu0 0.0
  %6884 = vmatpush.msra.mxu0 0.0
  %6885 = vmatpush.msra.mxu0 0.0
  %6886 = vmatpush.msra.mxu0 0.0
  %6887 = vmatpush.msra.mxu0 %v6809
  %6888 = vmatmul.f32.gmra.mxu0 %v2817
  %v6889 = vpop.f32.mrf.mxu0
  %v6890 = vadd.f32 0.0, %v6889
  %6891 = vmatmul.f32.gmra.mxu0 %v2820
  %v6892 = vpop.f32.mrf.mxu0
  %v6893 = vadd.f32 0.0, %v6892
  %6894 = vdwg.mxu0
  %6895 = vmatpush.msra.mxu0 0.0
  %6896 = vmatpush.msra.mxu0 0.0
  %6897 = vmatpush.msra.mxu0 0.0
  %6898 = vmatpush.msra.mxu0 0.0
  %6899 = vmatpush.msra.mxu0 0.0
  %6900 = vmatpush.msra.mxu0 0.0
  %6901 = vmatpush.msra.mxu0 0.0
  %6902 = vmatpush.msra.mxu0 0.0
  %6903 = vmatpush.msra.mxu0 0.0
  %6904 = vmatpush.msra.mxu0 0.0
  %6905 = vmatpush.msra.mxu0 0.0
  %6906 = vmatpush.msra.mxu0 0.0
  %6907 = vmatpush.msra.mxu0 0.0
  %6908 = vmatpush.msra.mxu0 0.0
  %6909 = vmatpush.msra.mxu0 0.0
  %6910 = vmatpush.msra.mxu0 %v6812
  %6911 = vmatmul.f32.gmra.mxu0 %v2817
  %v6912 = vpop.f32.mrf.mxu0
  %v6913 = vadd.f32 0.0, %v6912
  %6914 = vmatmul.f32.gmra.mxu0 %v2820
  %v6915 = vpop.f32.mrf.mxu0
  %v6916 = vadd.f32 0.0, %v6915
  %6917 = vdwg.mxu0
  %6918 = vmatpush.msra.mxu0 0.0
  %6919 = vmatpush.msra.mxu0 0.0
  %6920 = vmatpush.msra.mxu0 0.0
  %6921 = vmatpush.msra.mxu0 0.0
  %6922 = vmatpush.msra.mxu0 0.0
  %6923 = vmatpush.msra.mxu0 0.0
  %6924 = vmatpush.msra.mxu0 0.0
  %6925 = vmatpush.msra.mxu0 0.0
  %6926 = vmatpush.msra.mxu0 0.0
  %6927 = vmatpush.msra.mxu0 0.0
  %6928 = vmatpush.msra.mxu0 0.0
  %6929 = vmatpush.msra.mxu0 0.0
  %6930 = vmatpush.msra.mxu0 0.0
  %6931 = vmatpush.msra.mxu0 0.0
  %6932 = vmatpush.msra.mxu0 0.0
  %6933 = vmatpush.msra.mxu0 %v6815
  %6934 = vmatmul.f32.gmra.mxu0 %v2817
  %v6935 = vpop.f32.mrf.mxu0
  %v6936 = vadd.f32 0.0, %v6935
  %6937 = vmatmul.f32.gmra.mxu0 %v2820
  %v6938 = vpop.f32.mrf.mxu0
  %v6939 = vadd.f32 0.0, %v6938
  %6940 = vdwg.mxu0
  %6941 = vmatpush.msra.mxu0 0.0
  %6942 = vmatpush.msra.mxu0 0.0
  %6943 = vmatpush.msra.mxu0 0.0
  %6944 = vmatpush.msra.mxu0 0.0
  %6945 = vmatpush.msra.mxu0 0.0
  %6946 = vmatpush.msra.mxu0 0.0
  %6947 = vmatpush.msra.mxu0 0.0
  %6948 = vmatpush.msra.mxu0 0.0
  %6949 = vmatpush.msra.mxu0 0.0
  %6950 = vmatpush.msra.mxu0 0.0
  %6951 = vmatpush.msra.mxu0 0.0
  %6952 = vmatpush.msra.mxu0 0.0
  %6953 = vmatpush.msra.mxu0 0.0
  %6954 = vmatpush.msra.mxu0 0.0
  %6955 = vmatpush.msra.mxu0 0.0
  %6956 = vmatpush.msra.mxu0 %v6818
  %6957 = vmatmul.f32.gmra.mxu0 %v2817
  %v6958 = vpop.f32.mrf.mxu0
  %v6959 = vadd.f32 0.0, %v6958
  %6960 = vmatmul.f32.gmra.mxu0 %v2820
  %v6961 = vpop.f32.mrf.mxu0
  %v6962 = vadd.f32 0.0, %v6961
  %6963 = vdwg.mxu0
  %6964 = vmatpush.msra.mxu0 0.0
  %6965 = vmatpush.msra.mxu0 0.0
  %6966 = vmatpush.msra.mxu0 0.0
  %6967 = vmatpush.msra.mxu0 0.0
  %6968 = vmatpush.msra.mxu0 0.0
  %6969 = vmatpush.msra.mxu0 0.0
  %6970 = vmatpush.msra.mxu0 0.0
  %6971 = vmatpush.msra.mxu0 0.0
  %6972 = vmatpush.msra.mxu0 0.0
  %6973 = vmatpush.msra.mxu0 0.0
  %6974 = vmatpush.msra.mxu0 0.0
  %6975 = vmatpush.msra.mxu0 0.0
  %6976 = vmatpush.msra.mxu0 0.0
  %6977 = vmatpush.msra.mxu0 0.0
  %6978 = vmatpush.msra.mxu0 0.0
  %6979 = vmatpush.msra.mxu0 %v6821
  %6980 = vmatmul.f32.gmra.mxu0 %v2817
  %v6981 = vpop.f32.mrf.mxu0
  %v6982 = vadd.f32 0.0, %v6981
  %6983 = vmatmul.f32.gmra.mxu0 %v2820
  %v6984 = vpop.f32.mrf.mxu0
  %v6985 = vadd.f32 0.0, %v6984
  %6986 = vdwg.mxu0
  %6987 = vmatpush.msra.mxu0 0.0
  %6988 = vmatpush.msra.mxu0 0.0
  %6989 = vmatpush.msra.mxu0 0.0
  %6990 = vmatpush.msra.mxu0 0.0
  %6991 = vmatpush.msra.mxu0 0.0
  %6992 = vmatpush.msra.mxu0 0.0
  %6993 = vmatpush.msra.mxu0 0.0
  %6994 = vmatpush.msra.mxu0 0.0
  %6995 = vmatpush.msra.mxu0 0.0
  %6996 = vmatpush.msra.mxu0 0.0
  %6997 = vmatpush.msra.mxu0 0.0
  %6998 = vmatpush.msra.mxu0 0.0
  %6999 = vmatpush.msra.mxu0 0.0
  %7000 = vmatpush.msra.mxu0 0.0
  %7001 = vmatpush.msra.mxu0 0.0
  %7002 = vmatpush.msra.mxu0 %v6824
  %7003 = vmatmul.f32.gmra.mxu0 %v2817
  %v7004 = vpop.f32.mrf.mxu0
  %v7005 = vadd.f32 0.0, %v7004
  %7006 = vmatmul.f32.gmra.mxu0 %v2820
  %v7007 = vpop.f32.mrf.mxu0
  %v7008 = vadd.f32 0.0, %v7007
  %7009 = vdwg.mxu0
  %v7010 = vadd.f32 %v6722, %v6844
  %v7011 = vadd.f32 %v6723, %v6867
  %v7012 = vadd.f32 %v6724, %v6890
  %v7013 = vadd.f32 %v6725, %v6913
  %v7014 = vadd.f32 %v6726, %v6936
  %v7015 = vadd.f32 %v6727, %v6959
  %v7016 = vadd.f32 %v6728, %v6982
  %v7017 = vadd.f32 %v6729, %v7005
  %v7018 = vadd.f32 %v6730, %v6847
  %v7019 = vadd.f32 %v6731, %v6870
  %v7020 = vadd.f32 %v6732, %v6893
  %v7021 = vadd.f32 %v6733, %v6916
  %v7022 = vadd.f32 %v6734, %v6939
  %v7023 = vadd.f32 %v6735, %v6962
  %v7024 = vadd.f32 %v6736, %v6985
  %v7025 = vadd.f32 %v6737, %v7008
  %v7034 = vrot.slane %v6778, 6
  %v7035 = vrot.slane %v6779, 6
  %v7036 = vrot.slane %v6780, 6
  %v7037 = vrot.slane %v6781, 6
  %v7038 = vrot.slane %v6782, 6
  %v7039 = vrot.slane %v6783, 6
  %v7040 = vrot.slane %v6784, 6
  %v7041 = vrot.slane %v6785, 6
  %v7050 = vmul.f32 %v4865, %v7034
  %v7051 = vmul.f32 %v4867, %v7035
  %v7052 = vmul.f32 %v4869, %v7036
  %v7053 = vmul.f32 %v4871, %v7037
  %v7054 = vmul.f32 %v4873, %v7038
  %v7055 = vmul.f32 %v4875, %v7039
  %v7056 = vmul.f32 %v4877, %v7040
  %v7057 = vmul.f32 %v4879, %v7041
  %v7058 = vld [vmem:[#allocation2 + $0x40] sm:$0xc]
  %v7059 = vld [vmem:[#allocation2 + $0x48] sm:$0xc]
  %v7060 = vld [vmem:[#allocation2 + $0x50] sm:$0xc]
  %v7061 = vld [vmem:[#allocation2 + $0x58] sm:$0xc]
  %v7062 = vld [vmem:[#allocation2 + $0x60] sm:$0xc]
  %v7063 = vld [vmem:[#allocation2 + $0x68] sm:$0xc]
  %v7064 = vld [vmem:[#allocation2 + $0x70] sm:$0xc]
  %v7065 = vld [vmem:[#allocation2 + $0x78] sm:$0xc]
  %v7066 = vadd.f32 %v7050, %v7058
  %v7067 = vadd.f32 %v7051, %v7059
  %v7068 = vadd.f32 %v7052, %v7060
  %v7069 = vadd.f32 %v7053, %v7061
  %v7070 = vadd.f32 %v7054, %v7062
  %v7071 = vadd.f32 %v7055, %v7063
  %v7072 = vadd.f32 %v7056, %v7064
  %v7073 = vadd.f32 %v7057, %v7065
  %v7074 = vld [vmem:[#allocation3 + $0x40] sm:$0xc]
  %v7075 = vld [vmem:[#allocation3 + $0x48] sm:$0xc]
  %v7076 = vld [vmem:[#allocation3 + $0x50] sm:$0xc]
  %v7077 = vld [vmem:[#allocation3 + $0x58] sm:$0xc]
  %v7078 = vld [vmem:[#allocation3 + $0x60] sm:$0xc]
  %v7079 = vld [vmem:[#allocation3 + $0x68] sm:$0xc]
  %v7080 = vld [vmem:[#allocation3 + $0x70] sm:$0xc]
  %v7081 = vld [vmem:[#allocation3 + $0x78] sm:$0xc]
  %v7082 = vmul.f32 %v7066, %v7074
  %v7083 = vmul.f32 %v7067, %v7075
  %v7084 = vmul.f32 %v7068, %v7076
  %v7085 = vmul.f32 %v7069, %v7077
  %v7086 = vmul.f32 %v7070, %v7078
  %v7087 = vmul.f32 %v7071, %v7079
  %v7088 = vmul.f32 %v7072, %v7080
  %v7089 = vmul.f32 %v7073, %v7081
  %v7098 = vrot.slane %v7082, 2
  %v7099 = vrot.slane %v7083, 2
  %v7100 = vrot.slane %v7084, 2
  %v7101 = vrot.slane %v7085, 2
  %v7102 = vrot.slane %v7086, 2
  %v7103 = vrot.slane %v7087, 2
  %v7104 = vrot.slane %v7088, 2
  %v7105 = vrot.slane %v7089, 2
  %v7106 = vsel %vm1733, %v7098, 0
  %v7108 = vsel %vm1733, %v7099, 0
  %v7110 = vsel %vm1733, %v7100, 0
  %v7112 = vsel %vm1733, %v7101, 0
  %v7114 = vsel %vm1733, %v7102, 0
  %v7116 = vsel %vm1733, %v7103, 0
  %v7118 = vsel %vm1733, %v7104, 0
  %v7120 = vsel %vm1733, %v7105, 0
  %7122 = vmatpush.msra.mxu0 0.0
  %7123 = vmatpush.msra.mxu0 0.0
  %7124 = vmatpush.msra.mxu0 0.0
  %7125 = vmatpush.msra.mxu0 0.0
  %7126 = vmatpush.msra.mxu0 0.0
  %7127 = vmatpush.msra.mxu0 0.0
  %7128 = vmatpush.msra.mxu0 0.0
  %7129 = vmatpush.msra.mxu0 0.0
  %7130 = vmatpush.msra.mxu0 0.0
  %7131 = vmatpush.msra.mxu0 0.0
  %7132 = vmatpush.msra.mxu0 0.0
  %7133 = vmatpush.msra.mxu0 0.0
  %7134 = vmatpush.msra.mxu0 0.0
  %7135 = vmatpush.msra.mxu0 0.0
  %7136 = vmatpush.msra.mxu0 0.0
  %7137 = vmatpush.msra.mxu0 %v7106
  %7138 = vmatmul.f32.gmra.mxu0 %v3127
  %v7139 = vpop.f32.mrf.mxu0
  %v7140 = vadd.f32 0.0, %v7139
  %7141 = vmatmul.f32.gmra.mxu0 %v3130
  %v7142 = vpop.f32.mrf.mxu0
  %v7143 = vadd.f32 0.0, %v7142
  %7144 = vdwg.mxu0
  %7145 = vmatpush.msra.mxu0 0.0
  %7146 = vmatpush.msra.mxu0 0.0
  %7147 = vmatpush.msra.mxu0 0.0
  %7148 = vmatpush.msra.mxu0 0.0
  %7149 = vmatpush.msra.mxu0 0.0
  %7150 = vmatpush.msra.mxu0 0.0
  %7151 = vmatpush.msra.mxu0 0.0
  %7152 = vmatpush.msra.mxu0 0.0
  %7153 = vmatpush.msra.mxu0 0.0
  %7154 = vmatpush.msra.mxu0 0.0
  %7155 = vmatpush.msra.mxu0 0.0
  %7156 = vmatpush.msra.mxu0 0.0
  %7157 = vmatpush.msra.mxu0 0.0
  %7158 = vmatpush.msra.mxu0 0.0
  %7159 = vmatpush.msra.mxu0 0.0
  %7160 = vmatpush.msra.mxu0 %v7108
  %7161 = vmatmul.f32.gmra.mxu0 %v3127
  %v7162 = vpop.f32.mrf.mxu0
  %v7163 = vadd.f32 0.0, %v7162
  %7164 = vmatmul.f32.gmra.mxu0 %v3130
  %v7165 = vpop.f32.mrf.mxu0
  %v7166 = vadd.f32 0.0, %v7165
  %7167 = vdwg.mxu0
  %7168 = vmatpush.msra.mxu0 0.0
  %7169 = vmatpush.msra.mxu0 0.0
  %7170 = vmatpush.msra.mxu0 0.0
  %7171 = vmatpush.msra.mxu0 0.0
  %7172 = vmatpush.msra.mxu0 0.0
  %7173 = vmatpush.msra.mxu0 0.0
  %7174 = vmatpush.msra.mxu0 0.0
  %7175 = vmatpush.msra.mxu0 0.0
  %7176 = vmatpush.msra.mxu0 0.0
  %7177 = vmatpush.msra.mxu0 0.0
  %7178 = vmatpush.msra.mxu0 0.0
  %7179 = vmatpush.msra.mxu0 0.0
  %7180 = vmatpush.msra.mxu0 0.0
  %7181 = vmatpush.msra.mxu0 0.0
  %7182 = vmatpush.msra.mxu0 0.0
  %7183 = vmatpush.msra.mxu0 %v7110
  %7184 = vmatmul.f32.gmra.mxu0 %v3127
  %v7185 = vpop.f32.mrf.mxu0
  %v7186 = vadd.f32 0.0, %v7185
  %7187 = vmatmul.f32.gmra.mxu0 %v3130
  %v7188 = vpop.f32.mrf.mxu0
  %v7189 = vadd.f32 0.0, %v7188
  %7190 = vdwg.mxu0
  %7191 = vmatpush.msra.mxu0 0.0
  %7192 = vmatpush.msra.mxu0 0.0
  %7193 = vmatpush.msra.mxu0 0.0
  %7194 = vmatpush.msra.mxu0 0.0
  %7195 = vmatpush.msra.mxu0 0.0
  %7196 = vmatpush.msra.mxu0 0.0
  %7197 = vmatpush.msra.mxu0 0.0
  %7198 = vmatpush.msra.mxu0 0.0
  %7199 = vmatpush.msra.mxu0 0.0
  %7200 = vmatpush.msra.mxu0 0.0
  %7201 = vmatpush.msra.mxu0 0.0
  %7202 = vmatpush.msra.mxu0 0.0
  %7203 = vmatpush.msra.mxu0 0.0
  %7204 = vmatpush.msra.mxu0 0.0
  %7205 = vmatpush.msra.mxu0 0.0
  %7206 = vmatpush.msra.mxu0 %v7112
  %7207 = vmatmul.f32.gmra.mxu0 %v3127
  %v7208 = vpop.f32.mrf.mxu0
  %v7209 = vadd.f32 0.0, %v7208
  %7210 = vmatmul.f32.gmra.mxu0 %v3130
  %v7211 = vpop.f32.mrf.mxu0
  %v7212 = vadd.f32 0.0, %v7211
  %7213 = vdwg.mxu0
  %7214 = vmatpush.msra.mxu0 0.0
  %7215 = vmatpush.msra.mxu0 0.0
  %7216 = vmatpush.msra.mxu0 0.0
  %7217 = vmatpush.msra.mxu0 0.0
  %7218 = vmatpush.msra.mxu0 0.0
  %7219 = vmatpush.msra.mxu0 0.0
  %7220 = vmatpush.msra.mxu0 0.0
  %7221 = vmatpush.msra.mxu0 0.0
  %7222 = vmatpush.msra.mxu0 0.0
  %7223 = vmatpush.msra.mxu0 0.0
  %7224 = vmatpush.msra.mxu0 0.0
  %7225 = vmatpush.msra.mxu0 0.0
  %7226 = vmatpush.msra.mxu0 0.0
  %7227 = vmatpush.msra.mxu0 0.0
  %7228 = vmatpush.msra.mxu0 0.0
  %7229 = vmatpush.msra.mxu0 %v7114
  %7230 = vmatmul.f32.gmra.mxu0 %v3127
  %v7231 = vpop.f32.mrf.mxu0
  %v7232 = vadd.f32 0.0, %v7231
  %7233 = vmatmul.f32.gmra.mxu0 %v3130
  %v7234 = vpop.f32.mrf.mxu0
  %v7235 = vadd.f32 0.0, %v7234
  %7236 = vdwg.mxu0
  %7237 = vmatpush.msra.mxu0 0.0
  %7238 = vmatpush.msra.mxu0 0.0
  %7239 = vmatpush.msra.mxu0 0.0
  %7240 = vmatpush.msra.mxu0 0.0
  %7241 = vmatpush.msra.mxu0 0.0
  %7242 = vmatpush.msra.mxu0 0.0
  %7243 = vmatpush.msra.mxu0 0.0
  %7244 = vmatpush.msra.mxu0 0.0
  %7245 = vmatpush.msra.mxu0 0.0
  %7246 = vmatpush.msra.mxu0 0.0
  %7247 = vmatpush.msra.mxu0 0.0
  %7248 = vmatpush.msra.mxu0 0.0
  %7249 = vmatpush.msra.mxu0 0.0
  %7250 = vmatpush.msra.mxu0 0.0
  %7251 = vmatpush.msra.mxu0 0.0
  %7252 = vmatpush.msra.mxu0 %v7116
  %7253 = vmatmul.f32.gmra.mxu0 %v3127
  %v7254 = vpop.f32.mrf.mxu0
  %v7255 = vadd.f32 0.0, %v7254
  %7256 = vmatmul.f32.gmra.mxu0 %v3130
  %v7257 = vpop.f32.mrf.mxu0
  %v7258 = vadd.f32 0.0, %v7257
  %7259 = vdwg.mxu0
  %7260 = vmatpush.msra.mxu0 0.0
  %7261 = vmatpush.msra.mxu0 0.0
  %7262 = vmatpush.msra.mxu0 0.0
  %7263 = vmatpush.msra.mxu0 0.0
  %7264 = vmatpush.msra.mxu0 0.0
  %7265 = vmatpush.msra.mxu0 0.0
  %7266 = vmatpush.msra.mxu0 0.0
  %7267 = vmatpush.msra.mxu0 0.0
  %7268 = vmatpush.msra.mxu0 0.0
  %7269 = vmatpush.msra.mxu0 0.0
  %7270 = vmatpush.msra.mxu0 0.0
  %7271 = vmatpush.msra.mxu0 0.0
  %7272 = vmatpush.msra.mxu0 0.0
  %7273 = vmatpush.msra.mxu0 0.0
  %7274 = vmatpush.msra.mxu0 0.0
  %7275 = vmatpush.msra.mxu0 %v7118
  %7276 = vmatmul.f32.gmra.mxu0 %v3127
  %v7277 = vpop.f32.mrf.mxu0
  %v7278 = vadd.f32 0.0, %v7277
  %7279 = vmatmul.f32.gmra.mxu0 %v3130
  %v7280 = vpop.f32.mrf.mxu0
  %v7281 = vadd.f32 0.0, %v7280
  %7282 = vdwg.mxu0
  %7283 = vmatpush.msra.mxu0 0.0
  %7284 = vmatpush.msra.mxu0 0.0
  %7285 = vmatpush.msra.mxu0 0.0
  %7286 = vmatpush.msra.mxu0 0.0
  %7287 = vmatpush.msra.mxu0 0.0
  %7288 = vmatpush.msra.mxu0 0.0
  %7289 = vmatpush.msra.mxu0 0.0
  %7290 = vmatpush.msra.mxu0 0.0
  %7291 = vmatpush.msra.mxu0 0.0
  %7292 = vmatpush.msra.mxu0 0.0
  %7293 = vmatpush.msra.mxu0 0.0
  %7294 = vmatpush.msra.mxu0 0.0
  %7295 = vmatpush.msra.mxu0 0.0
  %7296 = vmatpush.msra.mxu0 0.0
  %7297 = vmatpush.msra.mxu0 0.0
  %7298 = vmatpush.msra.mxu0 %v7120
  %7299 = vmatmul.f32.gmra.mxu0 %v3127
  %v7300 = vpop.f32.mrf.mxu0
  %v7301 = vadd.f32 0.0, %v7300
  %7302 = vmatmul.f32.gmra.mxu0 %v3130
  %v7303 = vpop.f32.mrf.mxu0
  %v7304 = vadd.f32 0.0, %v7303
  %7305 = vdwg.mxu0
  %v7306 = vadd.f32 %v7010, %v7140
  %v7307 = vadd.f32 %v7011, %v7163
  %v7308 = vadd.f32 %v7012, %v7186
  %v7309 = vadd.f32 %v7013, %v7209
  %v7310 = vadd.f32 %v7014, %v7232
  %v7311 = vadd.f32 %v7015, %v7255
  %v7312 = vadd.f32 %v7016, %v7278
  %v7313 = vadd.f32 %v7017, %v7301
  %v7314 = vadd.f32 %v7018, %v7143
  %v7315 = vadd.f32 %v7019, %v7166
  %v7316 = vadd.f32 %v7020, %v7189
  %v7317 = vadd.f32 %v7021, %v7212
  %v7318 = vadd.f32 %v7022, %v7235
  %v7319 = vadd.f32 %v7023, %v7258
  %v7320 = vadd.f32 %v7024, %v7281
  %v7321 = vadd.f32 %v7025, %v7304
  %v7330 = vrot.slane %v7066, 6
  %v7331 = vrot.slane %v7067, 6
  %v7332 = vrot.slane %v7068, 6
  %v7333 = vrot.slane %v7069, 6
  %v7334 = vrot.slane %v7070, 6
  %v7335 = vrot.slane %v7071, 6
  %v7336 = vrot.slane %v7072, 6
  %v7337 = vrot.slane %v7073, 6
  %v7346 = vmul.f32 %v4865, %v7330
  %v7347 = vmul.f32 %v4867, %v7331
  %v7348 = vmul.f32 %v4869, %v7332
  %v7349 = vmul.f32 %v4871, %v7333
  %v7350 = vmul.f32 %v4873, %v7334
  %v7351 = vmul.f32 %v4875, %v7335
  %v7352 = vmul.f32 %v4877, %v7336
  %v7353 = vmul.f32 %v4879, %v7337
  %v7354 = vld [vmem:[#allocation2 + $0x40] sm:$0x30]
  %v7355 = vld [vmem:[#allocation2 + $0x48] sm:$0x30]
  %v7356 = vld [vmem:[#allocation2 + $0x50] sm:$0x30]
  %v7357 = vld [vmem:[#allocation2 + $0x58] sm:$0x30]
  %v7358 = vld [vmem:[#allocation2 + $0x60] sm:$0x30]
  %v7359 = vld [vmem:[#allocation2 + $0x68] sm:$0x30]
  %v7360 = vld [vmem:[#allocation2 + $0x70] sm:$0x30]
  %v7361 = vld [vmem:[#allocation2 + $0x78] sm:$0x30]
  %v7362 = vadd.f32 %v7346, %v7354
  %v7363 = vadd.f32 %v7347, %v7355
  %v7364 = vadd.f32 %v7348, %v7356
  %v7365 = vadd.f32 %v7349, %v7357
  %v7366 = vadd.f32 %v7350, %v7358
  %v7367 = vadd.f32 %v7351, %v7359
  %v7368 = vadd.f32 %v7352, %v7360
  %v7369 = vadd.f32 %v7353, %v7361
  %v7370 = vld [vmem:[#allocation3 + $0x40] sm:$0x30]
  %v7371 = vld [vmem:[#allocation3 + $0x48] sm:$0x30]
  %v7372 = vld [vmem:[#allocation3 + $0x50] sm:$0x30]
  %v7373 = vld [vmem:[#allocation3 + $0x58] sm:$0x30]
  %v7374 = vld [vmem:[#allocation3 + $0x60] sm:$0x30]
  %v7375 = vld [vmem:[#allocation3 + $0x68] sm:$0x30]
  %v7376 = vld [vmem:[#allocation3 + $0x70] sm:$0x30]
  %v7377 = vld [vmem:[#allocation3 + $0x78] sm:$0x30]
  %v7378 = vmul.f32 %v7362, %v7370
  %v7379 = vmul.f32 %v7363, %v7371
  %v7380 = vmul.f32 %v7364, %v7372
  %v7381 = vmul.f32 %v7365, %v7373
  %v7382 = vmul.f32 %v7366, %v7374
  %v7383 = vmul.f32 %v7367, %v7375
  %v7384 = vmul.f32 %v7368, %v7376
  %v7385 = vmul.f32 %v7369, %v7377
  %v7394 = vrot.slane %v7378, 4
  %v7395 = vrot.slane %v7379, 4
  %v7396 = vrot.slane %v7380, 4
  %v7397 = vrot.slane %v7381, 4
  %v7398 = vrot.slane %v7382, 4
  %v7399 = vrot.slane %v7383, 4
  %v7400 = vrot.slane %v7384, 4
  %v7401 = vrot.slane %v7385, 4
  %v7402 = vsel %vm1733, %v7394, 0
  %v7404 = vsel %vm1733, %v7395, 0
  %v7406 = vsel %vm1733, %v7396, 0
  %v7408 = vsel %vm1733, %v7397, 0
  %v7410 = vsel %vm1733, %v7398, 0
  %v7412 = vsel %vm1733, %v7399, 0
  %v7414 = vsel %vm1733, %v7400, 0
  %v7416 = vsel %vm1733, %v7401, 0
  %7418 = vmatpush.msra.mxu0 0.0
  %7419 = vmatpush.msra.mxu0 0.0
  %7420 = vmatpush.msra.mxu0 0.0
  %7421 = vmatpush.msra.mxu0 0.0
  %7422 = vmatpush.msra.mxu0 0.0
  %7423 = vmatpush.msra.mxu0 0.0
  %7424 = vmatpush.msra.mxu0 0.0
  %7425 = vmatpush.msra.mxu0 0.0
  %7426 = vmatpush.msra.mxu0 0.0
  %7427 = vmatpush.msra.mxu0 0.0
  %7428 = vmatpush.msra.mxu0 0.0
  %7429 = vmatpush.msra.mxu0 0.0
  %7430 = vmatpush.msra.mxu0 0.0
  %7431 = vmatpush.msra.mxu0 0.0
  %7432 = vmatpush.msra.mxu0 0.0
  %7433 = vmatpush.msra.mxu0 %v7402
  %7434 = vmatmul.f32.gmra.mxu0 %v3429
  %v7435 = vpop.f32.mrf.mxu0
  %v7436 = vadd.f32 0.0, %v7435
  %7437 = vmatmul.f32.gmra.mxu0 %v3432
  %v7438 = vpop.f32.mrf.mxu0
  %v7439 = vadd.f32 0.0, %v7438
  %7440 = vdwg.mxu0
  %7441 = vmatpush.msra.mxu0 0.0
  %7442 = vmatpush.msra.mxu0 0.0
  %7443 = vmatpush.msra.mxu0 0.0
  %7444 = vmatpush.msra.mxu0 0.0
  %7445 = vmatpush.msra.mxu0 0.0
  %7446 = vmatpush.msra.mxu0 0.0
  %7447 = vmatpush.msra.mxu0 0.0
  %7448 = vmatpush.msra.mxu0 0.0
  %7449 = vmatpush.msra.mxu0 0.0
  %7450 = vmatpush.msra.mxu0 0.0
  %7451 = vmatpush.msra.mxu0 0.0
  %7452 = vmatpush.msra.mxu0 0.0
  %7453 = vmatpush.msra.mxu0 0.0
  %7454 = vmatpush.msra.mxu0 0.0
  %7455 = vmatpush.msra.mxu0 0.0
  %7456 = vmatpush.msra.mxu0 %v7404
  %7457 = vmatmul.f32.gmra.mxu0 %v3429
  %v7458 = vpop.f32.mrf.mxu0
  %v7459 = vadd.f32 0.0, %v7458
  %7460 = vmatmul.f32.gmra.mxu0 %v3432
  %v7461 = vpop.f32.mrf.mxu0
  %v7462 = vadd.f32 0.0, %v7461
  %7463 = vdwg.mxu0
  %7464 = vmatpush.msra.mxu0 0.0
  %7465 = vmatpush.msra.mxu0 0.0
  %7466 = vmatpush.msra.mxu0 0.0
  %7467 = vmatpush.msra.mxu0 0.0
  %7468 = vmatpush.msra.mxu0 0.0
  %7469 = vmatpush.msra.mxu0 0.0
  %7470 = vmatpush.msra.mxu0 0.0
  %7471 = vmatpush.msra.mxu0 0.0
  %7472 = vmatpush.msra.mxu0 0.0
  %7473 = vmatpush.msra.mxu0 0.0
  %7474 = vmatpush.msra.mxu0 0.0
  %7475 = vmatpush.msra.mxu0 0.0
  %7476 = vmatpush.msra.mxu0 0.0
  %7477 = vmatpush.msra.mxu0 0.0
  %7478 = vmatpush.msra.mxu0 0.0
  %7479 = vmatpush.msra.mxu0 %v7406
  %7480 = vmatmul.f32.gmra.mxu0 %v3429
  %v7481 = vpop.f32.mrf.mxu0
  %v7482 = vadd.f32 0.0, %v7481
  %7483 = vmatmul.f32.gmra.mxu0 %v3432
  %v7484 = vpop.f32.mrf.mxu0
  %v7485 = vadd.f32 0.0, %v7484
  %7486 = vdwg.mxu0
  %7487 = vmatpush.msra.mxu0 0.0
  %7488 = vmatpush.msra.mxu0 0.0
  %7489 = vmatpush.msra.mxu0 0.0
  %7490 = vmatpush.msra.mxu0 0.0
  %7491 = vmatpush.msra.mxu0 0.0
  %7492 = vmatpush.msra.mxu0 0.0
  %7493 = vmatpush.msra.mxu0 0.0
  %7494 = vmatpush.msra.mxu0 0.0
  %7495 = vmatpush.msra.mxu0 0.0
  %7496 = vmatpush.msra.mxu0 0.0
  %7497 = vmatpush.msra.mxu0 0.0
  %7498 = vmatpush.msra.mxu0 0.0
  %7499 = vmatpush.msra.mxu0 0.0
  %7500 = vmatpush.msra.mxu0 0.0
  %7501 = vmatpush.msra.mxu0 0.0
  %7502 = vmatpush.msra.mxu0 %v7408
  %7503 = vmatmul.f32.gmra.mxu0 %v3429
  %v7504 = vpop.f32.mrf.mxu0
  %v7505 = vadd.f32 0.0, %v7504
  %7506 = vmatmul.f32.gmra.mxu0 %v3432
  %v7507 = vpop.f32.mrf.mxu0
  %v7508 = vadd.f32 0.0, %v7507
  %7509 = vdwg.mxu0
  %7510 = vmatpush.msra.mxu0 0.0
  %7511 = vmatpush.msra.mxu0 0.0
  %7512 = vmatpush.msra.mxu0 0.0
  %7513 = vmatpush.msra.mxu0 0.0
  %7514 = vmatpush.msra.mxu0 0.0
  %7515 = vmatpush.msra.mxu0 0.0
  %7516 = vmatpush.msra.mxu0 0.0
  %7517 = vmatpush.msra.mxu0 0.0
  %7518 = vmatpush.msra.mxu0 0.0
  %7519 = vmatpush.msra.mxu0 0.0
  %7520 = vmatpush.msra.mxu0 0.0
  %7521 = vmatpush.msra.mxu0 0.0
  %7522 = vmatpush.msra.mxu0 0.0
  %7523 = vmatpush.msra.mxu0 0.0
  %7524 = vmatpush.msra.mxu0 0.0
  %7525 = vmatpush.msra.mxu0 %v7410
  %7526 = vmatmul.f32.gmra.mxu0 %v3429
  %v7527 = vpop.f32.mrf.mxu0
  %v7528 = vadd.f32 0.0, %v7527
  %7529 = vmatmul.f32.gmra.mxu0 %v3432
  %v7530 = vpop.f32.mrf.mxu0
  %v7531 = vadd.f32 0.0, %v7530
  %7532 = vdwg.mxu0
  %7533 = vmatpush.msra.mxu0 0.0
  %7534 = vmatpush.msra.mxu0 0.0
  %7535 = vmatpush.msra.mxu0 0.0
  %7536 = vmatpush.msra.mxu0 0.0
  %7537 = vmatpush.msra.mxu0 0.0
  %7538 = vmatpush.msra.mxu0 0.0
  %7539 = vmatpush.msra.mxu0 0.0
  %7540 = vmatpush.msra.mxu0 0.0
  %7541 = vmatpush.msra.mxu0 0.0
  %7542 = vmatpush.msra.mxu0 0.0
  %7543 = vmatpush.msra.mxu0 0.0
  %7544 = vmatpush.msra.mxu0 0.0
  %7545 = vmatpush.msra.mxu0 0.0
  %7546 = vmatpush.msra.mxu0 0.0
  %7547 = vmatpush.msra.mxu0 0.0
  %7548 = vmatpush.msra.mxu0 %v7412
  %7549 = vmatmul.f32.gmra.mxu0 %v3429
  %v7550 = vpop.f32.mrf.mxu0
  %v7551 = vadd.f32 0.0, %v7550
  %7552 = vmatmul.f32.gmra.mxu0 %v3432
  %v7553 = vpop.f32.mrf.mxu0
  %v7554 = vadd.f32 0.0, %v7553
  %7555 = vdwg.mxu0
  %7556 = vmatpush.msra.mxu0 0.0
  %7557 = vmatpush.msra.mxu0 0.0
  %7558 = vmatpush.msra.mxu0 0.0
  %7559 = vmatpush.msra.mxu0 0.0
  %7560 = vmatpush.msra.mxu0 0.0
  %7561 = vmatpush.msra.mxu0 0.0
  %7562 = vmatpush.msra.mxu0 0.0
  %7563 = vmatpush.msra.mxu0 0.0
  %7564 = vmatpush.msra.mxu0 0.0
  %7565 = vmatpush.msra.mxu0 0.0
  %7566 = vmatpush.msra.mxu0 0.0
  %7567 = vmatpush.msra.mxu0 0.0
  %7568 = vmatpush.msra.mxu0 0.0
  %7569 = vmatpush.msra.mxu0 0.0
  %7570 = vmatpush.msra.mxu0 0.0
  %7571 = vmatpush.msra.mxu0 %v7414
  %7572 = vmatmul.f32.gmra.mxu0 %v3429
  %v7573 = vpop.f32.mrf.mxu0
  %v7574 = vadd.f32 0.0, %v7573
  %7575 = vmatmul.f32.gmra.mxu0 %v3432
  %v7576 = vpop.f32.mrf.mxu0
  %v7577 = vadd.f32 0.0, %v7576
  %7578 = vdwg.mxu0
  %7579 = vmatpush.msra.mxu0 0.0
  %7580 = vmatpush.msra.mxu0 0.0
  %7581 = vmatpush.msra.mxu0 0.0
  %7582 = vmatpush.msra.mxu0 0.0
  %7583 = vmatpush.msra.mxu0 0.0
  %7584 = vmatpush.msra.mxu0 0.0
  %7585 = vmatpush.msra.mxu0 0.0
  %7586 = vmatpush.msra.mxu0 0.0
  %7587 = vmatpush.msra.mxu0 0.0
  %7588 = vmatpush.msra.mxu0 0.0
  %7589 = vmatpush.msra.mxu0 0.0
  %7590 = vmatpush.msra.mxu0 0.0
  %7591 = vmatpush.msra.mxu0 0.0
  %7592 = vmatpush.msra.mxu0 0.0
  %7593 = vmatpush.msra.mxu0 0.0
  %7594 = vmatpush.msra.mxu0 %v7416
  %7595 = vmatmul.f32.gmra.mxu0 %v3429
  %v7596 = vpop.f32.mrf.mxu0
  %v7597 = vadd.f32 0.0, %v7596
  %7598 = vmatmul.f32.gmra.mxu0 %v3432
  %v7599 = vpop.f32.mrf.mxu0
  %v7600 = vadd.f32 0.0, %v7599
  %7601 = vdwg.mxu0
  %v7602 = vadd.f32 %v7306, %v7436
  %v7603 = vadd.f32 %v7307, %v7459
  %v7604 = vadd.f32 %v7308, %v7482
  %v7605 = vadd.f32 %v7309, %v7505
  %v7606 = vadd.f32 %v7310, %v7528
  %v7607 = vadd.f32 %v7311, %v7551
  %v7608 = vadd.f32 %v7312, %v7574
  %v7609 = vadd.f32 %v7313, %v7597
  %v7610 = vadd.f32 %v7314, %v7439
  %v7611 = vadd.f32 %v7315, %v7462
  %v7612 = vadd.f32 %v7316, %v7485
  %v7613 = vadd.f32 %v7317, %v7508
  %v7614 = vadd.f32 %v7318, %v7531
  %v7615 = vadd.f32 %v7319, %v7554
  %v7616 = vadd.f32 %v7320, %v7577
  %v7617 = vadd.f32 %v7321, %v7600
  %v7626 = vrot.slane %v7362, 6
  %v7627 = vrot.slane %v7363, 6
  %v7628 = vrot.slane %v7364, 6
  %v7629 = vrot.slane %v7365, 6
  %v7630 = vrot.slane %v7366, 6
  %v7631 = vrot.slane %v7367, 6
  %v7632 = vrot.slane %v7368, 6
  %v7633 = vrot.slane %v7369, 6
  %v7642 = vmul.f32 %v4865, %v7626
  %v7643 = vmul.f32 %v4867, %v7627
  %v7644 = vmul.f32 %v4869, %v7628
  %v7645 = vmul.f32 %v4871, %v7629
  %v7646 = vmul.f32 %v4873, %v7630
  %v7647 = vmul.f32 %v4875, %v7631
  %v7648 = vmul.f32 %v4877, %v7632
  %v7649 = vmul.f32 %v4879, %v7633
  %v7650 = vld [vmem:[#allocation2 + $0x40] sm:$0xc0]
  %v7651 = vld [vmem:[#allocation2 + $0x48] sm:$0xc0]
  %v7652 = vld [vmem:[#allocation2 + $0x50] sm:$0xc0]
  %v7653 = vld [vmem:[#allocation2 + $0x58] sm:$0xc0]
  %v7654 = vld [vmem:[#allocation2 + $0x60] sm:$0xc0]
  %v7655 = vld [vmem:[#allocation2 + $0x68] sm:$0xc0]
  %v7656 = vld [vmem:[#allocation2 + $0x70] sm:$0xc0]
  %v7657 = vld [vmem:[#allocation2 + $0x78] sm:$0xc0]
  %v7658 = vadd.f32 %v7642, %v7650
  %v7659 = vadd.f32 %v7643, %v7651
  %v7660 = vadd.f32 %v7644, %v7652
  %v7661 = vadd.f32 %v7645, %v7653
  %v7662 = vadd.f32 %v7646, %v7654
  %v7663 = vadd.f32 %v7647, %v7655
  %v7664 = vadd.f32 %v7648, %v7656
  %v7665 = vadd.f32 %v7649, %v7657
  %v7666 = vld [vmem:[#allocation3 + $0x40] sm:$0xc0]
  %v7667 = vld [vmem:[#allocation3 + $0x48] sm:$0xc0]
  %v7668 = vld [vmem:[#allocation3 + $0x50] sm:$0xc0]
  %v7669 = vld [vmem:[#allocation3 + $0x58] sm:$0xc0]
  %v7670 = vld [vmem:[#allocation3 + $0x60] sm:$0xc0]
  %v7671 = vld [vmem:[#allocation3 + $0x68] sm:$0xc0]
  %v7672 = vld [vmem:[#allocation3 + $0x70] sm:$0xc0]
  %v7673 = vld [vmem:[#allocation3 + $0x78] sm:$0xc0]
  %v7674 = vmul.f32 %v7658, %v7666
  %v7675 = vmul.f32 %v7659, %v7667
  %v7676 = vmul.f32 %v7660, %v7668
  %v7677 = vmul.f32 %v7661, %v7669
  %v7678 = vmul.f32 %v7662, %v7670
  %v7679 = vmul.f32 %v7663, %v7671
  %v7680 = vmul.f32 %v7664, %v7672
  %v7681 = vmul.f32 %v7665, %v7673
  %v7690 = vrot.slane %v7674, 6
  %v7691 = vrot.slane %v7675, 6
  %v7692 = vrot.slane %v7676, 6
  %v7693 = vrot.slane %v7677, 6
  %v7694 = vrot.slane %v7678, 6
  %v7695 = vrot.slane %v7679, 6
  %v7696 = vrot.slane %v7680, 6
  %v7697 = vrot.slane %v7681, 6
  %v7698 = vsel %vm1733, %v7690, 0
  %v7700 = vsel %vm1733, %v7691, 0
  %v7702 = vsel %vm1733, %v7692, 0
  %v7704 = vsel %vm1733, %v7693, 0
  %v7706 = vsel %vm1733, %v7694, 0
  %v7708 = vsel %vm1733, %v7695, 0
  %v7710 = vsel %vm1733, %v7696, 0
  %v7712 = vsel %vm1733, %v7697, 0
  %7714 = vmatpush.msra.mxu0 0.0
  %7715 = vmatpush.msra.mxu0 0.0
  %7716 = vmatpush.msra.mxu0 0.0
  %7717 = vmatpush.msra.mxu0 0.0
  %7718 = vmatpush.msra.mxu0 0.0
  %7719 = vmatpush.msra.mxu0 0.0
  %7720 = vmatpush.msra.mxu0 0.0
  %7721 = vmatpush.msra.mxu0 0.0
  %7722 = vmatpush.msra.mxu0 0.0
  %7723 = vmatpush.msra.mxu0 0.0
  %7724 = vmatpush.msra.mxu0 0.0
  %7725 = vmatpush.msra.mxu0 0.0
  %7726 = vmatpush.msra.mxu0 0.0
  %7727 = vmatpush.msra.mxu0 0.0
  %7728 = vmatpush.msra.mxu0 0.0
  %7729 = vmatpush.msra.mxu0 %v7698
  %7730 = vmatmul.f32.gmra.mxu0 %v3731
  %v7731 = vpop.f32.mrf.mxu0
  %v7732 = vadd.f32 0.0, %v7731
  %7733 = vmatmul.f32.gmra.mxu0 %v3734
  %v7734 = vpop.f32.mrf.mxu0
  %v7735 = vadd.f32 0.0, %v7734
  %7736 = vdwg.mxu0
  %7737 = vmatpush.msra.mxu0 0.0
  %7738 = vmatpush.msra.mxu0 0.0
  %7739 = vmatpush.msra.mxu0 0.0
  %7740 = vmatpush.msra.mxu0 0.0
  %7741 = vmatpush.msra.mxu0 0.0
  %7742 = vmatpush.msra.mxu0 0.0
  %7743 = vmatpush.msra.mxu0 0.0
  %7744 = vmatpush.msra.mxu0 0.0
  %7745 = vmatpush.msra.mxu0 0.0
  %7746 = vmatpush.msra.mxu0 0.0
  %7747 = vmatpush.msra.mxu0 0.0
  %7748 = vmatpush.msra.mxu0 0.0
  %7749 = vmatpush.msra.mxu0 0.0
  %7750 = vmatpush.msra.mxu0 0.0
  %7751 = vmatpush.msra.mxu0 0.0
  %7752 = vmatpush.msra.mxu0 %v7700
  %7753 = vmatmul.f32.gmra.mxu0 %v3731
  %v7754 = vpop.f32.mrf.mxu0
  %v7755 = vadd.f32 0.0, %v7754
  %7756 = vmatmul.f32.gmra.mxu0 %v3734
  %v7757 = vpop.f32.mrf.mxu0
  %v7758 = vadd.f32 0.0, %v7757
  %7759 = vdwg.mxu0
  %7760 = vmatpush.msra.mxu0 0.0
  %7761 = vmatpush.msra.mxu0 0.0
  %7762 = vmatpush.msra.mxu0 0.0
  %7763 = vmatpush.msra.mxu0 0.0
  %7764 = vmatpush.msra.mxu0 0.0
  %7765 = vmatpush.msra.mxu0 0.0
  %7766 = vmatpush.msra.mxu0 0.0
  %7767 = vmatpush.msra.mxu0 0.0
  %7768 = vmatpush.msra.mxu0 0.0
  %7769 = vmatpush.msra.mxu0 0.0
  %7770 = vmatpush.msra.mxu0 0.0
  %7771 = vmatpush.msra.mxu0 0.0
  %7772 = vmatpush.msra.mxu0 0.0
  %7773 = vmatpush.msra.mxu0 0.0
  %7774 = vmatpush.msra.mxu0 0.0
  %7775 = vmatpush.msra.mxu0 %v7702
  %7776 = vmatmul.f32.gmra.mxu0 %v3731
  %v7777 = vpop.f32.mrf.mxu0
  %v7778 = vadd.f32 0.0, %v7777
  %7779 = vmatmul.f32.gmra.mxu0 %v3734
  %v7780 = vpop.f32.mrf.mxu0
  %v7781 = vadd.f32 0.0, %v7780
  %7782 = vdwg.mxu0
  %7783 = vmatpush.msra.mxu0 0.0
  %7784 = vmatpush.msra.mxu0 0.0
  %7785 = vmatpush.msra.mxu0 0.0
  %7786 = vmatpush.msra.mxu0 0.0
  %7787 = vmatpush.msra.mxu0 0.0
  %7788 = vmatpush.msra.mxu0 0.0
  %7789 = vmatpush.msra.mxu0 0.0
  %7790 = vmatpush.msra.mxu0 0.0
  %7791 = vmatpush.msra.mxu0 0.0
  %7792 = vmatpush.msra.mxu0 0.0
  %7793 = vmatpush.msra.mxu0 0.0
  %7794 = vmatpush.msra.mxu0 0.0
  %7795 = vmatpush.msra.mxu0 0.0
  %7796 = vmatpush.msra.mxu0 0.0
  %7797 = vmatpush.msra.mxu0 0.0
  %7798 = vmatpush.msra.mxu0 %v7704
  %7799 = vmatmul.f32.gmra.mxu0 %v3731
  %v7800 = vpop.f32.mrf.mxu0
  %v7801 = vadd.f32 0.0, %v7800
  %7802 = vmatmul.f32.gmra.mxu0 %v3734
  %v7803 = vpop.f32.mrf.mxu0
  %v7804 = vadd.f32 0.0, %v7803
  %7805 = vdwg.mxu0
  %7806 = vmatpush.msra.mxu0 0.0
  %7807 = vmatpush.msra.mxu0 0.0
  %7808 = vmatpush.msra.mxu0 0.0
  %7809 = vmatpush.msra.mxu0 0.0
  %7810 = vmatpush.msra.mxu0 0.0
  %7811 = vmatpush.msra.mxu0 0.0
  %7812 = vmatpush.msra.mxu0 0.0
  %7813 = vmatpush.msra.mxu0 0.0
  %7814 = vmatpush.msra.mxu0 0.0
  %7815 = vmatpush.msra.mxu0 0.0
  %7816 = vmatpush.msra.mxu0 0.0
  %7817 = vmatpush.msra.mxu0 0.0
  %7818 = vmatpush.msra.mxu0 0.0
  %7819 = vmatpush.msra.mxu0 0.0
  %7820 = vmatpush.msra.mxu0 0.0
  %7821 = vmatpush.msra.mxu0 %v7706
  %7822 = vmatmul.f32.gmra.mxu0 %v3731
  %v7823 = vpop.f32.mrf.mxu0
  %v7824 = vadd.f32 0.0, %v7823
  %7825 = vmatmul.f32.gmra.mxu0 %v3734
  %v7826 = vpop.f32.mrf.mxu0
  %v7827 = vadd.f32 0.0, %v7826
  %7828 = vdwg.mxu0
  %7829 = vmatpush.msra.mxu0 0.0
  %7830 = vmatpush.msra.mxu0 0.0
  %7831 = vmatpush.msra.mxu0 0.0
  %7832 = vmatpush.msra.mxu0 0.0
  %7833 = vmatpush.msra.mxu0 0.0
  %7834 = vmatpush.msra.mxu0 0.0
  %7835 = vmatpush.msra.mxu0 0.0
  %7836 = vmatpush.msra.mxu0 0.0
  %7837 = vmatpush.msra.mxu0 0.0
  %7838 = vmatpush.msra.mxu0 0.0
  %7839 = vmatpush.msra.mxu0 0.0
  %7840 = vmatpush.msra.mxu0 0.0
  %7841 = vmatpush.msra.mxu0 0.0
  %7842 = vmatpush.msra.mxu0 0.0
  %7843 = vmatpush.msra.mxu0 0.0
  %7844 = vmatpush.msra.mxu0 %v7708
  %7845 = vmatmul.f32.gmra.mxu0 %v3731
  %v7846 = vpop.f32.mrf.mxu0
  %v7847 = vadd.f32 0.0, %v7846
  %7848 = vmatmul.f32.gmra.mxu0 %v3734
  %v7849 = vpop.f32.mrf.mxu0
  %v7850 = vadd.f32 0.0, %v7849
  %7851 = vdwg.mxu0
  %7852 = vmatpush.msra.mxu0 0.0
  %7853 = vmatpush.msra.mxu0 0.0
  %7854 = vmatpush.msra.mxu0 0.0
  %7855 = vmatpush.msra.mxu0 0.0
  %7856 = vmatpush.msra.mxu0 0.0
  %7857 = vmatpush.msra.mxu0 0.0
  %7858 = vmatpush.msra.mxu0 0.0
  %7859 = vmatpush.msra.mxu0 0.0
  %7860 = vmatpush.msra.mxu0 0.0
  %7861 = vmatpush.msra.mxu0 0.0
  %7862 = vmatpush.msra.mxu0 0.0
  %7863 = vmatpush.msra.mxu0 0.0
  %7864 = vmatpush.msra.mxu0 0.0
  %7865 = vmatpush.msra.mxu0 0.0
  %7866 = vmatpush.msra.mxu0 0.0
  %7867 = vmatpush.msra.mxu0 %v7710
  %7868 = vmatmul.f32.gmra.mxu0 %v3731
  %v7869 = vpop.f32.mrf.mxu0
  %v7870 = vadd.f32 0.0, %v7869
  %7871 = vmatmul.f32.gmra.mxu0 %v3734
  %v7872 = vpop.f32.mrf.mxu0
  %v7873 = vadd.f32 0.0, %v7872
  %7874 = vdwg.mxu0
  %7875 = vmatpush.msra.mxu0 0.0
  %7876 = vmatpush.msra.mxu0 0.0
  %7877 = vmatpush.msra.mxu0 0.0
  %7878 = vmatpush.msra.mxu0 0.0
  %7879 = vmatpush.msra.mxu0 0.0
  %7880 = vmatpush.msra.mxu0 0.0
  %7881 = vmatpush.msra.mxu0 0.0
  %7882 = vmatpush.msra.mxu0 0.0
  %7883 = vmatpush.msra.mxu0 0.0
  %7884 = vmatpush.msra.mxu0 0.0
  %7885 = vmatpush.msra.mxu0 0.0
  %7886 = vmatpush.msra.mxu0 0.0
  %7887 = vmatpush.msra.mxu0 0.0
  %7888 = vmatpush.msra.mxu0 0.0
  %7889 = vmatpush.msra.mxu0 0.0
  %7890 = vmatpush.msra.mxu0 %v7712
  %7891 = vmatmul.f32.gmra.mxu0 %v3731
  %v7892 = vpop.f32.mrf.mxu0
  %v7893 = vadd.f32 0.0, %v7892
  %7894 = vmatmul.f32.gmra.mxu0 %v3734
  %v7895 = vpop.f32.mrf.mxu0
  %v7896 = vadd.f32 0.0, %v7895
  %7897 = vdwg.mxu0
  %v7898 = vadd.f32 %v7602, %v7732
  %v7899 = vadd.f32 %v7603, %v7755
  %v7900 = vadd.f32 %v7604, %v7778
  %v7901 = vadd.f32 %v7605, %v7801
  %v7902 = vadd.f32 %v7606, %v7824
  %v7903 = vadd.f32 %v7607, %v7847
  %v7904 = vadd.f32 %v7608, %v7870
  %v7905 = vadd.f32 %v7609, %v7893
  %v7906 = vadd.f32 %v7610, %v7735
  %v7907 = vadd.f32 %v7611, %v7758
  %v7908 = vadd.f32 %v7612, %v7781
  %v7909 = vadd.f32 %v7613, %v7804
  %v7910 = vadd.f32 %v7614, %v7827
  %v7911 = vadd.f32 %v7615, %v7850
  %v7912 = vadd.f32 %v7616, %v7873
  %v7913 = vadd.f32 %v7617, %v7896
  %s7914 = scalar_lea.vmem %s13, 1
  %v7915 = vld [vmem:[%s7914] sm:$0x1]
  %v7917 = vperm.slane %v7915, 0
  %v7919 = vmul.f32 %v7917, %v4522
  %v7920 = vmul.f32 %v7917, %v4523
  %7921 = vmatpush.xpose.msra.mxu0 0.0
  %7922 = vmatpush.xpose.msra.mxu0 0.0
  %7923 = vmatpush.xpose.msra.mxu0 0.0
  %7924 = vmatpush.xpose.msra.mxu0 0.0
  %7925 = vmatpush.xpose.msra.mxu0 0.0
  %7926 = vmatpush.xpose.msra.mxu0 0.0
  %7927 = vmatpush.xpose.msra.mxu0 0.0
  %7928 = vmatpush.xpose.msra.mxu0 0.0
  %7929 = vmatpush.xpose.msra.mxu0 %v137
  %7930 = vmatpush.xpose.msra.mxu0 %v129
  %7931 = vmatpush.xpose.msra.mxu0 %v121
  %7932 = vmatpush.xpose.msra.mxu0 %v113
  %7933 = vmatpush.xpose.msra.mxu0 %v105
  %7934 = vmatpush.xpose.msra.mxu0 %v97
  %7935 = vmatpush.xpose.msra.mxu0 %v89
  %7936 = vmatpush.xpose.msra.mxu0 %v81
  %7937 = vmatmul.f32.gmra.mxu0 %v7898
  %v7938 = vpop.f32.mrf.mxu0
  %v7939 = vadd.f32 %v7919, %v7938
  %7940 = vmatmul.f32.gmra.mxu0 %v7906
  %v7941 = vpop.f32.mrf.mxu0
  %v7942 = vadd.f32 %v7920, %v7941
  %7943 = vdwg.mxu0
  %7944 = vmatpush.xpose.msra.mxu0 0.0
  %7945 = vmatpush.xpose.msra.mxu0 0.0
  %7946 = vmatpush.xpose.msra.mxu0 0.0
  %7947 = vmatpush.xpose.msra.mxu0 0.0
  %7948 = vmatpush.xpose.msra.mxu0 0.0
  %7949 = vmatpush.xpose.msra.mxu0 0.0
  %7950 = vmatpush.xpose.msra.mxu0 0.0
  %7951 = vmatpush.xpose.msra.mxu0 0.0
  %7952 = vmatpush.xpose.msra.mxu0 %v138
  %7953 = vmatpush.xpose.msra.mxu0 %v130
  %7954 = vmatpush.xpose.msra.mxu0 %v122
  %7955 = vmatpush.xpose.msra.mxu0 %v114
  %7956 = vmatpush.xpose.msra.mxu0 %v106
  %7957 = vmatpush.xpose.msra.mxu0 %v98
  %7958 = vmatpush.xpose.msra.mxu0 %v90
  %7959 = vmatpush.xpose.msra.mxu0 %v82
  %7960 = vmatmul.f32.gmra.mxu0 %v7899
  %v7961 = vpop.f32.mrf.mxu0
  %v7962 = vadd.f32 %v7939, %v7961
  %7963 = vmatmul.f32.gmra.mxu0 %v7907
  %v7964 = vpop.f32.mrf.mxu0
  %v7965 = vadd.f32 %v7942, %v7964
  %7966 = vdwg.mxu0
  %7967 = vmatpush.xpose.msra.mxu0 0.0
  %7968 = vmatpush.xpose.msra.mxu0 0.0
  %7969 = vmatpush.xpose.msra.mxu0 0.0
  %7970 = vmatpush.xpose.msra.mxu0 0.0
  %7971 = vmatpush.xpose.msra.mxu0 0.0
  %7972 = vmatpush.xpose.msra.mxu0 0.0
  %7973 = vmatpush.xpose.msra.mxu0 0.0
  %7974 = vmatpush.xpose.msra.mxu0 0.0
  %7975 = vmatpush.xpose.msra.mxu0 %v139
  %7976 = vmatpush.xpose.msra.mxu0 %v131
  %7977 = vmatpush.xpose.msra.mxu0 %v123
  %7978 = vmatpush.xpose.msra.mxu0 %v115
  %7979 = vmatpush.xpose.msra.mxu0 %v107
  %7980 = vmatpush.xpose.msra.mxu0 %v99
  %7981 = vmatpush.xpose.msra.mxu0 %v91
  %7982 = vmatpush.xpose.msra.mxu0 %v83
  %7983 = vmatmul.f32.gmra.mxu0 %v7900
  %v7984 = vpop.f32.mrf.mxu0
  %v7985 = vadd.f32 %v7962, %v7984
  %7986 = vmatmul.f32.gmra.mxu0 %v7908
  %v7987 = vpop.f32.mrf.mxu0
  %v7988 = vadd.f32 %v7965, %v7987
  %7989 = vdwg.mxu0
  %7990 = vmatpush.xpose.msra.mxu0 0.0
  %7991 = vmatpush.xpose.msra.mxu0 0.0
  %7992 = vmatpush.xpose.msra.mxu0 0.0
  %7993 = vmatpush.xpose.msra.mxu0 0.0
  %7994 = vmatpush.xpose.msra.mxu0 0.0
  %7995 = vmatpush.xpose.msra.mxu0 0.0
  %7996 = vmatpush.xpose.msra.mxu0 0.0
  %7997 = vmatpush.xpose.msra.mxu0 0.0
  %7998 = vmatpush.xpose.msra.mxu0 %v140
  %7999 = vmatpush.xpose.msra.mxu0 %v132
  %8000 = vmatpush.xpose.msra.mxu0 %v124
  %8001 = vmatpush.xpose.msra.mxu0 %v116
  %8002 = vmatpush.xpose.msra.mxu0 %v108
  %8003 = vmatpush.xpose.msra.mxu0 %v100
  %8004 = vmatpush.xpose.msra.mxu0 %v92
  %8005 = vmatpush.xpose.msra.mxu0 %v84
  %8006 = vmatmul.f32.gmra.mxu0 %v7901
  %v8007 = vpop.f32.mrf.mxu0
  %v8008 = vadd.f32 %v7985, %v8007
  %8009 = vmatmul.f32.gmra.mxu0 %v7909
  %v8010 = vpop.f32.mrf.mxu0
  %v8011 = vadd.f32 %v7988, %v8010
  %8012 = vdwg.mxu0
  %8013 = vmatpush.xpose.msra.mxu0 0.0
  %8014 = vmatpush.xpose.msra.mxu0 0.0
  %8015 = vmatpush.xpose.msra.mxu0 0.0
  %8016 = vmatpush.xpose.msra.mxu0 0.0
  %8017 = vmatpush.xpose.msra.mxu0 0.0
  %8018 = vmatpush.xpose.msra.mxu0 0.0
  %8019 = vmatpush.xpose.msra.mxu0 0.0
  %8020 = vmatpush.xpose.msra.mxu0 0.0
  %8021 = vmatpush.xpose.msra.mxu0 %v141
  %8022 = vmatpush.xpose.msra.mxu0 %v133
  %8023 = vmatpush.xpose.msra.mxu0 %v125
  %8024 = vmatpush.xpose.msra.mxu0 %v117
  %8025 = vmatpush.xpose.msra.mxu0 %v109
  %8026 = vmatpush.xpose.msra.mxu0 %v101
  %8027 = vmatpush.xpose.msra.mxu0 %v93
  %8028 = vmatpush.xpose.msra.mxu0 %v85
  %8029 = vmatmul.f32.gmra.mxu0 %v7902
  %v8030 = vpop.f32.mrf.mxu0
  %v8031 = vadd.f32 %v8008, %v8030
  %8032 = vmatmul.f32.gmra.mxu0 %v7910
  %v8033 = vpop.f32.mrf.mxu0
  %v8034 = vadd.f32 %v8011, %v8033
  %8035 = vdwg.mxu0
  %8036 = vmatpush.xpose.msra.mxu0 0.0
  %8037 = vmatpush.xpose.msra.mxu0 0.0
  %8038 = vmatpush.xpose.msra.mxu0 0.0
  %8039 = vmatpush.xpose.msra.mxu0 0.0
  %8040 = vmatpush.xpose.msra.mxu0 0.0
  %8041 = vmatpush.xpose.msra.mxu0 0.0
  %8042 = vmatpush.xpose.msra.mxu0 0.0
  %8043 = vmatpush.xpose.msra.mxu0 0.0
  %8044 = vmatpush.xpose.msra.mxu0 %v142
  %8045 = vmatpush.xpose.msra.mxu0 %v134
  %8046 = vmatpush.xpose.msra.mxu0 %v126
  %8047 = vmatpush.xpose.msra.mxu0 %v118
  %8048 = vmatpush.xpose.msra.mxu0 %v110
  %8049 = vmatpush.xpose.msra.mxu0 %v102
  %8050 = vmatpush.xpose.msra.mxu0 %v94
  %8051 = vmatpush.xpose.msra.mxu0 %v86
  %8052 = vmatmul.f32.gmra.mxu0 %v7903
  %v8053 = vpop.f32.mrf.mxu0
  %v8054 = vadd.f32 %v8031, %v8053
  %8055 = vmatmul.f32.gmra.mxu0 %v7911
  %v8056 = vpop.f32.mrf.mxu0
  %v8057 = vadd.f32 %v8034, %v8056
  %8058 = vdwg.mxu0
  %8059 = vmatpush.xpose.msra.mxu0 0.0
  %8060 = vmatpush.xpose.msra.mxu0 0.0
  %8061 = vmatpush.xpose.msra.mxu0 0.0
  %8062 = vmatpush.xpose.msra.mxu0 0.0
  %8063 = vmatpush.xpose.msra.mxu0 0.0
  %8064 = vmatpush.xpose.msra.mxu0 0.0
  %8065 = vmatpush.xpose.msra.mxu0 0.0
  %8066 = vmatpush.xpose.msra.mxu0 0.0
  %8067 = vmatpush.xpose.msra.mxu0 %v143
  %8068 = vmatpush.xpose.msra.mxu0 %v135
  %8069 = vmatpush.xpose.msra.mxu0 %v127
  %8070 = vmatpush.xpose.msra.mxu0 %v119
  %8071 = vmatpush.xpose.msra.mxu0 %v111
  %8072 = vmatpush.xpose.msra.mxu0 %v103
  %8073 = vmatpush.xpose.msra.mxu0 %v95
  %8074 = vmatpush.xpose.msra.mxu0 %v87
  %8075 = vmatmul.f32.gmra.mxu0 %v7904
  %v8076 = vpop.f32.mrf.mxu0
  %v8077 = vadd.f32 %v8054, %v8076
  %8078 = vmatmul.f32.gmra.mxu0 %v7912
  %v8079 = vpop.f32.mrf.mxu0
  %v8080 = vadd.f32 %v8057, %v8079
  %8081 = vdwg.mxu0
  %8082 = vmatpush.xpose.msra.mxu0 0.0
  %8083 = vmatpush.xpose.msra.mxu0 0.0
  %8084 = vmatpush.xpose.msra.mxu0 0.0
  %8085 = vmatpush.xpose.msra.mxu0 0.0
  %8086 = vmatpush.xpose.msra.mxu0 0.0
  %8087 = vmatpush.xpose.msra.mxu0 0.0
  %8088 = vmatpush.xpose.msra.mxu0 0.0
  %8089 = vmatpush.xpose.msra.mxu0 0.0
  %8090 = vmatpush.xpose.msra.mxu0 %v144
  %8091 = vmatpush.xpose.msra.mxu0 %v136
  %8092 = vmatpush.xpose.msra.mxu0 %v128
  %8093 = vmatpush.xpose.msra.mxu0 %v120
  %8094 = vmatpush.xpose.msra.mxu0 %v112
  %8095 = vmatpush.xpose.msra.mxu0 %v104
  %8096 = vmatpush.xpose.msra.mxu0 %v96
  %8097 = vmatpush.xpose.msra.mxu0 %v88
  %8098 = vmatmul.f32.gmra.mxu0 %v7905
  %v8099 = vpop.f32.mrf.mxu0
  %v8100 = vadd.f32 %v8077, %v8099
  %8101 = vmatmul.f32.gmra.mxu0 %v7913
  %v8102 = vpop.f32.mrf.mxu0
  %v8103 = vadd.f32 %v8080, %v8102
  %8104 = vdwg.mxu0
  %v8105 = vsub.f32 0.0, %v4383
  %v8106 = vsub.f32 0.0, %v4386
  %v8107 = vmul.f32 %v8105, 1.442695
  %v8108 = vpow.pop %v8107
  %v8109 = vmul.f32 %v8106, 1.442695
  %v8110 = vpow.pop %v8109
  %v8111 = vadd.f32 %v8108, 1.0
  %v8112 = vadd.f32 %v8110, 1.0
  %v8113 = vrcp.pop %v8111
  %v8114 = vmul.f32 %v8111, %v8113
  %v8115 = vsub.f32 1.0, %v8114
  %v8116 = vmul.f32 %v8113, %v8115
  %v8117 = vadd.f32 %v8113, %v8116
  %vm8118 = vweird.f32 %v8111
  %vm8119 = vweird.f32 %v8113
  %vm8120 = vmor %vm8118, %vm8119
  %v8121 = vsel %vm8120, %v8113, %v8117
  %v8122 = vand.u32 2147483647, %v8111
  %vm8123 = vcmp.eq.f32.partialorder %v8122, 8.507059e+37
  %v8124 = vand.u32 %v8111, 2147483648
  %v8125 = vor.u32 1.1754944e-38, %v8124
  %v8126 = vsel %vm8123, %v8125, %v8121
  %v8127 = vmul.f32 1.0, %v8126
  %v8128 = vrcp.pop %v8112
  %v8129 = vmul.f32 %v8112, %v8128
  %v8130 = vsub.f32 1.0, %v8129
  %v8131 = vmul.f32 %v8128, %v8130
  %v8132 = vadd.f32 %v8128, %v8131
  %vm8133 = vweird.f32 %v8112
  %vm8134 = vweird.f32 %v8128
  %vm8135 = vmor %vm8133, %vm8134
  %v8136 = vsel %vm8135, %v8128, %v8132
  %v8137 = vand.u32 2147483647, %v8112
  %vm8138 = vcmp.eq.f32.partialorder %v8137, 8.507059e+37
  %v8139 = vand.u32 %v8112, 2147483648
  %v8140 = vor.u32 1.1754944e-38, %v8139
  %v8141 = vsel %vm8138, %v8140, %v8136
  %v8142 = vmul.f32 1.0, %v8141
  %v8143 = vmul.f32 %v4383, %v8127
  %v8144 = vmul.f32 %v4386, %v8142
  %v8145 = vmul.f32 %v8100, %v8143
  %v8146 = vmul.f32 %v8103, %v8144
  %s8147 = scalar_lea.vmem %s14, 32
  %v8148 = vld [vmem:[%s8147] sm:$0xff]
  %v8149 = vld [vmem:[%s8147 + $0x8] sm:$0xff]
  %v8150 = vld [vmem:[%s8147 + $0x10] sm:$0xff]
  %v8151 = vld [vmem:[%s8147 + $0x18] sm:$0xff]
  %v8153 = vsel %vm518, %v8145, 0
  %v8156 = vsel %vm518, %v8146, 0
  %v8159 = vsel %vm518, %v8148, 0
  %v8162 = vsel %vm518, %v8149, 0
  %v8165 = vsel %vm518, %v8150, 0
  %v8168 = vsel %vm518, %v8151, 0
  %8170 = vmatpush.xpose.msra.mxu0 0.0
  %8171 = vmatpush.xpose.msra.mxu0 0.0
  %8172 = vmatpush.xpose.msra.mxu0 0.0
  %8173 = vmatpush.xpose.msra.mxu0 0.0
  %8174 = vmatpush.xpose.msra.mxu0 0.0
  %8175 = vmatpush.xpose.msra.mxu0 0.0
  %8176 = vmatpush.xpose.msra.mxu0 0.0
  %8177 = vmatpush.xpose.msra.mxu0 0.0
  %8178 = vmatpush.xpose.msra.mxu0 0.0
  %8179 = vmatpush.xpose.msra.mxu0 0.0
  %8180 = vmatpush.xpose.msra.mxu0 0.0
  %8181 = vmatpush.xpose.msra.mxu0 0.0
  %8182 = vmatpush.xpose.msra.mxu0 %v8168
  %8183 = vmatpush.xpose.msra.mxu0 %v8165
  %8184 = vmatpush.xpose.msra.mxu0 %v8162
  %8185 = vmatpush.xpose.msra.mxu0 %v8159
  %8186 = vmatmul.f32.gmra.mxu0 %v8153
  %v8187 = vpop.f32.mrf.mxu0
  %v8188 = vadd.f32 %v4224, %v8187
  %8189 = vmatmul.f32.gmra.mxu0 %v8156
  %v8190 = vpop.f32.mrf.mxu0
  %v8191 = vadd.f32 %v4227, %v8190
  %8192 = vdwg.mxu0
  %v8193 = vmul.f32 %v8188, %v8188
  %v8194 = vmul.f32 %v8191, %v8191
  %v8195 = vsel %vm202, %v8193, 0.0
  %8196 = vadd.xlane.f32.xlu0 %v8195
  %v8197 = vpop.xlane.xlu0 %8196
  %v8198 = vsel %vm202, %v8194, 0.0
  %8199 = vadd.xlane.f32.xlu0 %v8198
  %v8200 = vpop.xlane.xlu0 %8199
  %v8201 = vmul.f32 %v8197, %v215
  %v8202 = vmul.f32 %v8200, %v215
  %v8203 = vadd.f32 %v8201, 1e-05
  %v8204 = vadd.f32 %v8202, 1e-05
  %v8205 = vrsqrt.pop %v8203
  %v8206 = vmul.f32 %v8205, %v8203
  %v8207 = vmul.f32 %v8206, %v8205
  %v8208 = vmul.f32 0.5, %v8207
  %v8209 = vsub.f32 1.5, %v8208
  %v8210 = vmul.f32 %v8205, %v8209
  %vm8211 = vweird.f32 %v8203
  %vm8212 = vweird.f32 %v8205
  %vm8213 = vmor %vm8211, %vm8212
  %v8214 = vsel %vm8213, %v8205, %v8210
  %v8215 = vrsqrt.pop %v8204
  %v8216 = vmul.f32 %v8215, %v8204
  %v8217 = vmul.f32 %v8216, %v8215
  %v8218 = vmul.f32 0.5, %v8217
  %v8219 = vsub.f32 1.5, %v8218
  %v8220 = vmul.f32 %v8215, %v8219
  %vm8221 = vweird.f32 %v8204
  %vm8222 = vweird.f32 %v8215
  %vm8223 = vmor %vm8221, %vm8222
  %v8224 = vsel %vm8223, %v8215, %v8220
  %v8225 = vmul.f32 %v8188, %v8214
  %v8226 = vmul.f32 %v8191, %v8224
  %s8227 = scalar_lea.vmem %s2, 2
  %v8228 = vld [vmem:[%s8227] sm:$0x1]
  %v8230 = vperm.slane %v8228, 0
  %v8232 = vmul.f32 %v8225, %v8230
  %v8233 = vmul.f32 %v8226, %v8230
  %s8234 = scalar_lea.vmem %s3, 128
  %v8235 = vld [vmem:[%s8234] sm:$0xff]
  %v8236 = vld [vmem:[%s8234 + $0x8] sm:$0xff]
  %v8237 = vld [vmem:[%s8234 + $0x10] sm:$0xff]
  %v8238 = vld [vmem:[%s8234 + $0x18] sm:$0xff]
  %v8239 = vld [vmem:[%s8234 + $0x20] sm:$0xff]
  %v8240 = vld [vmem:[%s8234 + $0x28] sm:$0xff]
  %v8241 = vld [vmem:[%s8234 + $0x30] sm:$0xff]
  %v8242 = vld [vmem:[%s8234 + $0x38] sm:$0xff]
  %v8244 = vsel %vm202, %v8232, 0
  %v8247 = vsel %vm202, %v8233, 0
  %v8250 = vsel %vm202, %v8235, 0
  %v8253 = vsel %vm202, %v8236, 0
  %v8256 = vsel %vm202, %v8237, 0
  %v8259 = vsel %vm202, %v8238, 0
  %v8262 = vsel %vm202, %v8239, 0
  %v8265 = vsel %vm202, %v8240, 0
  %v8268 = vsel %vm202, %v8241, 0
  %v8271 = vsel %vm202, %v8242, 0
  %8273 = vmatpush.xpose.msra.mxu0 0.0
  %8274 = vmatpush.xpose.msra.mxu0 0.0
  %8275 = vmatpush.xpose.msra.mxu0 0.0
  %8276 = vmatpush.xpose.msra.mxu0 0.0
  %8277 = vmatpush.xpose.msra.mxu0 0.0
  %8278 = vmatpush.xpose.msra.mxu0 0.0
  %8279 = vmatpush.xpose.msra.mxu0 0.0
  %8280 = vmatpush.xpose.msra.mxu0 0.0
  %8281 = vmatpush.xpose.msra.mxu0 %v8271
  %8282 = vmatpush.xpose.msra.mxu0 %v8268
  %8283 = vmatpush.xpose.msra.mxu0 %v8265
  %8284 = vmatpush.xpose.msra.mxu0 %v8262
  %8285 = vmatpush.xpose.msra.mxu0 %v8259
  %8286 = vmatpush.xpose.msra.mxu0 %v8256
  %8287 = vmatpush.xpose.msra.mxu0 %v8253
  %8288 = vmatpush.xpose.msra.mxu0 %v8250
  %8289 = vmatmul.f32.gmra.mxu0 %v8244
  %v8290 = vpop.f32.mrf.mxu0
  %v8291 = vadd.f32 0.0, %v8290
  %8292 = vmatmul.f32.gmra.mxu0 %v8247
  %v8293 = vpop.f32.mrf.mxu0
  %v8294 = vadd.f32 0.0, %v8293
  %8295 = vdwg.mxu0
  %s8296 = scalar_lea.vmem %s4, 128
  %v8297 = vld [vmem:[%s8296] sm:$0xff]
  %v8298 = vld [vmem:[%s8296 + $0x8] sm:$0xff]
  %v8299 = vld [vmem:[%s8296 + $0x10] sm:$0xff]
  %v8300 = vld [vmem:[%s8296 + $0x18] sm:$0xff]
  %v8301 = vld [vmem:[%s8296 + $0x20] sm:$0xff]
  %v8302 = vld [vmem:[%s8296 + $0x28] sm:$0xff]
  %v8303 = vld [vmem:[%s8296 + $0x30] sm:$0xff]
  %v8304 = vld [vmem:[%s8296 + $0x38] sm:$0xff]
  %v8306 = vsel %vm202, %v8297, 0
  %v8309 = vsel %vm202, %v8298, 0
  %v8312 = vsel %vm202, %v8299, 0
  %v8315 = vsel %vm202, %v8300, 0
  %v8318 = vsel %vm202, %v8301, 0
  %v8321 = vsel %vm202, %v8302, 0
  %v8324 = vsel %vm202, %v8303, 0
  %v8327 = vsel %vm202, %v8304, 0
  %8329 = vmatpush.xpose.msra.mxu0 0.0
  %8330 = vmatpush.xpose.msra.mxu0 0.0
  %8331 = vmatpush.xpose.msra.mxu0 0.0
  %8332 = vmatpush.xpose.msra.mxu0 0.0
  %8333 = vmatpush.xpose.msra.mxu0 0.0
  %8334 = vmatpush.xpose.msra.mxu0 0.0
  %8335 = vmatpush.xpose.msra.mxu0 0.0
  %8336 = vmatpush.xpose.msra.mxu0 0.0
  %8337 = vmatpush.xpose.msra.mxu0 %v8327
  %8338 = vmatpush.xpose.msra.mxu0 %v8324
  %8339 = vmatpush.xpose.msra.mxu0 %v8321
  %8340 = vmatpush.xpose.msra.mxu0 %v8318
  %8341 = vmatpush.xpose.msra.mxu0 %v8315
  %8342 = vmatpush.xpose.msra.mxu0 %v8312
  %8343 = vmatpush.xpose.msra.mxu0 %v8309
  %8344 = vmatpush.xpose.msra.mxu0 %v8306
  %8345 = vmatmul.f32.gmra.mxu0 %v8244
  %v8346 = vpop.f32.mrf.mxu0
  %v8347 = vadd.f32 0.0, %v8346
  %8348 = vmatmul.f32.gmra.mxu0 %v8247
  %v8349 = vpop.f32.mrf.mxu0
  %v8350 = vadd.f32 0.0, %v8349
  %8351 = vdwg.mxu0
  %s8352 = scalar_lea.vmem %s5, 8
  %v8353 = vld [vmem:[%s8352] sm:$0xf]
  %s8354 = scalar_lea.vmem %s6, 2
  %v8355 = vld [vmem:[%s8354] sm:$0x1]
  %v8356 = vperm.slane %v8353, 3
  %v8357 = vmul.f32 %v8291, %v8356
  %v8358 = vmul.f32 %v8294, %v8356
  %v8360 = vperm.slane %v8355, 0
  %v8362 = vadd.f32 %v8360, %v8357
  %v8363 = vadd.f32 %v8360, %v8358
  %8364 = vmatpush.msra.mxu0 0.0
  %8365 = vmatpush.msra.mxu0 0.0
  %8366 = vmatpush.msra.mxu0 0.0
  %8367 = vmatpush.msra.mxu0 0.0
  %8368 = vmatpush.msra.mxu0 0.0
  %8369 = vmatpush.msra.mxu0 0.0
  %8370 = vmatpush.msra.mxu0 0.0
  %8371 = vmatpush.msra.mxu0 0.0
  %8372 = vmatpush.msra.mxu0 0.0
  %8373 = vmatpush.msra.mxu0 0.0
  %8374 = vmatpush.msra.mxu0 0.0
  %8375 = vmatpush.msra.mxu0 0.0
  %8376 = vmatpush.msra.mxu0 0.0
  %8377 = vmatpush.msra.mxu0 0.0
  %8378 = vmatpush.msra.mxu0 %v8294
  %8379 = vmatpush.msra.mxu0 %v8291
  %8380 = vmatmul.f32.gmra.mxu0 %v376
  %v8381 = vpop.f32.mrf.mxu0
  %v8382 = vadd.f32 0.0, %v8381
  %8383 = vmatmul.f32.gmra.mxu0 %v379
  %v8384 = vpop.f32.mrf.mxu0
  %v8385 = vadd.f32 0.0, %v8384
  %8386 = vdwg.mxu0
  %v8387 = vperm.slane %v8353, 2
  %v8388 = vmul.f32 %v8382, %v8387
  %v8389 = vmul.f32 %v8385, %v8387
  %v8390 = vadd.f32 %v8362, %v8388
  %v8391 = vadd.f32 %v8363, %v8389
  %8392 = vmatpush.msra.mxu0 0.0
  %8393 = vmatpush.msra.mxu0 0.0
  %8394 = vmatpush.msra.mxu0 0.0
  %8395 = vmatpush.msra.mxu0 0.0
  %8396 = vmatpush.msra.mxu0 0.0
  %8397 = vmatpush.msra.mxu0 0.0
  %8398 = vmatpush.msra.mxu0 0.0
  %8399 = vmatpush.msra.mxu0 0.0
  %8400 = vmatpush.msra.mxu0 0.0
  %8401 = vmatpush.msra.mxu0 0.0
  %8402 = vmatpush.msra.mxu0 0.0
  %8403 = vmatpush.msra.mxu0 0.0
  %8404 = vmatpush.msra.mxu0 0.0
  %8405 = vmatpush.msra.mxu0 0.0
  %8406 = vmatpush.msra.mxu0 %v8294
  %8407 = vmatpush.msra.mxu0 %v8291
  %8408 = vmatmul.f32.gmra.mxu0 %v410
  %v8409 = vpop.f32.mrf.mxu0
  %v8410 = vadd.f32 0.0, %v8409
  %8411 = vmatmul.f32.gmra.mxu0 %v413
  %v8412 = vpop.f32.mrf.mxu0
  %v8413 = vadd.f32 0.0, %v8412
  %8414 = vdwg.mxu0
  %v8415 = vperm.slane %v8353, 1
  %v8416 = vmul.f32 %v8410, %v8415
  %v8417 = vmul.f32 %v8413, %v8415
  %v8418 = vadd.f32 %v8390, %v8416
  %v8419 = vadd.f32 %v8391, %v8417
  %8420 = vmatpush.msra.mxu0 0.0
  %8421 = vmatpush.msra.mxu0 0.0
  %8422 = vmatpush.msra.mxu0 0.0
  %8423 = vmatpush.msra.mxu0 0.0
  %8424 = vmatpush.msra.mxu0 0.0
  %8425 = vmatpush.msra.mxu0 0.0
  %8426 = vmatpush.msra.mxu0 0.0
  %8427 = vmatpush.msra.mxu0 0.0
  %8428 = vmatpush.msra.mxu0 0.0
  %8429 = vmatpush.msra.mxu0 0.0
  %8430 = vmatpush.msra.mxu0 0.0
  %8431 = vmatpush.msra.mxu0 0.0
  %8432 = vmatpush.msra.mxu0 0.0
  %8433 = vmatpush.msra.mxu0 0.0
  %8434 = vmatpush.msra.mxu0 %v8294
  %8435 = vmatpush.msra.mxu0 %v8291
  %8436 = vmatmul.f32.gmra.mxu0 %v444
  %v8437 = vpop.f32.mrf.mxu0
  %v8438 = vadd.f32 0.0, %v8437
  %8439 = vmatmul.f32.gmra.mxu0 %v447
  %v8440 = vpop.f32.mrf.mxu0
  %v8441 = vadd.f32 0.0, %v8440
  %8442 = vdwg.mxu0
  %v8443 = vperm.slane %v8353, 0
  %v8444 = vmul.f32 %v8438, %v8443
  %v8445 = vmul.f32 %v8441, %v8443
  %v8446 = vadd.f32 %v8418, %v8444
  %v8447 = vadd.f32 %v8419, %v8445
  %v8448 = vsub.f32 0.0, %v8446
  %v8449 = vsub.f32 0.0, %v8447
  %v8450 = vmul.f32 %v8448, 1.442695
  %v8451 = vpow.pop %v8450
  %v8452 = vmul.f32 %v8449, 1.442695
  %v8453 = vpow.pop %v8452
  %v8454 = vadd.f32 %v8451, 1.0
  %v8455 = vadd.f32 %v8453, 1.0
  %v8456 = vrcp.pop %v8454
  %v8457 = vmul.f32 %v8454, %v8456
  %v8458 = vsub.f32 1.0, %v8457
  %v8459 = vmul.f32 %v8456, %v8458
  %v8460 = vadd.f32 %v8456, %v8459
  %vm8461 = vweird.f32 %v8454
  %vm8462 = vweird.f32 %v8456
  %vm8463 = vmor %vm8461, %vm8462
  %v8464 = vsel %vm8463, %v8456, %v8460
  %v8465 = vand.u32 2147483647, %v8454
  %vm8466 = vcmp.eq.f32.partialorder %v8465, 8.507059e+37
  %v8467 = vand.u32 %v8454, 2147483648
  %v8468 = vor.u32 1.1754944e-38, %v8467
  %v8469 = vsel %vm8466, %v8468, %v8464
  %v8470 = vmul.f32 1.0, %v8469
  %v8471 = vrcp.pop %v8455
  %v8472 = vmul.f32 %v8455, %v8471
  %v8473 = vsub.f32 1.0, %v8472
  %v8474 = vmul.f32 %v8471, %v8473
  %v8475 = vadd.f32 %v8471, %v8474
  %vm8476 = vweird.f32 %v8455
  %vm8477 = vweird.f32 %v8471
  %vm8478 = vmor %vm8476, %vm8477
  %v8479 = vsel %vm8478, %v8471, %v8475
  %v8480 = vand.u32 2147483647, %v8455
  %vm8481 = vcmp.eq.f32.partialorder %v8480, 8.507059e+37
  %v8482 = vand.u32 %v8455, 2147483648
  %v8483 = vor.u32 1.1754944e-38, %v8482
  %v8484 = vsel %vm8481, %v8483, %v8479
  %v8485 = vmul.f32 1.0, %v8484
  %v8486 = vmul.f32 %v8446, %v8470
  %v8487 = vmul.f32 %v8447, %v8485
  %s8488 = scalar_lea.vmem %s7, 4
  %v8489 = vld [vmem:[%s8488] sm:$0x3]
  %v8491 = vsel %vm518, %v8486, 0
  %v8494 = vsel %vm518, %v8487, 0
  %v8497 = vsel %vm518, %v8489, 0
  %8499 = vmatpush.xpose.msra.mxu0 0.0
  %8500 = vmatpush.xpose.msra.mxu0 0.0
  %8501 = vmatpush.xpose.msra.mxu0 0.0
  %8502 = vmatpush.xpose.msra.mxu0 0.0
  %8503 = vmatpush.xpose.msra.mxu0 0.0
  %8504 = vmatpush.xpose.msra.mxu0 0.0
  %8505 = vmatpush.xpose.msra.mxu0 0.0
  %8506 = vmatpush.xpose.msra.mxu0 0.0
  %8507 = vmatpush.xpose.msra.mxu0 0.0
  %8508 = vmatpush.xpose.msra.mxu0 0.0
  %8509 = vmatpush.xpose.msra.mxu0 0.0
  %8510 = vmatpush.xpose.msra.mxu0 0.0
  %8511 = vmatpush.xpose.msra.mxu0 0.0
  %8512 = vmatpush.xpose.msra.mxu0 0.0
  %8513 = vmatpush.xpose.msra.mxu0 0.0
  %8514 = vmatpush.xpose.msra.mxu0 %v8497
  %8515 = vmatmul.f32.gmra.mxu0 %v8491
  %v8516 = vpop.f32.mrf.mxu0
  %v8517 = vadd.f32 0.0, %v8516
  %8518 = vmatmul.f32.gmra.mxu0 %v8494
  %v8519 = vpop.f32.mrf.mxu0
  %v8520 = vadd.f32 0.0, %v8519
  %8521 = vdwg.mxu0
  %s8522 = scalar_lea.vmem %s8, 4
  %v8523 = vld [vmem:[%s8522] sm:$0x3]
  %s8524 = scalar_lea.vmem %s9, 2
  %v8525 = vld [vmem:[%s8524] sm:$0x1]
  %8527 = vset.pattern.permute.xlu0 0
  %8528 = vperm.xlu0 %8527, %v8517
  %v8529 = vpop.permute.xlu0 %8528
  %8532 = vset.pattern.permute.xlu0 0
  %8533 = vperm.xlu0 %8532, %v8520
  %v8534 = vpop.permute.xlu0 %8533
  %v8536 = vperm.slane %v8523, 0
  %v8537 = vmul.f32 %v8529, %v8536
  %v8538 = vmul.f32 %v8534, %v8536
  %v8540 = vperm.slane %v8525, 0
  %v8542 = vadd.f32 %v8540, %v8537
  %v8543 = vadd.f32 %v8540, %v8538
  %8544 = vset.pattern.permute.xlu0 1
  %8545 = vperm.xlu0 %8544, %v8517
  %v8546 = vpop.permute.xlu0 %8545
  %8548 = vset.pattern.permute.xlu0 1
  %8549 = vperm.xlu0 %8548, %v8520
  %v8550 = vpop.permute.xlu0 %8549
  %v8552 = vperm.slane %v8523, 1
  %v8553 = vmul.f32 %v8546, %v8552
  %v8554 = vmul.f32 %v8550, %v8552
  %v8555 = vadd.f32 %v8542, %v8553
  %v8556 = vadd.f32 %v8543, %v8554
  %v8557 = vmax.f32 %v8555, 0.0
  %v8558 = vmax.f32 %v8556, 0.0
  %v8559 = vand.u32 2147483647, %v8555
  %v8560 = vand.u32 2147483647, %v8556
  %v8561 = vsub.f32 0.0, %v8559
  %v8562 = vsub.f32 0.0, %v8560
  %v8563 = vmul.f32 %v8561, 1.442695
  %v8564 = vpow.pop %v8563
  %v8565 = vmul.f32 %v8562, 1.442695
  %v8566 = vpow.pop %v8565
  %v8567 = vadd.f32 %v8564, 1.0
  %v8568 = vlog2.pop %v8567
  %v8569 = vmul.f32 %v8568, 0.6931472
  %v8570 = vmul.f32 -0.5, %v8564
  %v8571 = vadd.f32 %v8570, 1.0
  %v8572 = vmul.f32 %v8571, %v8564
  %v8573 = vand.u32 2147483647, %v8564
  %vm8574 = vcmp.lt.f32.partialorder %v8573, 0.0004427343
  %v8575 = vsel %vm8574, %v8572, %v8569
  %v8576 = vadd.f32 %v8566, 1.0
  %v8577 = vlog2.pop %v8576
  %v8578 = vmul.f32 %v8577, 0.6931472
  %v8579 = vmul.f32 -0.5, %v8566
  %v8580 = vadd.f32 %v8579, 1.0
  %v8581 = vmul.f32 %v8580, %v8566
  %v8582 = vand.u32 2147483647, %v8566
  %vm8583 = vcmp.lt.f32.partialorder %v8582, 0.0004427343
  %v8584 = vsel %vm8583, %v8581, %v8578
  %v8585 = vadd.f32 %v8557, %v8575
  %v8586 = vadd.f32 %v8558, %v8584
  %v8588 = vsel %vm518, %v8585, 0
  %v8591 = vsel %vm518, %v8586, 0
  %8593 = vmatpush.msra.mxu0 0.0
  %8594 = vmatpush.msra.mxu0 0.0
  %8595 = vmatpush.msra.mxu0 0.0
  %8596 = vmatpush.msra.mxu0 0.0
  %8597 = vmatpush.msra.mxu0 0.0
  %8598 = vmatpush.msra.mxu0 0.0
  %8599 = vmatpush.msra.mxu0 0.0
  %8600 = vmatpush.msra.mxu0 0.0
  %8601 = vmatpush.msra.mxu0 %v137
  %8602 = vmatpush.msra.mxu0 %v129
  %8603 = vmatpush.msra.mxu0 %v121
  %8604 = vmatpush.msra.mxu0 %v113
  %8605 = vmatpush.msra.mxu0 %v105
  %8606 = vmatpush.msra.mxu0 %v97
  %8607 = vmatpush.msra.mxu0 %v89
  %8608 = vmatpush.msra.mxu0 %v81
  %8609 = vmatmul.f32.gmra.mxu0 %v8588
  %v8610 = vpop.f32.mrf.mxu0
  %v8611 = vadd.f32 0.0, %v8610
  %8612 = vmatmul.f32.gmra.mxu0 %v8591
  %v8613 = vpop.f32.mrf.mxu0
  %v8614 = vadd.f32 0.0, %v8613
  %8615 = vdwg.mxu0
  %8616 = vmatpush.msra.mxu0 0.0
  %8617 = vmatpush.msra.mxu0 0.0
  %8618 = vmatpush.msra.mxu0 0.0
  %8619 = vmatpush.msra.mxu0 0.0
  %8620 = vmatpush.msra.mxu0 0.0
  %8621 = vmatpush.msra.mxu0 0.0
  %8622 = vmatpush.msra.mxu0 0.0
  %8623 = vmatpush.msra.mxu0 0.0
  %8624 = vmatpush.msra.mxu0 %v138
  %8625 = vmatpush.msra.mxu0 %v130
  %8626 = vmatpush.msra.mxu0 %v122
  %8627 = vmatpush.msra.mxu0 %v114
  %8628 = vmatpush.msra.mxu0 %v106
  %8629 = vmatpush.msra.mxu0 %v98
  %8630 = vmatpush.msra.mxu0 %v90
  %8631 = vmatpush.msra.mxu0 %v82
  %8632 = vmatmul.f32.gmra.mxu0 %v8588
  %v8633 = vpop.f32.mrf.mxu0
  %v8634 = vadd.f32 0.0, %v8633
  %8635 = vmatmul.f32.gmra.mxu0 %v8591
  %v8636 = vpop.f32.mrf.mxu0
  %v8637 = vadd.f32 0.0, %v8636
  %8638 = vdwg.mxu0
  %8639 = vmatpush.msra.mxu0 0.0
  %8640 = vmatpush.msra.mxu0 0.0
  %8641 = vmatpush.msra.mxu0 0.0
  %8642 = vmatpush.msra.mxu0 0.0
  %8643 = vmatpush.msra.mxu0 0.0
  %8644 = vmatpush.msra.mxu0 0.0
  %8645 = vmatpush.msra.mxu0 0.0
  %8646 = vmatpush.msra.mxu0 0.0
  %8647 = vmatpush.msra.mxu0 %v139
  %8648 = vmatpush.msra.mxu0 %v131
  %8649 = vmatpush.msra.mxu0 %v123
  %8650 = vmatpush.msra.mxu0 %v115
  %8651 = vmatpush.msra.mxu0 %v107
  %8652 = vmatpush.msra.mxu0 %v99
  %8653 = vmatpush.msra.mxu0 %v91
  %8654 = vmatpush.msra.mxu0 %v83
  %8655 = vmatmul.f32.gmra.mxu0 %v8588
  %v8656 = vpop.f32.mrf.mxu0
  %v8657 = vadd.f32 0.0, %v8656
  %8658 = vmatmul.f32.gmra.mxu0 %v8591
  %v8659 = vpop.f32.mrf.mxu0
  %v8660 = vadd.f32 0.0, %v8659
  %8661 = vdwg.mxu0
  %8662 = vmatpush.msra.mxu0 0.0
  %8663 = vmatpush.msra.mxu0 0.0
  %8664 = vmatpush.msra.mxu0 0.0
  %8665 = vmatpush.msra.mxu0 0.0
  %8666 = vmatpush.msra.mxu0 0.0
  %8667 = vmatpush.msra.mxu0 0.0
  %8668 = vmatpush.msra.mxu0 0.0
  %8669 = vmatpush.msra.mxu0 0.0
  %8670 = vmatpush.msra.mxu0 %v140
  %8671 = vmatpush.msra.mxu0 %v132
  %8672 = vmatpush.msra.mxu0 %v124
  %8673 = vmatpush.msra.mxu0 %v116
  %8674 = vmatpush.msra.mxu0 %v108
  %8675 = vmatpush.msra.mxu0 %v100
  %8676 = vmatpush.msra.mxu0 %v92
  %8677 = vmatpush.msra.mxu0 %v84
  %8678 = vmatmul.f32.gmra.mxu0 %v8588
  %v8679 = vpop.f32.mrf.mxu0
  %v8680 = vadd.f32 0.0, %v8679
  %8681 = vmatmul.f32.gmra.mxu0 %v8591
  %v8682 = vpop.f32.mrf.mxu0
  %v8683 = vadd.f32 0.0, %v8682
  %8684 = vdwg.mxu0
  %8685 = vmatpush.msra.mxu0 0.0
  %8686 = vmatpush.msra.mxu0 0.0
  %8687 = vmatpush.msra.mxu0 0.0
  %8688 = vmatpush.msra.mxu0 0.0
  %8689 = vmatpush.msra.mxu0 0.0
  %8690 = vmatpush.msra.mxu0 0.0
  %8691 = vmatpush.msra.mxu0 0.0
  %8692 = vmatpush.msra.mxu0 0.0
  %8693 = vmatpush.msra.mxu0 %v141
  %8694 = vmatpush.msra.mxu0 %v133
  %8695 = vmatpush.msra.mxu0 %v125
  %8696 = vmatpush.msra.mxu0 %v117
  %8697 = vmatpush.msra.mxu0 %v109
  %8698 = vmatpush.msra.mxu0 %v101
  %8699 = vmatpush.msra.mxu0 %v93
  %8700 = vmatpush.msra.mxu0 %v85
  %8701 = vmatmul.f32.gmra.mxu0 %v8588
  %v8702 = vpop.f32.mrf.mxu0
  %v8703 = vadd.f32 0.0, %v8702
  %8704 = vmatmul.f32.gmra.mxu0 %v8591
  %v8705 = vpop.f32.mrf.mxu0
  %v8706 = vadd.f32 0.0, %v8705
  %8707 = vdwg.mxu0
  %8708 = vmatpush.msra.mxu0 0.0
  %8709 = vmatpush.msra.mxu0 0.0
  %8710 = vmatpush.msra.mxu0 0.0
  %8711 = vmatpush.msra.mxu0 0.0
  %8712 = vmatpush.msra.mxu0 0.0
  %8713 = vmatpush.msra.mxu0 0.0
  %8714 = vmatpush.msra.mxu0 0.0
  %8715 = vmatpush.msra.mxu0 0.0
  %8716 = vmatpush.msra.mxu0 %v142
  %8717 = vmatpush.msra.mxu0 %v134
  %8718 = vmatpush.msra.mxu0 %v126
  %8719 = vmatpush.msra.mxu0 %v118
  %8720 = vmatpush.msra.mxu0 %v110
  %8721 = vmatpush.msra.mxu0 %v102
  %8722 = vmatpush.msra.mxu0 %v94
  %8723 = vmatpush.msra.mxu0 %v86
  %8724 = vmatmul.f32.gmra.mxu0 %v8588
  %v8725 = vpop.f32.mrf.mxu0
  %v8726 = vadd.f32 0.0, %v8725
  %8727 = vmatmul.f32.gmra.mxu0 %v8591
  %v8728 = vpop.f32.mrf.mxu0
  %v8729 = vadd.f32 0.0, %v8728
  %8730 = vdwg.mxu0
  %8731 = vmatpush.msra.mxu0 0.0
  %8732 = vmatpush.msra.mxu0 0.0
  %8733 = vmatpush.msra.mxu0 0.0
  %8734 = vmatpush.msra.mxu0 0.0
  %8735 = vmatpush.msra.mxu0 0.0
  %8736 = vmatpush.msra.mxu0 0.0
  %8737 = vmatpush.msra.mxu0 0.0
  %8738 = vmatpush.msra.mxu0 0.0
  %8739 = vmatpush.msra.mxu0 %v143
  %8740 = vmatpush.msra.mxu0 %v135
  %8741 = vmatpush.msra.mxu0 %v127
  %8742 = vmatpush.msra.mxu0 %v119
  %8743 = vmatpush.msra.mxu0 %v111
  %8744 = vmatpush.msra.mxu0 %v103
  %8745 = vmatpush.msra.mxu0 %v95
  %8746 = vmatpush.msra.mxu0 %v87
  %8747 = vmatmul.f32.gmra.mxu0 %v8588
  %v8748 = vpop.f32.mrf.mxu0
  %v8749 = vadd.f32 0.0, %v8748
  %8750 = vmatmul.f32.gmra.mxu0 %v8591
  %v8751 = vpop.f32.mrf.mxu0
  %v8752 = vadd.f32 0.0, %v8751
  %8753 = vdwg.mxu0
  %8754 = vmatpush.msra.mxu0 0.0
  %8755 = vmatpush.msra.mxu0 0.0
  %8756 = vmatpush.msra.mxu0 0.0
  %8757 = vmatpush.msra.mxu0 0.0
  %8758 = vmatpush.msra.mxu0 0.0
  %8759 = vmatpush.msra.mxu0 0.0
  %8760 = vmatpush.msra.mxu0 0.0
  %8761 = vmatpush.msra.mxu0 0.0
  %8762 = vmatpush.msra.mxu0 %v144
  %8763 = vmatpush.msra.mxu0 %v136
  %8764 = vmatpush.msra.mxu0 %v128
  %8765 = vmatpush.msra.mxu0 %v120
  %8766 = vmatpush.msra.mxu0 %v112
  %8767 = vmatpush.msra.mxu0 %v104
  %8768 = vmatpush.msra.mxu0 %v96
  %8769 = vmatpush.msra.mxu0 %v88
  %8770 = vmatmul.f32.gmra.mxu0 %v8588
  %v8771 = vpop.f32.mrf.mxu0
  %v8772 = vadd.f32 0.0, %v8771
  %8773 = vmatmul.f32.gmra.mxu0 %v8591
  %v8774 = vpop.f32.mrf.mxu0
  %v8775 = vadd.f32 0.0, %v8774
  %8776 = vdwg.mxu0
  %s8777 = scalar_lea.vmem %s12, 16
  %v8778 = vld [vmem:[%s8777] sm:$0xff]
  %v8780 = vperm.slane %v8778, 0
  %v8781 = vperm.slane %v8778, 1
  %v8782 = vperm.slane %v8778, 2
  %v8783 = vperm.slane %v8778, 3
  %v8784 = vperm.slane %v8778, 4
  %v8785 = vperm.slane %v8778, 5
  %v8786 = vperm.slane %v8778, 6
  %v8787 = vperm.slane %v8778, 7
  %v8796 = vmul.f32 %v8611, %v8780
  %v8797 = vmul.f32 %v8634, %v8781
  %v8798 = vmul.f32 %v8657, %v8782
  %v8799 = vmul.f32 %v8680, %v8783
  %v8800 = vmul.f32 %v8703, %v8784
  %v8801 = vmul.f32 %v8726, %v8785
  %v8802 = vmul.f32 %v8749, %v8786
  %v8803 = vmul.f32 %v8772, %v8787
  %v8804 = vmul.f32 %v8614, %v8780
  %v8805 = vmul.f32 %v8637, %v8781
  %v8806 = vmul.f32 %v8660, %v8782
  %v8807 = vmul.f32 %v8683, %v8783
  %v8808 = vmul.f32 %v8706, %v8784
  %v8809 = vmul.f32 %v8729, %v8785
  %v8810 = vmul.f32 %v8752, %v8786
  %v8811 = vmul.f32 %v8775, %v8787
  %v8812 = vmul.f32 %v8796, 1.442695
  %v8813 = vpow.pop %v8812
  %v8814 = vmul.f32 %v8797, 1.442695
  %v8815 = vpow.pop %v8814
  %v8816 = vmul.f32 %v8798, 1.442695
  %v8817 = vpow.pop %v8816
  %v8818 = vmul.f32 %v8799, 1.442695
  %v8819 = vpow.pop %v8818
  %v8820 = vmul.f32 %v8800, 1.442695
  %v8821 = vpow.pop %v8820
  %v8822 = vmul.f32 %v8801, 1.442695
  %v8823 = vpow.pop %v8822
  %v8824 = vmul.f32 %v8802, 1.442695
  %v8825 = vpow.pop %v8824
  %v8826 = vmul.f32 %v8803, 1.442695
  %v8827 = vpow.pop %v8826
  %v8828 = vmul.f32 %v8804, 1.442695
  %v8829 = vpow.pop %v8828
  %v8830 = vmul.f32 %v8805, 1.442695
  %v8831 = vpow.pop %v8830
  %v8832 = vmul.f32 %v8806, 1.442695
  %v8833 = vpow.pop %v8832
  %v8834 = vmul.f32 %v8807, 1.442695
  %v8835 = vpow.pop %v8834
  %v8836 = vmul.f32 %v8808, 1.442695
  %v8837 = vpow.pop %v8836
  %v8838 = vmul.f32 %v8809, 1.442695
  %v8839 = vpow.pop %v8838
  %v8840 = vmul.f32 %v8810, 1.442695
  %v8841 = vpow.pop %v8840
  %v8842 = vmul.f32 %v8811, 1.442695
  %v8843 = vpow.pop %v8842
  %v8844 = vmul.f32 %v8585, %v8486
  %v8845 = vmul.f32 %v8586, %v8487
  %v8847 = vsel %vm518, %v8844, 0
  %v8850 = vsel %vm518, %v8845, 0
  %8852 = vmatpush.msra.mxu0 0.0
  %8853 = vmatpush.msra.mxu0 0.0
  %8854 = vmatpush.msra.mxu0 0.0
  %8855 = vmatpush.msra.mxu0 0.0
  %8856 = vmatpush.msra.mxu0 0.0
  %8857 = vmatpush.msra.mxu0 0.0
  %8858 = vmatpush.msra.mxu0 0.0
  %8859 = vmatpush.msra.mxu0 0.0
  %8860 = vmatpush.msra.mxu0 %v137
  %8861 = vmatpush.msra.mxu0 %v129
  %8862 = vmatpush.msra.mxu0 %v121
  %8863 = vmatpush.msra.mxu0 %v113
  %8864 = vmatpush.msra.mxu0 %v105
  %8865 = vmatpush.msra.mxu0 %v97
  %8866 = vmatpush.msra.mxu0 %v89
  %8867 = vmatpush.msra.mxu0 %v81
  %8868 = vmatmul.f32.gmra.mxu0 %v8847
  %v8869 = vpop.f32.mrf.mxu0
  %v8870 = vadd.f32 0.0, %v8869
  %8871 = vmatmul.f32.gmra.mxu0 %v8850
  %v8872 = vpop.f32.mrf.mxu0
  %v8873 = vadd.f32 0.0, %v8872
  %8874 = vdwg.mxu0
  %8875 = vmatpush.msra.mxu0 0.0
  %8876 = vmatpush.msra.mxu0 0.0
  %8877 = vmatpush.msra.mxu0 0.0
  %8878 = vmatpush.msra.mxu0 0.0
  %8879 = vmatpush.msra.mxu0 0.0
  %8880 = vmatpush.msra.mxu0 0.0
  %8881 = vmatpush.msra.mxu0 0.0
  %8882 = vmatpush.msra.mxu0 0.0
  %8883 = vmatpush.msra.mxu0 %v138
  %8884 = vmatpush.msra.mxu0 %v130
  %8885 = vmatpush.msra.mxu0 %v122
  %8886 = vmatpush.msra.mxu0 %v114
  %8887 = vmatpush.msra.mxu0 %v106
  %8888 = vmatpush.msra.mxu0 %v98
  %8889 = vmatpush.msra.mxu0 %v90
  %8890 = vmatpush.msra.mxu0 %v82
  %8891 = vmatmul.f32.gmra.mxu0 %v8847
  %v8892 = vpop.f32.mrf.mxu0
  %v8893 = vadd.f32 0.0, %v8892
  %8894 = vmatmul.f32.gmra.mxu0 %v8850
  %v8895 = vpop.f32.mrf.mxu0
  %v8896 = vadd.f32 0.0, %v8895
  %8897 = vdwg.mxu0
  %8898 = vmatpush.msra.mxu0 0.0
  %8899 = vmatpush.msra.mxu0 0.0
  %8900 = vmatpush.msra.mxu0 0.0
  %8901 = vmatpush.msra.mxu0 0.0
  %8902 = vmatpush.msra.mxu0 0.0
  %8903 = vmatpush.msra.mxu0 0.0
  %8904 = vmatpush.msra.mxu0 0.0
  %8905 = vmatpush.msra.mxu0 0.0
  %8906 = vmatpush.msra.mxu0 %v139
  %8907 = vmatpush.msra.mxu0 %v131
  %8908 = vmatpush.msra.mxu0 %v123
  %8909 = vmatpush.msra.mxu0 %v115
  %8910 = vmatpush.msra.mxu0 %v107
  %8911 = vmatpush.msra.mxu0 %v99
  %8912 = vmatpush.msra.mxu0 %v91
  %8913 = vmatpush.msra.mxu0 %v83
  %8914 = vmatmul.f32.gmra.mxu0 %v8847
  %v8915 = vpop.f32.mrf.mxu0
  %v8916 = vadd.f32 0.0, %v8915
  %8917 = vmatmul.f32.gmra.mxu0 %v8850
  %v8918 = vpop.f32.mrf.mxu0
  %v8919 = vadd.f32 0.0, %v8918
  %8920 = vdwg.mxu0
  %8921 = vmatpush.msra.mxu0 0.0
  %8922 = vmatpush.msra.mxu0 0.0
  %8923 = vmatpush.msra.mxu0 0.0
  %8924 = vmatpush.msra.mxu0 0.0
  %8925 = vmatpush.msra.mxu0 0.0
  %8926 = vmatpush.msra.mxu0 0.0
  %8927 = vmatpush.msra.mxu0 0.0
  %8928 = vmatpush.msra.mxu0 0.0
  %8929 = vmatpush.msra.mxu0 %v140
  %8930 = vmatpush.msra.mxu0 %v132
  %8931 = vmatpush.msra.mxu0 %v124
  %8932 = vmatpush.msra.mxu0 %v116
  %8933 = vmatpush.msra.mxu0 %v108
  %8934 = vmatpush.msra.mxu0 %v100
  %8935 = vmatpush.msra.mxu0 %v92
  %8936 = vmatpush.msra.mxu0 %v84
  %8937 = vmatmul.f32.gmra.mxu0 %v8847
  %v8938 = vpop.f32.mrf.mxu0
  %v8939 = vadd.f32 0.0, %v8938
  %8940 = vmatmul.f32.gmra.mxu0 %v8850
  %v8941 = vpop.f32.mrf.mxu0
  %v8942 = vadd.f32 0.0, %v8941
  %8943 = vdwg.mxu0
  %8944 = vmatpush.msra.mxu0 0.0
  %8945 = vmatpush.msra.mxu0 0.0
  %8946 = vmatpush.msra.mxu0 0.0
  %8947 = vmatpush.msra.mxu0 0.0
  %8948 = vmatpush.msra.mxu0 0.0
  %8949 = vmatpush.msra.mxu0 0.0
  %8950 = vmatpush.msra.mxu0 0.0
  %8951 = vmatpush.msra.mxu0 0.0
  %8952 = vmatpush.msra.mxu0 %v141
  %8953 = vmatpush.msra.mxu0 %v133
  %8954 = vmatpush.msra.mxu0 %v125
  %8955 = vmatpush.msra.mxu0 %v117
  %8956 = vmatpush.msra.mxu0 %v109
  %8957 = vmatpush.msra.mxu0 %v101
  %8958 = vmatpush.msra.mxu0 %v93
  %8959 = vmatpush.msra.mxu0 %v85
  %8960 = vmatmul.f32.gmra.mxu0 %v8847
  %v8961 = vpop.f32.mrf.mxu0
  %v8962 = vadd.f32 0.0, %v8961
  %8963 = vmatmul.f32.gmra.mxu0 %v8850
  %v8964 = vpop.f32.mrf.mxu0
  %v8965 = vadd.f32 0.0, %v8964
  %8966 = vdwg.mxu0
  %8967 = vmatpush.msra.mxu0 0.0
  %8968 = vmatpush.msra.mxu0 0.0
  %8969 = vmatpush.msra.mxu0 0.0
  %8970 = vmatpush.msra.mxu0 0.0
  %8971 = vmatpush.msra.mxu0 0.0
  %8972 = vmatpush.msra.mxu0 0.0
  %8973 = vmatpush.msra.mxu0 0.0
  %8974 = vmatpush.msra.mxu0 0.0
  %8975 = vmatpush.msra.mxu0 %v142
  %8976 = vmatpush.msra.mxu0 %v134
  %8977 = vmatpush.msra.mxu0 %v126
  %8978 = vmatpush.msra.mxu0 %v118
  %8979 = vmatpush.msra.mxu0 %v110
  %8980 = vmatpush.msra.mxu0 %v102
  %8981 = vmatpush.msra.mxu0 %v94
  %8982 = vmatpush.msra.mxu0 %v86
  %8983 = vmatmul.f32.gmra.mxu0 %v8847
  %v8984 = vpop.f32.mrf.mxu0
  %v8985 = vadd.f32 0.0, %v8984
  %8986 = vmatmul.f32.gmra.mxu0 %v8850
  %v8987 = vpop.f32.mrf.mxu0
  %v8988 = vadd.f32 0.0, %v8987
  %8989 = vdwg.mxu0
  %8990 = vmatpush.msra.mxu0 0.0
  %8991 = vmatpush.msra.mxu0 0.0
  %8992 = vmatpush.msra.mxu0 0.0
  %8993 = vmatpush.msra.mxu0 0.0
  %8994 = vmatpush.msra.mxu0 0.0
  %8995 = vmatpush.msra.mxu0 0.0
  %8996 = vmatpush.msra.mxu0 0.0
  %8997 = vmatpush.msra.mxu0 0.0
  %8998 = vmatpush.msra.mxu0 %v143
  %8999 = vmatpush.msra.mxu0 %v135
  %9000 = vmatpush.msra.mxu0 %v127
  %9001 = vmatpush.msra.mxu0 %v119
  %9002 = vmatpush.msra.mxu0 %v111
  %9003 = vmatpush.msra.mxu0 %v103
  %9004 = vmatpush.msra.mxu0 %v95
  %9005 = vmatpush.msra.mxu0 %v87
  %9006 = vmatmul.f32.gmra.mxu0 %v8847
  %v9007 = vpop.f32.mrf.mxu0
  %v9008 = vadd.f32 0.0, %v9007
  %9009 = vmatmul.f32.gmra.mxu0 %v8850
  %v9010 = vpop.f32.mrf.mxu0
  %v9011 = vadd.f32 0.0, %v9010
  %9012 = vdwg.mxu0
  %9013 = vmatpush.msra.mxu0 0.0
  %9014 = vmatpush.msra.mxu0 0.0
  %9015 = vmatpush.msra.mxu0 0.0
  %9016 = vmatpush.msra.mxu0 0.0
  %9017 = vmatpush.msra.mxu0 0.0
  %9018 = vmatpush.msra.mxu0 0.0
  %9019 = vmatpush.msra.mxu0 0.0
  %9020 = vmatpush.msra.mxu0 0.0
  %9021 = vmatpush.msra.mxu0 %v144
  %9022 = vmatpush.msra.mxu0 %v136
  %9023 = vmatpush.msra.mxu0 %v128
  %9024 = vmatpush.msra.mxu0 %v120
  %9025 = vmatpush.msra.mxu0 %v112
  %9026 = vmatpush.msra.mxu0 %v104
  %9027 = vmatpush.msra.mxu0 %v96
  %9028 = vmatpush.msra.mxu0 %v88
  %9029 = vmatmul.f32.gmra.mxu0 %v8847
  %v9030 = vpop.f32.mrf.mxu0
  %v9031 = vadd.f32 0.0, %v9030
  %9032 = vmatmul.f32.gmra.mxu0 %v8850
  %v9033 = vpop.f32.mrf.mxu0
  %v9034 = vadd.f32 0.0, %v9033
  %9035 = vdwg.mxu0
  %s9036 = scalar_lea.vmem %s10, 1024
  %v9037 = vld [vmem:[%s9036] sm:$0xff]
  %v9038 = vld [vmem:[%s9036 + $0x8] sm:$0xff]
  %v9039 = vld [vmem:[%s9036 + $0x10] sm:$0xff]
  %v9040 = vld [vmem:[%s9036 + $0x18] sm:$0xff]
  %v9041 = vld [vmem:[%s9036 + $0x20] sm:$0xff]
  %v9042 = vld [vmem:[%s9036 + $0x28] sm:$0xff]
  %v9043 = vld [vmem:[%s9036 + $0x30] sm:$0xff]
  %v9044 = vld [vmem:[%s9036 + $0x38] sm:$0xff]
  %v9045 = vld [vmem:[%s9036 + $0x40] sm:$0xff]
  %v9046 = vld [vmem:[%s9036 + $0x48] sm:$0xff]
  %v9047 = vld [vmem:[%s9036 + $0x50] sm:$0xff]
  %v9048 = vld [vmem:[%s9036 + $0x58] sm:$0xff]
  %v9049 = vld [vmem:[%s9036 + $0x60] sm:$0xff]
  %v9050 = vld [vmem:[%s9036 + $0x68] sm:$0xff]
  %v9051 = vld [vmem:[%s9036 + $0x70] sm:$0xff]
  %v9052 = vld [vmem:[%s9036 + $0x78] sm:$0xff]
  %v9053 = vld [vmem:[%s9036 + $0x80] sm:$0xff]
  %v9054 = vld [vmem:[%s9036 + $0x88] sm:$0xff]
  %v9055 = vld [vmem:[%s9036 + $0x90] sm:$0xff]
  %v9056 = vld [vmem:[%s9036 + $0x98] sm:$0xff]
  %v9057 = vld [vmem:[%s9036 + $0xa0] sm:$0xff]
  %v9058 = vld [vmem:[%s9036 + $0xa8] sm:$0xff]
  %v9059 = vld [vmem:[%s9036 + $0xb0] sm:$0xff]
  %v9060 = vld [vmem:[%s9036 + $0xb8] sm:$0xff]
  %v9061 = vld [vmem:[%s9036 + $0xc0] sm:$0xff]
  %v9062 = vld [vmem:[%s9036 + $0xc8] sm:$0xff]
  %v9063 = vld [vmem:[%s9036 + $0xd0] sm:$0xff]
  %v9064 = vld [vmem:[%s9036 + $0xd8] sm:$0xff]
  %v9065 = vld [vmem:[%s9036 + $0xe0] sm:$0xff]
  %v9066 = vld [vmem:[%s9036 + $0xe8] sm:$0xff]
  %v9067 = vld [vmem:[%s9036 + $0xf0] sm:$0xff]
  %v9068 = vld [vmem:[%s9036 + $0xf8] sm:$0xff]
  %v9069 = vld [vmem:[%s9036 + $0x100] sm:$0xff]
  %v9070 = vld [vmem:[%s9036 + $0x108] sm:$0xff]
  %v9071 = vld [vmem:[%s9036 + $0x110] sm:$0xff]
  %v9072 = vld [vmem:[%s9036 + $0x118] sm:$0xff]
  %v9073 = vld [vmem:[%s9036 + $0x120] sm:$0xff]
  %v9074 = vld [vmem:[%s9036 + $0x128] sm:$0xff]
  %v9075 = vld [vmem:[%s9036 + $0x130] sm:$0xff]
  %v9076 = vld [vmem:[%s9036 + $0x138] sm:$0xff]
  %v9077 = vld [vmem:[%s9036 + $0x140] sm:$0xff]
  %v9078 = vld [vmem:[%s9036 + $0x148] sm:$0xff]
  %v9079 = vld [vmem:[%s9036 + $0x150] sm:$0xff]
  %v9080 = vld [vmem:[%s9036 + $0x158] sm:$0xff]
  %v9081 = vld [vmem:[%s9036 + $0x160] sm:$0xff]
  %v9082 = vld [vmem:[%s9036 + $0x168] sm:$0xff]
  %v9083 = vld [vmem:[%s9036 + $0x170] sm:$0xff]
  %v9084 = vld [vmem:[%s9036 + $0x178] sm:$0xff]
  %v9085 = vld [vmem:[%s9036 + $0x180] sm:$0xff]
  %v9086 = vld [vmem:[%s9036 + $0x188] sm:$0xff]
  %v9087 = vld [vmem:[%s9036 + $0x190] sm:$0xff]
  %v9088 = vld [vmem:[%s9036 + $0x198] sm:$0xff]
  %v9089 = vld [vmem:[%s9036 + $0x1a0] sm:$0xff]
  %v9090 = vld [vmem:[%s9036 + $0x1a8] sm:$0xff]
  %v9091 = vld [vmem:[%s9036 + $0x1b0] sm:$0xff]
  %v9092 = vld [vmem:[%s9036 + $0x1b8] sm:$0xff]
  %v9093 = vld [vmem:[%s9036 + $0x1c0] sm:$0xff]
  %v9094 = vld [vmem:[%s9036 + $0x1c8] sm:$0xff]
  %v9095 = vld [vmem:[%s9036 + $0x1d0] sm:$0xff]
  %v9096 = vld [vmem:[%s9036 + $0x1d8] sm:$0xff]
  %v9097 = vld [vmem:[%s9036 + $0x1e0] sm:$0xff]
  %v9098 = vld [vmem:[%s9036 + $0x1e8] sm:$0xff]
  %v9099 = vld [vmem:[%s9036 + $0x1f0] sm:$0xff]
  %v9100 = vld [vmem:[%s9036 + $0x1f8] sm:$0xff]
  %9101 = vmatpush.msra.mxu0 0.0
  %9102 = vmatpush.msra.mxu0 0.0
  %9103 = vmatpush.msra.mxu0 0.0
  %9104 = vmatpush.msra.mxu0 0.0
  %9105 = vmatpush.msra.mxu0 0.0
  %9106 = vmatpush.msra.mxu0 0.0
  %9107 = vmatpush.msra.mxu0 0.0
  %9108 = vmatpush.msra.mxu0 0.0
  %9109 = vmatpush.msra.mxu0 %v9093
  %9110 = vmatpush.msra.mxu0 %v9085
  %9111 = vmatpush.msra.mxu0 %v9077
  %9112 = vmatpush.msra.mxu0 %v9069
  %9113 = vmatpush.msra.mxu0 %v9061
  %9114 = vmatpush.msra.mxu0 %v9053
  %9115 = vmatpush.msra.mxu0 %v9045
  %9116 = vmatpush.msra.mxu0 %v9037
  %9117 = vmatmul.f32.gmra.mxu0 %v8491
  %v9118 = vpop.f32.mrf.mxu0
  %v9119 = vadd.f32 0.0, %v9118
  %9120 = vmatmul.f32.gmra.mxu0 %v8494
  %v9121 = vpop.f32.mrf.mxu0
  %v9122 = vadd.f32 0.0, %v9121
  %9123 = vdwg.mxu0
  %9124 = vmatpush.msra.mxu0 0.0
  %9125 = vmatpush.msra.mxu0 0.0
  %9126 = vmatpush.msra.mxu0 0.0
  %9127 = vmatpush.msra.mxu0 0.0
  %9128 = vmatpush.msra.mxu0 0.0
  %9129 = vmatpush.msra.mxu0 0.0
  %9130 = vmatpush.msra.mxu0 0.0
  %9131 = vmatpush.msra.mxu0 0.0
  %9132 = vmatpush.msra.mxu0 %v9094
  %9133 = vmatpush.msra.mxu0 %v9086
  %9134 = vmatpush.msra.mxu0 %v9078
  %9135 = vmatpush.msra.mxu0 %v9070
  %9136 = vmatpush.msra.mxu0 %v9062
  %9137 = vmatpush.msra.mxu0 %v9054
  %9138 = vmatpush.msra.mxu0 %v9046
  %9139 = vmatpush.msra.mxu0 %v9038
  %9140 = vmatmul.f32.gmra.mxu0 %v8491
  %v9141 = vpop.f32.mrf.mxu0
  %v9142 = vadd.f32 0.0, %v9141
  %9143 = vmatmul.f32.gmra.mxu0 %v8494
  %v9144 = vpop.f32.mrf.mxu0
  %v9145 = vadd.f32 0.0, %v9144
  %9146 = vdwg.mxu0
  %9147 = vmatpush.msra.mxu0 0.0
  %9148 = vmatpush.msra.mxu0 0.0
  %9149 = vmatpush.msra.mxu0 0.0
  %9150 = vmatpush.msra.mxu0 0.0
  %9151 = vmatpush.msra.mxu0 0.0
  %9152 = vmatpush.msra.mxu0 0.0
  %9153 = vmatpush.msra.mxu0 0.0
  %9154 = vmatpush.msra.mxu0 0.0
  %9155 = vmatpush.msra.mxu0 %v9095
  %9156 = vmatpush.msra.mxu0 %v9087
  %9157 = vmatpush.msra.mxu0 %v9079
  %9158 = vmatpush.msra.mxu0 %v9071
  %9159 = vmatpush.msra.mxu0 %v9063
  %9160 = vmatpush.msra.mxu0 %v9055
  %9161 = vmatpush.msra.mxu0 %v9047
  %9162 = vmatpush.msra.mxu0 %v9039
  %9163 = vmatmul.f32.gmra.mxu0 %v8491
  %v9164 = vpop.f32.mrf.mxu0
  %v9165 = vadd.f32 0.0, %v9164
  %9166 = vmatmul.f32.gmra.mxu0 %v8494
  %v9167 = vpop.f32.mrf.mxu0
  %v9168 = vadd.f32 0.0, %v9167
  %9169 = vdwg.mxu0
  %9170 = vmatpush.msra.mxu0 0.0
  %9171 = vmatpush.msra.mxu0 0.0
  %9172 = vmatpush.msra.mxu0 0.0
  %9173 = vmatpush.msra.mxu0 0.0
  %9174 = vmatpush.msra.mxu0 0.0
  %9175 = vmatpush.msra.mxu0 0.0
  %9176 = vmatpush.msra.mxu0 0.0
  %9177 = vmatpush.msra.mxu0 0.0
  %9178 = vmatpush.msra.mxu0 %v9096
  %9179 = vmatpush.msra.mxu0 %v9088
  %9180 = vmatpush.msra.mxu0 %v9080
  %9181 = vmatpush.msra.mxu0 %v9072
  %9182 = vmatpush.msra.mxu0 %v9064
  %9183 = vmatpush.msra.mxu0 %v9056
  %9184 = vmatpush.msra.mxu0 %v9048
  %9185 = vmatpush.msra.mxu0 %v9040
  %9186 = vmatmul.f32.gmra.mxu0 %v8491
  %v9187 = vpop.f32.mrf.mxu0
  %v9188 = vadd.f32 0.0, %v9187
  %9189 = vmatmul.f32.gmra.mxu0 %v8494
  %v9190 = vpop.f32.mrf.mxu0
  %v9191 = vadd.f32 0.0, %v9190
  %9192 = vdwg.mxu0
  %9193 = vmatpush.msra.mxu0 0.0
  %9194 = vmatpush.msra.mxu0 0.0
  %9195 = vmatpush.msra.mxu0 0.0
  %9196 = vmatpush.msra.mxu0 0.0
  %9197 = vmatpush.msra.mxu0 0.0
  %9198 = vmatpush.msra.mxu0 0.0
  %9199 = vmatpush.msra.mxu0 0.0
  %9200 = vmatpush.msra.mxu0 0.0
  %9201 = vmatpush.msra.mxu0 %v9097
  %9202 = vmatpush.msra.mxu0 %v9089
  %9203 = vmatpush.msra.mxu0 %v9081
  %9204 = vmatpush.msra.mxu0 %v9073
  %9205 = vmatpush.msra.mxu0 %v9065
  %9206 = vmatpush.msra.mxu0 %v9057
  %9207 = vmatpush.msra.mxu0 %v9049
  %9208 = vmatpush.msra.mxu0 %v9041
  %9209 = vmatmul.f32.gmra.mxu0 %v8491
  %v9210 = vpop.f32.mrf.mxu0
  %v9211 = vadd.f32 0.0, %v9210
  %9212 = vmatmul.f32.gmra.mxu0 %v8494
  %v9213 = vpop.f32.mrf.mxu0
  %v9214 = vadd.f32 0.0, %v9213
  %9215 = vdwg.mxu0
  %9216 = vmatpush.msra.mxu0 0.0
  %9217 = vmatpush.msra.mxu0 0.0
  %9218 = vmatpush.msra.mxu0 0.0
  %9219 = vmatpush.msra.mxu0 0.0
  %9220 = vmatpush.msra.mxu0 0.0
  %9221 = vmatpush.msra.mxu0 0.0
  %9222 = vmatpush.msra.mxu0 0.0
  %9223 = vmatpush.msra.mxu0 0.0
  %9224 = vmatpush.msra.mxu0 %v9098
  %9225 = vmatpush.msra.mxu0 %v9090
  %9226 = vmatpush.msra.mxu0 %v9082
  %9227 = vmatpush.msra.mxu0 %v9074
  %9228 = vmatpush.msra.mxu0 %v9066
  %9229 = vmatpush.msra.mxu0 %v9058
  %9230 = vmatpush.msra.mxu0 %v9050
  %9231 = vmatpush.msra.mxu0 %v9042
  %9232 = vmatmul.f32.gmra.mxu0 %v8491
  %v9233 = vpop.f32.mrf.mxu0
  %v9234 = vadd.f32 0.0, %v9233
  %9235 = vmatmul.f32.gmra.mxu0 %v8494
  %v9236 = vpop.f32.mrf.mxu0
  %v9237 = vadd.f32 0.0, %v9236
  %9238 = vdwg.mxu0
  %9239 = vmatpush.msra.mxu0 0.0
  %9240 = vmatpush.msra.mxu0 0.0
  %9241 = vmatpush.msra.mxu0 0.0
  %9242 = vmatpush.msra.mxu0 0.0
  %9243 = vmatpush.msra.mxu0 0.0
  %9244 = vmatpush.msra.mxu0 0.0
  %9245 = vmatpush.msra.mxu0 0.0
  %9246 = vmatpush.msra.mxu0 0.0
  %9247 = vmatpush.msra.mxu0 %v9099
  %9248 = vmatpush.msra.mxu0 %v9091
  %9249 = vmatpush.msra.mxu0 %v9083
  %9250 = vmatpush.msra.mxu0 %v9075
  %9251 = vmatpush.msra.mxu0 %v9067
  %9252 = vmatpush.msra.mxu0 %v9059
  %9253 = vmatpush.msra.mxu0 %v9051
  %9254 = vmatpush.msra.mxu0 %v9043
  %9255 = vmatmul.f32.gmra.mxu0 %v8491
  %v9256 = vpop.f32.mrf.mxu0
  %v9257 = vadd.f32 0.0, %v9256
  %9258 = vmatmul.f32.gmra.mxu0 %v8494
  %v9259 = vpop.f32.mrf.mxu0
  %v9260 = vadd.f32 0.0, %v9259
  %9261 = vdwg.mxu0
  %9262 = vmatpush.msra.mxu0 0.0
  %9263 = vmatpush.msra.mxu0 0.0
  %9264 = vmatpush.msra.mxu0 0.0
  %9265 = vmatpush.msra.mxu0 0.0
  %9266 = vmatpush.msra.mxu0 0.0
  %9267 = vmatpush.msra.mxu0 0.0
  %9268 = vmatpush.msra.mxu0 0.0
  %9269 = vmatpush.msra.mxu0 0.0
  %9270 = vmatpush.msra.mxu0 %v9100
  %9271 = vmatpush.msra.mxu0 %v9092
  %9272 = vmatpush.msra.mxu0 %v9084
  %9273 = vmatpush.msra.mxu0 %v9076
  %9274 = vmatpush.msra.mxu0 %v9068
  %9275 = vmatpush.msra.mxu0 %v9060
  %9276 = vmatpush.msra.mxu0 %v9052
  %9277 = vmatpush.msra.mxu0 %v9044
  %9278 = vmatmul.f32.gmra.mxu0 %v8491
  %v9279 = vpop.f32.mrf.mxu0
  %v9280 = vadd.f32 0.0, %v9279
  %9281 = vmatmul.f32.gmra.mxu0 %v8494
  %v9282 = vpop.f32.mrf.mxu0
  %v9283 = vadd.f32 0.0, %v9282
  %9284 = vdwg.mxu0
  %v9285 = vmul.f32 %v8870, %v9119
  %v9286 = vmul.f32 %v8893, %v9142
  %v9287 = vmul.f32 %v8916, %v9165
  %v9288 = vmul.f32 %v8939, %v9188
  %v9289 = vmul.f32 %v8962, %v9211
  %v9290 = vmul.f32 %v8985, %v9234
  %v9291 = vmul.f32 %v9008, %v9257
  %v9292 = vmul.f32 %v9031, %v9280
  %v9293 = vmul.f32 %v8873, %v9122
  %v9294 = vmul.f32 %v8896, %v9145
  %v9295 = vmul.f32 %v8919, %v9168
  %v9296 = vmul.f32 %v8942, %v9191
  %v9297 = vmul.f32 %v8965, %v9214
  %v9298 = vmul.f32 %v8988, %v9237
  %v9299 = vmul.f32 %v9011, %v9260
  %v9300 = vmul.f32 %v9034, %v9283
  %s9301 = scalar_lea.vmem %s11, 1024
  %v9302 = vld [vmem:[%s9301] sm:$0xff]
  %v9303 = vld [vmem:[%s9301 + $0x8] sm:$0xff]
  %v9304 = vld [vmem:[%s9301 + $0x10] sm:$0xff]
  %v9305 = vld [vmem:[%s9301 + $0x18] sm:$0xff]
  %v9306 = vld [vmem:[%s9301 + $0x20] sm:$0xff]
  %v9307 = vld [vmem:[%s9301 + $0x28] sm:$0xff]
  %v9308 = vld [vmem:[%s9301 + $0x30] sm:$0xff]
  %v9309 = vld [vmem:[%s9301 + $0x38] sm:$0xff]
  %v9310 = vld [vmem:[%s9301 + $0x40] sm:$0xff]
  %v9311 = vld [vmem:[%s9301 + $0x48] sm:$0xff]
  %v9312 = vld [vmem:[%s9301 + $0x50] sm:$0xff]
  %v9313 = vld [vmem:[%s9301 + $0x58] sm:$0xff]
  %v9314 = vld [vmem:[%s9301 + $0x60] sm:$0xff]
  %v9315 = vld [vmem:[%s9301 + $0x68] sm:$0xff]
  %v9316 = vld [vmem:[%s9301 + $0x70] sm:$0xff]
  %v9317 = vld [vmem:[%s9301 + $0x78] sm:$0xff]
  %v9318 = vld [vmem:[%s9301 + $0x80] sm:$0xff]
  %v9319 = vld [vmem:[%s9301 + $0x88] sm:$0xff]
  %v9320 = vld [vmem:[%s9301 + $0x90] sm:$0xff]
  %v9321 = vld [vmem:[%s9301 + $0x98] sm:$0xff]
  %v9322 = vld [vmem:[%s9301 + $0xa0] sm:$0xff]
  %v9323 = vld [vmem:[%s9301 + $0xa8] sm:$0xff]
  %v9324 = vld [vmem:[%s9301 + $0xb0] sm:$0xff]
  %v9325 = vld [vmem:[%s9301 + $0xb8] sm:$0xff]
  %v9326 = vld [vmem:[%s9301 + $0xc0] sm:$0xff]
  %v9327 = vld [vmem:[%s9301 + $0xc8] sm:$0xff]
  %v9328 = vld [vmem:[%s9301 + $0xd0] sm:$0xff]
  %v9329 = vld [vmem:[%s9301 + $0xd8] sm:$0xff]
  %v9330 = vld [vmem:[%s9301 + $0xe0] sm:$0xff]
  %v9331 = vld [vmem:[%s9301 + $0xe8] sm:$0xff]
  %v9332 = vld [vmem:[%s9301 + $0xf0] sm:$0xff]
  %v9333 = vld [vmem:[%s9301 + $0xf8] sm:$0xff]
  %v9334 = vld [vmem:[%s9301 + $0x100] sm:$0xff]
  %v9335 = vld [vmem:[%s9301 + $0x108] sm:$0xff]
  %v9336 = vld [vmem:[%s9301 + $0x110] sm:$0xff]
  %v9337 = vld [vmem:[%s9301 + $0x118] sm:$0xff]
  %v9338 = vld [vmem:[%s9301 + $0x120] sm:$0xff]
  %v9339 = vld [vmem:[%s9301 + $0x128] sm:$0xff]
  %v9340 = vld [vmem:[%s9301 + $0x130] sm:$0xff]
  %v9341 = vld [vmem:[%s9301 + $0x138] sm:$0xff]
  %v9342 = vld [vmem:[%s9301 + $0x140] sm:$0xff]
  %v9343 = vld [vmem:[%s9301 + $0x148] sm:$0xff]
  %v9344 = vld [vmem:[%s9301 + $0x150] sm:$0xff]
  %v9345 = vld [vmem:[%s9301 + $0x158] sm:$0xff]
  %v9346 = vld [vmem:[%s9301 + $0x160] sm:$0xff]
  %v9347 = vld [vmem:[%s9301 + $0x168] sm:$0xff]
  %v9348 = vld [vmem:[%s9301 + $0x170] sm:$0xff]
  %v9349 = vld [vmem:[%s9301 + $0x178] sm:$0xff]
  %v9350 = vld [vmem:[%s9301 + $0x180] sm:$0xff]
  %v9351 = vld [vmem:[%s9301 + $0x188] sm:$0xff]
  %v9352 = vld [vmem:[%s9301 + $0x190] sm:$0xff]
  %v9353 = vld [vmem:[%s9301 + $0x198] sm:$0xff]
  %v9354 = vld [vmem:[%s9301 + $0x1a0] sm:$0xff]
  %v9355 = vld [vmem:[%s9301 + $0x1a8] sm:$0xff]
  %v9356 = vld [vmem:[%s9301 + $0x1b0] sm:$0xff]
  %v9357 = vld [vmem:[%s9301 + $0x1b8] sm:$0xff]
  %v9358 = vld [vmem:[%s9301 + $0x1c0] sm:$0xff]
  %v9359 = vld [vmem:[%s9301 + $0x1c8] sm:$0xff]
  %v9360 = vld [vmem:[%s9301 + $0x1d0] sm:$0xff]
  %v9361 = vld [vmem:[%s9301 + $0x1d8] sm:$0xff]
  %v9362 = vld [vmem:[%s9301 + $0x1e0] sm:$0xff]
  %v9363 = vld [vmem:[%s9301 + $0x1e8] sm:$0xff]
  %v9364 = vld [vmem:[%s9301 + $0x1f0] sm:$0xff]
  %v9365 = vld [vmem:[%s9301 + $0x1f8] sm:$0xff]
  %9366 = vmatpush.msra.mxu0 0.0
  %9367 = vmatpush.msra.mxu0 0.0
  %9368 = vmatpush.msra.mxu0 0.0
  %9369 = vmatpush.msra.mxu0 0.0
  %9370 = vmatpush.msra.mxu0 0.0
  %9371 = vmatpush.msra.mxu0 0.0
  %9372 = vmatpush.msra.mxu0 0.0
  %9373 = vmatpush.msra.mxu0 0.0
  %9374 = vmatpush.msra.mxu0 %v9358
  %9375 = vmatpush.msra.mxu0 %v9350
  %9376 = vmatpush.msra.mxu0 %v9342
  %9377 = vmatpush.msra.mxu0 %v9334
  %9378 = vmatpush.msra.mxu0 %v9326
  %9379 = vmatpush.msra.mxu0 %v9318
  %9380 = vmatpush.msra.mxu0 %v9310
  %9381 = vmatpush.msra.mxu0 %v9302
  %9382 = vmatmul.f32.gmra.mxu0 %v8491
  %v9383 = vpop.f32.mrf.mxu0
  %v9384 = vadd.f32 0.0, %v9383
  %9385 = vmatmul.f32.gmra.mxu0 %v8494
  %v9386 = vpop.f32.mrf.mxu0
  %v9387 = vadd.f32 0.0, %v9386
  %9388 = vdwg.mxu0
  %9389 = vmatpush.msra.mxu0 0.0
  %9390 = vmatpush.msra.mxu0 0.0
  %9391 = vmatpush.msra.mxu0 0.0
  %9392 = vmatpush.msra.mxu0 0.0
  %9393 = vmatpush.msra.mxu0 0.0
  %9394 = vmatpush.msra.mxu0 0.0
  %9395 = vmatpush.msra.mxu0 0.0
  %9396 = vmatpush.msra.mxu0 0.0
  %9397 = vmatpush.msra.mxu0 %v9359
  %9398 = vmatpush.msra.mxu0 %v9351
  %9399 = vmatpush.msra.mxu0 %v9343
  %9400 = vmatpush.msra.mxu0 %v9335
  %9401 = vmatpush.msra.mxu0 %v9327
  %9402 = vmatpush.msra.mxu0 %v9319
  %9403 = vmatpush.msra.mxu0 %v9311
  %9404 = vmatpush.msra.mxu0 %v9303
  %9405 = vmatmul.f32.gmra.mxu0 %v8491
  %v9406 = vpop.f32.mrf.mxu0
  %v9407 = vadd.f32 0.0, %v9406
  %9408 = vmatmul.f32.gmra.mxu0 %v8494
  %v9409 = vpop.f32.mrf.mxu0
  %v9410 = vadd.f32 0.0, %v9409
  %9411 = vdwg.mxu0
  %9412 = vmatpush.msra.mxu0 0.0
  %9413 = vmatpush.msra.mxu0 0.0
  %9414 = vmatpush.msra.mxu0 0.0
  %9415 = vmatpush.msra.mxu0 0.0
  %9416 = vmatpush.msra.mxu0 0.0
  %9417 = vmatpush.msra.mxu0 0.0
  %9418 = vmatpush.msra.mxu0 0.0
  %9419 = vmatpush.msra.mxu0 0.0
  %9420 = vmatpush.msra.mxu0 %v9360
  %9421 = vmatpush.msra.mxu0 %v9352
  %9422 = vmatpush.msra.mxu0 %v9344
  %9423 = vmatpush.msra.mxu0 %v9336
  %9424 = vmatpush.msra.mxu0 %v9328
  %9425 = vmatpush.msra.mxu0 %v9320
  %9426 = vmatpush.msra.mxu0 %v9312
  %9427 = vmatpush.msra.mxu0 %v9304
  %9428 = vmatmul.f32.gmra.mxu0 %v8491
  %v9429 = vpop.f32.mrf.mxu0
  %v9430 = vadd.f32 0.0, %v9429
  %9431 = vmatmul.f32.gmra.mxu0 %v8494
  %v9432 = vpop.f32.mrf.mxu0
  %v9433 = vadd.f32 0.0, %v9432
  %9434 = vdwg.mxu0
  %9435 = vmatpush.msra.mxu0 0.0
  %9436 = vmatpush.msra.mxu0 0.0
  %9437 = vmatpush.msra.mxu0 0.0
  %9438 = vmatpush.msra.mxu0 0.0
  %9439 = vmatpush.msra.mxu0 0.0
  %9440 = vmatpush.msra.mxu0 0.0
  %9441 = vmatpush.msra.mxu0 0.0
  %9442 = vmatpush.msra.mxu0 0.0
  %9443 = vmatpush.msra.mxu0 %v9361
  %9444 = vmatpush.msra.mxu0 %v9353
  %9445 = vmatpush.msra.mxu0 %v9345
  %9446 = vmatpush.msra.mxu0 %v9337
  %9447 = vmatpush.msra.mxu0 %v9329
  %9448 = vmatpush.msra.mxu0 %v9321
  %9449 = vmatpush.msra.mxu0 %v9313
  %9450 = vmatpush.msra.mxu0 %v9305
  %9451 = vmatmul.f32.gmra.mxu0 %v8491
  %v9452 = vpop.f32.mrf.mxu0
  %v9453 = vadd.f32 0.0, %v9452
  %9454 = vmatmul.f32.gmra.mxu0 %v8494
  %v9455 = vpop.f32.mrf.mxu0
  %v9456 = vadd.f32 0.0, %v9455
  %9457 = vdwg.mxu0
  %9458 = vmatpush.msra.mxu0 0.0
  %9459 = vmatpush.msra.mxu0 0.0
  %9460 = vmatpush.msra.mxu0 0.0
  %9461 = vmatpush.msra.mxu0 0.0
  %9462 = vmatpush.msra.mxu0 0.0
  %9463 = vmatpush.msra.mxu0 0.0
  %9464 = vmatpush.msra.mxu0 0.0
  %9465 = vmatpush.msra.mxu0 0.0
  %9466 = vmatpush.msra.mxu0 %v9362
  %9467 = vmatpush.msra.mxu0 %v9354
  %9468 = vmatpush.msra.mxu0 %v9346
  %9469 = vmatpush.msra.mxu0 %v9338
  %9470 = vmatpush.msra.mxu0 %v9330
  %9471 = vmatpush.msra.mxu0 %v9322
  %9472 = vmatpush.msra.mxu0 %v9314
  %9473 = vmatpush.msra.mxu0 %v9306
  %9474 = vmatmul.f32.gmra.mxu0 %v8491
  %v9475 = vpop.f32.mrf.mxu0
  %v9476 = vadd.f32 0.0, %v9475
  %9477 = vmatmul.f32.gmra.mxu0 %v8494
  %v9478 = vpop.f32.mrf.mxu0
  %v9479 = vadd.f32 0.0, %v9478
  %9480 = vdwg.mxu0
  %9481 = vmatpush.msra.mxu0 0.0
  %9482 = vmatpush.msra.mxu0 0.0
  %9483 = vmatpush.msra.mxu0 0.0
  %9484 = vmatpush.msra.mxu0 0.0
  %9485 = vmatpush.msra.mxu0 0.0
  %9486 = vmatpush.msra.mxu0 0.0
  %9487 = vmatpush.msra.mxu0 0.0
  %9488 = vmatpush.msra.mxu0 0.0
  %9489 = vmatpush.msra.mxu0 %v9363
  %9490 = vmatpush.msra.mxu0 %v9355
  %9491 = vmatpush.msra.mxu0 %v9347
  %9492 = vmatpush.msra.mxu0 %v9339
  %9493 = vmatpush.msra.mxu0 %v9331
  %9494 = vmatpush.msra.mxu0 %v9323
  %9495 = vmatpush.msra.mxu0 %v9315
  %9496 = vmatpush.msra.mxu0 %v9307
  %9497 = vmatmul.f32.gmra.mxu0 %v8491
  %v9498 = vpop.f32.mrf.mxu0
  %v9499 = vadd.f32 0.0, %v9498
  %9500 = vmatmul.f32.gmra.mxu0 %v8494
  %v9501 = vpop.f32.mrf.mxu0
  %v9502 = vadd.f32 0.0, %v9501
  %9503 = vdwg.mxu0
  %9504 = vmatpush.msra.mxu0 0.0
  %9505 = vmatpush.msra.mxu0 0.0
  %9506 = vmatpush.msra.mxu0 0.0
  %9507 = vmatpush.msra.mxu0 0.0
  %9508 = vmatpush.msra.mxu0 0.0
  %9509 = vmatpush.msra.mxu0 0.0
  %9510 = vmatpush.msra.mxu0 0.0
  %9511 = vmatpush.msra.mxu0 0.0
  %9512 = vmatpush.msra.mxu0 %v9364
  %9513 = vmatpush.msra.mxu0 %v9356
  %9514 = vmatpush.msra.mxu0 %v9348
  %9515 = vmatpush.msra.mxu0 %v9340
  %9516 = vmatpush.msra.mxu0 %v9332
  %9517 = vmatpush.msra.mxu0 %v9324
  %9518 = vmatpush.msra.mxu0 %v9316
  %9519 = vmatpush.msra.mxu0 %v9308
  %9520 = vmatmul.f32.gmra.mxu0 %v8491
  %v9521 = vpop.f32.mrf.mxu0
  %v9522 = vadd.f32 0.0, %v9521
  %9523 = vmatmul.f32.gmra.mxu0 %v8494
  %v9524 = vpop.f32.mrf.mxu0
  %v9525 = vadd.f32 0.0, %v9524
  %9526 = vdwg.mxu0
  %9527 = vmatpush.msra.mxu0 0.0
  %9528 = vmatpush.msra.mxu0 0.0
  %9529 = vmatpush.msra.mxu0 0.0
  %9530 = vmatpush.msra.mxu0 0.0
  %9531 = vmatpush.msra.mxu0 0.0
  %9532 = vmatpush.msra.mxu0 0.0
  %9533 = vmatpush.msra.mxu0 0.0
  %9534 = vmatpush.msra.mxu0 0.0
  %9535 = vmatpush.msra.mxu0 %v9365
  %9536 = vmatpush.msra.mxu0 %v9357
  %9537 = vmatpush.msra.mxu0 %v9349
  %9538 = vmatpush.msra.mxu0 %v9341
  %9539 = vmatpush.msra.mxu0 %v9333
  %9540 = vmatpush.msra.mxu0 %v9325
  %9541 = vmatpush.msra.mxu0 %v9317
  %9542 = vmatpush.msra.mxu0 %v9309
  %9543 = vmatmul.f32.gmra.mxu0 %v8491
  %v9544 = vpop.f32.mrf.mxu0
  %v9545 = vadd.f32 0.0, %v9544
  %9546 = vmatmul.f32.gmra.mxu0 %v8494
  %v9547 = vpop.f32.mrf.mxu0
  %v9548 = vadd.f32 0.0, %v9547
  %9549 = vdwg.mxu0
  %9550 = vst [vmem:[#allocation2] sm:$0xff] %v9285
  %9551 = vst [vmem:[#allocation2 + $0x8] sm:$0xff] %v9286
  %9552 = vst [vmem:[#allocation2 + $0x10] sm:$0xff] %v9287
  %9553 = vst [vmem:[#allocation2 + $0x18] sm:$0xff] %v9288
  %9554 = vst [vmem:[#allocation2 + $0x20] sm:$0xff] %v9289
  %9555 = vst [vmem:[#allocation2 + $0x28] sm:$0xff] %v9290
  %9556 = vst [vmem:[#allocation2 + $0x30] sm:$0xff] %v9291
  %9557 = vst [vmem:[#allocation2 + $0x38] sm:$0xff] %v9292
  %9558 = vst [vmem:[#allocation2 + $0x40] sm:$0xff] %v9293
  %9559 = vst [vmem:[#allocation2 + $0x48] sm:$0xff] %v9294
  %9560 = vst [vmem:[#allocation2 + $0x50] sm:$0xff] %v9295
  %9561 = vst [vmem:[#allocation2 + $0x58] sm:$0xff] %v9296
  %9562 = vst [vmem:[#allocation2 + $0x60] sm:$0xff] %v9297
  %9563 = vst [vmem:[#allocation2 + $0x68] sm:$0xff] %v9298
  %9564 = vst [vmem:[#allocation2 + $0x70] sm:$0xff] %v9299
  %9565 = vst [vmem:[#allocation2 + $0x78] sm:$0xff] %v9300
  %9566 = vst [vmem:[#allocation3] sm:$0xff] %v9384
  %9567 = vst [vmem:[#allocation3 + $0x8] sm:$0xff] %v9407
  %9568 = vst [vmem:[#allocation3 + $0x10] sm:$0xff] %v9430
  %9569 = vst [vmem:[#allocation3 + $0x18] sm:$0xff] %v9453
  %9570 = vst [vmem:[#allocation3 + $0x20] sm:$0xff] %v9476
  %9571 = vst [vmem:[#allocation3 + $0x28] sm:$0xff] %v9499
  %9572 = vst [vmem:[#allocation3 + $0x30] sm:$0xff] %v9522
  %9573 = vst [vmem:[#allocation3 + $0x38] sm:$0xff] %v9545
  %9574 = vst [vmem:[#allocation3 + $0x40] sm:$0xff] %v9387
  %9575 = vst [vmem:[#allocation3 + $0x48] sm:$0xff] %v9410
  %9576 = vst [vmem:[#allocation3 + $0x50] sm:$0xff] %v9433
  %9577 = vst [vmem:[#allocation3 + $0x58] sm:$0xff] %v9456
  %9578 = vst [vmem:[#allocation3 + $0x60] sm:$0xff] %v9479
  %9579 = vst [vmem:[#allocation3 + $0x68] sm:$0xff] %v9502
  %9580 = vst [vmem:[#allocation3 + $0x70] sm:$0xff] %v9525
  %9581 = vst [vmem:[#allocation3 + $0x78] sm:$0xff] %v9548
  %v9582 = vmul.f32 %v8813, 0.0
  %v9583 = vmul.f32 %v8815, 0.0
  %v9584 = vmul.f32 %v8817, 0.0
  %v9585 = vmul.f32 %v8819, 0.0
  %v9586 = vmul.f32 %v8821, 0.0
  %v9587 = vmul.f32 %v8823, 0.0
  %v9588 = vmul.f32 %v8825, 0.0
  %v9589 = vmul.f32 %v8827, 0.0
  %v9590 = vld [vmem:[#allocation2] sm:$0x3]
  %v9591 = vld [vmem:[#allocation2 + $0x8] sm:$0x3]
  %v9592 = vld [vmem:[#allocation2 + $0x10] sm:$0x3]
  %v9593 = vld [vmem:[#allocation2 + $0x18] sm:$0x3]
  %v9594 = vld [vmem:[#allocation2 + $0x20] sm:$0x3]
  %v9595 = vld [vmem:[#allocation2 + $0x28] sm:$0x3]
  %v9596 = vld [vmem:[#allocation2 + $0x30] sm:$0x3]
  %v9597 = vld [vmem:[#allocation2 + $0x38] sm:$0x3]
  %v9598 = vadd.f32 %v9582, %v9590
  %v9599 = vadd.f32 %v9583, %v9591
  %v9600 = vadd.f32 %v9584, %v9592
  %v9601 = vadd.f32 %v9585, %v9593
  %v9602 = vadd.f32 %v9586, %v9594
  %v9603 = vadd.f32 %v9587, %v9595
  %v9604 = vadd.f32 %v9588, %v9596
  %v9605 = vadd.f32 %v9589, %v9597
  %v9606 = vld [vmem:[#allocation3] sm:$0x3]
  %v9607 = vld [vmem:[#allocation3 + $0x8] sm:$0x3]
  %v9608 = vld [vmem:[#allocation3 + $0x10] sm:$0x3]
  %v9609 = vld [vmem:[#allocation3 + $0x18] sm:$0x3]
  %v9610 = vld [vmem:[#allocation3 + $0x20] sm:$0x3]
  %v9611 = vld [vmem:[#allocation3 + $0x28] sm:$0x3]
  %v9612 = vld [vmem:[#allocation3 + $0x30] sm:$0x3]
  %v9613 = vld [vmem:[#allocation3 + $0x38] sm:$0x3]
  %v9614 = vmul.f32 %v9598, %v9606
  %v9615 = vmul.f32 %v9599, %v9607
  %v9616 = vmul.f32 %v9600, %v9608
  %v9617 = vmul.f32 %v9601, %v9609
  %v9618 = vmul.f32 %v9602, %v9610
  %v9619 = vmul.f32 %v9603, %v9611
  %v9620 = vmul.f32 %v9604, %v9612
  %v9621 = vmul.f32 %v9605, %v9613
  %v9630 = vrot.slane %v9598, 6
  %v9631 = vrot.slane %v9599, 6
  %v9632 = vrot.slane %v9600, 6
  %v9633 = vrot.slane %v9601, 6
  %v9634 = vrot.slane %v9602, 6
  %v9635 = vrot.slane %v9603, 6
  %v9636 = vrot.slane %v9604, 6
  %v9637 = vrot.slane %v9605, 6
  %v9646 = vmul.f32 %v8813, %v9630
  %v9647 = vmul.f32 %v8815, %v9631
  %v9648 = vmul.f32 %v8817, %v9632
  %v9649 = vmul.f32 %v8819, %v9633
  %v9650 = vmul.f32 %v8821, %v9634
  %v9651 = vmul.f32 %v8823, %v9635
  %v9652 = vmul.f32 %v8825, %v9636
  %v9653 = vmul.f32 %v8827, %v9637
  %v9654 = vld [vmem:[#allocation2] sm:$0xc]
  %v9655 = vld [vmem:[#allocation2 + $0x8] sm:$0xc]
  %v9656 = vld [vmem:[#allocation2 + $0x10] sm:$0xc]
  %v9657 = vld [vmem:[#allocation2 + $0x18] sm:$0xc]
  %v9658 = vld [vmem:[#allocation2 + $0x20] sm:$0xc]
  %v9659 = vld [vmem:[#allocation2 + $0x28] sm:$0xc]
  %v9660 = vld [vmem:[#allocation2 + $0x30] sm:$0xc]
  %v9661 = vld [vmem:[#allocation2 + $0x38] sm:$0xc]
  %v9662 = vadd.f32 %v9646, %v9654
  %v9663 = vadd.f32 %v9647, %v9655
  %v9664 = vadd.f32 %v9648, %v9656
  %v9665 = vadd.f32 %v9649, %v9657
  %v9666 = vadd.f32 %v9650, %v9658
  %v9667 = vadd.f32 %v9651, %v9659
  %v9668 = vadd.f32 %v9652, %v9660
  %v9669 = vadd.f32 %v9653, %v9661
  %v9670 = vld [vmem:[#allocation3] sm:$0xc]
  %v9671 = vld [vmem:[#allocation3 + $0x8] sm:$0xc]
  %v9672 = vld [vmem:[#allocation3 + $0x10] sm:$0xc]
  %v9673 = vld [vmem:[#allocation3 + $0x18] sm:$0xc]
  %v9674 = vld [vmem:[#allocation3 + $0x20] sm:$0xc]
  %v9675 = vld [vmem:[#allocation3 + $0x28] sm:$0xc]
  %v9676 = vld [vmem:[#allocation3 + $0x30] sm:$0xc]
  %v9677 = vld [vmem:[#allocation3 + $0x38] sm:$0xc]
  %v9678 = vmul.f32 %v9662, %v9670
  %v9679 = vmul.f32 %v9663, %v9671
  %v9680 = vmul.f32 %v9664, %v9672
  %v9681 = vmul.f32 %v9665, %v9673
  %v9682 = vmul.f32 %v9666, %v9674
  %v9683 = vmul.f32 %v9667, %v9675
  %v9684 = vmul.f32 %v9668, %v9676
  %v9685 = vmul.f32 %v9669, %v9677
  %v9694 = vrot.slane %v9678, 2
  %v9695 = vrot.slane %v9679, 2
  %v9696 = vrot.slane %v9680, 2
  %v9697 = vrot.slane %v9681, 2
  %v9698 = vrot.slane %v9682, 2
  %v9699 = vrot.slane %v9683, 2
  %v9700 = vrot.slane %v9684, 2
  %v9701 = vrot.slane %v9685, 2
  %v9702 = vsel %vm1733, %v9694, 0
  %v9704 = vsel %vm1733, %v9695, 0
  %v9706 = vsel %vm1733, %v9696, 0
  %v9708 = vsel %vm1733, %v9697, 0
  %v9710 = vsel %vm1733, %v9698, 0
  %v9712 = vsel %vm1733, %v9699, 0
  %v9714 = vsel %vm1733, %v9700, 0
  %v9716 = vsel %vm1733, %v9701, 0
  %9718 = vmatpush.msra.mxu0 0.0
  %9719 = vmatpush.msra.mxu0 0.0
  %9720 = vmatpush.msra.mxu0 0.0
  %9721 = vmatpush.msra.mxu0 0.0
  %9722 = vmatpush.msra.mxu0 0.0
  %9723 = vmatpush.msra.mxu0 0.0
  %9724 = vmatpush.msra.mxu0 0.0
  %9725 = vmatpush.msra.mxu0 0.0
  %9726 = vmatpush.msra.mxu0 0.0
  %9727 = vmatpush.msra.mxu0 0.0
  %9728 = vmatpush.msra.mxu0 0.0
  %9729 = vmatpush.msra.mxu0 0.0
  %9730 = vmatpush.msra.mxu0 0.0
  %9731 = vmatpush.msra.mxu0 0.0
  %9732 = vmatpush.msra.mxu0 0.0
  %9733 = vmatpush.msra.mxu0 %v9702
  %9734 = vmatmul.f32.gmra.mxu0 %v1728
  %v9735 = vpop.f32.mrf.mxu0
  %v9736 = vadd.f32 0.0, %v9735
  %9737 = vmatmul.f32.gmra.mxu0 %v1731
  %v9738 = vpop.f32.mrf.mxu0
  %v9739 = vadd.f32 0.0, %v9738
  %9740 = vdwg.mxu0
  %9741 = vmatpush.msra.mxu0 0.0
  %9742 = vmatpush.msra.mxu0 0.0
  %9743 = vmatpush.msra.mxu0 0.0
  %9744 = vmatpush.msra.mxu0 0.0
  %9745 = vmatpush.msra.mxu0 0.0
  %9746 = vmatpush.msra.mxu0 0.0
  %9747 = vmatpush.msra.mxu0 0.0
  %9748 = vmatpush.msra.mxu0 0.0
  %9749 = vmatpush.msra.mxu0 0.0
  %9750 = vmatpush.msra.mxu0 0.0
  %9751 = vmatpush.msra.mxu0 0.0
  %9752 = vmatpush.msra.mxu0 0.0
  %9753 = vmatpush.msra.mxu0 0.0
  %9754 = vmatpush.msra.mxu0 0.0
  %9755 = vmatpush.msra.mxu0 0.0
  %9756 = vmatpush.msra.mxu0 %v9704
  %9757 = vmatmul.f32.gmra.mxu0 %v1728
  %v9758 = vpop.f32.mrf.mxu0
  %v9759 = vadd.f32 0.0, %v9758
  %9760 = vmatmul.f32.gmra.mxu0 %v1731
  %v9761 = vpop.f32.mrf.mxu0
  %v9762 = vadd.f32 0.0, %v9761
  %9763 = vdwg.mxu0
  %9764 = vmatpush.msra.mxu0 0.0
  %9765 = vmatpush.msra.mxu0 0.0
  %9766 = vmatpush.msra.mxu0 0.0
  %9767 = vmatpush.msra.mxu0 0.0
  %9768 = vmatpush.msra.mxu0 0.0
  %9769 = vmatpush.msra.mxu0 0.0
  %9770 = vmatpush.msra.mxu0 0.0
  %9771 = vmatpush.msra.mxu0 0.0
  %9772 = vmatpush.msra.mxu0 0.0
  %9773 = vmatpush.msra.mxu0 0.0
  %9774 = vmatpush.msra.mxu0 0.0
  %9775 = vmatpush.msra.mxu0 0.0
  %9776 = vmatpush.msra.mxu0 0.0
  %9777 = vmatpush.msra.mxu0 0.0
  %9778 = vmatpush.msra.mxu0 0.0
  %9779 = vmatpush.msra.mxu0 %v9706
  %9780 = vmatmul.f32.gmra.mxu0 %v1728
  %v9781 = vpop.f32.mrf.mxu0
  %v9782 = vadd.f32 0.0, %v9781
  %9783 = vmatmul.f32.gmra.mxu0 %v1731
  %v9784 = vpop.f32.mrf.mxu0
  %v9785 = vadd.f32 0.0, %v9784
  %9786 = vdwg.mxu0
  %9787 = vmatpush.msra.mxu0 0.0
  %9788 = vmatpush.msra.mxu0 0.0
  %9789 = vmatpush.msra.mxu0 0.0
  %9790 = vmatpush.msra.mxu0 0.0
  %9791 = vmatpush.msra.mxu0 0.0
  %9792 = vmatpush.msra.mxu0 0.0
  %9793 = vmatpush.msra.mxu0 0.0
  %9794 = vmatpush.msra.mxu0 0.0
  %9795 = vmatpush.msra.mxu0 0.0
  %9796 = vmatpush.msra.mxu0 0.0
  %9797 = vmatpush.msra.mxu0 0.0
  %9798 = vmatpush.msra.mxu0 0.0
  %9799 = vmatpush.msra.mxu0 0.0
  %9800 = vmatpush.msra.mxu0 0.0
  %9801 = vmatpush.msra.mxu0 0.0
  %9802 = vmatpush.msra.mxu0 %v9708
  %9803 = vmatmul.f32.gmra.mxu0 %v1728
  %v9804 = vpop.f32.mrf.mxu0
  %v9805 = vadd.f32 0.0, %v9804
  %9806 = vmatmul.f32.gmra.mxu0 %v1731
  %v9807 = vpop.f32.mrf.mxu0
  %v9808 = vadd.f32 0.0, %v9807
  %9809 = vdwg.mxu0
  %9810 = vmatpush.msra.mxu0 0.0
  %9811 = vmatpush.msra.mxu0 0.0
  %9812 = vmatpush.msra.mxu0 0.0
  %9813 = vmatpush.msra.mxu0 0.0
  %9814 = vmatpush.msra.mxu0 0.0
  %9815 = vmatpush.msra.mxu0 0.0
  %9816 = vmatpush.msra.mxu0 0.0
  %9817 = vmatpush.msra.mxu0 0.0
  %9818 = vmatpush.msra.mxu0 0.0
  %9819 = vmatpush.msra.mxu0 0.0
  %9820 = vmatpush.msra.mxu0 0.0
  %9821 = vmatpush.msra.mxu0 0.0
  %9822 = vmatpush.msra.mxu0 0.0
  %9823 = vmatpush.msra.mxu0 0.0
  %9824 = vmatpush.msra.mxu0 0.0
  %9825 = vmatpush.msra.mxu0 %v9710
  %9826 = vmatmul.f32.gmra.mxu0 %v1728
  %v9827 = vpop.f32.mrf.mxu0
  %v9828 = vadd.f32 0.0, %v9827
  %9829 = vmatmul.f32.gmra.mxu0 %v1731
  %v9830 = vpop.f32.mrf.mxu0
  %v9831 = vadd.f32 0.0, %v9830
  %9832 = vdwg.mxu0
  %9833 = vmatpush.msra.mxu0 0.0
  %9834 = vmatpush.msra.mxu0 0.0
  %9835 = vmatpush.msra.mxu0 0.0
  %9836 = vmatpush.msra.mxu0 0.0
  %9837 = vmatpush.msra.mxu0 0.0
  %9838 = vmatpush.msra.mxu0 0.0
  %9839 = vmatpush.msra.mxu0 0.0
  %9840 = vmatpush.msra.mxu0 0.0
  %9841 = vmatpush.msra.mxu0 0.0
  %9842 = vmatpush.msra.mxu0 0.0
  %9843 = vmatpush.msra.mxu0 0.0
  %9844 = vmatpush.msra.mxu0 0.0
  %9845 = vmatpush.msra.mxu0 0.0
  %9846 = vmatpush.msra.mxu0 0.0
  %9847 = vmatpush.msra.mxu0 0.0
  %9848 = vmatpush.msra.mxu0 %v9712
  %9849 = vmatmul.f32.gmra.mxu0 %v1728
  %v9850 = vpop.f32.mrf.mxu0
  %v9851 = vadd.f32 0.0, %v9850
  %9852 = vmatmul.f32.gmra.mxu0 %v1731
  %v9853 = vpop.f32.mrf.mxu0
  %v9854 = vadd.f32 0.0, %v9853
  %9855 = vdwg.mxu0
  %9856 = vmatpush.msra.mxu0 0.0
  %9857 = vmatpush.msra.mxu0 0.0
  %9858 = vmatpush.msra.mxu0 0.0
  %9859 = vmatpush.msra.mxu0 0.0
  %9860 = vmatpush.msra.mxu0 0.0
  %9861 = vmatpush.msra.mxu0 0.0
  %9862 = vmatpush.msra.mxu0 0.0
  %9863 = vmatpush.msra.mxu0 0.0
  %9864 = vmatpush.msra.mxu0 0.0
  %9865 = vmatpush.msra.mxu0 0.0
  %9866 = vmatpush.msra.mxu0 0.0
  %9867 = vmatpush.msra.mxu0 0.0
  %9868 = vmatpush.msra.mxu0 0.0
  %9869 = vmatpush.msra.mxu0 0.0
  %9870 = vmatpush.msra.mxu0 0.0
  %9871 = vmatpush.msra.mxu0 %v9714
  %9872 = vmatmul.f32.gmra.mxu0 %v1728
  %v9873 = vpop.f32.mrf.mxu0
  %v9874 = vadd.f32 0.0, %v9873
  %9875 = vmatmul.f32.gmra.mxu0 %v1731
  %v9876 = vpop.f32.mrf.mxu0
  %v9877 = vadd.f32 0.0, %v9876
  %9878 = vdwg.mxu0
  %9879 = vmatpush.msra.mxu0 0.0
  %9880 = vmatpush.msra.mxu0 0.0
  %9881 = vmatpush.msra.mxu0 0.0
  %9882 = vmatpush.msra.mxu0 0.0
  %9883 = vmatpush.msra.mxu0 0.0
  %9884 = vmatpush.msra.mxu0 0.0
  %9885 = vmatpush.msra.mxu0 0.0
  %9886 = vmatpush.msra.mxu0 0.0
  %9887 = vmatpush.msra.mxu0 0.0
  %9888 = vmatpush.msra.mxu0 0.0
  %9889 = vmatpush.msra.mxu0 0.0
  %9890 = vmatpush.msra.mxu0 0.0
  %9891 = vmatpush.msra.mxu0 0.0
  %9892 = vmatpush.msra.mxu0 0.0
  %9893 = vmatpush.msra.mxu0 0.0
  %9894 = vmatpush.msra.mxu0 %v9716
  %9895 = vmatmul.f32.gmra.mxu0 %v1728
  %v9896 = vpop.f32.mrf.mxu0
  %v9897 = vadd.f32 0.0, %v9896
  %9898 = vmatmul.f32.gmra.mxu0 %v1731
  %v9899 = vpop.f32.mrf.mxu0
  %v9900 = vadd.f32 0.0, %v9899
  %9901 = vdwg.mxu0
  %v9903 = vsel %vm1733, %v9614, 0
  %v9906 = vsel %vm1733, %v9615, 0
  %v9909 = vsel %vm1733, %v9616, 0
  %v9912 = vsel %vm1733, %v9617, 0
  %v9915 = vsel %vm1733, %v9618, 0
  %v9918 = vsel %vm1733, %v9619, 0
  %v9921 = vsel %vm1733, %v9620, 0
  %v9924 = vsel %vm1733, %v9621, 0
  %9926 = vmatpush.msra.mxu0 0.0
  %9927 = vmatpush.msra.mxu0 0.0
  %9928 = vmatpush.msra.mxu0 0.0
  %9929 = vmatpush.msra.mxu0 0.0
  %9930 = vmatpush.msra.mxu0 0.0
  %9931 = vmatpush.msra.mxu0 0.0
  %9932 = vmatpush.msra.mxu0 0.0
  %9933 = vmatpush.msra.mxu0 0.0
  %9934 = vmatpush.msra.mxu0 0.0
  %9935 = vmatpush.msra.mxu0 0.0
  %9936 = vmatpush.msra.mxu0 0.0
  %9937 = vmatpush.msra.mxu0 0.0
  %9938 = vmatpush.msra.mxu0 0.0
  %9939 = vmatpush.msra.mxu0 0.0
  %9940 = vmatpush.msra.mxu0 0.0
  %9941 = vmatpush.msra.mxu0 %v9903
  %9942 = vmatmul.f32.gmra.mxu0 %v1935
  %v9943 = vpop.f32.mrf.mxu0
  %v9944 = vadd.f32 %v9736, %v9943
  %9945 = vmatmul.f32.gmra.mxu0 %v1938
  %v9946 = vpop.f32.mrf.mxu0
  %v9947 = vadd.f32 %v9739, %v9946
  %9948 = vdwg.mxu0
  %9949 = vmatpush.msra.mxu0 0.0
  %9950 = vmatpush.msra.mxu0 0.0
  %9951 = vmatpush.msra.mxu0 0.0
  %9952 = vmatpush.msra.mxu0 0.0
  %9953 = vmatpush.msra.mxu0 0.0
  %9954 = vmatpush.msra.mxu0 0.0
  %9955 = vmatpush.msra.mxu0 0.0
  %9956 = vmatpush.msra.mxu0 0.0
  %9957 = vmatpush.msra.mxu0 0.0
  %9958 = vmatpush.msra.mxu0 0.0
  %9959 = vmatpush.msra.mxu0 0.0
  %9960 = vmatpush.msra.mxu0 0.0
  %9961 = vmatpush.msra.mxu0 0.0
  %9962 = vmatpush.msra.mxu0 0.0
  %9963 = vmatpush.msra.mxu0 0.0
  %9964 = vmatpush.msra.mxu0 %v9906
  %9965 = vmatmul.f32.gmra.mxu0 %v1935
  %v9966 = vpop.f32.mrf.mxu0
  %v9967 = vadd.f32 %v9759, %v9966
  %9968 = vmatmul.f32.gmra.mxu0 %v1938
  %v9969 = vpop.f32.mrf.mxu0
  %v9970 = vadd.f32 %v9762, %v9969
  %9971 = vdwg.mxu0
  %9972 = vmatpush.msra.mxu0 0.0
  %9973 = vmatpush.msra.mxu0 0.0
  %9974 = vmatpush.msra.mxu0 0.0
  %9975 = vmatpush.msra.mxu0 0.0
  %9976 = vmatpush.msra.mxu0 0.0
  %9977 = vmatpush.msra.mxu0 0.0
  %9978 = vmatpush.msra.mxu0 0.0
  %9979 = vmatpush.msra.mxu0 0.0
  %9980 = vmatpush.msra.mxu0 0.0
  %9981 = vmatpush.msra.mxu0 0.0
  %9982 = vmatpush.msra.mxu0 0.0
  %9983 = vmatpush.msra.mxu0 0.0
  %9984 = vmatpush.msra.mxu0 0.0
  %9985 = vmatpush.msra.mxu0 0.0
  %9986 = vmatpush.msra.mxu0 0.0
  %9987 = vmatpush.msra.mxu0 %v9909
  %9988 = vmatmul.f32.gmra.mxu0 %v1935
  %v9989 = vpop.f32.mrf.mxu0
  %v9990 = vadd.f32 %v9782, %v9989
  %9991 = vmatmul.f32.gmra.mxu0 %v1938
  %v9992 = vpop.f32.mrf.mxu0
  %v9993 = vadd.f32 %v9785, %v9992
  %9994 = vdwg.mxu0
  %9995 = vmatpush.msra.mxu0 0.0
  %9996 = vmatpush.msra.mxu0 0.0
  %9997 = vmatpush.msra.mxu0 0.0
  %9998 = vmatpush.msra.mxu0 0.0
  %9999 = vmatpush.msra.mxu0 0.0
  %10000 = vmatpush.msra.mxu0 0.0
  %10001 = vmatpush.msra.mxu0 0.0
  %10002 = vmatpush.msra.mxu0 0.0
  %10003 = vmatpush.msra.mxu0 0.0
  %10004 = vmatpush.msra.mxu0 0.0
  %10005 = vmatpush.msra.mxu0 0.0
  %10006 = vmatpush.msra.mxu0 0.0
  %10007 = vmatpush.msra.mxu0 0.0
  %10008 = vmatpush.msra.mxu0 0.0
  %10009 = vmatpush.msra.mxu0 0.0
  %10010 = vmatpush.msra.mxu0 %v9912
  %10011 = vmatmul.f32.gmra.mxu0 %v1935
  %v10012 = vpop.f32.mrf.mxu0
  %v10013 = vadd.f32 %v9805, %v10012
  %10014 = vmatmul.f32.gmra.mxu0 %v1938
  %v10015 = vpop.f32.mrf.mxu0
  %v10016 = vadd.f32 %v9808, %v10015
  %10017 = vdwg.mxu0
  %10018 = vmatpush.msra.mxu0 0.0
  %10019 = vmatpush.msra.mxu0 0.0
  %10020 = vmatpush.msra.mxu0 0.0
  %10021 = vmatpush.msra.mxu0 0.0
  %10022 = vmatpush.msra.mxu0 0.0
  %10023 = vmatpush.msra.mxu0 0.0
  %10024 = vmatpush.msra.mxu0 0.0
  %10025 = vmatpush.msra.mxu0 0.0
  %10026 = vmatpush.msra.mxu0 0.0
  %10027 = vmatpush.msra.mxu0 0.0
  %10028 = vmatpush.msra.mxu0 0.0
  %10029 = vmatpush.msra.mxu0 0.0
  %10030 = vmatpush.msra.mxu0 0.0
  %10031 = vmatpush.msra.mxu0 0.0
  %10032 = vmatpush.msra.mxu0 0.0
  %10033 = vmatpush.msra.mxu0 %v9915
  %10034 = vmatmul.f32.gmra.mxu0 %v1935
  %v10035 = vpop.f32.mrf.mxu0
  %v10036 = vadd.f32 %v9828, %v10035
  %10037 = vmatmul.f32.gmra.mxu0 %v1938
  %v10038 = vpop.f32.mrf.mxu0
  %v10039 = vadd.f32 %v9831, %v10038
  %10040 = vdwg.mxu0
  %10041 = vmatpush.msra.mxu0 0.0
  %10042 = vmatpush.msra.mxu0 0.0
  %10043 = vmatpush.msra.mxu0 0.0
  %10044 = vmatpush.msra.mxu0 0.0
  %10045 = vmatpush.msra.mxu0 0.0
  %10046 = vmatpush.msra.mxu0 0.0
  %10047 = vmatpush.msra.mxu0 0.0
  %10048 = vmatpush.msra.mxu0 0.0
  %10049 = vmatpush.msra.mxu0 0.0
  %10050 = vmatpush.msra.mxu0 0.0
  %10051 = vmatpush.msra.mxu0 0.0
  %10052 = vmatpush.msra.mxu0 0.0
  %10053 = vmatpush.msra.mxu0 0.0
  %10054 = vmatpush.msra.mxu0 0.0
  %10055 = vmatpush.msra.mxu0 0.0
  %10056 = vmatpush.msra.mxu0 %v9918
  %10057 = vmatmul.f32.gmra.mxu0 %v1935
  %v10058 = vpop.f32.mrf.mxu0
  %v10059 = vadd.f32 %v9851, %v10058
  %10060 = vmatmul.f32.gmra.mxu0 %v1938
  %v10061 = vpop.f32.mrf.mxu0
  %v10062 = vadd.f32 %v9854, %v10061
  %10063 = vdwg.mxu0
  %10064 = vmatpush.msra.mxu0 0.0
  %10065 = vmatpush.msra.mxu0 0.0
  %10066 = vmatpush.msra.mxu0 0.0
  %10067 = vmatpush.msra.mxu0 0.0
  %10068 = vmatpush.msra.mxu0 0.0
  %10069 = vmatpush.msra.mxu0 0.0
  %10070 = vmatpush.msra.mxu0 0.0
  %10071 = vmatpush.msra.mxu0 0.0
  %10072 = vmatpush.msra.mxu0 0.0
  %10073 = vmatpush.msra.mxu0 0.0
  %10074 = vmatpush.msra.mxu0 0.0
  %10075 = vmatpush.msra.mxu0 0.0
  %10076 = vmatpush.msra.mxu0 0.0
  %10077 = vmatpush.msra.mxu0 0.0
  %10078 = vmatpush.msra.mxu0 0.0
  %10079 = vmatpush.msra.mxu0 %v9921
  %10080 = vmatmul.f32.gmra.mxu0 %v1935
  %v10081 = vpop.f32.mrf.mxu0
  %v10082 = vadd.f32 %v9874, %v10081
  %10083 = vmatmul.f32.gmra.mxu0 %v1938
  %v10084 = vpop.f32.mrf.mxu0
  %v10085 = vadd.f32 %v9877, %v10084
  %10086 = vdwg.mxu0
  %10087 = vmatpush.msra.mxu0 0.0
  %10088 = vmatpush.msra.mxu0 0.0
  %10089 = vmatpush.msra.mxu0 0.0
  %10090 = vmatpush.msra.mxu0 0.0
  %10091 = vmatpush.msra.mxu0 0.0
  %10092 = vmatpush.msra.mxu0 0.0
  %10093 = vmatpush.msra.mxu0 0.0
  %10094 = vmatpush.msra.mxu0 0.0
  %10095 = vmatpush.msra.mxu0 0.0
  %10096 = vmatpush.msra.mxu0 0.0
  %10097 = vmatpush.msra.mxu0 0.0
  %10098 = vmatpush.msra.mxu0 0.0
  %10099 = vmatpush.msra.mxu0 0.0
  %10100 = vmatpush.msra.mxu0 0.0
  %10101 = vmatpush.msra.mxu0 0.0
  %10102 = vmatpush.msra.mxu0 %v9924
  %10103 = vmatmul.f32.gmra.mxu0 %v1935
  %v10104 = vpop.f32.mrf.mxu0
  %v10105 = vadd.f32 %v9897, %v10104
  %10106 = vmatmul.f32.gmra.mxu0 %v1938
  %v10107 = vpop.f32.mrf.mxu0
  %v10108 = vadd.f32 %v9900, %v10107
  %10109 = vdwg.mxu0
  %v10118 = vrot.slane %v9662, 6
  %v10119 = vrot.slane %v9663, 6
  %v10120 = vrot.slane %v9664, 6
  %v10121 = vrot.slane %v9665, 6
  %v10122 = vrot.slane %v9666, 6
  %v10123 = vrot.slane %v9667, 6
  %v10124 = vrot.slane %v9668, 6
  %v10125 = vrot.slane %v9669, 6
  %v10134 = vmul.f32 %v8813, %v10118
  %v10135 = vmul.f32 %v8815, %v10119
  %v10136 = vmul.f32 %v8817, %v10120
  %v10137 = vmul.f32 %v8819, %v10121
  %v10138 = vmul.f32 %v8821, %v10122
  %v10139 = vmul.f32 %v8823, %v10123
  %v10140 = vmul.f32 %v8825, %v10124
  %v10141 = vmul.f32 %v8827, %v10125
  %v10142 = vld [vmem:[#allocation2] sm:$0x30]
  %v10143 = vld [vmem:[#allocation2 + $0x8] sm:$0x30]
  %v10144 = vld [vmem:[#allocation2 + $0x10] sm:$0x30]
  %v10145 = vld [vmem:[#allocation2 + $0x18] sm:$0x30]
  %v10146 = vld [vmem:[#allocation2 + $0x20] sm:$0x30]
  %v10147 = vld [vmem:[#allocation2 + $0x28] sm:$0x30]
  %v10148 = vld [vmem:[#allocation2 + $0x30] sm:$0x30]
  %v10149 = vld [vmem:[#allocation2 + $0x38] sm:$0x30]
  %v10150 = vadd.f32 %v10134, %v10142
  %v10151 = vadd.f32 %v10135, %v10143
  %v10152 = vadd.f32 %v10136, %v10144
  %v10153 = vadd.f32 %v10137, %v10145
  %v10154 = vadd.f32 %v10138, %v10146
  %v10155 = vadd.f32 %v10139, %v10147
  %v10156 = vadd.f32 %v10140, %v10148
  %v10157 = vadd.f32 %v10141, %v10149
  %v10158 = vld [vmem:[#allocation3] sm:$0x30]
  %v10159 = vld [vmem:[#allocation3 + $0x8] sm:$0x30]
  %v10160 = vld [vmem:[#allocation3 + $0x10] sm:$0x30]
  %v10161 = vld [vmem:[#allocation3 + $0x18] sm:$0x30]
  %v10162 = vld [vmem:[#allocation3 + $0x20] sm:$0x30]
  %v10163 = vld [vmem:[#allocation3 + $0x28] sm:$0x30]
  %v10164 = vld [vmem:[#allocation3 + $0x30] sm:$0x30]
  %v10165 = vld [vmem:[#allocation3 + $0x38] sm:$0x30]
  %v10166 = vmul.f32 %v10150, %v10158
  %v10167 = vmul.f32 %v10151, %v10159
  %v10168 = vmul.f32 %v10152, %v10160
  %v10169 = vmul.f32 %v10153, %v10161
  %v10170 = vmul.f32 %v10154, %v10162
  %v10171 = vmul.f32 %v10155, %v10163
  %v10172 = vmul.f32 %v10156, %v10164
  %v10173 = vmul.f32 %v10157, %v10165
  %v10182 = vrot.slane %v10166, 4
  %v10183 = vrot.slane %v10167, 4
  %v10184 = vrot.slane %v10168, 4
  %v10185 = vrot.slane %v10169, 4
  %v10186 = vrot.slane %v10170, 4
  %v10187 = vrot.slane %v10171, 4
  %v10188 = vrot.slane %v10172, 4
  %v10189 = vrot.slane %v10173, 4
  %v10190 = vsel %vm1733, %v10182, 0
  %v10192 = vsel %vm1733, %v10183, 0
  %v10194 = vsel %vm1733, %v10184, 0
  %v10196 = vsel %vm1733, %v10185, 0
  %v10198 = vsel %vm1733, %v10186, 0
  %v10200 = vsel %vm1733, %v10187, 0
  %v10202 = vsel %vm1733, %v10188, 0
  %v10204 = vsel %vm1733, %v10189, 0
  %10206 = vmatpush.msra.mxu0 0.0
  %10207 = vmatpush.msra.mxu0 0.0
  %10208 = vmatpush.msra.mxu0 0.0
  %10209 = vmatpush.msra.mxu0 0.0
  %10210 = vmatpush.msra.mxu0 0.0
  %10211 = vmatpush.msra.mxu0 0.0
  %10212 = vmatpush.msra.mxu0 0.0
  %10213 = vmatpush.msra.mxu0 0.0
  %10214 = vmatpush.msra.mxu0 0.0
  %10215 = vmatpush.msra.mxu0 0.0
  %10216 = vmatpush.msra.mxu0 0.0
  %10217 = vmatpush.msra.mxu0 0.0
  %10218 = vmatpush.msra.mxu0 0.0
  %10219 = vmatpush.msra.mxu0 0.0
  %10220 = vmatpush.msra.mxu0 0.0
  %10221 = vmatpush.msra.mxu0 %v10190
  %10222 = vmatmul.f32.gmra.mxu0 %v2229
  %v10223 = vpop.f32.mrf.mxu0
  %v10224 = vadd.f32 0.0, %v10223
  %10225 = vmatmul.f32.gmra.mxu0 %v2232
  %v10226 = vpop.f32.mrf.mxu0
  %v10227 = vadd.f32 0.0, %v10226
  %10228 = vdwg.mxu0
  %10229 = vmatpush.msra.mxu0 0.0
  %10230 = vmatpush.msra.mxu0 0.0
  %10231 = vmatpush.msra.mxu0 0.0
  %10232 = vmatpush.msra.mxu0 0.0
  %10233 = vmatpush.msra.mxu0 0.0
  %10234 = vmatpush.msra.mxu0 0.0
  %10235 = vmatpush.msra.mxu0 0.0
  %10236 = vmatpush.msra.mxu0 0.0
  %10237 = vmatpush.msra.mxu0 0.0
  %10238 = vmatpush.msra.mxu0 0.0
  %10239 = vmatpush.msra.mxu0 0.0
  %10240 = vmatpush.msra.mxu0 0.0
  %10241 = vmatpush.msra.mxu0 0.0
  %10242 = vmatpush.msra.mxu0 0.0
  %10243 = vmatpush.msra.mxu0 0.0
  %10244 = vmatpush.msra.mxu0 %v10192
  %10245 = vmatmul.f32.gmra.mxu0 %v2229
  %v10246 = vpop.f32.mrf.mxu0
  %v10247 = vadd.f32 0.0, %v10246
  %10248 = vmatmul.f32.gmra.mxu0 %v2232
  %v10249 = vpop.f32.mrf.mxu0
  %v10250 = vadd.f32 0.0, %v10249
  %10251 = vdwg.mxu0
  %10252 = vmatpush.msra.mxu0 0.0
  %10253 = vmatpush.msra.mxu0 0.0
  %10254 = vmatpush.msra.mxu0 0.0
  %10255 = vmatpush.msra.mxu0 0.0
  %10256 = vmatpush.msra.mxu0 0.0
  %10257 = vmatpush.msra.mxu0 0.0
  %10258 = vmatpush.msra.mxu0 0.0
  %10259 = vmatpush.msra.mxu0 0.0
  %10260 = vmatpush.msra.mxu0 0.0
  %10261 = vmatpush.msra.mxu0 0.0
  %10262 = vmatpush.msra.mxu0 0.0
  %10263 = vmatpush.msra.mxu0 0.0
  %10264 = vmatpush.msra.mxu0 0.0
  %10265 = vmatpush.msra.mxu0 0.0
  %10266 = vmatpush.msra.mxu0 0.0
  %10267 = vmatpush.msra.mxu0 %v10194
  %10268 = vmatmul.f32.gmra.mxu0 %v2229
  %v10269 = vpop.f32.mrf.mxu0
  %v10270 = vadd.f32 0.0, %v10269
  %10271 = vmatmul.f32.gmra.mxu0 %v2232
  %v10272 = vpop.f32.mrf.mxu0
  %v10273 = vadd.f32 0.0, %v10272
  %10274 = vdwg.mxu0
  %10275 = vmatpush.msra.mxu0 0.0
  %10276 = vmatpush.msra.mxu0 0.0
  %10277 = vmatpush.msra.mxu0 0.0
  %10278 = vmatpush.msra.mxu0 0.0
  %10279 = vmatpush.msra.mxu0 0.0
  %10280 = vmatpush.msra.mxu0 0.0
  %10281 = vmatpush.msra.mxu0 0.0
  %10282 = vmatpush.msra.mxu0 0.0
  %10283 = vmatpush.msra.mxu0 0.0
  %10284 = vmatpush.msra.mxu0 0.0
  %10285 = vmatpush.msra.mxu0 0.0
  %10286 = vmatpush.msra.mxu0 0.0
  %10287 = vmatpush.msra.mxu0 0.0
  %10288 = vmatpush.msra.mxu0 0.0
  %10289 = vmatpush.msra.mxu0 0.0
  %10290 = vmatpush.msra.mxu0 %v10196
  %10291 = vmatmul.f32.gmra.mxu0 %v2229
  %v10292 = vpop.f32.mrf.mxu0
  %v10293 = vadd.f32 0.0, %v10292
  %10294 = vmatmul.f32.gmra.mxu0 %v2232
  %v10295 = vpop.f32.mrf.mxu0
  %v10296 = vadd.f32 0.0, %v10295
  %10297 = vdwg.mxu0
  %10298 = vmatpush.msra.mxu0 0.0
  %10299 = vmatpush.msra.mxu0 0.0
  %10300 = vmatpush.msra.mxu0 0.0
  %10301 = vmatpush.msra.mxu0 0.0
  %10302 = vmatpush.msra.mxu0 0.0
  %10303 = vmatpush.msra.mxu0 0.0
  %10304 = vmatpush.msra.mxu0 0.0
  %10305 = vmatpush.msra.mxu0 0.0
  %10306 = vmatpush.msra.mxu0 0.0
  %10307 = vmatpush.msra.mxu0 0.0
  %10308 = vmatpush.msra.mxu0 0.0
  %10309 = vmatpush.msra.mxu0 0.0
  %10310 = vmatpush.msra.mxu0 0.0
  %10311 = vmatpush.msra.mxu0 0.0
  %10312 = vmatpush.msra.mxu0 0.0
  %10313 = vmatpush.msra.mxu0 %v10198
  %10314 = vmatmul.f32.gmra.mxu0 %v2229
  %v10315 = vpop.f32.mrf.mxu0
  %v10316 = vadd.f32 0.0, %v10315
  %10317 = vmatmul.f32.gmra.mxu0 %v2232
  %v10318 = vpop.f32.mrf.mxu0
  %v10319 = vadd.f32 0.0, %v10318
  %10320 = vdwg.mxu0
  %10321 = vmatpush.msra.mxu0 0.0
  %10322 = vmatpush.msra.mxu0 0.0
  %10323 = vmatpush.msra.mxu0 0.0
  %10324 = vmatpush.msra.mxu0 0.0
  %10325 = vmatpush.msra.mxu0 0.0
  %10326 = vmatpush.msra.mxu0 0.0
  %10327 = vmatpush.msra.mxu0 0.0
  %10328 = vmatpush.msra.mxu0 0.0
  %10329 = vmatpush.msra.mxu0 0.0
  %10330 = vmatpush.msra.mxu0 0.0
  %10331 = vmatpush.msra.mxu0 0.0
  %10332 = vmatpush.msra.mxu0 0.0
  %10333 = vmatpush.msra.mxu0 0.0
  %10334 = vmatpush.msra.mxu0 0.0
  %10335 = vmatpush.msra.mxu0 0.0
  %10336 = vmatpush.msra.mxu0 %v10200
  %10337 = vmatmul.f32.gmra.mxu0 %v2229
  %v10338 = vpop.f32.mrf.mxu0
  %v10339 = vadd.f32 0.0, %v10338
  %10340 = vmatmul.f32.gmra.mxu0 %v2232
  %v10341 = vpop.f32.mrf.mxu0
  %v10342 = vadd.f32 0.0, %v10341
  %10343 = vdwg.mxu0
  %10344 = vmatpush.msra.mxu0 0.0
  %10345 = vmatpush.msra.mxu0 0.0
  %10346 = vmatpush.msra.mxu0 0.0
  %10347 = vmatpush.msra.mxu0 0.0
  %10348 = vmatpush.msra.mxu0 0.0
  %10349 = vmatpush.msra.mxu0 0.0
  %10350 = vmatpush.msra.mxu0 0.0
  %10351 = vmatpush.msra.mxu0 0.0
  %10352 = vmatpush.msra.mxu0 0.0
  %10353 = vmatpush.msra.mxu0 0.0
  %10354 = vmatpush.msra.mxu0 0.0
  %10355 = vmatpush.msra.mxu0 0.0
  %10356 = vmatpush.msra.mxu0 0.0
  %10357 = vmatpush.msra.mxu0 0.0
  %10358 = vmatpush.msra.mxu0 0.0
  %10359 = vmatpush.msra.mxu0 %v10202
  %10360 = vmatmul.f32.gmra.mxu0 %v2229
  %v10361 = vpop.f32.mrf.mxu0
  %v10362 = vadd.f32 0.0, %v10361
  %10363 = vmatmul.f32.gmra.mxu0 %v2232
  %v10364 = vpop.f32.mrf.mxu0
  %v10365 = vadd.f32 0.0, %v10364
  %10366 = vdwg.mxu0
  %10367 = vmatpush.msra.mxu0 0.0
  %10368 = vmatpush.msra.mxu0 0.0
  %10369 = vmatpush.msra.mxu0 0.0
  %10370 = vmatpush.msra.mxu0 0.0
  %10371 = vmatpush.msra.mxu0 0.0
  %10372 = vmatpush.msra.mxu0 0.0
  %10373 = vmatpush.msra.mxu0 0.0
  %10374 = vmatpush.msra.mxu0 0.0
  %10375 = vmatpush.msra.mxu0 0.0
  %10376 = vmatpush.msra.mxu0 0.0
  %10377 = vmatpush.msra.mxu0 0.0
  %10378 = vmatpush.msra.mxu0 0.0
  %10379 = vmatpush.msra.mxu0 0.0
  %10380 = vmatpush.msra.mxu0 0.0
  %10381 = vmatpush.msra.mxu0 0.0
  %10382 = vmatpush.msra.mxu0 %v10204
  %10383 = vmatmul.f32.gmra.mxu0 %v2229
  %v10384 = vpop.f32.mrf.mxu0
  %v10385 = vadd.f32 0.0, %v10384
  %10386 = vmatmul.f32.gmra.mxu0 %v2232
  %v10387 = vpop.f32.mrf.mxu0
  %v10388 = vadd.f32 0.0, %v10387
  %10389 = vdwg.mxu0
  %v10390 = vadd.f32 %v9944, %v10224
  %v10391 = vadd.f32 %v9967, %v10247
  %v10392 = vadd.f32 %v9990, %v10270
  %v10393 = vadd.f32 %v10013, %v10293
  %v10394 = vadd.f32 %v10036, %v10316
  %v10395 = vadd.f32 %v10059, %v10339
  %v10396 = vadd.f32 %v10082, %v10362
  %v10397 = vadd.f32 %v10105, %v10385
  %v10398 = vadd.f32 %v9947, %v10227
  %v10399 = vadd.f32 %v9970, %v10250
  %v10400 = vadd.f32 %v9993, %v10273
  %v10401 = vadd.f32 %v10016, %v10296
  %v10402 = vadd.f32 %v10039, %v10319
  %v10403 = vadd.f32 %v10062, %v10342
  %v10404 = vadd.f32 %v10085, %v10365
  %v10405 = vadd.f32 %v10108, %v10388
  %v10414 = vrot.slane %v10150, 6
  %v10415 = vrot.slane %v10151, 6
  %v10416 = vrot.slane %v10152, 6
  %v10417 = vrot.slane %v10153, 6
  %v10418 = vrot.slane %v10154, 6
  %v10419 = vrot.slane %v10155, 6
  %v10420 = vrot.slane %v10156, 6
  %v10421 = vrot.slane %v10157, 6
  %v10430 = vmul.f32 %v8813, %v10414
  %v10431 = vmul.f32 %v8815, %v10415
  %v10432 = vmul.f32 %v8817, %v10416
  %v10433 = vmul.f32 %v8819, %v10417
  %v10434 = vmul.f32 %v8821, %v10418
  %v10435 = vmul.f32 %v8823, %v10419
  %v10436 = vmul.f32 %v8825, %v10420
  %v10437 = vmul.f32 %v8827, %v10421
  %v10438 = vld [vmem:[#allocation2] sm:$0xc0]
  %v10439 = vld [vmem:[#allocation2 + $0x8] sm:$0xc0]
  %v10440 = vld [vmem:[#allocation2 + $0x10] sm:$0xc0]
  %v10441 = vld [vmem:[#allocation2 + $0x18] sm:$0xc0]
  %v10442 = vld [vmem:[#allocation2 + $0x20] sm:$0xc0]
  %v10443 = vld [vmem:[#allocation2 + $0x28] sm:$0xc0]
  %v10444 = vld [vmem:[#allocation2 + $0x30] sm:$0xc0]
  %v10445 = vld [vmem:[#allocation2 + $0x38] sm:$0xc0]
  %v10446 = vadd.f32 %v10430, %v10438
  %v10447 = vadd.f32 %v10431, %v10439
  %v10448 = vadd.f32 %v10432, %v10440
  %v10449 = vadd.f32 %v10433, %v10441
  %v10450 = vadd.f32 %v10434, %v10442
  %v10451 = vadd.f32 %v10435, %v10443
  %v10452 = vadd.f32 %v10436, %v10444
  %v10453 = vadd.f32 %v10437, %v10445
  %v10454 = vld [vmem:[#allocation3] sm:$0xc0]
  %v10455 = vld [vmem:[#allocation3 + $0x8] sm:$0xc0]
  %v10456 = vld [vmem:[#allocation3 + $0x10] sm:$0xc0]
  %v10457 = vld [vmem:[#allocation3 + $0x18] sm:$0xc0]
  %v10458 = vld [vmem:[#allocation3 + $0x20] sm:$0xc0]
  %v10459 = vld [vmem:[#allocation3 + $0x28] sm:$0xc0]
  %v10460 = vld [vmem:[#allocation3 + $0x30] sm:$0xc0]
  %v10461 = vld [vmem:[#allocation3 + $0x38] sm:$0xc0]
  %v10462 = vmul.f32 %v10446, %v10454
  %v10463 = vmul.f32 %v10447, %v10455
  %v10464 = vmul.f32 %v10448, %v10456
  %v10465 = vmul.f32 %v10449, %v10457
  %v10466 = vmul.f32 %v10450, %v10458
  %v10467 = vmul.f32 %v10451, %v10459
  %v10468 = vmul.f32 %v10452, %v10460
  %v10469 = vmul.f32 %v10453, %v10461
  %v10478 = vrot.slane %v10462, 6
  %v10479 = vrot.slane %v10463, 6
  %v10480 = vrot.slane %v10464, 6
  %v10481 = vrot.slane %v10465, 6
  %v10482 = vrot.slane %v10466, 6
  %v10483 = vrot.slane %v10467, 6
  %v10484 = vrot.slane %v10468, 6
  %v10485 = vrot.slane %v10469, 6
  %v10486 = vsel %vm1733, %v10478, 0
  %v10488 = vsel %vm1733, %v10479, 0
  %v10490 = vsel %vm1733, %v10480, 0
  %v10492 = vsel %vm1733, %v10481, 0
  %v10494 = vsel %vm1733, %v10482, 0
  %v10496 = vsel %vm1733, %v10483, 0
  %v10498 = vsel %vm1733, %v10484, 0
  %v10500 = vsel %vm1733, %v10485, 0
  %10502 = vmatpush.msra.mxu0 0.0
  %10503 = vmatpush.msra.mxu0 0.0
  %10504 = vmatpush.msra.mxu0 0.0
  %10505 = vmatpush.msra.mxu0 0.0
  %10506 = vmatpush.msra.mxu0 0.0
  %10507 = vmatpush.msra.mxu0 0.0
  %10508 = vmatpush.msra.mxu0 0.0
  %10509 = vmatpush.msra.mxu0 0.0
  %10510 = vmatpush.msra.mxu0 0.0
  %10511 = vmatpush.msra.mxu0 0.0
  %10512 = vmatpush.msra.mxu0 0.0
  %10513 = vmatpush.msra.mxu0 0.0
  %10514 = vmatpush.msra.mxu0 0.0
  %10515 = vmatpush.msra.mxu0 0.0
  %10516 = vmatpush.msra.mxu0 0.0
  %10517 = vmatpush.msra.mxu0 %v10486
  %10518 = vmatmul.f32.gmra.mxu0 %v2531
  %v10519 = vpop.f32.mrf.mxu0
  %v10520 = vadd.f32 0.0, %v10519
  %10521 = vmatmul.f32.gmra.mxu0 %v2534
  %v10522 = vpop.f32.mrf.mxu0
  %v10523 = vadd.f32 0.0, %v10522
  %10524 = vdwg.mxu0
  %10525 = vmatpush.msra.mxu0 0.0
  %10526 = vmatpush.msra.mxu0 0.0
  %10527 = vmatpush.msra.mxu0 0.0
  %10528 = vmatpush.msra.mxu0 0.0
  %10529 = vmatpush.msra.mxu0 0.0
  %10530 = vmatpush.msra.mxu0 0.0
  %10531 = vmatpush.msra.mxu0 0.0
  %10532 = vmatpush.msra.mxu0 0.0
  %10533 = vmatpush.msra.mxu0 0.0
  %10534 = vmatpush.msra.mxu0 0.0
  %10535 = vmatpush.msra.mxu0 0.0
  %10536 = vmatpush.msra.mxu0 0.0
  %10537 = vmatpush.msra.mxu0 0.0
  %10538 = vmatpush.msra.mxu0 0.0
  %10539 = vmatpush.msra.mxu0 0.0
  %10540 = vmatpush.msra.mxu0 %v10488
  %10541 = vmatmul.f32.gmra.mxu0 %v2531
  %v10542 = vpop.f32.mrf.mxu0
  %v10543 = vadd.f32 0.0, %v10542
  %10544 = vmatmul.f32.gmra.mxu0 %v2534
  %v10545 = vpop.f32.mrf.mxu0
  %v10546 = vadd.f32 0.0, %v10545
  %10547 = vdwg.mxu0
  %10548 = vmatpush.msra.mxu0 0.0
  %10549 = vmatpush.msra.mxu0 0.0
  %10550 = vmatpush.msra.mxu0 0.0
  %10551 = vmatpush.msra.mxu0 0.0
  %10552 = vmatpush.msra.mxu0 0.0
  %10553 = vmatpush.msra.mxu0 0.0
  %10554 = vmatpush.msra.mxu0 0.0
  %10555 = vmatpush.msra.mxu0 0.0
  %10556 = vmatpush.msra.mxu0 0.0
  %10557 = vmatpush.msra.mxu0 0.0
  %10558 = vmatpush.msra.mxu0 0.0
  %10559 = vmatpush.msra.mxu0 0.0
  %10560 = vmatpush.msra.mxu0 0.0
  %10561 = vmatpush.msra.mxu0 0.0
  %10562 = vmatpush.msra.mxu0 0.0
  %10563 = vmatpush.msra.mxu0 %v10490
  %10564 = vmatmul.f32.gmra.mxu0 %v2531
  %v10565 = vpop.f32.mrf.mxu0
  %v10566 = vadd.f32 0.0, %v10565
  %10567 = vmatmul.f32.gmra.mxu0 %v2534
  %v10568 = vpop.f32.mrf.mxu0
  %v10569 = vadd.f32 0.0, %v10568
  %10570 = vdwg.mxu0
  %10571 = vmatpush.msra.mxu0 0.0
  %10572 = vmatpush.msra.mxu0 0.0
  %10573 = vmatpush.msra.mxu0 0.0
  %10574 = vmatpush.msra.mxu0 0.0
  %10575 = vmatpush.msra.mxu0 0.0
  %10576 = vmatpush.msra.mxu0 0.0
  %10577 = vmatpush.msra.mxu0 0.0
  %10578 = vmatpush.msra.mxu0 0.0
  %10579 = vmatpush.msra.mxu0 0.0
  %10580 = vmatpush.msra.mxu0 0.0
  %10581 = vmatpush.msra.mxu0 0.0
  %10582 = vmatpush.msra.mxu0 0.0
  %10583 = vmatpush.msra.mxu0 0.0
  %10584 = vmatpush.msra.mxu0 0.0
  %10585 = vmatpush.msra.mxu0 0.0
  %10586 = vmatpush.msra.mxu0 %v10492
  %10587 = vmatmul.f32.gmra.mxu0 %v2531
  %v10588 = vpop.f32.mrf.mxu0
  %v10589 = vadd.f32 0.0, %v10588
  %10590 = vmatmul.f32.gmra.mxu0 %v2534
  %v10591 = vpop.f32.mrf.mxu0
  %v10592 = vadd.f32 0.0, %v10591
  %10593 = vdwg.mxu0
  %10594 = vmatpush.msra.mxu0 0.0
  %10595 = vmatpush.msra.mxu0 0.0
  %10596 = vmatpush.msra.mxu0 0.0
  %10597 = vmatpush.msra.mxu0 0.0
  %10598 = vmatpush.msra.mxu0 0.0
  %10599 = vmatpush.msra.mxu0 0.0
  %10600 = vmatpush.msra.mxu0 0.0
  %10601 = vmatpush.msra.mxu0 0.0
  %10602 = vmatpush.msra.mxu0 0.0
  %10603 = vmatpush.msra.mxu0 0.0
  %10604 = vmatpush.msra.mxu0 0.0
  %10605 = vmatpush.msra.mxu0 0.0
  %10606 = vmatpush.msra.mxu0 0.0
  %10607 = vmatpush.msra.mxu0 0.0
  %10608 = vmatpush.msra.mxu0 0.0
  %10609 = vmatpush.msra.mxu0 %v10494
  %10610 = vmatmul.f32.gmra.mxu0 %v2531
  %v10611 = vpop.f32.mrf.mxu0
  %v10612 = vadd.f32 0.0, %v10611
  %10613 = vmatmul.f32.gmra.mxu0 %v2534
  %v10614 = vpop.f32.mrf.mxu0
  %v10615 = vadd.f32 0.0, %v10614
  %10616 = vdwg.mxu0
  %10617 = vmatpush.msra.mxu0 0.0
  %10618 = vmatpush.msra.mxu0 0.0
  %10619 = vmatpush.msra.mxu0 0.0
  %10620 = vmatpush.msra.mxu0 0.0
  %10621 = vmatpush.msra.mxu0 0.0
  %10622 = vmatpush.msra.mxu0 0.0
  %10623 = vmatpush.msra.mxu0 0.0
  %10624 = vmatpush.msra.mxu0 0.0
  %10625 = vmatpush.msra.mxu0 0.0
  %10626 = vmatpush.msra.mxu0 0.0
  %10627 = vmatpush.msra.mxu0 0.0
  %10628 = vmatpush.msra.mxu0 0.0
  %10629 = vmatpush.msra.mxu0 0.0
  %10630 = vmatpush.msra.mxu0 0.0
  %10631 = vmatpush.msra.mxu0 0.0
  %10632 = vmatpush.msra.mxu0 %v10496
  %10633 = vmatmul.f32.gmra.mxu0 %v2531
  %v10634 = vpop.f32.mrf.mxu0
  %v10635 = vadd.f32 0.0, %v10634
  %10636 = vmatmul.f32.gmra.mxu0 %v2534
  %v10637 = vpop.f32.mrf.mxu0
  %v10638 = vadd.f32 0.0, %v10637
  %10639 = vdwg.mxu0
  %10640 = vmatpush.msra.mxu0 0.0
  %10641 = vmatpush.msra.mxu0 0.0
  %10642 = vmatpush.msra.mxu0 0.0
  %10643 = vmatpush.msra.mxu0 0.0
  %10644 = vmatpush.msra.mxu0 0.0
  %10645 = vmatpush.msra.mxu0 0.0
  %10646 = vmatpush.msra.mxu0 0.0
  %10647 = vmatpush.msra.mxu0 0.0
  %10648 = vmatpush.msra.mxu0 0.0
  %10649 = vmatpush.msra.mxu0 0.0
  %10650 = vmatpush.msra.mxu0 0.0
  %10651 = vmatpush.msra.mxu0 0.0
  %10652 = vmatpush.msra.mxu0 0.0
  %10653 = vmatpush.msra.mxu0 0.0
  %10654 = vmatpush.msra.mxu0 0.0
  %10655 = vmatpush.msra.mxu0 %v10498
  %10656 = vmatmul.f32.gmra.mxu0 %v2531
  %v10657 = vpop.f32.mrf.mxu0
  %v10658 = vadd.f32 0.0, %v10657
  %10659 = vmatmul.f32.gmra.mxu0 %v2534
  %v10660 = vpop.f32.mrf.mxu0
  %v10661 = vadd.f32 0.0, %v10660
  %10662 = vdwg.mxu0
  %10663 = vmatpush.msra.mxu0 0.0
  %10664 = vmatpush.msra.mxu0 0.0
  %10665 = vmatpush.msra.mxu0 0.0
  %10666 = vmatpush.msra.mxu0 0.0
  %10667 = vmatpush.msra.mxu0 0.0
  %10668 = vmatpush.msra.mxu0 0.0
  %10669 = vmatpush.msra.mxu0 0.0
  %10670 = vmatpush.msra.mxu0 0.0
  %10671 = vmatpush.msra.mxu0 0.0
  %10672 = vmatpush.msra.mxu0 0.0
  %10673 = vmatpush.msra.mxu0 0.0
  %10674 = vmatpush.msra.mxu0 0.0
  %10675 = vmatpush.msra.mxu0 0.0
  %10676 = vmatpush.msra.mxu0 0.0
  %10677 = vmatpush.msra.mxu0 0.0
  %10678 = vmatpush.msra.mxu0 %v10500
  %10679 = vmatmul.f32.gmra.mxu0 %v2531
  %v10680 = vpop.f32.mrf.mxu0
  %v10681 = vadd.f32 0.0, %v10680
  %10682 = vmatmul.f32.gmra.mxu0 %v2534
  %v10683 = vpop.f32.mrf.mxu0
  %v10684 = vadd.f32 0.0, %v10683
  %10685 = vdwg.mxu0
  %v10686 = vadd.f32 %v10390, %v10520
  %v10687 = vadd.f32 %v10391, %v10543
  %v10688 = vadd.f32 %v10392, %v10566
  %v10689 = vadd.f32 %v10393, %v10589
  %v10690 = vadd.f32 %v10394, %v10612
  %v10691 = vadd.f32 %v10395, %v10635
  %v10692 = vadd.f32 %v10396, %v10658
  %v10693 = vadd.f32 %v10397, %v10681
  %v10694 = vadd.f32 %v10398, %v10523
  %v10695 = vadd.f32 %v10399, %v10546
  %v10696 = vadd.f32 %v10400, %v10569
  %v10697 = vadd.f32 %v10401, %v10592
  %v10698 = vadd.f32 %v10402, %v10615
  %v10699 = vadd.f32 %v10403, %v10638
  %v10700 = vadd.f32 %v10404, %v10661
  %v10701 = vadd.f32 %v10405, %v10684
  %v10710 = vrot.slane %v10446, 6
  %v10711 = vrot.slane %v10447, 6
  %v10712 = vrot.slane %v10448, 6
  %v10713 = vrot.slane %v10449, 6
  %v10714 = vrot.slane %v10450, 6
  %v10715 = vrot.slane %v10451, 6
  %v10716 = vrot.slane %v10452, 6
  %v10717 = vrot.slane %v10453, 6
  %v10726 = vmul.f32 %v8829, %v10710
  %v10727 = vmul.f32 %v8831, %v10711
  %v10728 = vmul.f32 %v8833, %v10712
  %v10729 = vmul.f32 %v8835, %v10713
  %v10730 = vmul.f32 %v8837, %v10714
  %v10731 = vmul.f32 %v8839, %v10715
  %v10732 = vmul.f32 %v8841, %v10716
  %v10733 = vmul.f32 %v8843, %v10717
  %v10734 = vld [vmem:[#allocation2 + $0x40] sm:$0x3]
  %v10735 = vld [vmem:[#allocation2 + $0x48] sm:$0x3]
  %v10736 = vld [vmem:[#allocation2 + $0x50] sm:$0x3]
  %v10737 = vld [vmem:[#allocation2 + $0x58] sm:$0x3]
  %v10738 = vld [vmem:[#allocation2 + $0x60] sm:$0x3]
  %v10739 = vld [vmem:[#allocation2 + $0x68] sm:$0x3]
  %v10740 = vld [vmem:[#allocation2 + $0x70] sm:$0x3]
  %v10741 = vld [vmem:[#allocation2 + $0x78] sm:$0x3]
  %v10742 = vadd.f32 %v10726, %v10734
  %v10743 = vadd.f32 %v10727, %v10735
  %v10744 = vadd.f32 %v10728, %v10736
  %v10745 = vadd.f32 %v10729, %v10737
  %v10746 = vadd.f32 %v10730, %v10738
  %v10747 = vadd.f32 %v10731, %v10739
  %v10748 = vadd.f32 %v10732, %v10740
  %v10749 = vadd.f32 %v10733, %v10741
  %v10750 = vld [vmem:[#allocation3 + $0x40] sm:$0x3]
  %v10751 = vld [vmem:[#allocation3 + $0x48] sm:$0x3]
  %v10752 = vld [vmem:[#allocation3 + $0x50] sm:$0x3]
  %v10753 = vld [vmem:[#allocation3 + $0x58] sm:$0x3]
  %v10754 = vld [vmem:[#allocation3 + $0x60] sm:$0x3]
  %v10755 = vld [vmem:[#allocation3 + $0x68] sm:$0x3]
  %v10756 = vld [vmem:[#allocation3 + $0x70] sm:$0x3]
  %v10757 = vld [vmem:[#allocation3 + $0x78] sm:$0x3]
  %v10758 = vmul.f32 %v10742, %v10750
  %v10759 = vmul.f32 %v10743, %v10751
  %v10760 = vmul.f32 %v10744, %v10752
  %v10761 = vmul.f32 %v10745, %v10753
  %v10762 = vmul.f32 %v10746, %v10754
  %v10763 = vmul.f32 %v10747, %v10755
  %v10764 = vmul.f32 %v10748, %v10756
  %v10765 = vmul.f32 %v10749, %v10757
  %v10767 = vsel %vm1733, %v10758, 0
  %v10770 = vsel %vm1733, %v10759, 0
  %v10773 = vsel %vm1733, %v10760, 0
  %v10776 = vsel %vm1733, %v10761, 0
  %v10779 = vsel %vm1733, %v10762, 0
  %v10782 = vsel %vm1733, %v10763, 0
  %v10785 = vsel %vm1733, %v10764, 0
  %v10788 = vsel %vm1733, %v10765, 0
  %10790 = vmatpush.msra.mxu0 0.0
  %10791 = vmatpush.msra.mxu0 0.0
  %10792 = vmatpush.msra.mxu0 0.0
  %10793 = vmatpush.msra.mxu0 0.0
  %10794 = vmatpush.msra.mxu0 0.0
  %10795 = vmatpush.msra.mxu0 0.0
  %10796 = vmatpush.msra.mxu0 0.0
  %10797 = vmatpush.msra.mxu0 0.0
  %10798 = vmatpush.msra.mxu0 0.0
  %10799 = vmatpush.msra.mxu0 0.0
  %10800 = vmatpush.msra.mxu0 0.0
  %10801 = vmatpush.msra.mxu0 0.0
  %10802 = vmatpush.msra.mxu0 0.0
  %10803 = vmatpush.msra.mxu0 0.0
  %10804 = vmatpush.msra.mxu0 0.0
  %10805 = vmatpush.msra.mxu0 %v10767
  %10806 = vmatmul.f32.gmra.mxu0 %v2817
  %v10807 = vpop.f32.mrf.mxu0
  %v10808 = vadd.f32 0.0, %v10807
  %10809 = vmatmul.f32.gmra.mxu0 %v2820
  %v10810 = vpop.f32.mrf.mxu0
  %v10811 = vadd.f32 0.0, %v10810
  %10812 = vdwg.mxu0
  %10813 = vmatpush.msra.mxu0 0.0
  %10814 = vmatpush.msra.mxu0 0.0
  %10815 = vmatpush.msra.mxu0 0.0
  %10816 = vmatpush.msra.mxu0 0.0
  %10817 = vmatpush.msra.mxu0 0.0
  %10818 = vmatpush.msra.mxu0 0.0
  %10819 = vmatpush.msra.mxu0 0.0
  %10820 = vmatpush.msra.mxu0 0.0
  %10821 = vmatpush.msra.mxu0 0.0
  %10822 = vmatpush.msra.mxu0 0.0
  %10823 = vmatpush.msra.mxu0 0.0
  %10824 = vmatpush.msra.mxu0 0.0
  %10825 = vmatpush.msra.mxu0 0.0
  %10826 = vmatpush.msra.mxu0 0.0
  %10827 = vmatpush.msra.mxu0 0.0
  %10828 = vmatpush.msra.mxu0 %v10770
  %10829 = vmatmul.f32.gmra.mxu0 %v2817
  %v10830 = vpop.f32.mrf.mxu0
  %v10831 = vadd.f32 0.0, %v10830
  %10832 = vmatmul.f32.gmra.mxu0 %v2820
  %v10833 = vpop.f32.mrf.mxu0
  %v10834 = vadd.f32 0.0, %v10833
  %10835 = vdwg.mxu0
  %10836 = vmatpush.msra.mxu0 0.0
  %10837 = vmatpush.msra.mxu0 0.0
  %10838 = vmatpush.msra.mxu0 0.0
  %10839 = vmatpush.msra.mxu0 0.0
  %10840 = vmatpush.msra.mxu0 0.0
  %10841 = vmatpush.msra.mxu0 0.0
  %10842 = vmatpush.msra.mxu0 0.0
  %10843 = vmatpush.msra.mxu0 0.0
  %10844 = vmatpush.msra.mxu0 0.0
  %10845 = vmatpush.msra.mxu0 0.0
  %10846 = vmatpush.msra.mxu0 0.0
  %10847 = vmatpush.msra.mxu0 0.0
  %10848 = vmatpush.msra.mxu0 0.0
  %10849 = vmatpush.msra.mxu0 0.0
  %10850 = vmatpush.msra.mxu0 0.0
  %10851 = vmatpush.msra.mxu0 %v10773
  %10852 = vmatmul.f32.gmra.mxu0 %v2817
  %v10853 = vpop.f32.mrf.mxu0
  %v10854 = vadd.f32 0.0, %v10853
  %10855 = vmatmul.f32.gmra.mxu0 %v2820
  %v10856 = vpop.f32.mrf.mxu0
  %v10857 = vadd.f32 0.0, %v10856
  %10858 = vdwg.mxu0
  %10859 = vmatpush.msra.mxu0 0.0
  %10860 = vmatpush.msra.mxu0 0.0
  %10861 = vmatpush.msra.mxu0 0.0
  %10862 = vmatpush.msra.mxu0 0.0
  %10863 = vmatpush.msra.mxu0 0.0
  %10864 = vmatpush.msra.mxu0 0.0
  %10865 = vmatpush.msra.mxu0 0.0
  %10866 = vmatpush.msra.mxu0 0.0
  %10867 = vmatpush.msra.mxu0 0.0
  %10868 = vmatpush.msra.mxu0 0.0
  %10869 = vmatpush.msra.mxu0 0.0
  %10870 = vmatpush.msra.mxu0 0.0
  %10871 = vmatpush.msra.mxu0 0.0
  %10872 = vmatpush.msra.mxu0 0.0
  %10873 = vmatpush.msra.mxu0 0.0
  %10874 = vmatpush.msra.mxu0 %v10776
  %10875 = vmatmul.f32.gmra.mxu0 %v2817
  %v10876 = vpop.f32.mrf.mxu0
  %v10877 = vadd.f32 0.0, %v10876
  %10878 = vmatmul.f32.gmra.mxu0 %v2820
  %v10879 = vpop.f32.mrf.mxu0
  %v10880 = vadd.f32 0.0, %v10879
  %10881 = vdwg.mxu0
  %10882 = vmatpush.msra.mxu0 0.0
  %10883 = vmatpush.msra.mxu0 0.0
  %10884 = vmatpush.msra.mxu0 0.0
  %10885 = vmatpush.msra.mxu0 0.0
  %10886 = vmatpush.msra.mxu0 0.0
  %10887 = vmatpush.msra.mxu0 0.0
  %10888 = vmatpush.msra.mxu0 0.0
  %10889 = vmatpush.msra.mxu0 0.0
  %10890 = vmatpush.msra.mxu0 0.0
  %10891 = vmatpush.msra.mxu0 0.0
  %10892 = vmatpush.msra.mxu0 0.0
  %10893 = vmatpush.msra.mxu0 0.0
  %10894 = vmatpush.msra.mxu0 0.0
  %10895 = vmatpush.msra.mxu0 0.0
  %10896 = vmatpush.msra.mxu0 0.0
  %10897 = vmatpush.msra.mxu0 %v10779
  %10898 = vmatmul.f32.gmra.mxu0 %v2817
  %v10899 = vpop.f32.mrf.mxu0
  %v10900 = vadd.f32 0.0, %v10899
  %10901 = vmatmul.f32.gmra.mxu0 %v2820
  %v10902 = vpop.f32.mrf.mxu0
  %v10903 = vadd.f32 0.0, %v10902
  %10904 = vdwg.mxu0
  %10905 = vmatpush.msra.mxu0 0.0
  %10906 = vmatpush.msra.mxu0 0.0
  %10907 = vmatpush.msra.mxu0 0.0
  %10908 = vmatpush.msra.mxu0 0.0
  %10909 = vmatpush.msra.mxu0 0.0
  %10910 = vmatpush.msra.mxu0 0.0
  %10911 = vmatpush.msra.mxu0 0.0
  %10912 = vmatpush.msra.mxu0 0.0
  %10913 = vmatpush.msra.mxu0 0.0
  %10914 = vmatpush.msra.mxu0 0.0
  %10915 = vmatpush.msra.mxu0 0.0
  %10916 = vmatpush.msra.mxu0 0.0
  %10917 = vmatpush.msra.mxu0 0.0
  %10918 = vmatpush.msra.mxu0 0.0
  %10919 = vmatpush.msra.mxu0 0.0
  %10920 = vmatpush.msra.mxu0 %v10782
  %10921 = vmatmul.f32.gmra.mxu0 %v2817
  %v10922 = vpop.f32.mrf.mxu0
  %v10923 = vadd.f32 0.0, %v10922
  %10924 = vmatmul.f32.gmra.mxu0 %v2820
  %v10925 = vpop.f32.mrf.mxu0
  %v10926 = vadd.f32 0.0, %v10925
  %10927 = vdwg.mxu0
  %10928 = vmatpush.msra.mxu0 0.0
  %10929 = vmatpush.msra.mxu0 0.0
  %10930 = vmatpush.msra.mxu0 0.0
  %10931 = vmatpush.msra.mxu0 0.0
  %10932 = vmatpush.msra.mxu0 0.0
  %10933 = vmatpush.msra.mxu0 0.0
  %10934 = vmatpush.msra.mxu0 0.0
  %10935 = vmatpush.msra.mxu0 0.0
  %10936 = vmatpush.msra.mxu0 0.0
  %10937 = vmatpush.msra.mxu0 0.0
  %10938 = vmatpush.msra.mxu0 0.0
  %10939 = vmatpush.msra.mxu0 0.0
  %10940 = vmatpush.msra.mxu0 0.0
  %10941 = vmatpush.msra.mxu0 0.0
  %10942 = vmatpush.msra.mxu0 0.0
  %10943 = vmatpush.msra.mxu0 %v10785
  %10944 = vmatmul.f32.gmra.mxu0 %v2817
  %v10945 = vpop.f32.mrf.mxu0
  %v10946 = vadd.f32 0.0, %v10945
  %10947 = vmatmul.f32.gmra.mxu0 %v2820
  %v10948 = vpop.f32.mrf.mxu0
  %v10949 = vadd.f32 0.0, %v10948
  %10950 = vdwg.mxu0
  %10951 = vmatpush.msra.mxu0 0.0
  %10952 = vmatpush.msra.mxu0 0.0
  %10953 = vmatpush.msra.mxu0 0.0
  %10954 = vmatpush.msra.mxu0 0.0
  %10955 = vmatpush.msra.mxu0 0.0
  %10956 = vmatpush.msra.mxu0 0.0
  %10957 = vmatpush.msra.mxu0 0.0
  %10958 = vmatpush.msra.mxu0 0.0
  %10959 = vmatpush.msra.mxu0 0.0
  %10960 = vmatpush.msra.mxu0 0.0
  %10961 = vmatpush.msra.mxu0 0.0
  %10962 = vmatpush.msra.mxu0 0.0
  %10963 = vmatpush.msra.mxu0 0.0
  %10964 = vmatpush.msra.mxu0 0.0
  %10965 = vmatpush.msra.mxu0 0.0
  %10966 = vmatpush.msra.mxu0 %v10788
  %10967 = vmatmul.f32.gmra.mxu0 %v2817
  %v10968 = vpop.f32.mrf.mxu0
  %v10969 = vadd.f32 0.0, %v10968
  %10970 = vmatmul.f32.gmra.mxu0 %v2820
  %v10971 = vpop.f32.mrf.mxu0
  %v10972 = vadd.f32 0.0, %v10971
  %10973 = vdwg.mxu0
  %v10974 = vadd.f32 %v10686, %v10808
  %v10975 = vadd.f32 %v10687, %v10831
  %v10976 = vadd.f32 %v10688, %v10854
  %v10977 = vadd.f32 %v10689, %v10877
  %v10978 = vadd.f32 %v10690, %v10900
  %v10979 = vadd.f32 %v10691, %v10923
  %v10980 = vadd.f32 %v10692, %v10946
  %v10981 = vadd.f32 %v10693, %v10969
  %v10982 = vadd.f32 %v10694, %v10811
  %v10983 = vadd.f32 %v10695, %v10834
  %v10984 = vadd.f32 %v10696, %v10857
  %v10985 = vadd.f32 %v10697, %v10880
  %v10986 = vadd.f32 %v10698, %v10903
  %v10987 = vadd.f32 %v10699, %v10926
  %v10988 = vadd.f32 %v10700, %v10949
  %v10989 = vadd.f32 %v10701, %v10972
  %v10998 = vrot.slane %v10742, 6
  %v10999 = vrot.slane %v10743, 6
  %v11000 = vrot.slane %v10744, 6
  %v11001 = vrot.slane %v10745, 6
  %v11002 = vrot.slane %v10746, 6
  %v11003 = vrot.slane %v10747, 6
  %v11004 = vrot.slane %v10748, 6
  %v11005 = vrot.slane %v10749, 6
  %v11014 = vmul.f32 %v8829, %v10998
  %v11015 = vmul.f32 %v8831, %v10999
  %v11016 = vmul.f32 %v8833, %v11000
  %v11017 = vmul.f32 %v8835, %v11001
  %v11018 = vmul.f32 %v8837, %v11002
  %v11019 = vmul.f32 %v8839, %v11003
  %v11020 = vmul.f32 %v8841, %v11004
  %v11021 = vmul.f32 %v8843, %v11005
  %v11022 = vld [vmem:[#allocation2 + $0x40] sm:$0xc]
  %v11023 = vld [vmem:[#allocation2 + $0x48] sm:$0xc]
  %v11024 = vld [vmem:[#allocation2 + $0x50] sm:$0xc]
  %v11025 = vld [vmem:[#allocation2 + $0x58] sm:$0xc]
  %v11026 = vld [vmem:[#allocation2 + $0x60] sm:$0xc]
  %v11027 = vld [vmem:[#allocation2 + $0x68] sm:$0xc]
  %v11028 = vld [vmem:[#allocation2 + $0x70] sm:$0xc]
  %v11029 = vld [vmem:[#allocation2 + $0x78] sm:$0xc]
  %v11030 = vadd.f32 %v11014, %v11022
  %v11031 = vadd.f32 %v11015, %v11023
  %v11032 = vadd.f32 %v11016, %v11024
  %v11033 = vadd.f32 %v11017, %v11025
  %v11034 = vadd.f32 %v11018, %v11026
  %v11035 = vadd.f32 %v11019, %v11027
  %v11036 = vadd.f32 %v11020, %v11028
  %v11037 = vadd.f32 %v11021, %v11029
  %v11038 = vld [vmem:[#allocation3 + $0x40] sm:$0xc]
  %v11039 = vld [vmem:[#allocation3 + $0x48] sm:$0xc]
  %v11040 = vld [vmem:[#allocation3 + $0x50] sm:$0xc]
  %v11041 = vld [vmem:[#allocation3 + $0x58] sm:$0xc]
  %v11042 = vld [vmem:[#allocation3 + $0x60] sm:$0xc]
  %v11043 = vld [vmem:[#allocation3 + $0x68] sm:$0xc]
  %v11044 = vld [vmem:[#allocation3 + $0x70] sm:$0xc]
  %v11045 = vld [vmem:[#allocation3 + $0x78] sm:$0xc]
  %v11046 = vmul.f32 %v11030, %v11038
  %v11047 = vmul.f32 %v11031, %v11039
  %v11048 = vmul.f32 %v11032, %v11040
  %v11049 = vmul.f32 %v11033, %v11041
  %v11050 = vmul.f32 %v11034, %v11042
  %v11051 = vmul.f32 %v11035, %v11043
  %v11052 = vmul.f32 %v11036, %v11044
  %v11053 = vmul.f32 %v11037, %v11045
  %v11062 = vrot.slane %v11046, 2
  %v11063 = vrot.slane %v11047, 2
  %v11064 = vrot.slane %v11048, 2
  %v11065 = vrot.slane %v11049, 2
  %v11066 = vrot.slane %v11050, 2
  %v11067 = vrot.slane %v11051, 2
  %v11068 = vrot.slane %v11052, 2
  %v11069 = vrot.slane %v11053, 2
  %v11070 = vsel %vm1733, %v11062, 0
  %v11072 = vsel %vm1733, %v11063, 0
  %v11074 = vsel %vm1733, %v11064, 0
  %v11076 = vsel %vm1733, %v11065, 0
  %v11078 = vsel %vm1733, %v11066, 0
  %v11080 = vsel %vm1733, %v11067, 0
  %v11082 = vsel %vm1733, %v11068, 0
  %v11084 = vsel %vm1733, %v11069, 0
  %11086 = vmatpush.msra.mxu0 0.0
  %11087 = vmatpush.msra.mxu0 0.0
  %11088 = vmatpush.msra.mxu0 0.0
  %11089 = vmatpush.msra.mxu0 0.0
  %11090 = vmatpush.msra.mxu0 0.0
  %11091 = vmatpush.msra.mxu0 0.0
  %11092 = vmatpush.msra.mxu0 0.0
  %11093 = vmatpush.msra.mxu0 0.0
  %11094 = vmatpush.msra.mxu0 0.0
  %11095 = vmatpush.msra.mxu0 0.0
  %11096 = vmatpush.msra.mxu0 0.0
  %11097 = vmatpush.msra.mxu0 0.0
  %11098 = vmatpush.msra.mxu0 0.0
  %11099 = vmatpush.msra.mxu0 0.0
  %11100 = vmatpush.msra.mxu0 0.0
  %11101 = vmatpush.msra.mxu0 %v11070
  %11102 = vmatmul.f32.gmra.mxu0 %v3127
  %v11103 = vpop.f32.mrf.mxu0
  %v11104 = vadd.f32 0.0, %v11103
  %11105 = vmatmul.f32.gmra.mxu0 %v3130
  %v11106 = vpop.f32.mrf.mxu0
  %v11107 = vadd.f32 0.0, %v11106
  %11108 = vdwg.mxu0
  %11109 = vmatpush.msra.mxu0 0.0
  %11110 = vmatpush.msra.mxu0 0.0
  %11111 = vmatpush.msra.mxu0 0.0
  %11112 = vmatpush.msra.mxu0 0.0
  %11113 = vmatpush.msra.mxu0 0.0
  %11114 = vmatpush.msra.mxu0 0.0
  %11115 = vmatpush.msra.mxu0 0.0
  %11116 = vmatpush.msra.mxu0 0.0
  %11117 = vmatpush.msra.mxu0 0.0
  %11118 = vmatpush.msra.mxu0 0.0
  %11119 = vmatpush.msra.mxu0 0.0
  %11120 = vmatpush.msra.mxu0 0.0
  %11121 = vmatpush.msra.mxu0 0.0
  %11122 = vmatpush.msra.mxu0 0.0
  %11123 = vmatpush.msra.mxu0 0.0
  %11124 = vmatpush.msra.mxu0 %v11072
  %11125 = vmatmul.f32.gmra.mxu0 %v3127
  %v11126 = vpop.f32.mrf.mxu0
  %v11127 = vadd.f32 0.0, %v11126
  %11128 = vmatmul.f32.gmra.mxu0 %v3130
  %v11129 = vpop.f32.mrf.mxu0
  %v11130 = vadd.f32 0.0, %v11129
  %11131 = vdwg.mxu0
  %11132 = vmatpush.msra.mxu0 0.0
  %11133 = vmatpush.msra.mxu0 0.0
  %11134 = vmatpush.msra.mxu0 0.0
  %11135 = vmatpush.msra.mxu0 0.0
  %11136 = vmatpush.msra.mxu0 0.0
  %11137 = vmatpush.msra.mxu0 0.0
  %11138 = vmatpush.msra.mxu0 0.0
  %11139 = vmatpush.msra.mxu0 0.0
  %11140 = vmatpush.msra.mxu0 0.0
  %11141 = vmatpush.msra.mxu0 0.0
  %11142 = vmatpush.msra.mxu0 0.0
  %11143 = vmatpush.msra.mxu0 0.0
  %11144 = vmatpush.msra.mxu0 0.0
  %11145 = vmatpush.msra.mxu0 0.0
  %11146 = vmatpush.msra.mxu0 0.0
  %11147 = vmatpush.msra.mxu0 %v11074
  %11148 = vmatmul.f32.gmra.mxu0 %v3127
  %v11149 = vpop.f32.mrf.mxu0
  %v11150 = vadd.f32 0.0, %v11149
  %11151 = vmatmul.f32.gmra.mxu0 %v3130
  %v11152 = vpop.f32.mrf.mxu0
  %v11153 = vadd.f32 0.0, %v11152
  %11154 = vdwg.mxu0
  %11155 = vmatpush.msra.mxu0 0.0
  %11156 = vmatpush.msra.mxu0 0.0
  %11157 = vmatpush.msra.mxu0 0.0
  %11158 = vmatpush.msra.mxu0 0.0
  %11159 = vmatpush.msra.mxu0 0.0
  %11160 = vmatpush.msra.mxu0 0.0
  %11161 = vmatpush.msra.mxu0 0.0
  %11162 = vmatpush.msra.mxu0 0.0
  %11163 = vmatpush.msra.mxu0 0.0
  %11164 = vmatpush.msra.mxu0 0.0
  %11165 = vmatpush.msra.mxu0 0.0
  %11166 = vmatpush.msra.mxu0 0.0
  %11167 = vmatpush.msra.mxu0 0.0
  %11168 = vmatpush.msra.mxu0 0.0
  %11169 = vmatpush.msra.mxu0 0.0
  %11170 = vmatpush.msra.mxu0 %v11076
  %11171 = vmatmul.f32.gmra.mxu0 %v3127
  %v11172 = vpop.f32.mrf.mxu0
  %v11173 = vadd.f32 0.0, %v11172
  %11174 = vmatmul.f32.gmra.mxu0 %v3130
  %v11175 = vpop.f32.mrf.mxu0
  %v11176 = vadd.f32 0.0, %v11175
  %11177 = vdwg.mxu0
  %11178 = vmatpush.msra.mxu0 0.0
  %11179 = vmatpush.msra.mxu0 0.0
  %11180 = vmatpush.msra.mxu0 0.0
  %11181 = vmatpush.msra.mxu0 0.0
  %11182 = vmatpush.msra.mxu0 0.0
  %11183 = vmatpush.msra.mxu0 0.0
  %11184 = vmatpush.msra.mxu0 0.0
  %11185 = vmatpush.msra.mxu0 0.0
  %11186 = vmatpush.msra.mxu0 0.0
  %11187 = vmatpush.msra.mxu0 0.0
  %11188 = vmatpush.msra.mxu0 0.0
  %11189 = vmatpush.msra.mxu0 0.0
  %11190 = vmatpush.msra.mxu0 0.0
  %11191 = vmatpush.msra.mxu0 0.0
  %11192 = vmatpush.msra.mxu0 0.0
  %11193 = vmatpush.msra.mxu0 %v11078
  %11194 = vmatmul.f32.gmra.mxu0 %v3127
  %v11195 = vpop.f32.mrf.mxu0
  %v11196 = vadd.f32 0.0, %v11195
  %11197 = vmatmul.f32.gmra.mxu0 %v3130
  %v11198 = vpop.f32.mrf.mxu0
  %v11199 = vadd.f32 0.0, %v11198
  %11200 = vdwg.mxu0
  %11201 = vmatpush.msra.mxu0 0.0
  %11202 = vmatpush.msra.mxu0 0.0
  %11203 = vmatpush.msra.mxu0 0.0
  %11204 = vmatpush.msra.mxu0 0.0
  %11205 = vmatpush.msra.mxu0 0.0
  %11206 = vmatpush.msra.mxu0 0.0
  %11207 = vmatpush.msra.mxu0 0.0
  %11208 = vmatpush.msra.mxu0 0.0
  %11209 = vmatpush.msra.mxu0 0.0
  %11210 = vmatpush.msra.mxu0 0.0
  %11211 = vmatpush.msra.mxu0 0.0
  %11212 = vmatpush.msra.mxu0 0.0
  %11213 = vmatpush.msra.mxu0 0.0
  %11214 = vmatpush.msra.mxu0 0.0
  %11215 = vmatpush.msra.mxu0 0.0
  %11216 = vmatpush.msra.mxu0 %v11080
  %11217 = vmatmul.f32.gmra.mxu0 %v3127
  %v11218 = vpop.f32.mrf.mxu0
  %v11219 = vadd.f32 0.0, %v11218
  %11220 = vmatmul.f32.gmra.mxu0 %v3130
  %v11221 = vpop.f32.mrf.mxu0
  %v11222 = vadd.f32 0.0, %v11221
  %11223 = vdwg.mxu0
  %11224 = vmatpush.msra.mxu0 0.0
  %11225 = vmatpush.msra.mxu0 0.0
  %11226 = vmatpush.msra.mxu0 0.0
  %11227 = vmatpush.msra.mxu0 0.0
  %11228 = vmatpush.msra.mxu0 0.0
  %11229 = vmatpush.msra.mxu0 0.0
  %11230 = vmatpush.msra.mxu0 0.0
  %11231 = vmatpush.msra.mxu0 0.0
  %11232 = vmatpush.msra.mxu0 0.0
  %11233 = vmatpush.msra.mxu0 0.0
  %11234 = vmatpush.msra.mxu0 0.0
  %11235 = vmatpush.msra.mxu0 0.0
  %11236 = vmatpush.msra.mxu0 0.0
  %11237 = vmatpush.msra.mxu0 0.0
  %11238 = vmatpush.msra.mxu0 0.0
  %11239 = vmatpush.msra.mxu0 %v11082
  %11240 = vmatmul.f32.gmra.mxu0 %v3127
  %v11241 = vpop.f32.mrf.mxu0
  %v11242 = vadd.f32 0.0, %v11241
  %11243 = vmatmul.f32.gmra.mxu0 %v3130
  %v11244 = vpop.f32.mrf.mxu0
  %v11245 = vadd.f32 0.0, %v11244
  %11246 = vdwg.mxu0
  %11247 = vmatpush.msra.mxu0 0.0
  %11248 = vmatpush.msra.mxu0 0.0
  %11249 = vmatpush.msra.mxu0 0.0
  %11250 = vmatpush.msra.mxu0 0.0
  %11251 = vmatpush.msra.mxu0 0.0
  %11252 = vmatpush.msra.mxu0 0.0
  %11253 = vmatpush.msra.mxu0 0.0
  %11254 = vmatpush.msra.mxu0 0.0
  %11255 = vmatpush.msra.mxu0 0.0
  %11256 = vmatpush.msra.mxu0 0.0
  %11257 = vmatpush.msra.mxu0 0.0
  %11258 = vmatpush.msra.mxu0 0.0
  %11259 = vmatpush.msra.mxu0 0.0
  %11260 = vmatpush.msra.mxu0 0.0
  %11261 = vmatpush.msra.mxu0 0.0
  %11262 = vmatpush.msra.mxu0 %v11084
  %11263 = vmatmul.f32.gmra.mxu0 %v3127
  %v11264 = vpop.f32.mrf.mxu0
  %v11265 = vadd.f32 0.0, %v11264
  %11266 = vmatmul.f32.gmra.mxu0 %v3130
  %v11267 = vpop.f32.mrf.mxu0
  %v11268 = vadd.f32 0.0, %v11267
  %11269 = vdwg.mxu0
  %v11270 = vadd.f32 %v10974, %v11104
  %v11271 = vadd.f32 %v10975, %v11127
  %v11272 = vadd.f32 %v10976, %v11150
  %v11273 = vadd.f32 %v10977, %v11173
  %v11274 = vadd.f32 %v10978, %v11196
  %v11275 = vadd.f32 %v10979, %v11219
  %v11276 = vadd.f32 %v10980, %v11242
  %v11277 = vadd.f32 %v10981, %v11265
  %v11278 = vadd.f32 %v10982, %v11107
  %v11279 = vadd.f32 %v10983, %v11130
  %v11280 = vadd.f32 %v10984, %v11153
  %v11281 = vadd.f32 %v10985, %v11176
  %v11282 = vadd.f32 %v10986, %v11199
  %v11283 = vadd.f32 %v10987, %v11222
  %v11284 = vadd.f32 %v10988, %v11245
  %v11285 = vadd.f32 %v10989, %v11268
  %v11294 = vrot.slane %v11030, 6
  %v11295 = vrot.slane %v11031, 6
  %v11296 = vrot.slane %v11032, 6
  %v11297 = vrot.slane %v11033, 6
  %v11298 = vrot.slane %v11034, 6
  %v11299 = vrot.slane %v11035, 6
  %v11300 = vrot.slane %v11036, 6
  %v11301 = vrot.slane %v11037, 6
  %v11310 = vmul.f32 %v8829, %v11294
  %v11311 = vmul.f32 %v8831, %v11295
  %v11312 = vmul.f32 %v8833, %v11296
  %v11313 = vmul.f32 %v8835, %v11297
  %v11314 = vmul.f32 %v8837, %v11298
  %v11315 = vmul.f32 %v8839, %v11299
  %v11316 = vmul.f32 %v8841, %v11300
  %v11317 = vmul.f32 %v8843, %v11301
  %v11318 = vld [vmem:[#allocation2 + $0x40] sm:$0x30]
  %v11319 = vld [vmem:[#allocation2 + $0x48] sm:$0x30]
  %v11320 = vld [vmem:[#allocation2 + $0x50] sm:$0x30]
  %v11321 = vld [vmem:[#allocation2 + $0x58] sm:$0x30]
  %v11322 = vld [vmem:[#allocation2 + $0x60] sm:$0x30]
  %v11323 = vld [vmem:[#allocation2 + $0x68] sm:$0x30]
  %v11324 = vld [vmem:[#allocation2 + $0x70] sm:$0x30]
  %v11325 = vld [vmem:[#allocation2 + $0x78] sm:$0x30]
  %v11326 = vadd.f32 %v11310, %v11318
  %v11327 = vadd.f32 %v11311, %v11319
  %v11328 = vadd.f32 %v11312, %v11320
  %v11329 = vadd.f32 %v11313, %v11321
  %v11330 = vadd.f32 %v11314, %v11322
  %v11331 = vadd.f32 %v11315, %v11323
  %v11332 = vadd.f32 %v11316, %v11324
  %v11333 = vadd.f32 %v11317, %v11325
  %v11334 = vld [vmem:[#allocation3 + $0x40] sm:$0x30]
  %v11335 = vld [vmem:[#allocation3 + $0x48] sm:$0x30]
  %v11336 = vld [vmem:[#allocation3 + $0x50] sm:$0x30]
  %v11337 = vld [vmem:[#allocation3 + $0x58] sm:$0x30]
  %v11338 = vld [vmem:[#allocation3 + $0x60] sm:$0x30]
  %v11339 = vld [vmem:[#allocation3 + $0x68] sm:$0x30]
  %v11340 = vld [vmem:[#allocation3 + $0x70] sm:$0x30]
  %v11341 = vld [vmem:[#allocation3 + $0x78] sm:$0x30]
  %v11342 = vmul.f32 %v11326, %v11334
  %v11343 = vmul.f32 %v11327, %v11335
  %v11344 = vmul.f32 %v11328, %v11336
  %v11345 = vmul.f32 %v11329, %v11337
  %v11346 = vmul.f32 %v11330, %v11338
  %v11347 = vmul.f32 %v11331, %v11339
  %v11348 = vmul.f32 %v11332, %v11340
  %v11349 = vmul.f32 %v11333, %v11341
  %v11358 = vrot.slane %v11342, 4
  %v11359 = vrot.slane %v11343, 4
  %v11360 = vrot.slane %v11344, 4
  %v11361 = vrot.slane %v11345, 4
  %v11362 = vrot.slane %v11346, 4
  %v11363 = vrot.slane %v11347, 4
  %v11364 = vrot.slane %v11348, 4
  %v11365 = vrot.slane %v11349, 4
  %v11366 = vsel %vm1733, %v11358, 0
  %v11368 = vsel %vm1733, %v11359, 0
  %v11370 = vsel %vm1733, %v11360, 0
  %v11372 = vsel %vm1733, %v11361, 0
  %v11374 = vsel %vm1733, %v11362, 0
  %v11376 = vsel %vm1733, %v11363, 0
  %v11378 = vsel %vm1733, %v11364, 0
  %v11380 = vsel %vm1733, %v11365, 0
  %11382 = vmatpush.msra.mxu0 0.0
  %11383 = vmatpush.msra.mxu0 0.0
  %11384 = vmatpush.msra.mxu0 0.0
  %11385 = vmatpush.msra.mxu0 0.0
  %11386 = vmatpush.msra.mxu0 0.0
  %11387 = vmatpush.msra.mxu0 0.0
  %11388 = vmatpush.msra.mxu0 0.0
  %11389 = vmatpush.msra.mxu0 0.0
  %11390 = vmatpush.msra.mxu0 0.0
  %11391 = vmatpush.msra.mxu0 0.0
  %11392 = vmatpush.msra.mxu0 0.0
  %11393 = vmatpush.msra.mxu0 0.0
  %11394 = vmatpush.msra.mxu0 0.0
  %11395 = vmatpush.msra.mxu0 0.0
  %11396 = vmatpush.msra.mxu0 0.0
  %11397 = vmatpush.msra.mxu0 %v11366
  %11398 = vmatmul.f32.gmra.mxu0 %v3429
  %v11399 = vpop.f32.mrf.mxu0
  %v11400 = vadd.f32 0.0, %v11399
  %11401 = vmatmul.f32.gmra.mxu0 %v3432
  %v11402 = vpop.f32.mrf.mxu0
  %v11403 = vadd.f32 0.0, %v11402
  %11404 = vdwg.mxu0
  %11405 = vmatpush.msra.mxu0 0.0
  %11406 = vmatpush.msra.mxu0 0.0
  %11407 = vmatpush.msra.mxu0 0.0
  %11408 = vmatpush.msra.mxu0 0.0
  %11409 = vmatpush.msra.mxu0 0.0
  %11410 = vmatpush.msra.mxu0 0.0
  %11411 = vmatpush.msra.mxu0 0.0
  %11412 = vmatpush.msra.mxu0 0.0
  %11413 = vmatpush.msra.mxu0 0.0
  %11414 = vmatpush.msra.mxu0 0.0
  %11415 = vmatpush.msra.mxu0 0.0
  %11416 = vmatpush.msra.mxu0 0.0
  %11417 = vmatpush.msra.mxu0 0.0
  %11418 = vmatpush.msra.mxu0 0.0
  %11419 = vmatpush.msra.mxu0 0.0
  %11420 = vmatpush.msra.mxu0 %v11368
  %11421 = vmatmul.f32.gmra.mxu0 %v3429
  %v11422 = vpop.f32.mrf.mxu0
  %v11423 = vadd.f32 0.0, %v11422
  %11424 = vmatmul.f32.gmra.mxu0 %v3432
  %v11425 = vpop.f32.mrf.mxu0
  %v11426 = vadd.f32 0.0, %v11425
  %11427 = vdwg.mxu0
  %11428 = vmatpush.msra.mxu0 0.0
  %11429 = vmatpush.msra.mxu0 0.0
  %11430 = vmatpush.msra.mxu0 0.0
  %11431 = vmatpush.msra.mxu0 0.0
  %11432 = vmatpush.msra.mxu0 0.0
  %11433 = vmatpush.msra.mxu0 0.0
  %11434 = vmatpush.msra.mxu0 0.0
  %11435 = vmatpush.msra.mxu0 0.0
  %11436 = vmatpush.msra.mxu0 0.0
  %11437 = vmatpush.msra.mxu0 0.0
  %11438 = vmatpush.msra.mxu0 0.0
  %11439 = vmatpush.msra.mxu0 0.0
  %11440 = vmatpush.msra.mxu0 0.0
  %11441 = vmatpush.msra.mxu0 0.0
  %11442 = vmatpush.msra.mxu0 0.0
  %11443 = vmatpush.msra.mxu0 %v11370
  %11444 = vmatmul.f32.gmra.mxu0 %v3429
  %v11445 = vpop.f32.mrf.mxu0
  %v11446 = vadd.f32 0.0, %v11445
  %11447 = vmatmul.f32.gmra.mxu0 %v3432
  %v11448 = vpop.f32.mrf.mxu0
  %v11449 = vadd.f32 0.0, %v11448
  %11450 = vdwg.mxu0
  %11451 = vmatpush.msra.mxu0 0.0
  %11452 = vmatpush.msra.mxu0 0.0
  %11453 = vmatpush.msra.mxu0 0.0
  %11454 = vmatpush.msra.mxu0 0.0
  %11455 = vmatpush.msra.mxu0 0.0
  %11456 = vmatpush.msra.mxu0 0.0
  %11457 = vmatpush.msra.mxu0 0.0
  %11458 = vmatpush.msra.mxu0 0.0
  %11459 = vmatpush.msra.mxu0 0.0
  %11460 = vmatpush.msra.mxu0 0.0
  %11461 = vmatpush.msra.mxu0 0.0
  %11462 = vmatpush.msra.mxu0 0.0
  %11463 = vmatpush.msra.mxu0 0.0
  %11464 = vmatpush.msra.mxu0 0.0
  %11465 = vmatpush.msra.mxu0 0.0
  %11466 = vmatpush.msra.mxu0 %v11372
  %11467 = vmatmul.f32.gmra.mxu0 %v3429
  %v11468 = vpop.f32.mrf.mxu0
  %v11469 = vadd.f32 0.0, %v11468
  %11470 = vmatmul.f32.gmra.mxu0 %v3432
  %v11471 = vpop.f32.mrf.mxu0
  %v11472 = vadd.f32 0.0, %v11471
  %11473 = vdwg.mxu0
  %11474 = vmatpush.msra.mxu0 0.0
  %11475 = vmatpush.msra.mxu0 0.0
  %11476 = vmatpush.msra.mxu0 0.0
  %11477 = vmatpush.msra.mxu0 0.0
  %11478 = vmatpush.msra.mxu0 0.0
  %11479 = vmatpush.msra.mxu0 0.0
  %11480 = vmatpush.msra.mxu0 0.0
  %11481 = vmatpush.msra.mxu0 0.0
  %11482 = vmatpush.msra.mxu0 0.0
  %11483 = vmatpush.msra.mxu0 0.0
  %11484 = vmatpush.msra.mxu0 0.0
  %11485 = vmatpush.msra.mxu0 0.0
  %11486 = vmatpush.msra.mxu0 0.0
  %11487 = vmatpush.msra.mxu0 0.0
  %11488 = vmatpush.msra.mxu0 0.0
  %11489 = vmatpush.msra.mxu0 %v11374
  %11490 = vmatmul.f32.gmra.mxu0 %v3429
  %v11491 = vpop.f32.mrf.mxu0
  %v11492 = vadd.f32 0.0, %v11491
  %11493 = vmatmul.f32.gmra.mxu0 %v3432
  %v11494 = vpop.f32.mrf.mxu0
  %v11495 = vadd.f32 0.0, %v11494
  %11496 = vdwg.mxu0
  %11497 = vmatpush.msra.mxu0 0.0
  %11498 = vmatpush.msra.mxu0 0.0
  %11499 = vmatpush.msra.mxu0 0.0
  %11500 = vmatpush.msra.mxu0 0.0
  %11501 = vmatpush.msra.mxu0 0.0
  %11502 = vmatpush.msra.mxu0 0.0
  %11503 = vmatpush.msra.mxu0 0.0
  %11504 = vmatpush.msra.mxu0 0.0
  %11505 = vmatpush.msra.mxu0 0.0
  %11506 = vmatpush.msra.mxu0 0.0
  %11507 = vmatpush.msra.mxu0 0.0
  %11508 = vmatpush.msra.mxu0 0.0
  %11509 = vmatpush.msra.mxu0 0.0
  %11510 = vmatpush.msra.mxu0 0.0
  %11511 = vmatpush.msra.mxu0 0.0
  %11512 = vmatpush.msra.mxu0 %v11376
  %11513 = vmatmul.f32.gmra.mxu0 %v3429
  %v11514 = vpop.f32.mrf.mxu0
  %v11515 = vadd.f32 0.0, %v11514
  %11516 = vmatmul.f32.gmra.mxu0 %v3432
  %v11517 = vpop.f32.mrf.mxu0
  %v11518 = vadd.f32 0.0, %v11517
  %11519 = vdwg.mxu0
  %11520 = vmatpush.msra.mxu0 0.0
  %11521 = vmatpush.msra.mxu0 0.0
  %11522 = vmatpush.msra.mxu0 0.0
  %11523 = vmatpush.msra.mxu0 0.0
  %11524 = vmatpush.msra.mxu0 0.0
  %11525 = vmatpush.msra.mxu0 0.0
  %11526 = vmatpush.msra.mxu0 0.0
  %11527 = vmatpush.msra.mxu0 0.0
  %11528 = vmatpush.msra.mxu0 0.0
  %11529 = vmatpush.msra.mxu0 0.0
  %11530 = vmatpush.msra.mxu0 0.0
  %11531 = vmatpush.msra.mxu0 0.0
  %11532 = vmatpush.msra.mxu0 0.0
  %11533 = vmatpush.msra.mxu0 0.0
  %11534 = vmatpush.msra.mxu0 0.0
  %11535 = vmatpush.msra.mxu0 %v11378
  %11536 = vmatmul.f32.gmra.mxu0 %v3429
  %v11537 = vpop.f32.mrf.mxu0
  %v11538 = vadd.f32 0.0, %v11537
  %11539 = vmatmul.f32.gmra.mxu0 %v3432
  %v11540 = vpop.f32.mrf.mxu0
  %v11541 = vadd.f32 0.0, %v11540
  %11542 = vdwg.mxu0
  %11543 = vmatpush.msra.mxu0 0.0
  %11544 = vmatpush.msra.mxu0 0.0
  %11545 = vmatpush.msra.mxu0 0.0
  %11546 = vmatpush.msra.mxu0 0.0
  %11547 = vmatpush.msra.mxu0 0.0
  %11548 = vmatpush.msra.mxu0 0.0
  %11549 = vmatpush.msra.mxu0 0.0
  %11550 = vmatpush.msra.mxu0 0.0
  %11551 = vmatpush.msra.mxu0 0.0
  %11552 = vmatpush.msra.mxu0 0.0
  %11553 = vmatpush.msra.mxu0 0.0
  %11554 = vmatpush.msra.mxu0 0.0
  %11555 = vmatpush.msra.mxu0 0.0
  %11556 = vmatpush.msra.mxu0 0.0
  %11557 = vmatpush.msra.mxu0 0.0
  %11558 = vmatpush.msra.mxu0 %v11380
  %11559 = vmatmul.f32.gmra.mxu0 %v3429
  %v11560 = vpop.f32.mrf.mxu0
  %v11561 = vadd.f32 0.0, %v11560
  %11562 = vmatmul.f32.gmra.mxu0 %v3432
  %v11563 = vpop.f32.mrf.mxu0
  %v11564 = vadd.f32 0.0, %v11563
  %11565 = vdwg.mxu0
  %v11566 = vadd.f32 %v11270, %v11400
  %v11567 = vadd.f32 %v11271, %v11423
  %v11568 = vadd.f32 %v11272, %v11446
  %v11569 = vadd.f32 %v11273, %v11469
  %v11570 = vadd.f32 %v11274, %v11492
  %v11571 = vadd.f32 %v11275, %v11515
  %v11572 = vadd.f32 %v11276, %v11538
  %v11573 = vadd.f32 %v11277, %v11561
  %v11574 = vadd.f32 %v11278, %v11403
  %v11575 = vadd.f32 %v11279, %v11426
  %v11576 = vadd.f32 %v11280, %v11449
  %v11577 = vadd.f32 %v11281, %v11472
  %v11578 = vadd.f32 %v11282, %v11495
  %v11579 = vadd.f32 %v11283, %v11518
  %v11580 = vadd.f32 %v11284, %v11541
  %v11581 = vadd.f32 %v11285, %v11564
  %v11590 = vrot.slane %v11326, 6
  %v11591 = vrot.slane %v11327, 6
  %v11592 = vrot.slane %v11328, 6
  %v11593 = vrot.slane %v11329, 6
  %v11594 = vrot.slane %v11330, 6
  %v11595 = vrot.slane %v11331, 6
  %v11596 = vrot.slane %v11332, 6
  %v11597 = vrot.slane %v11333, 6
  %v11606 = vmul.f32 %v8829, %v11590
  %v11607 = vmul.f32 %v8831, %v11591
  %v11608 = vmul.f32 %v8833, %v11592
  %v11609 = vmul.f32 %v8835, %v11593
  %v11610 = vmul.f32 %v8837, %v11594
  %v11611 = vmul.f32 %v8839, %v11595
  %v11612 = vmul.f32 %v8841, %v11596
  %v11613 = vmul.f32 %v8843, %v11597
  %v11614 = vld [vmem:[#allocation2 + $0x40] sm:$0xc0]
  %v11615 = vld [vmem:[#allocation2 + $0x48] sm:$0xc0]
  %v11616 = vld [vmem:[#allocation2 + $0x50] sm:$0xc0]
  %v11617 = vld [vmem:[#allocation2 + $0x58] sm:$0xc0]
  %v11618 = vld [vmem:[#allocation2 + $0x60] sm:$0xc0]
  %v11619 = vld [vmem:[#allocation2 + $0x68] sm:$0xc0]
  %v11620 = vld [vmem:[#allocation2 + $0x70] sm:$0xc0]
  %v11621 = vld [vmem:[#allocation2 + $0x78] sm:$0xc0]
  %v11622 = vadd.f32 %v11606, %v11614
  %v11623 = vadd.f32 %v11607, %v11615
  %v11624 = vadd.f32 %v11608, %v11616
  %v11625 = vadd.f32 %v11609, %v11617
  %v11626 = vadd.f32 %v11610, %v11618
  %v11627 = vadd.f32 %v11611, %v11619
  %v11628 = vadd.f32 %v11612, %v11620
  %v11629 = vadd.f32 %v11613, %v11621
  %v11630 = vld [vmem:[#allocation3 + $0x40] sm:$0xc0]
  %v11631 = vld [vmem:[#allocation3 + $0x48] sm:$0xc0]
  %v11632 = vld [vmem:[#allocation3 + $0x50] sm:$0xc0]
  %v11633 = vld [vmem:[#allocation3 + $0x58] sm:$0xc0]
  %v11634 = vld [vmem:[#allocation3 + $0x60] sm:$0xc0]
  %v11635 = vld [vmem:[#allocation3 + $0x68] sm:$0xc0]
  %v11636 = vld [vmem:[#allocation3 + $0x70] sm:$0xc0]
  %v11637 = vld [vmem:[#allocation3 + $0x78] sm:$0xc0]
  %v11638 = vmul.f32 %v11622, %v11630
  %v11639 = vmul.f32 %v11623, %v11631
  %v11640 = vmul.f32 %v11624, %v11632
  %v11641 = vmul.f32 %v11625, %v11633
  %v11642 = vmul.f32 %v11626, %v11634
  %v11643 = vmul.f32 %v11627, %v11635
  %v11644 = vmul.f32 %v11628, %v11636
  %v11645 = vmul.f32 %v11629, %v11637
  %v11654 = vrot.slane %v11638, 6
  %v11655 = vrot.slane %v11639, 6
  %v11656 = vrot.slane %v11640, 6
  %v11657 = vrot.slane %v11641, 6
  %v11658 = vrot.slane %v11642, 6
  %v11659 = vrot.slane %v11643, 6
  %v11660 = vrot.slane %v11644, 6
  %v11661 = vrot.slane %v11645, 6
  %v11662 = vsel %vm1733, %v11654, 0
  %v11664 = vsel %vm1733, %v11655, 0
  %v11666 = vsel %vm1733, %v11656, 0
  %v11668 = vsel %vm1733, %v11657, 0
  %v11670 = vsel %vm1733, %v11658, 0
  %v11672 = vsel %vm1733, %v11659, 0
  %v11674 = vsel %vm1733, %v11660, 0
  %v11676 = vsel %vm1733, %v11661, 0
  %11678 = vmatpush.msra.mxu0 0.0
  %11679 = vmatpush.msra.mxu0 0.0
  %11680 = vmatpush.msra.mxu0 0.0
  %11681 = vmatpush.msra.mxu0 0.0
  %11682 = vmatpush.msra.mxu0 0.0
  %11683 = vmatpush.msra.mxu0 0.0
  %11684 = vmatpush.msra.mxu0 0.0
  %11685 = vmatpush.msra.mxu0 0.0
  %11686 = vmatpush.msra.mxu0 0.0
  %11687 = vmatpush.msra.mxu0 0.0
  %11688 = vmatpush.msra.mxu0 0.0
  %11689 = vmatpush.msra.mxu0 0.0
  %11690 = vmatpush.msra.mxu0 0.0
  %11691 = vmatpush.msra.mxu0 0.0
  %11692 = vmatpush.msra.mxu0 0.0
  %11693 = vmatpush.msra.mxu0 %v11662
  %11694 = vmatmul.f32.gmra.mxu0 %v3731
  %v11695 = vpop.f32.mrf.mxu0
  %v11696 = vadd.f32 0.0, %v11695
  %11697 = vmatmul.f32.gmra.mxu0 %v3734
  %v11698 = vpop.f32.mrf.mxu0
  %v11699 = vadd.f32 0.0, %v11698
  %11700 = vdwg.mxu0
  %11701 = vmatpush.msra.mxu0 0.0
  %11702 = vmatpush.msra.mxu0 0.0
  %11703 = vmatpush.msra.mxu0 0.0
  %11704 = vmatpush.msra.mxu0 0.0
  %11705 = vmatpush.msra.mxu0 0.0
  %11706 = vmatpush.msra.mxu0 0.0
  %11707 = vmatpush.msra.mxu0 0.0
  %11708 = vmatpush.msra.mxu0 0.0
  %11709 = vmatpush.msra.mxu0 0.0
  %11710 = vmatpush.msra.mxu0 0.0
  %11711 = vmatpush.msra.mxu0 0.0
  %11712 = vmatpush.msra.mxu0 0.0
  %11713 = vmatpush.msra.mxu0 0.0
  %11714 = vmatpush.msra.mxu0 0.0
  %11715 = vmatpush.msra.mxu0 0.0
  %11716 = vmatpush.msra.mxu0 %v11664
  %11717 = vmatmul.f32.gmra.mxu0 %v3731
  %v11718 = vpop.f32.mrf.mxu0
  %v11719 = vadd.f32 0.0, %v11718
  %11720 = vmatmul.f32.gmra.mxu0 %v3734
  %v11721 = vpop.f32.mrf.mxu0
  %v11722 = vadd.f32 0.0, %v11721
  %11723 = vdwg.mxu0
  %11724 = vmatpush.msra.mxu0 0.0
  %11725 = vmatpush.msra.mxu0 0.0
  %11726 = vmatpush.msra.mxu0 0.0
  %11727 = vmatpush.msra.mxu0 0.0
  %11728 = vmatpush.msra.mxu0 0.0
  %11729 = vmatpush.msra.mxu0 0.0
  %11730 = vmatpush.msra.mxu0 0.0
  %11731 = vmatpush.msra.mxu0 0.0
  %11732 = vmatpush.msra.mxu0 0.0
  %11733 = vmatpush.msra.mxu0 0.0
  %11734 = vmatpush.msra.mxu0 0.0
  %11735 = vmatpush.msra.mxu0 0.0
  %11736 = vmatpush.msra.mxu0 0.0
  %11737 = vmatpush.msra.mxu0 0.0
  %11738 = vmatpush.msra.mxu0 0.0
  %11739 = vmatpush.msra.mxu0 %v11666
  %11740 = vmatmul.f32.gmra.mxu0 %v3731
  %v11741 = vpop.f32.mrf.mxu0
  %v11742 = vadd.f32 0.0, %v11741
  %11743 = vmatmul.f32.gmra.mxu0 %v3734
  %v11744 = vpop.f32.mrf.mxu0
  %v11745 = vadd.f32 0.0, %v11744
  %11746 = vdwg.mxu0
  %11747 = vmatpush.msra.mxu0 0.0
  %11748 = vmatpush.msra.mxu0 0.0
  %11749 = vmatpush.msra.mxu0 0.0
  %11750 = vmatpush.msra.mxu0 0.0
  %11751 = vmatpush.msra.mxu0 0.0
  %11752 = vmatpush.msra.mxu0 0.0
  %11753 = vmatpush.msra.mxu0 0.0
  %11754 = vmatpush.msra.mxu0 0.0
  %11755 = vmatpush.msra.mxu0 0.0
  %11756 = vmatpush.msra.mxu0 0.0
  %11757 = vmatpush.msra.mxu0 0.0
  %11758 = vmatpush.msra.mxu0 0.0
  %11759 = vmatpush.msra.mxu0 0.0
  %11760 = vmatpush.msra.mxu0 0.0
  %11761 = vmatpush.msra.mxu0 0.0
  %11762 = vmatpush.msra.mxu0 %v11668
  %11763 = vmatmul.f32.gmra.mxu0 %v3731
  %v11764 = vpop.f32.mrf.mxu0
  %v11765 = vadd.f32 0.0, %v11764
  %11766 = vmatmul.f32.gmra.mxu0 %v3734
  %v11767 = vpop.f32.mrf.mxu0
  %v11768 = vadd.f32 0.0, %v11767
  %11769 = vdwg.mxu0
  %11770 = vmatpush.msra.mxu0 0.0
  %11771 = vmatpush.msra.mxu0 0.0
  %11772 = vmatpush.msra.mxu0 0.0
  %11773 = vmatpush.msra.mxu0 0.0
  %11774 = vmatpush.msra.mxu0 0.0
  %11775 = vmatpush.msra.mxu0 0.0
  %11776 = vmatpush.msra.mxu0 0.0
  %11777 = vmatpush.msra.mxu0 0.0
  %11778 = vmatpush.msra.mxu0 0.0
  %11779 = vmatpush.msra.mxu0 0.0
  %11780 = vmatpush.msra.mxu0 0.0
  %11781 = vmatpush.msra.mxu0 0.0
  %11782 = vmatpush.msra.mxu0 0.0
  %11783 = vmatpush.msra.mxu0 0.0
  %11784 = vmatpush.msra.mxu0 0.0
  %11785 = vmatpush.msra.mxu0 %v11670
  %11786 = vmatmul.f32.gmra.mxu0 %v3731
  %v11787 = vpop.f32.mrf.mxu0
  %v11788 = vadd.f32 0.0, %v11787
  %11789 = vmatmul.f32.gmra.mxu0 %v3734
  %v11790 = vpop.f32.mrf.mxu0
  %v11791 = vadd.f32 0.0, %v11790
  %11792 = vdwg.mxu0
  %11793 = vmatpush.msra.mxu0 0.0
  %11794 = vmatpush.msra.mxu0 0.0
  %11795 = vmatpush.msra.mxu0 0.0
  %11796 = vmatpush.msra.mxu0 0.0
  %11797 = vmatpush.msra.mxu0 0.0
  %11798 = vmatpush.msra.mxu0 0.0
  %11799 = vmatpush.msra.mxu0 0.0
  %11800 = vmatpush.msra.mxu0 0.0
  %11801 = vmatpush.msra.mxu0 0.0
  %11802 = vmatpush.msra.mxu0 0.0
  %11803 = vmatpush.msra.mxu0 0.0
  %11804 = vmatpush.msra.mxu0 0.0
  %11805 = vmatpush.msra.mxu0 0.0
  %11806 = vmatpush.msra.mxu0 0.0
  %11807 = vmatpush.msra.mxu0 0.0
  %11808 = vmatpush.msra.mxu0 %v11672
  %11809 = vmatmul.f32.gmra.mxu0 %v3731
  %v11810 = vpop.f32.mrf.mxu0
  %v11811 = vadd.f32 0.0, %v11810
  %11812 = vmatmul.f32.gmra.mxu0 %v3734
  %v11813 = vpop.f32.mrf.mxu0
  %v11814 = vadd.f32 0.0, %v11813
  %11815 = vdwg.mxu0
  %11816 = vmatpush.msra.mxu0 0.0
  %11817 = vmatpush.msra.mxu0 0.0
  %11818 = vmatpush.msra.mxu0 0.0
  %11819 = vmatpush.msra.mxu0 0.0
  %11820 = vmatpush.msra.mxu0 0.0
  %11821 = vmatpush.msra.mxu0 0.0
  %11822 = vmatpush.msra.mxu0 0.0
  %11823 = vmatpush.msra.mxu0 0.0
  %11824 = vmatpush.msra.mxu0 0.0
  %11825 = vmatpush.msra.mxu0 0.0
  %11826 = vmatpush.msra.mxu0 0.0
  %11827 = vmatpush.msra.mxu0 0.0
  %11828 = vmatpush.msra.mxu0 0.0
  %11829 = vmatpush.msra.mxu0 0.0
  %11830 = vmatpush.msra.mxu0 0.0
  %11831 = vmatpush.msra.mxu0 %v11674
  %11832 = vmatmul.f32.gmra.mxu0 %v3731
  %v11833 = vpop.f32.mrf.mxu0
  %v11834 = vadd.f32 0.0, %v11833
  %11835 = vmatmul.f32.gmra.mxu0 %v3734
  %v11836 = vpop.f32.mrf.mxu0
  %v11837 = vadd.f32 0.0, %v11836
  %11838 = vdwg.mxu0
  %11839 = vmatpush.msra.mxu0 0.0
  %11840 = vmatpush.msra.mxu0 0.0
  %11841 = vmatpush.msra.mxu0 0.0
  %11842 = vmatpush.msra.mxu0 0.0
  %11843 = vmatpush.msra.mxu0 0.0
  %11844 = vmatpush.msra.mxu0 0.0
  %11845 = vmatpush.msra.mxu0 0.0
  %11846 = vmatpush.msra.mxu0 0.0
  %11847 = vmatpush.msra.mxu0 0.0
  %11848 = vmatpush.msra.mxu0 0.0
  %11849 = vmatpush.msra.mxu0 0.0
  %11850 = vmatpush.msra.mxu0 0.0
  %11851 = vmatpush.msra.mxu0 0.0
  %11852 = vmatpush.msra.mxu0 0.0
  %11853 = vmatpush.msra.mxu0 0.0
  %11854 = vmatpush.msra.mxu0 %v11676
  %11855 = vmatmul.f32.gmra.mxu0 %v3731
  %v11856 = vpop.f32.mrf.mxu0
  %v11857 = vadd.f32 0.0, %v11856
  %11858 = vmatmul.f32.gmra.mxu0 %v3734
  %v11859 = vpop.f32.mrf.mxu0
  %v11860 = vadd.f32 0.0, %v11859
  %11861 = vdwg.mxu0
  %v11862 = vadd.f32 %v11566, %v11696
  %v11863 = vadd.f32 %v11567, %v11719
  %v11864 = vadd.f32 %v11568, %v11742
  %v11865 = vadd.f32 %v11569, %v11765
  %v11866 = vadd.f32 %v11570, %v11788
  %v11867 = vadd.f32 %v11571, %v11811
  %v11868 = vadd.f32 %v11572, %v11834
  %v11869 = vadd.f32 %v11573, %v11857
  %v11870 = vadd.f32 %v11574, %v11699
  %v11871 = vadd.f32 %v11575, %v11722
  %v11872 = vadd.f32 %v11576, %v11745
  %v11873 = vadd.f32 %v11577, %v11768
  %v11874 = vadd.f32 %v11578, %v11791
  %v11875 = vadd.f32 %v11579, %v11814
  %v11876 = vadd.f32 %v11580, %v11837
  %v11877 = vadd.f32 %v11581, %v11860
  %s11878 = scalar_lea.vmem %s13, 2
  %v11879 = vld [vmem:[%s11878] sm:$0x1]
  %v11881 = vperm.slane %v11879, 0
  %v11883 = vmul.f32 %v11881, %v8486
  %v11884 = vmul.f32 %v11881, %v8487
  %11885 = vmatpush.xpose.msra.mxu0 0.0
  %11886 = vmatpush.xpose.msra.mxu0 0.0
  %11887 = vmatpush.xpose.msra.mxu0 0.0
  %11888 = vmatpush.xpose.msra.mxu0 0.0
  %11889 = vmatpush.xpose.msra.mxu0 0.0
  %11890 = vmatpush.xpose.msra.mxu0 0.0
  %11891 = vmatpush.xpose.msra.mxu0 0.0
  %11892 = vmatpush.xpose.msra.mxu0 0.0
  %11893 = vmatpush.xpose.msra.mxu0 %v137
  %11894 = vmatpush.xpose.msra.mxu0 %v129
  %11895 = vmatpush.xpose.msra.mxu0 %v121
  %11896 = vmatpush.xpose.msra.mxu0 %v113
  %11897 = vmatpush.xpose.msra.mxu0 %v105
  %11898 = vmatpush.xpose.msra.mxu0 %v97
  %11899 = vmatpush.xpose.msra.mxu0 %v89
  %11900 = vmatpush.xpose.msra.mxu0 %v81
  %11901 = vmatmul.f32.gmra.mxu0 %v11862
  %v11902 = vpop.f32.mrf.mxu0
  %v11903 = vadd.f32 %v11883, %v11902
  %11904 = vmatmul.f32.gmra.mxu0 %v11870
  %v11905 = vpop.f32.mrf.mxu0
  %v11906 = vadd.f32 %v11884, %v11905
  %11907 = vdwg.mxu0
  %11908 = vmatpush.xpose.msra.mxu0 0.0
  %11909 = vmatpush.xpose.msra.mxu0 0.0
  %11910 = vmatpush.xpose.msra.mxu0 0.0
  %11911 = vmatpush.xpose.msra.mxu0 0.0
  %11912 = vmatpush.xpose.msra.mxu0 0.0
  %11913 = vmatpush.xpose.msra.mxu0 0.0
  %11914 = vmatpush.xpose.msra.mxu0 0.0
  %11915 = vmatpush.xpose.msra.mxu0 0.0
  %11916 = vmatpush.xpose.msra.mxu0 %v138
  %11917 = vmatpush.xpose.msra.mxu0 %v130
  %11918 = vmatpush.xpose.msra.mxu0 %v122
  %11919 = vmatpush.xpose.msra.mxu0 %v114
  %11920 = vmatpush.xpose.msra.mxu0 %v106
  %11921 = vmatpush.xpose.msra.mxu0 %v98
  %11922 = vmatpush.xpose.msra.mxu0 %v90
  %11923 = vmatpush.xpose.msra.mxu0 %v82
  %11924 = vmatmul.f32.gmra.mxu0 %v11863
  %v11925 = vpop.f32.mrf.mxu0
  %v11926 = vadd.f32 %v11903, %v11925
  %11927 = vmatmul.f32.gmra.mxu0 %v11871
  %v11928 = vpop.f32.mrf.mxu0
  %v11929 = vadd.f32 %v11906, %v11928
  %11930 = vdwg.mxu0
  %11931 = vmatpush.xpose.msra.mxu0 0.0
  %11932 = vmatpush.xpose.msra.mxu0 0.0
  %11933 = vmatpush.xpose.msra.mxu0 0.0
  %11934 = vmatpush.xpose.msra.mxu0 0.0
  %11935 = vmatpush.xpose.msra.mxu0 0.0
  %11936 = vmatpush.xpose.msra.mxu0 0.0
  %11937 = vmatpush.xpose.msra.mxu0 0.0
  %11938 = vmatpush.xpose.msra.mxu0 0.0
  %11939 = vmatpush.xpose.msra.mxu0 %v139
  %11940 = vmatpush.xpose.msra.mxu0 %v131
  %11941 = vmatpush.xpose.msra.mxu0 %v123
  %11942 = vmatpush.xpose.msra.mxu0 %v115
  %11943 = vmatpush.xpose.msra.mxu0 %v107
  %11944 = vmatpush.xpose.msra.mxu0 %v99
  %11945 = vmatpush.xpose.msra.mxu0 %v91
  %11946 = vmatpush.xpose.msra.mxu0 %v83
  %11947 = vmatmul.f32.gmra.mxu0 %v11864
  %v11948 = vpop.f32.mrf.mxu0
  %v11949 = vadd.f32 %v11926, %v11948
  %11950 = vmatmul.f32.gmra.mxu0 %v11872
  %v11951 = vpop.f32.mrf.mxu0
  %v11952 = vadd.f32 %v11929, %v11951
  %11953 = vdwg.mxu0
  %11954 = vmatpush.xpose.msra.mxu0 0.0
  %11955 = vmatpush.xpose.msra.mxu0 0.0
  %11956 = vmatpush.xpose.msra.mxu0 0.0
  %11957 = vmatpush.xpose.msra.mxu0 0.0
  %11958 = vmatpush.xpose.msra.mxu0 0.0
  %11959 = vmatpush.xpose.msra.mxu0 0.0
  %11960 = vmatpush.xpose.msra.mxu0 0.0
  %11961 = vmatpush.xpose.msra.mxu0 0.0
  %11962 = vmatpush.xpose.msra.mxu0 %v140
  %11963 = vmatpush.xpose.msra.mxu0 %v132
  %11964 = vmatpush.xpose.msra.mxu0 %v124
  %11965 = vmatpush.xpose.msra.mxu0 %v116
  %11966 = vmatpush.xpose.msra.mxu0 %v108
  %11967 = vmatpush.xpose.msra.mxu0 %v100
  %11968 = vmatpush.xpose.msra.mxu0 %v92
  %11969 = vmatpush.xpose.msra.mxu0 %v84
  %11970 = vmatmul.f32.gmra.mxu0 %v11865
  %v11971 = vpop.f32.mrf.mxu0
  %v11972 = vadd.f32 %v11949, %v11971
  %11973 = vmatmul.f32.gmra.mxu0 %v11873
  %v11974 = vpop.f32.mrf.mxu0
  %v11975 = vadd.f32 %v11952, %v11974
  %11976 = vdwg.mxu0
  %11977 = vmatpush.xpose.msra.mxu0 0.0
  %11978 = vmatpush.xpose.msra.mxu0 0.0
  %11979 = vmatpush.xpose.msra.mxu0 0.0
  %11980 = vmatpush.xpose.msra.mxu0 0.0
  %11981 = vmatpush.xpose.msra.mxu0 0.0
  %11982 = vmatpush.xpose.msra.mxu0 0.0
  %11983 = vmatpush.xpose.msra.mxu0 0.0
  %11984 = vmatpush.xpose.msra.mxu0 0.0
  %11985 = vmatpush.xpose.msra.mxu0 %v141
  %11986 = vmatpush.xpose.msra.mxu0 %v133
  %11987 = vmatpush.xpose.msra.mxu0 %v125
  %11988 = vmatpush.xpose.msra.mxu0 %v117
  %11989 = vmatpush.xpose.msra.mxu0 %v109
  %11990 = vmatpush.xpose.msra.mxu0 %v101
  %11991 = vmatpush.xpose.msra.mxu0 %v93
  %11992 = vmatpush.xpose.msra.mxu0 %v85
  %11993 = vmatmul.f32.gmra.mxu0 %v11866
  %v11994 = vpop.f32.mrf.mxu0
  %v11995 = vadd.f32 %v11972, %v11994
  %11996 = vmatmul.f32.gmra.mxu0 %v11874
  %v11997 = vpop.f32.mrf.mxu0
  %v11998 = vadd.f32 %v11975, %v11997
  %11999 = vdwg.mxu0
  %12000 = vmatpush.xpose.msra.mxu0 0.0
  %12001 = vmatpush.xpose.msra.mxu0 0.0
  %12002 = vmatpush.xpose.msra.mxu0 0.0
  %12003 = vmatpush.xpose.msra.mxu0 0.0
  %12004 = vmatpush.xpose.msra.mxu0 0.0
  %12005 = vmatpush.xpose.msra.mxu0 0.0
  %12006 = vmatpush.xpose.msra.mxu0 0.0
  %12007 = vmatpush.xpose.msra.mxu0 0.0
  %12008 = vmatpush.xpose.msra.mxu0 %v142
  %12009 = vmatpush.xpose.msra.mxu0 %v134
  %12010 = vmatpush.xpose.msra.mxu0 %v126
  %12011 = vmatpush.xpose.msra.mxu0 %v118
  %12012 = vmatpush.xpose.msra.mxu0 %v110
  %12013 = vmatpush.xpose.msra.mxu0 %v102
  %12014 = vmatpush.xpose.msra.mxu0 %v94
  %12015 = vmatpush.xpose.msra.mxu0 %v86
  %12016 = vmatmul.f32.gmra.mxu0 %v11867
  %v12017 = vpop.f32.mrf.mxu0
  %v12018 = vadd.f32 %v11995, %v12017
  %12019 = vmatmul.f32.gmra.mxu0 %v11875
  %v12020 = vpop.f32.mrf.mxu0
  %v12021 = vadd.f32 %v11998, %v12020
  %12022 = vdwg.mxu0
  %12023 = vmatpush.xpose.msra.mxu0 0.0
  %12024 = vmatpush.xpose.msra.mxu0 0.0
  %12025 = vmatpush.xpose.msra.mxu0 0.0
  %12026 = vmatpush.xpose.msra.mxu0 0.0
  %12027 = vmatpush.xpose.msra.mxu0 0.0
  %12028 = vmatpush.xpose.msra.mxu0 0.0
  %12029 = vmatpush.xpose.msra.mxu0 0.0
  %12030 = vmatpush.xpose.msra.mxu0 0.0
  %12031 = vmatpush.xpose.msra.mxu0 %v143
  %12032 = vmatpush.xpose.msra.mxu0 %v135
  %12033 = vmatpush.xpose.msra.mxu0 %v127
  %12034 = vmatpush.xpose.msra.mxu0 %v119
  %12035 = vmatpush.xpose.msra.mxu0 %v111
  %12036 = vmatpush.xpose.msra.mxu0 %v103
  %12037 = vmatpush.xpose.msra.mxu0 %v95
  %12038 = vmatpush.xpose.msra.mxu0 %v87
  %12039 = vmatmul.f32.gmra.mxu0 %v11868
  %v12040 = vpop.f32.mrf.mxu0
  %v12041 = vadd.f32 %v12018, %v12040
  %12042 = vmatmul.f32.gmra.mxu0 %v11876
  %v12043 = vpop.f32.mrf.mxu0
  %v12044 = vadd.f32 %v12021, %v12043
  %12045 = vdwg.mxu0
  %12046 = vmatpush.xpose.msra.mxu0 0.0
  %12047 = vmatpush.xpose.msra.mxu0 0.0
  %12048 = vmatpush.xpose.msra.mxu0 0.0
  %12049 = vmatpush.xpose.msra.mxu0 0.0
  %12050 = vmatpush.xpose.msra.mxu0 0.0
  %12051 = vmatpush.xpose.msra.mxu0 0.0
  %12052 = vmatpush.xpose.msra.mxu0 0.0
  %12053 = vmatpush.xpose.msra.mxu0 0.0
  %12054 = vmatpush.xpose.msra.mxu0 %v144
  %12055 = vmatpush.xpose.msra.mxu0 %v136
  %12056 = vmatpush.xpose.msra.mxu0 %v128
  %12057 = vmatpush.xpose.msra.mxu0 %v120
  %12058 = vmatpush.xpose.msra.mxu0 %v112
  %12059 = vmatpush.xpose.msra.mxu0 %v104
  %12060 = vmatpush.xpose.msra.mxu0 %v96
  %12061 = vmatpush.xpose.msra.mxu0 %v88
  %12062 = vmatmul.f32.gmra.mxu0 %v11869
  %v12063 = vpop.f32.mrf.mxu0
  %v12064 = vadd.f32 %v12041, %v12063
  %12065 = vmatmul.f32.gmra.mxu0 %v11877
  %v12066 = vpop.f32.mrf.mxu0
  %v12067 = vadd.f32 %v12044, %v12066
  %12068 = vdwg.mxu0
  %v12069 = vsub.f32 0.0, %v8347
  %v12070 = vsub.f32 0.0, %v8350
  %v12071 = vmul.f32 %v12069, 1.442695
  %v12072 = vpow.pop %v12071
  %v12073 = vmul.f32 %v12070, 1.442695
  %v12074 = vpow.pop %v12073
  %v12075 = vadd.f32 %v12072, 1.0
  %v12076 = vadd.f32 %v12074, 1.0
  %v12077 = vrcp.pop %v12075
  %v12078 = vmul.f32 %v12075, %v12077
  %v12079 = vsub.f32 1.0, %v12078
  %v12080 = vmul.f32 %v12077, %v12079
  %v12081 = vadd.f32 %v12077, %v12080
  %vm12082 = vweird.f32 %v12075
  %vm12083 = vweird.f32 %v12077
  %vm12084 = vmor %vm12082, %vm12083
  %v12085 = vsel %vm12084, %v12077, %v12081
  %v12086 = vand.u32 2147483647, %v12075
  %vm12087 = vcmp.eq.f32.partialorder %v12086, 8.507059e+37
  %v12088 = vand.u32 %v12075, 2147483648
  %v12089 = vor.u32 1.1754944e-38, %v12088
  %v12090 = vsel %vm12087, %v12089, %v12085
  %v12091 = vmul.f32 1.0, %v12090
  %v12092 = vrcp.pop %v12076
  %v12093 = vmul.f32 %v12076, %v12092
  %v12094 = vsub.f32 1.0, %v12093
  %v12095 = vmul.f32 %v12092, %v12094
  %v12096 = vadd.f32 %v12092, %v12095
  %vm12097 = vweird.f32 %v12076
  %vm12098 = vweird.f32 %v12092
  %vm12099 = vmor %vm12097, %vm12098
  %v12100 = vsel %vm12099, %v12092, %v12096
  %v12101 = vand.u32 2147483647, %v12076
  %vm12102 = vcmp.eq.f32.partialorder %v12101, 8.507059e+37
  %v12103 = vand.u32 %v12076, 2147483648
  %v12104 = vor.u32 1.1754944e-38, %v12103
  %v12105 = vsel %vm12102, %v12104, %v12100
  %v12106 = vmul.f32 1.0, %v12105
  %v12107 = vmul.f32 %v8347, %v12091
  %v12108 = vmul.f32 %v8350, %v12106
  %v12109 = vmul.f32 %v12064, %v12107
  %v12110 = vmul.f32 %v12067, %v12108
  %s12111 = scalar_lea.vmem %s14, 64
  %v12112 = vld [vmem:[%s12111] sm:$0xff]
  %v12113 = vld [vmem:[%s12111 + $0x8] sm:$0xff]
  %v12114 = vld [vmem:[%s12111 + $0x10] sm:$0xff]
  %v12115 = vld [vmem:[%s12111 + $0x18] sm:$0xff]
  %v12117 = vsel %vm518, %v12109, 0
  %v12120 = vsel %vm518, %v12110, 0
  %v12123 = vsel %vm518, %v12112, 0
  %v12126 = vsel %vm518, %v12113, 0
  %v12129 = vsel %vm518, %v12114, 0
  %v12132 = vsel %vm518, %v12115, 0
  %12134 = vmatpush.xpose.msra.mxu0 0.0
  %12135 = vmatpush.xpose.msra.mxu0 0.0
  %12136 = vmatpush.xpose.msra.mxu0 0.0
  %12137 = vmatpush.xpose.msra.mxu0 0.0
  %12138 = vmatpush.xpose.msra.mxu0 0.0
  %12139 = vmatpush.xpose.msra.mxu0 0.0
  %12140 = vmatpush.xpose.msra.mxu0 0.0
  %12141 = vmatpush.xpose.msra.mxu0 0.0
  %12142 = vmatpush.xpose.msra.mxu0 0.0
  %12143 = vmatpush.xpose.msra.mxu0 0.0
  %12144 = vmatpush.xpose.msra.mxu0 0.0
  %12145 = vmatpush.xpose.msra.mxu0 0.0
  %12146 = vmatpush.xpose.msra.mxu0 %v12132
  %12147 = vmatpush.xpose.msra.mxu0 %v12129
  %12148 = vmatpush.xpose.msra.mxu0 %v12126
  %12149 = vmatpush.xpose.msra.mxu0 %v12123
  %12150 = vmatmul.f32.gmra.mxu0 %v12117
  %v12151 = vpop.f32.mrf.mxu0
  %v12152 = vadd.f32 %v8188, %v12151
  %12153 = vmatmul.f32.gmra.mxu0 %v12120
  %v12154 = vpop.f32.mrf.mxu0
  %v12155 = vadd.f32 %v8191, %v12154
  %12156 = vdwg.mxu0
  %12157 = vst.msk [vmem:[%s15] sm:$0xff] %vm202, %v12152
  %12158 = vst.msk [vmem:[%s15 + $0x8] sm:$0xff] %vm202, %v12155
  // Predicated region
  $region62: #{mamba_forward.1} parent=0 // pred_check
    _
  $region63: #{mamba_forward.1} parent=0 // pred_check_branch
    %12160 = sbr.rel (0) target = $region65
  $region64: #{mamba_forward.1} parent=0 // pred_region
    _
  $region65: #{mamba_forward.1} parent=0 // pred_fallthru
    _
  // Predicated region
  $region66: #{mamba_forward.1} parent=0 // pred_check
    _
  $region67: #{mamba_forward.1} parent=0 // pred_check_branch
    %12162 = sbr.rel (0) target = $region69
  $region68: #{mamba_forward.1} parent=0 // pred_region
    _
  $region69: #{mamba_forward.1} parent=0 // pred_fallthru
    _

</llo_original>
